<compile_context>
chip_gen: v7x
topology: tpu7x:2x2x1
jax: 0.10.0
libtpu: 0.0.40
codegen_flags: <defaults>
</compile_context>

<pallas_src>
import jax
import jax.numpy as jnp
from jax import lax
from jax.experimental import pallas as pl
from jax.experimental.pallas import tpu as pltpu

LN_EPS = 1e-5
GRN_EPS = 1e-6


# --------------------------------------------------------------------------- #
# in-kernel helpers
# --------------------------------------------------------------------------- #

def _erf(x):
    # Abramowitz & Stegun 7.1.26 rational approximation (|err| <= 1.5e-7); used
    # because erf has no guaranteed Mosaic lowering (exp does, via the EUP).
    a1, a2, a3, a4, a5 = (0.254829592, -0.284496736, 1.421413741,
                          -1.453152027, 1.061405429)
    p = 0.3275911
    sgn = jnp.where(x < 0.0, -1.0, 1.0)
    z = jnp.abs(x)
    t = 1.0 / (1.0 + p * z)
    poly = ((((a5 * t + a4) * t + a3) * t + a2) * t + a1) * t
    return sgn * (1.0 - poly * jnp.exp(-z * z))


def _gelu(x):
    # exact (erf-based) GELU, matching torch.nn.functional.gelu's default.
    return 0.5 * x * (1.0 + _erf(x * 0.7071067811865476))


def _layernorm_w(v, g_ref, b_ref):
    """LayerNorm over the W axis (axis=1) of (H, W, C); affine indexed by w (W == dim)."""
    mean = jnp.mean(v, axis=1, keepdims=True)
    ex2 = jnp.mean(v * v, axis=1, keepdims=True)
    var = jnp.maximum(ex2 - mean * mean, 0.0)           # one-pass variance
    xhat = (v - mean) * lax.rsqrt(var + LN_EPS)
    return xhat * g_ref[...][None, :, :] + b_ref[...][None, :, :]


def _pw_conv(v, w_ref, b_ref):
    """1x1 conv as a channel matmul; bf16 MXU inputs, f32 accumulation."""
    Hh, Ww, Cin = v.shape
    Cout = w_ref.shape[1]
    y = jnp.dot(v.reshape(Hh * Ww, Cin).astype(jnp.bfloat16), w_ref[...],
                preferred_element_type=jnp.float32)
    return (y + b_ref[0][None, :]).reshape(Hh, Ww, Cout)


def _zero_halo(pad_ref, r):
    """Zero the r-wide border of an (H+2r, W+2r, C) halo scratch buffer."""
    Hp, Wp, Cc = pad_ref.shape
    zrow = jnp.zeros((r, Wp, Cc), jnp.float32)
    zcol = jnp.zeros((Hp, r, Cc), jnp.float32)
    pad_ref[0:r, :, :] = zrow
    pad_ref[Hp - r:Hp, :, :] = zrow
    pad_ref[:, 0:r, :] = zcol
    pad_ref[:, Wp - r:Wp, :] = zcol


def _dwconv(v, k_ref, b_ref, pad_ref, r):
    """(2r+1)x(2r+1) depthwise conv, stride 1, zero padding r, via a halo scratch
    buffer (no concatenate-based padding). k_ref is (ksz*ksz, C), row-major taps."""
    Hh, Ww, Cc = v.shape
    ksz = 2 * r + 1
    pad_ref[r:Hh + r, r:Ww + r, :] = v                  # borders stay zero
    acc = jnp.zeros((Hh, Ww, Cc), jnp.float32)
    for dh in range(ksz):
        for dw in range(ksz):
            tap = dh * ksz + dw
            acc = acc + pad_ref[dh:dh + Hh, dw:dw + Ww, :] * k_ref[tap, :][None, None, :]
    return acc + b_ref[0][None, None, :]


def _global_mean(v):
    """Mean over (H, W) of an (H, W, C) value -> (1, 1, C)."""
    return jnp.mean(jnp.mean(v, axis=0, keepdims=True), axis=1, keepdims=True)


# --------------------------------------------------------------------------- #
# fused ConvFormerBlock kernel
# --------------------------------------------------------------------------- #

def _convformer_kernel(
    x_ref,
    # ChannelAttention
    ca_lng_ref, ca_lnb_ref, ca_w1_ref, ca_b1_ref, ca_k2_ref, ca_b2_ref,
    ca_wsca_ref, ca_bsca_ref, ca_w3_ref, ca_b3_ref,
    # ConvBlock (spatial attention)
    cb_kdw_ref, cb_bdw_ref, cb_lng_ref, cb_lnb_ref, cb_w1_ref, cb_b1_ref,
    grn_g_ref, grn_b_ref, cb_w2_ref, cb_b2_ref,
    # FeedForward
    ff_lng_ref, ff_lnb_ref, ff_w1_ref, ff_b1_ref, ff_k2_ref, ff_b2_ref,
    ff_w3_ref, ff_b3_ref,
    # output
    o_ref,
    # scratch
    cur_ref, pad_ca_ref, pad_cb_ref, pad_ff_ref,
):
    # Halo borders are re-zeroed every grid step (NOT only at program_id == 0): the
    # batch axis is "parallel", so on a 2-TC chip each core only sees a slice of the
    # grid and its per-core scratch would otherwise stay uninitialized.
    _zero_halo(pad_ca_ref, 1)
    _zero_halo(pad_cb_ref, 3)
    _zero_halo(pad_ff_ref, 1)

    # Resident activation; re-read from VMEM right before each residual add.
    cur_ref[...] = x_ref[0].astype(jnp.float32)

    # ---------------- ChannelAttention ----------------
    xn = _layernorm_w(cur_ref[...], ca_lng_ref, ca_lnb_ref)
    t = _pw_conv(xn, ca_w1_ref, ca_b1_ref)                # (H, W, 2*hid): fused halves
    u = _dwconv(t, ca_k2_ref, ca_b2_ref, pad_ca_ref, 1)   # one dw-conv over 2*hid
    hid = u.shape[-1] // 2
    g = u[:, :, :hid] * u[:, :, hid:]                     # SimpleGate
    pooled = _global_mean(g)                              # (1, 1, hid)
    # sca 1x1 conv on the pooled vector: VPU broadcast-multiply + lane reduce (no MXU).
    s = jnp.sum(ca_wsca_ref[...] * pooled[0], axis=1) + ca_bsca_ref[0]   # (hid,)
    g = g * s[None, None, :]
    delta = _pw_conv(g, ca_w3_ref, ca_b3_ref)
    cur_ref[...] = cur_ref[...] + delta                   # residual

    # ---------------- ConvBlock (spatial_attn) ----------------
    v = _dwconv(cur_ref[...], cb_kdw_ref, cb_bdw_ref, pad_cb_ref, 3)     # 7x7 dw
    v = _layernorm_w(v, cb_lng_ref, cb_lnb_ref)
    v = _pw_conv(v, cb_w1_ref, cb_b1_ref)                 # (H, W, hid_cb)
    # GRN (global response normalization)
    sumsq = jnp.sum(jnp.sum(v * v, axis=0, keepdims=True), axis=1, keepdims=True)
    gx = jnp.sqrt(sumsq)                                  # (1, 1, hid_cb)
    gmean = jnp.mean(gx, axis=2, keepdims=True)           # (1, 1, 1)
    nx = gx / (gmean + GRN_EPS)
    v = grn_g_ref[0][None, None, :] * (v * nx) + grn_b_ref[0][None, None, :] + v
    delta = _pw_conv(v, cb_w2_ref, cb_b2_ref)
    cur_ref[...] = cur_ref[...] + delta                   # residual

    # ---------------- FeedForward ----------------
    xn = _layernorm_w(cur_ref[...], ff_lng_ref, ff_lnb_ref)
    t = _pw_conv(xn, ff_w1_ref, ff_b1_ref)                # (H, W, 2*hid_ff)
    u = _dwconv(t, ff_k2_ref, ff_b2_ref, pad_ff_ref, 1)
    hidf = u.shape[-1] // 2
    g = _gelu(u[:, :, :hidf]) * u[:, :, hidf:]            # GeluGate (exact gelu)
    delta = _pw_conv(g, ff_w3_ref, ff_b3_ref)
    o_ref[0] = (cur_ref[...] + delta).astype(o_ref.dtype)


# --------------------------------------------------------------------------- #
# wrapper
# --------------------------------------------------------------------------- #

def convformer_block_pallas(x_nchw, params):
    """ConvFormerBlock forward.  x_nchw: (N, C, H, W) with W == C == dim (see note)."""
    N, C, H, W = x_nchw.shape
    dim = C
    assert W == dim, "nn.LayerNorm(dim) applied to NCHW requires W == dim"

    pca, pcb, pff = params["ca"], params["cb"], params["ffn"]
    hid_ca = pca["conv3_w"].shape[1]
    hid_ff = pff["conv3_w"].shape[1]

    x = jnp.transpose(x_nchw, (0, 2, 3, 1))               # NHWC: channels on lanes

    f32 = jnp.float32

    def pw_w(w):   # (out, in, 1, 1) -> (in, out), stored bf16 for the MXU
        return w[:, :, 0, 0].T.astype(jnp.bfloat16)

    def vec(b):    # (n,) -> (1, n) f32
        return b.reshape(1, -1).astype(f32)

    def dw_k(w):   # (C, 1, k, k) -> (k*k, C) f32, row-major taps
        c, _, kk, _ = w.shape
        return jnp.transpose(w[:, 0], (1, 2, 0)).reshape(kk * kk, c).astype(f32)

    def ln_p(g):   # (dim,) -> (dim, 1) f32 (sublane-oriented for the W-axis norm)
        return g.reshape(-1, 1).astype(f32)

    operands = (
        # ChannelAttention
        ln_p(pca["ln_gamma"]), ln_p(pca["ln_beta"]),
        pw_w(pca["conv1_w"]), vec(pca["conv1_b"]),
        dw_k(pca["conv2_w"]), vec(pca["conv2_b"]),
        pca["sca_w"][:, :, 0, 0].astype(f32), vec(pca["sca_b"]),
        pw_w(pca["conv3_w"]), vec(pca["conv3_b"]),
        # ConvBlock
        dw_k(pcb["dw_w"]), vec(pcb["dw_b"]),
        ln_p(pcb["ln_gamma"]), ln_p(pcb["ln_beta"]),
        pw_w(pcb["pw1_w"]), vec(pcb["pw1_b"]),
        pcb["grn_gamma"].reshape(1, -1).astype(f32),
        pcb["grn_beta"].reshape(1, -1).astype(f32),
        pw_w(pcb["pw2_w"]), vec(pcb["pw2_b"]),
        # FeedForward
        ln_p(pff["ln_gamma"]), ln_p(pff["ln_beta"]),
        pw_w(pff["conv1_w"]), vec(pff["conv1_b"]),
        dw_k(pff["conv2_w"]), vec(pff["conv2_b"]),
        pw_w(pff["conv3_w"]), vec(pff["conv3_b"]),
    )

    def full_spec(a):
        return pl.BlockSpec(a.shape, lambda n, _nd=a.ndim: (0,) * _nd)

    # TODO(synk): for large images, tile H (with a 1/3-row halo) and restructure the
    # sca/GRN global pools as a cross-tile accumulate-then-apply pass, plus a second
    # "parallel" grid axis so both v7x TensorCores stay busy when N is small.
    out = pl.pallas_call(
        _convformer_kernel,
        out_shape=jax.ShapeDtypeStruct((N, H, W, C), x.dtype),
        grid_spec=pltpu.PrefetchScalarGridSpec(
            num_scalar_prefetch=0,
            grid=(N,),
            in_specs=[pl.BlockSpec((1, H, W, C), lambda n: (n, 0, 0, 0))]
                     + [full_spec(a) for a in operands],
            out_specs=pl.BlockSpec((1, H, W, C), lambda n: (n, 0, 0, 0)),
            scratch_shapes=[
                pltpu.VMEM((H, W, C), jnp.float32),                    # resident activation
                pltpu.VMEM((H + 2, W + 2, 2 * hid_ca), jnp.float32),   # 3x3 halo (CA)
                pltpu.VMEM((H + 6, W + 6, C), jnp.float32),            # 7x7 halo (ConvBlock)
                pltpu.VMEM((H + 2, W + 2, 2 * hid_ff), jnp.float32),   # 3x3 halo (FFN)
            ],
        ),
        compiler_params=pltpu.CompilerParams(
            dimension_semantics=("parallel",),
            # Explicit limit: ample for the <1 MiB working set + double-buffered I/O
            # blocks, and safely below v7x's 64 MiB physical VMEM.
            vmem_limit_bytes=48 * 1024 * 1024,
        ),
    )(x, *operands)

    return jnp.transpose(out, (0, 3, 1, 2))               # back to NCHW


# --------------------------------------------------------------------------- #
# parameters + pure-JAX reference (PyTorch layout / NCHW semantics)
# --------------------------------------------------------------------------- #

def init_params(key, dim, mlp_ratio=4.0):
    hid_ca = dim                 # ChannelAttention: channel_expansion_ratio = 1
    hid_cb = 2 * dim             # ConvBlock: expansion_factor = 2
    hid_ff = int(dim * mlp_ratio)
    keys = iter(jax.random.split(key, 32))
    s = 0.1

    def nrm(shape):
        return s * jax.random.normal(next(keys), shape, jnp.float32)

    ca = {
        "ln_gamma": 1.0 + nrm((dim,)), "ln_beta": nrm((dim,)),
        "conv1_w": nrm((2 * hid_ca, dim, 1, 1)), "conv1_b": nrm((2 * hid_ca,)),
        "conv2_w": nrm((2 * hid_ca, 1, 3, 3)), "conv2_b": nrm((2 * hid_ca,)),
        "sca_w": nrm((hid_ca, hid_ca, 1, 1)), "sca_b": nrm((hid_ca,)),
        "conv3_w": nrm((dim, hid_ca, 1, 1)), "conv3_b": nrm((dim,)),
    }
    cb = {
        "dw_w": nrm((dim, 1, 7, 7)), "dw_b": nrm((dim,)),
        "ln_gamma": 1.0 + nrm((dim,)), "ln_beta": nrm((dim,)),
        "pw1_w": nrm((hid_cb, dim, 1, 1)), "pw1_b": nrm((hid_cb,)),
        # PyTorch initializes the GRN affine to zeros; use random values here so the
        # GRN path is actually exercised by the check.
        "grn_gamma": nrm((1, hid_cb, 1, 1)), "grn_beta": nrm((1, hid_cb, 1, 1)),
        "pw2_w": nrm((dim, hid_cb, 1, 1)), "pw2_b": nrm((dim,)),
    }
    ffn = {
        "ln_gamma": 1.0 + nrm((dim,)), "ln_beta": nrm((dim,)),
        "conv1_w": nrm((2 * hid_ff, dim, 1, 1)), "conv1_b": nrm((2 * hid_ff,)),
        "conv2_w": nrm((2 * hid_ff, 1, 3, 3)), "conv2_b": nrm((2 * hid_ff,)),
        "conv3_w": nrm((dim, hid_ff, 1, 1)), "conv3_b": nrm((dim,)),
    }
    return {"ca": ca, "cb": cb, "ffn": ffn}


def _layernorm_ref(x, gamma, beta):
    mean = x.mean(-1, keepdims=True)
    var = ((x - mean) ** 2).mean(-1, keepdims=True)
    return (x - mean) / jnp.sqrt(var + LN_EPS) * gamma + beta


def _conv1x1_ref(x, w, b):
    return jnp.einsum("nchw,oc->nohw", x, w[:, :, 0, 0]) + b[None, :, None, None]


def _dwconv_ref(x, w, b, pad):
    n, c, h, wid = x.shape
    k = w.shape[-1]
    xp = jnp.pad(x, ((0, 0), (0, 0), (pad, pad), (pad, pad)))
    y = jnp.zeros_like(x)
    for dh in range(k):
        for dw in range(k):
            y = y + xp[:, :, dh:dh + h, dw:dw + wid] * w[:, 0, dh, dw][None, :, None, None]
    return y + b[None, :, None, None]


def _channel_attention_ref(x, p):
    inp = x
    x = _layernorm_ref(x, p["ln_gamma"], p["ln_beta"])
    x = _conv1x1_ref(x, p["conv1_w"], p["conv1_b"])
    x = _dwconv_ref(x, p["conv2_w"], p["conv2_b"], pad=1)
    hid = x.shape[1] // 2
    x = x[:, :hid] * x[:, hid:]                           # SimpleGate
    pooled = x.mean(axis=(2, 3), keepdims=True)
    s = _conv1x1_ref(pooled, p["sca_w"], p["sca_b"])
    x = x * s
    x = _conv1x1_ref(x, p["conv3_w"], p["conv3_b"])
    return inp + x


def _conv_block_ref(x, p):
    inp = x
    x = _dwconv_ref(x, p["dw_w"], p["dw_b"], pad=3)
    x = _layernorm_ref(x, p["ln_gamma"], p["ln_beta"])
    x = _conv1x1_ref(x, p["pw1_w"], p["pw1_b"])
    gx = jnp.sqrt(jnp.sum(x * x, axis=(2, 3), keepdims=True))
    nx = gx / (gx.mean(axis=1, keepdims=True) + GRN_EPS)
    x = p["grn_gamma"] * (x * nx) + p["grn_beta"] + x
    x = _conv1x1_ref(x, p["pw2_w"], p["pw2_b"])
    return inp + x


def _feed_forward_ref(x, p):
    inp = x
    x = _layernorm_ref(x, p["ln_gamma"], p["ln_beta"])
    x = _conv1x1_ref(x, p["conv1_w"], p["conv1_b"])
    x = _dwconv_ref(x, p["conv2_w"], p["conv2_b"], pad=1)
    hid = x.shape[1] // 2
    x = jax.nn.gelu(x[:, :hid], approximate=False) * x[:, hid:]   # GeluGate (exact)
    x = _conv1x1_ref(x, p["conv3_w"], p["conv3_b"])
    return inp + x


def convformer_block_ref(x_nchw, params):
    x = x_nchw.astype(jnp.float32)
    x = _channel_attention_ref(x, params["ca"])
    x = _conv_block_ref(x, params["cb"])
    x = _feed_forward_ref(x, params["ffn"])
    return x


# --------------------------------------------------------------------------- #
# demo / self-check
# --------------------------------------------------------------------------- #

if __name__ == "__main__":
    dim = 16
    N, H, W = 2, 8, dim          # LayerNorm(dim) on NCHW requires W == dim
    key = jax.random.PRNGKey(0)
    kx, kp = jax.random.split(key)
    x = jax.random.normal(kx, (N, dim, H, W), jnp.float32)   # NCHW, C == dim
    params = init_params(kp, dim, mlp_ratio=4.0)

    out = convformer_block_pallas(x, params)
    out = jax.block_until_ready(out)
    ref = convformer_block_ref(x, params)

    assert out.shape == x.shape
    # bf16 MXU inputs (f32 accumulation) -> compare against the pure-f32 reference
    # with a correspondingly relaxed tolerance.
    err = float(jnp.max(jnp.abs(out - ref)))
    if not jnp.allclose(out, ref, rtol=2e-2, atol=2e-2):
        raise AssertionError(f"mismatch: max abs err {err}")
    print("KERNEL_OK")
</pallas_src>

<mosaic_0001>
module attributes {stable_mosaic.version = 11 : i64} {
  func.func @_convformer_kernel(%arg0: i32, %arg1: memref<1x8x16x16xf32, #tpu.memory_space<vmem>>, %arg2: memref<16x1xf32, #tpu.memory_space<vmem>>, %arg3: memref<16x1xf32, #tpu.memory_space<vmem>>, %arg4: memref<16x32xbf16, #tpu.memory_space<vmem>>, %arg5: memref<1x32xf32, #tpu.memory_space<vmem>>, %arg6: memref<9x32xf32, #tpu.memory_space<vmem>>, %arg7: memref<1x32xf32, #tpu.memory_space<vmem>>, %arg8: memref<16x16xf32, #tpu.memory_space<vmem>>, %arg9: memref<1x16xf32, #tpu.memory_space<vmem>>, %arg10: memref<16x16xbf16, #tpu.memory_space<vmem>>, %arg11: memref<1x16xf32, #tpu.memory_space<vmem>>, %arg12: memref<49x16xf32, #tpu.memory_space<vmem>>, %arg13: memref<1x16xf32, #tpu.memory_space<vmem>>, %arg14: memref<16x1xf32, #tpu.memory_space<vmem>>, %arg15: memref<16x1xf32, #tpu.memory_space<vmem>>, %arg16: memref<16x32xbf16, #tpu.memory_space<vmem>>, %arg17: memref<1x32xf32, #tpu.memory_space<vmem>>, %arg18: memref<1x32xf32, #tpu.memory_space<vmem>>, %arg19: memref<1x32xf32, #tpu.memory_space<vmem>>, %arg20: memref<32x16xbf16, #tpu.memory_space<vmem>>, %arg21: memref<1x16xf32, #tpu.memory_space<vmem>>, %arg22: memref<16x1xf32, #tpu.memory_space<vmem>>, %arg23: memref<16x1xf32, #tpu.memory_space<vmem>>, %arg24: memref<16x128xbf16, #tpu.memory_space<vmem>>, %arg25: memref<1x128xf32, #tpu.memory_space<vmem>>, %arg26: memref<9x128xf32, #tpu.memory_space<vmem>>, %arg27: memref<1x128xf32, #tpu.memory_space<vmem>>, %arg28: memref<64x16xbf16, #tpu.memory_space<vmem>>, %arg29: memref<1x16xf32, #tpu.memory_space<vmem>>, %arg30: memref<1x8x16x16xf32, #tpu.memory_space<vmem>>, %arg31: memref<8x16x16xf32, #tpu.memory_space<vmem>>, %arg32: memref<10x18x32xf32, #tpu.memory_space<vmem>>, %arg33: memref<14x22x16xf32, #tpu.memory_space<vmem>>, %arg34: memref<10x18x128xf32, #tpu.memory_space<vmem>>) attributes {dimension_semantics = [#tpu.dimension_semantics<parallel>], iteration_bounds = array<i64: 2>, scalar_prefetch = 0 : i64, scratch_operands = 4 : i64, tpu.core_type = #tpu.core_type<tc>, window_params = [{transform_indices = @transform_0, window_bounds = array<i64: 1, 8, 16, 16>}, {pipeline_mode = #tpu.pipeline_mode<synchronous>, transform_indices = @transform_1, window_bounds = array<i64: 16, 1>}, {pipeline_mode = #tpu.pipeline_mode<synchronous>, transform_indices = @transform_2, window_bounds = array<i64: 16, 1>}, {pipeline_mode = #tpu.pipeline_mode<synchronous>, transform_indices = @transform_3, window_bounds = array<i64: 16, 32>}, {pipeline_mode = #tpu.pipeline_mode<synchronous>, transform_indices = @transform_4, window_bounds = array<i64: 1, 32>}, {pipeline_mode = #tpu.pipeline_mode<synchronous>, transform_indices = @transform_5, window_bounds = array<i64: 9, 32>}, {pipeline_mode = #tpu.pipeline_mode<synchronous>, transform_indices = @transform_6, window_bounds = array<i64: 1, 32>}, {pipeline_mode = #tpu.pipeline_mode<synchronous>, transform_indices = @transform_7, window_bounds = array<i64: 16, 16>}, {pipeline_mode = #tpu.pipeline_mode<synchronous>, transform_indices = @transform_8, window_bounds = array<i64: 1, 16>}, {pipeline_mode = #tpu.pipeline_mode<synchronous>, transform_indices = @transform_9, window_bounds = array<i64: 16, 16>}, {pipeline_mode = #tpu.pipeline_mode<synchronous>, transform_indices = @transform_10, window_bounds = array<i64: 1, 16>}, {pipeline_mode = #tpu.pipeline_mode<synchronous>, transform_indices = @transform_11, window_bounds = array<i64: 49, 16>}, {pipeline_mode = #tpu.pipeline_mode<synchronous>, transform_indices = @transform_12, window_bounds = array<i64: 1, 16>}, {pipeline_mode = #tpu.pipeline_mode<synchronous>, transform_indices = @transform_13, window_bounds = array<i64: 16, 1>}, {pipeline_mode = #tpu.pipeline_mode<synchronous>, transform_indices = @transform_14, window_bounds = array<i64: 16, 1>}, {pipeline_mode = #tpu.pipeline_mode<synchronous>, transform_indices = @transform_15, window_bounds = array<i64: 16, 32>}, {pipeline_mode = #tpu.pipeline_mode<synchronous>, transform_indices = @transform_16, window_bounds = array<i64: 1, 32>}, {pipeline_mode = #tpu.pipeline_mode<synchronous>, transform_indices = @transform_17, window_bounds = array<i64: 1, 32>}, {pipeline_mode = #tpu.pipeline_mode<synchronous>, transform_indices = @transform_18, window_bounds = array<i64: 1, 32>}, {pipeline_mode = #tpu.pipeline_mode<synchronous>, transform_indices = @transform_19, window_bounds = array<i64: 32, 16>}, {pipeline_mode = #tpu.pipeline_mode<synchronous>, transform_indices = @transform_20, window_bounds = array<i64: 1, 16>}, {pipeline_mode = #tpu.pipeline_mode<synchronous>, transform_indices = @transform_21, window_bounds = array<i64: 16, 1>}, {pipeline_mode = #tpu.pipeline_mode<synchronous>, transform_indices = @transform_22, window_bounds = array<i64: 16, 1>}, {pipeline_mode = #tpu.pipeline_mode<synchronous>, transform_indices = @transform_23, window_bounds = array<i64: 16, 128>}, {pipeline_mode = #tpu.pipeline_mode<synchronous>, transform_indices = @transform_24, window_bounds = array<i64: 1, 128>}, {pipeline_mode = #tpu.pipeline_mode<synchronous>, transform_indices = @transform_25, window_bounds = array<i64: 9, 128>}, {pipeline_mode = #tpu.pipeline_mode<synchronous>, transform_indices = @transform_26, window_bounds = array<i64: 1, 128>}, {pipeline_mode = #tpu.pipeline_mode<synchronous>, transform_indices = @transform_27, window_bounds = array<i64: 64, 16>}, {pipeline_mode = #tpu.pipeline_mode<synchronous>, transform_indices = @transform_28, window_bounds = array<i64: 1, 16>}, {transform_indices = @transform_29, window_bounds = array<i64: 1, 8, 16, 16>}]} {
    %cst = arith.constant 0.000000e+00 : f32
    %0 = vector.broadcast %cst : f32 to vector<1x18x32xf32>
    %cst_0 = arith.constant 0.000000e+00 : f32
    %1 = vector.broadcast %cst_0 : f32 to vector<10x1x32xf32>
    %c0 = arith.constant 0 : index
    %c0_1 = arith.constant 0 : index
    %c0_2 = arith.constant 0 : index
    %2 = vector.load %arg32[%c0, %c0_1, %c0_2] : memref<10x18x32xf32, #tpu.memory_space<vmem>>, vector<1x18x32xf32>
    tpu.vector_store %arg32[%c0, %c0_1, %c0_2], %0 {strides = array<i32>} : memref<10x18x32xf32, #tpu.memory_space<vmem>>, vector<1x18x32xf32>,
    %c9 = arith.constant 9 : index
    %c0_3 = arith.constant 0 : index
    %c0_4 = arith.constant 0 : index
    %3 = vector.load %arg32[%c9, %c0_3, %c0_4] : memref<10x18x32xf32, #tpu.memory_space<vmem>>, vector<1x18x32xf32>
    tpu.vector_store %arg32[%c9, %c0_3, %c0_4], %0 {strides = array<i32>} : memref<10x18x32xf32, #tpu.memory_space<vmem>>, vector<1x18x32xf32>,
    %c0_5 = arith.constant 0 : index
    %c0_6 = arith.constant 0 : index
    %c0_7 = arith.constant 0 : index
    %4 = vector.load %arg32[%c0_5, %c0_6, %c0_7] : memref<10x18x32xf32, #tpu.memory_space<vmem>>, vector<10x1x32xf32>
    tpu.vector_store %arg32[%c0_5, %c0_6, %c0_7], %1 {strides = array<i32>} : memref<10x18x32xf32, #tpu.memory_space<vmem>>, vector<10x1x32xf32>,
    %c0_8 = arith.constant 0 : index
    %c17 = arith.constant 17 : index
    %c0_9 = arith.constant 0 : index
    %5 = vector.load %arg32[%c0_8, %c17, %c0_9] : memref<10x18x32xf32, #tpu.memory_space<vmem>>, vector<10x1x32xf32>
    tpu.vector_store %arg32[%c0_8, %c17, %c0_9], %1 {strides = array<i32>} : memref<10x18x32xf32, #tpu.memory_space<vmem>>, vector<10x1x32xf32>,
    %cst_10 = arith.constant 0.000000e+00 : f32
    %6 = vector.broadcast %cst_10 : f32 to vector<3x22x16xf32>
    %cst_11 = arith.constant 0.000000e+00 : f32
    %7 = vector.broadcast %cst_11 : f32 to vector<14x3x16xf32>
    %c0_12 = arith.constant 0 : index
    %c0_13 = arith.constant 0 : index
    %c0_14 = arith.constant 0 : index
    %8 = vector.load %arg33[%c0_12, %c0_13, %c0_14] : memref<14x22x16xf32, #tpu.memory_space<vmem>>, vector<3x22x16xf32>
    tpu.vector_store %arg33[%c0_12, %c0_13, %c0_14], %6 {strides = array<i32>} : memref<14x22x16xf32, #tpu.memory_space<vmem>>, vector<3x22x16xf32>,
    %c11 = arith.constant 11 : index
    %c0_15 = arith.constant 0 : index
    %c0_16 = arith.constant 0 : index
    %9 = vector.load %arg33[%c11, %c0_15, %c0_16] : memref<14x22x16xf32, #tpu.memory_space<vmem>>, vector<3x22x16xf32>
    tpu.vector_store %arg33[%c11, %c0_15, %c0_16], %6 {strides = array<i32>} : memref<14x22x16xf32, #tpu.memory_space<vmem>>, vector<3x22x16xf32>,
    %c0_17 = arith.constant 0 : index
    %c0_18 = arith.constant 0 : index
    %c0_19 = arith.constant 0 : index
    %10 = vector.load %arg33[%c0_17, %c0_18, %c0_19] : memref<14x22x16xf32, #tpu.memory_space<vmem>>, vector<14x3x16xf32>
    tpu.vector_store %arg33[%c0_17, %c0_18, %c0_19], %7 {strides = array<i32>} : memref<14x22x16xf32, #tpu.memory_space<vmem>>, vector<14x3x16xf32>,
    %c0_20 = arith.constant 0 : index
    %c19 = arith.constant 19 : index
    %c0_21 = arith.constant 0 : index
    %11 = vector.load %arg33[%c0_20, %c19, %c0_21] : memref<14x22x16xf32, #tpu.memory_space<vmem>>, vector<14x3x16xf32>
    tpu.vector_store %arg33[%c0_20, %c19, %c0_21], %7 {strides = array<i32>} : memref<14x22x16xf32, #tpu.memory_space<vmem>>, vector<14x3x16xf32>,
    %cst_22 = arith.constant 0.000000e+00 : f32
    %12 = vector.broadcast %cst_22 : f32 to vector<1x18x128xf32>
    %cst_23 = arith.constant 0.000000e+00 : f32
    %13 = vector.broadcast %cst_23 : f32 to vector<10x1x128xf32>
    %c0_24 = arith.constant 0 : index
    %c0_25 = arith.constant 0 : index
    %c0_26 = arith.constant 0 : index
    %14 = vector.load %arg34[%c0_24, %c0_25, %c0_26] : memref<10x18x128xf32, #tpu.memory_space<vmem>>, vector<1x18x128xf32>
    tpu.vector_store %arg34[%c0_24, %c0_25, %c0_26], %12 {strides = array<i32>} : memref<10x18x128xf32, #tpu.memory_space<vmem>>, vector<1x18x128xf32>,
    %c9_27 = arith.constant 9 : index
    %c0_28 = arith.constant 0 : index
    %c0_29 = arith.constant 0 : index
    %15 = vector.load %arg34[%c9_27, %c0_28, %c0_29] : memref<10x18x128xf32, #tpu.memory_space<vmem>>, vector<1x18x128xf32>
    tpu.vector_store %arg34[%c9_27, %c0_28, %c0_29], %12 {strides = array<i32>} : memref<10x18x128xf32, #tpu.memory_space<vmem>>, vector<1x18x128xf32>,
    %c0_30 = arith.constant 0 : index
    %c0_31 = arith.constant 0 : index
    %c0_32 = arith.constant 0 : index
    %16 = vector.load %arg34[%c0_30, %c0_31, %c0_32] : memref<10x18x128xf32, #tpu.memory_space<vmem>>, vector<10x1x128xf32>
    tpu.vector_store %arg34[%c0_30, %c0_31, %c0_32], %13 {strides = array<i32>} : memref<10x18x128xf32, #tpu.memory_space<vmem>>, vector<10x1x128xf32>,
    %c0_33 = arith.constant 0 : index
    %c17_34 = arith.constant 17 : index
    %c0_35 = arith.constant 0 : index
    %17 = vector.load %arg34[%c0_33, %c17_34, %c0_35] : memref<10x18x128xf32, #tpu.memory_space<vmem>>, vector<10x1x128xf32>
    tpu.vector_store %arg34[%c0_33, %c17_34, %c0_35], %13 {strides = array<i32>} : memref<10x18x128xf32, #tpu.memory_space<vmem>>, vector<10x1x128xf32>,
    %c0_36 = arith.constant 0 : index
    %c0_37 = arith.constant 0 : index
    %c0_38 = arith.constant 0 : index
    %c0_39 = arith.constant 0 : index
    %18 = vector.load %arg1[%c0_36, %c0_37, %c0_38, %c0_39] : memref<1x8x16x16xf32, #tpu.memory_space<vmem>>, vector<1x8x16x16xf32>
    %19 = vector.shape_cast %18 : vector<1x8x16x16xf32> to vector<8x16x16xf32>
    %c0_40 = arith.constant 0 : index
    %c0_41 = arith.constant 0 : index
    %c0_42 = arith.constant 0 : index
    %20 = vector.load %arg31[%c0_40, %c0_41, %c0_42] : memref<8x16x16xf32, #tpu.memory_space<vmem>>, vector<8x16x16xf32>
    tpu.vector_store %arg31[%c0_40, %c0_41, %c0_42], %19 {strides = array<i32>} : memref<8x16x16xf32, #tpu.memory_space<vmem>>, vector<8x16x16xf32>,
    %c0_43 = arith.constant 0 : index
    %c0_44 = arith.constant 0 : index
    %c0_45 = arith.constant 0 : index
    %21 = vector.load %arg31[%c0_43, %c0_44, %c0_45] : memref<8x16x16xf32, #tpu.memory_space<vmem>>, vector<8x16x16xf32>
    %cst_46 = arith.constant dense<0.000000e+00> : vector<8x16xf32>
    %22 = vector.multi_reduction <add>, %21, %cst_46 [1] : vector<8x16x16xf32> to vector<8x16xf32>
    %23 = vector.shape_cast %22 : vector<8x16xf32> to vector<8x1x16xf32>
    %cst_47 = arith.constant 1.600000e+01 : f32
    %24 = vector.broadcast %cst_47 : f32 to vector<8x1x16xf32>
    %25 = arith.divf %23, %24 : vector<8x1x16xf32>
    %26 = arith.mulf %21, %21 : vector<8x16x16xf32>
    %cst_48 = arith.constant dense<0.000000e+00> : vector<8x16xf32>
    %27 = vector.multi_reduction <add>, %26, %cst_48 [1] : vector<8x16x16xf32> to vector<8x16xf32>
    %28 = vector.shape_cast %27 : vector<8x16xf32> to vector<8x1x16xf32>
    %cst_49 = arith.constant 1.600000e+01 : f32
    %29 = vector.broadcast %cst_49 : f32 to vector<8x1x16xf32>
    %30 = arith.divf %28, %29 : vector<8x1x16xf32>
    %31 = arith.mulf %25, %25 : vector<8x1x16xf32>
    %32 = arith.subf %30, %31 : vector<8x1x16xf32>
    %cst_50 = arith.constant 0.000000e+00 : f32
    %33 = vector.broadcast %cst_50 : f32 to vector<8x1x16xf32>
    %34 = arith.maximumf %32, %33 : vector<8x1x16xf32>
    %35 = vector.broadcast %25 : vector<8x1x16xf32> to vector<8x16x16xf32>
    %36 = arith.subf %21, %35 : vector<8x16x16xf32>
    %cst_51 = arith.constant 9.99999974E-6 : f32
    %37 = vector.broadcast %cst_51 : f32 to vector<8x1x16xf32>
    %38 = arith.addf %34, %37 : vector<8x1x16xf32>
    %39 = math.rsqrt %38 : vector<8x1x16xf32>
    %40 = vector.broadcast %39 : vector<8x1x16xf32> to vector<8x16x16xf32>
    %41 = arith.mulf %36, %40 : vector<8x16x16xf32>
    %c0_52 = arith.constant 0 : index
    %c0_53 = arith.constant 0 : index
    %42 = vector.load %arg2[%c0_52, %c0_53] : memref<16x1xf32, #tpu.memory_space<vmem>>, vector<16x1xf32>
    %43 = vector.shape_cast %42 : vector<16x1xf32> to vector<1x16x1xf32>
    %44 = vector.broadcast %43 : vector<1x16x1xf32> to vector<8x16x16xf32>
    %45 = arith.mulf %41, %44 : vector<8x16x16xf32>
    %c0_54 = arith.constant 0 : index
    %c0_55 = arith.constant 0 : index
    %46 = vector.load %arg3[%c0_54, %c0_55] : memref<16x1xf32, #tpu.memory_space<vmem>>, vector<16x1xf32>
    %47 = vector.shape_cast %46 : vector<16x1xf32> to vector<1x16x1xf32>
    %48 = vector.broadcast %47 : vector<1x16x1xf32> to vector<8x16x16xf32>
    %49 = arith.addf %45, %48 : vector<8x16x16xf32>
    %50 = vector.shape_cast %49 : vector<8x16x16xf32> to vector<128x16xf32>
    %51 = arith.truncf %50 : vector<128x16xf32> to vector<128x16xbf16>
    %c0_56 = arith.constant 0 : index
    %c0_57 = arith.constant 0 : index
    %52 = vector.load %arg4[%c0_56, %c0_57] : memref<16x32xbf16, #tpu.memory_space<vmem>>, vector<16x32xbf16>
    %cst_58 = arith.constant dense<0.000000e+00> : vector<128x32xf32>
    %53 = tpu.matmul %51, %52, %cst_58 {dimension_numbers = #tpu.dot_dimension_numbers<[1], [0], [0], [1], [0, 0, 1, 1], [], []>} : vector<128x16xbf16>, vector<16x32xbf16>, vector<128x32xf32> -> vector<128x32xf32>
    %c0_59 = arith.constant 0 : index
    %c0_60 = arith.constant 0 : index
    %54 = vector.load %arg5[%c0_59, %c0_60] : memref<1x32xf32, #tpu.memory_space<vmem>>, vector<1x32xf32>
    %55 = vector.shape_cast %54 : vector<1x32xf32> to vector<32xf32>
    %56 = vector.shape_cast %55 : vector<32xf32> to vector<1x32xf32>
    %57 = vector.broadcast %56 : vector<1x32xf32> to vector<128x32xf32>
    %58 = arith.addf %53, %57 : vector<128x32xf32>
    %59 = vector.shape_cast %58 : vector<128x32xf32> to vector<8x16x32xf32>
    %c1 = arith.constant 1 : index
    %c1_61 = arith.constant 1 : index
    %c0_62 = arith.constant 0 : index
    %60 = vector.load %arg32[%c1, %c1_61, %c0_62] : memref<10x18x32xf32, #tpu.memory_space<vmem>>, vector<8x16x32xf32>
    tpu.vector_store %arg32[%c1, %c1_61, %c0_62], %59 {strides = array<i32>} : memref<10x18x32xf32, #tpu.memory_space<vmem>>, vector<8x16x32xf32>,
    %cst_63 = arith.constant 0.000000e+00 : f32
    %61 = vector.broadcast %cst_63 : f32 to vector<8x16x32xf32>
    %c0_64 = arith.constant 0 : index
    %c0_65 = arith.constant 0 : index
    %c0_66 = arith.constant 0 : index
    %62 = vector.load %arg32[%c0_64, %c0_65, %c0_66] : memref<10x18x32xf32, #tpu.memory_space<vmem>>, vector<8x16x32xf32>
    %c0_67 = arith.constant 0 : index
    %c0_68 = arith.constant 0 : index
    %63 = vector.load %arg6[%c0_67, %c0_68] : memref<9x32xf32, #tpu.memory_space<vmem>>, vector<1x32xf32>
    %64 = vector.shape_cast %63 : vector<1x32xf32> to vector<32xf32>
    %65 = vector.shape_cast %64 : vector<32xf32> to vector<1x1x32xf32>
    %66 = vector.broadcast %65 : vector<1x1x32xf32> to vector<8x16x32xf32>
    %67 = arith.mulf %62, %66 : vector<8x16x32xf32>
    %68 = arith.addf %61, %67 : vector<8x16x32xf32>
    %c0_69 = arith.constant 0 : index
    %c1_70 = arith.constant 1 : index
    %c0_71 = arith.constant 0 : index
    %69 = vector.load %arg32[%c0_69, %c1_70, %c0_71] : memref<10x18x32xf32, #tpu.memory_space<vmem>>, vector<8x16x32xf32>
    %c1_72 = arith.constant 1 : index
    %c0_73 = arith.constant 0 : index
    %70 = vector.load %arg6[%c1_72, %c0_73] : memref<9x32xf32, #tpu.memory_space<vmem>>, vector<1x32xf32>
    %71 = vector.shape_cast %70 : vector<1x32xf32> to vector<32xf32>
    %72 = vector.shape_cast %71 : vector<32xf32> to vector<1x1x32xf32>
    %73 = vector.broadcast %72 : vector<1x1x32xf32> to vector<8x16x32xf32>
    %74 = arith.mulf %69, %73 : vector<8x16x32xf32>
    %75 = arith.addf %68, %74 : vector<8x16x32xf32>
    %c0_74 = arith.constant 0 : index
    %c2 = arith.constant 2 : index
    %c0_75 = arith.constant 0 : index
    %76 = vector.load %arg32[%c0_74, %c2, %c0_75] : memref<10x18x32xf32, #tpu.memory_space<vmem>>, vector<8x16x32xf32>
    %c2_76 = arith.constant 2 : index
    %c0_77 = arith.constant 0 : index
    %77 = vector.load %arg6[%c2_76, %c0_77] : memref<9x32xf32, #tpu.memory_space<vmem>>, vector<1x32xf32>
    %78 = vector.shape_cast %77 : vector<1x32xf32> to vector<32xf32>
    %79 = vector.shape_cast %78 : vector<32xf32> to vector<1x1x32xf32>
    %80 = vector.broadcast %79 : vector<1x1x32xf32> to vector<8x16x32xf32>
    %81 = arith.mulf %76, %80 : vector<8x16x32xf32>
    %82 = arith.addf %75, %81 : vector<8x16x32xf32>
    %c1_78 = arith.constant 1 : index
    %c0_79 = arith.constant 0 : index
    %c0_80 = arith.constant 0 : index
    %83 = vector.load %arg32[%c1_78, %c0_79, %c0_80] : memref<10x18x32xf32, #tpu.memory_space<vmem>>, vector<8x16x32xf32>
    %c3 = arith.constant 3 : index
    %c0_81 = arith.constant 0 : index
    %84 = vector.load %arg6[%c3, %c0_81] : memref<9x32xf32, #tpu.memory_space<vmem>>, vector<1x32xf32>
    %85 = vector.shape_cast %84 : vector<1x32xf32> to vector<32xf32>
    %86 = vector.shape_cast %85 : vector<32xf32> to vector<1x1x32xf32>
    %87 = vector.broadcast %86 : vector<1x1x32xf32> to vector<8x16x32xf32>
    %88 = arith.mulf %83, %87 : vector<8x16x32xf32>
    %89 = arith.addf %82, %88 : vector<8x16x32xf32>
    %c1_82 = arith.constant 1 : index
    %c1_83 = arith.constant 1 : index
    %c0_84 = arith.constant 0 : index
    %90 = vector.load %arg32[%c1_82, %c1_83, %c0_84] : memref<10x18x32xf32, #tpu.memory_space<vmem>>, vector<8x16x32xf32>
    %c4 = arith.constant 4 : index
    %c0_85 = arith.constant 0 : index
    %91 = vector.load %arg6[%c4, %c0_85] : memref<9x32xf32, #tpu.memory_space<vmem>>, vector<1x32xf32>
    %92 = vector.shape_cast %91 : vector<1x32xf32> to vector<32xf32>
    %93 = vector.shape_cast %92 : vector<32xf32> to vector<1x1x32xf32>
    %94 = vector.broadcast %93 : vector<1x1x32xf32> to vector<8x16x32xf32>
    %95 = arith.mulf %90, %94 : vector<8x16x32xf32>
    %96 = arith.addf %89, %95 : vector<8x16x32xf32>
    %c1_86 = arith.constant 1 : index
    %c2_87 = arith.constant 2 : index
    %c0_88 = arith.constant 0 : index
    %97 = vector.load %arg32[%c1_86, %c2_87, %c0_88] : memref<10x18x32xf32, #tpu.memory_space<vmem>>, vector<8x16x32xf32>
    %c5 = arith.constant 5 : index
    %c0_89 = arith.constant 0 : index
    %98 = vector.load %arg6[%c5, %c0_89] : memref<9x32xf32, #tpu.memory_space<vmem>>, vector<1x32xf32>
    %99 = vector.shape_cast %98 : vector<1x32xf32> to vector<32xf32>
    %100 = vector.shape_cast %99 : vector<32xf32> to vector<1x1x32xf32>
    %101 = vector.broadcast %100 : vector<1x1x32xf32> to vector<8x16x32xf32>
    %102 = arith.mulf %97, %101 : vector<8x16x32xf32>
    %103 = arith.addf %96, %102 : vector<8x16x32xf32>
    %c2_90 = arith.constant 2 : index
    %c0_91 = arith.constant 0 : index
    %c0_92 = arith.constant 0 : index
    %104 = vector.load %arg32[%c2_90, %c0_91, %c0_92] : memref<10x18x32xf32, #tpu.memory_space<vmem>>, vector<8x16x32xf32>
    %c6 = arith.constant 6 : index
    %c0_93 = arith.constant 0 : index
    %105 = vector.load %arg6[%c6, %c0_93] : memref<9x32xf32, #tpu.memory_space<vmem>>, vector<1x32xf32>
    %106 = vector.shape_cast %105 : vector<1x32xf32> to vector<32xf32>
    %107 = vector.shape_cast %106 : vector<32xf32> to vector<1x1x32xf32>
    %108 = vector.broadcast %107 : vector<1x1x32xf32> to vector<8x16x32xf32>
    %109 = arith.mulf %104, %108 : vector<8x16x32xf32>
    %110 = arith.addf %103, %109 : vector<8x16x32xf32>
    %c2_94 = arith.constant 2 : index
    %c1_95 = arith.constant 1 : index
    %c0_96 = arith.constant 0 : index
    %111 = vector.load %arg32[%c2_94, %c1_95, %c0_96] : memref<10x18x32xf32, #tpu.memory_space<vmem>>, vector<8x16x32xf32>
    %c7 = arith.constant 7 : index
    %c0_97 = arith.constant 0 : index
    %112 = vector.load %arg6[%c7, %c0_97] : memref<9x32xf32, #tpu.memory_space<vmem>>, vector<1x32xf32>
    %113 = vector.shape_cast %112 : vector<1x32xf32> to vector<32xf32>
    %114 = vector.shape_cast %113 : vector<32xf32> to vector<1x1x32xf32>
    %115 = vector.broadcast %114 : vector<1x1x32xf32> to vector<8x16x32xf32>
    %116 = arith.mulf %111, %115 : vector<8x16x32xf32>
    %117 = arith.addf %110, %116 : vector<8x16x32xf32>
    %c2_98 = arith.constant 2 : index
    %c2_99 = arith.constant 2 : index
    %c0_100 = arith.constant 0 : index
    %118 = vector.load %arg32[%c2_98, %c2_99, %c0_100] : memref<10x18x32xf32, #tpu.memory_space<vmem>>, vector<8x16x32xf32>
    %c8 = arith.constant 8 : index
    %c0_101 = arith.constant 0 : index
    %119 = vector.load %arg6[%c8, %c0_101] : memref<9x32xf32, #tpu.memory_space<vmem>>, vector<1x32xf32>
    %120 = vector.shape_cast %119 : vector<1x32xf32> to vector<32xf32>
    %121 = vector.shape_cast %120 : vector<32xf32> to vector<1x1x32xf32>
    %122 = vector.broadcast %121 : vector<1x1x32xf32> to vector<8x16x32xf32>
    %123 = arith.mulf %118, %122 : vector<8x16x32xf32>
    %124 = arith.addf %117, %123 : vector<8x16x32xf32>
    %c0_102 = arith.constant 0 : index
    %c0_103 = arith.constant 0 : index
    %125 = vector.load %arg7[%c0_102, %c0_103] : memref<1x32xf32, #tpu.memory_space<vmem>>, vector<1x32xf32>
    %126 = vector.shape_cast %125 : vector<1x32xf32> to vector<32xf32>
    %127 = vector.shape_cast %126 : vector<32xf32> to vector<1x1x32xf32>
    %128 = vector.broadcast %127 : vector<1x1x32xf32> to vector<8x16x32xf32>
    %129 = arith.addf %124, %128 : vector<8x16x32xf32>
    %130 = vector.extract_strided_slice %129 {offsets = [0, 0, 0], sizes = [8, 16, 16], strides = [1, 1, 1]} : vector<8x16x32xf32> to vector<8x16x16xf32>
    %131 = vector.extract_strided_slice %129 {offsets = [0, 0, 16], sizes = [8, 16, 16], strides = [1, 1, 1]} : vector<8x16x32xf32> to vector<8x16x16xf32>
    %132 = arith.mulf %130, %131 : vector<8x16x16xf32>
    %cst_104 = arith.constant dense<0.000000e+00> : vector<16x16xf32>
    %133 = vector.multi_reduction <add>, %132, %cst_104 [0] : vector<8x16x16xf32> to vector<16x16xf32>
    %134 = vector.shape_cast %133 : vector<16x16xf32> to vector<1x16x16xf32>
    %cst_105 = arith.constant 8.000000e+00 : f32
    %135 = vector.broadcast %cst_105 : f32 to vector<1x16x16xf32>
    %136 = arith.divf %134, %135 : vector<1x16x16xf32>
    %cst_106 = arith.constant dense<0.000000e+00> : vector<1x16xf32>
    %137 = vector.multi_reduction <add>, %136, %cst_106 [1] : vector<1x16x16xf32> to vector<1x16xf32>
    %138 = vector.shape_cast %137 : vector<1x16xf32> to vector<1x1x16xf32>
    %cst_107 = arith.constant 1.600000e+01 : f32
    %139 = vector.broadcast %cst_107 : f32 to vector<1x1x16xf32>
    %140 = arith.divf %138, %139 : vector<1x1x16xf32>
    %c0_108 = arith.constant 0 : index
    %c0_109 = arith.constant 0 : index
    %141 = vector.load %arg8[%c0_108, %c0_109] : memref<16x16xf32, #tpu.memory_space<vmem>>, vector<16x16xf32>
    %142 = vector.shape_cast %140 : vector<1x1x16xf32> to vector<1x16xf32>
    %143 = vector.broadcast %142 : vector<1x16xf32> to vector<16x16xf32>
    %144 = arith.mulf %141, %143 : vector<16x16xf32>
    %cst_110 = arith.constant dense<0.000000e+00> : vector<16xf32>
    %145 = vector.multi_reduction <add>, %144, %cst_110 [1] : vector<16x16xf32> to vector<16xf32>
    %c0_111 = arith.constant 0 : index
    %c0_112 = arith.constant 0 : index
    %146 = vector.load %arg9[%c0_111, %c0_112] : memref<1x16xf32, #tpu.memory_space<vmem>>, vector<1x16xf32>
    %147 = vector.shape_cast %146 : vector<1x16xf32> to vector<16xf32>
    %148 = arith.addf %145, %147 : vector<16xf32>
    %149 = vector.shape_cast %148 : vector<16xf32> to vector<1x1x16xf32>
    %150 = vector.broadcast %149 : vector<1x1x16xf32> to vector<8x16x16xf32>
    %151 = arith.mulf %132, %150 : vector<8x16x16xf32>
    %152 = vector.shape_cast %151 : vector<8x16x16xf32> to vector<128x16xf32>
    %153 = arith.truncf %152 : vector<128x16xf32> to vector<128x16xbf16>
    %c0_113 = arith.constant 0 : index
    %c0_114 = arith.constant 0 : index
    %154 = vector.load %arg10[%c0_113, %c0_114] : memref<16x16xbf16, #tpu.memory_space<vmem>>, vector<16x16xbf16>
    %cst_115 = arith.constant dense<0.000000e+00> : vector<128x16xf32>
    %155 = tpu.matmul %153, %154, %cst_115 {dimension_numbers = #tpu.dot_dimension_numbers<[1], [0], [0], [1], [0, 0, 1, 1], [], []>} : vector<128x16xbf16>, vector<16x16xbf16>, vector<128x16xf32> -> vector<128x16xf32>
    %c0_116 = arith.constant 0 : index
    %c0_117 = arith.constant 0 : index
    %156 = vector.load %arg11[%c0_116, %c0_117] : memref<1x16xf32, #tpu.memory_space<vmem>>, vector<1x16xf32>
    %157 = vector.shape_cast %156 : vector<1x16xf32> to vector<16xf32>
    %158 = vector.shape_cast %157 : vector<16xf32> to vector<1x16xf32>
    %159 = vector.broadcast %158 : vector<1x16xf32> to vector<128x16xf32>
    %160 = arith.addf %155, %159 : vector<128x16xf32>
    %161 = vector.shape_cast %160 : vector<128x16xf32> to vector<8x16x16xf32>
    %c0_118 = arith.constant 0 : index
    %c0_119 = arith.constant 0 : index
    %c0_120 = arith.constant 0 : index
    %162 = vector.load %arg31[%c0_118, %c0_119, %c0_120] : memref<8x16x16xf32, #tpu.memory_space<vmem>>, vector<8x16x16xf32>
    %163 = arith.addf %162, %161 : vector<8x16x16xf32>
    %c0_121 = arith.constant 0 : index
    %c0_122 = arith.constant 0 : index
    %c0_123 = arith.constant 0 : index
    %164 = vector.load %arg31[%c0_121, %c0_122, %c0_123] : memref<8x16x16xf32, #tpu.memory_space<vmem>>, vector<8x16x16xf32>
    tpu.vector_store %arg31[%c0_121, %c0_122, %c0_123], %163 {strides = array<i32>} : memref<8x16x16xf32, #tpu.memory_space<vmem>>, vector<8x16x16xf32>,
    %c0_124 = arith.constant 0 : index
    %c0_125 = arith.constant 0 : index
    %c0_126 = arith.constant 0 : index
    %165 = vector.load %arg31[%c0_124, %c0_125, %c0_126] : memref<8x16x16xf32, #tpu.memory_space<vmem>>, vector<8x16x16xf32>
    %c3_127 = arith.constant 3 : index
    %c3_128 = arith.constant 3 : index
    %c0_129 = arith.constant 0 : index
    %166 = vector.load %arg33[%c3_127, %c3_128, %c0_129] : memref<14x22x16xf32, #tpu.memory_space<vmem>>, vector<8x16x16xf32>
    tpu.vector_store %arg33[%c3_127, %c3_128, %c0_129], %165 {strides = array<i32>} : memref<14x22x16xf32, #tpu.memory_space<vmem>>, vector<8x16x16xf32>,
    %cst_130 = arith.constant 0.000000e+00 : f32
    %167 = vector.broadcast %cst_130 : f32 to vector<8x16x16xf32>
    %c0_131 = arith.constant 0 : index
    %c0_132 = arith.constant 0 : index
    %c0_133 = arith.constant 0 : index
    %168 = vector.load %arg33[%c0_131, %c0_132, %c0_133] : memref<14x22x16xf32, #tpu.memory_space<vmem>>, vector<8x16x16xf32>
    %c0_134 = arith.constant 0 : index
    %c0_135 = arith.constant 0 : index
    %169 = vector.load %arg12[%c0_134, %c0_135] : memref<49x16xf32, #tpu.memory_space<vmem>>, vector<1x16xf32>
    %170 = vector.shape_cast %169 : vector<1x16xf32> to vector<16xf32>
    %171 = vector.shape_cast %170 : vector<16xf32> to vector<1x1x16xf32>
    %172 = vector.broadcast %171 : vector<1x1x16xf32> to vector<8x16x16xf32>
    %173 = arith.mulf %168, %172 : vector<8x16x16xf32>
    %174 = arith.addf %167, %173 : vector<8x16x16xf32>
    %c0_136 = arith.constant 0 : index
    %c1_137 = arith.constant 1 : index
    %c0_138 = arith.constant 0 : index
    %175 = vector.load %arg33[%c0_136, %c1_137, %c0_138] : memref<14x22x16xf32, #tpu.memory_space<vmem>>, vector<8x16x16xf32>
    %c1_139 = arith.constant 1 : index
    %c0_140 = arith.constant 0 : index
    %176 = vector.load %arg12[%c1_139, %c0_140] : memref<49x16xf32, #tpu.memory_space<vmem>>, vector<1x16xf32>
    %177 = vector.shape_cast %176 : vector<1x16xf32> to vector<16xf32>
    %178 = vector.shape_cast %177 : vector<16xf32> to vector<1x1x16xf32>
    %179 = vector.broadcast %178 : vector<1x1x16xf32> to vector<8x16x16xf32>
    %180 = arith.mulf %175, %179 : vector<8x16x16xf32>
    %181 = arith.addf %174, %180 : vector<8x16x16xf32>
    %c0_141 = arith.constant 0 : index
    %c2_142 = arith.constant 2 : index
    %c0_143 = arith.constant 0 : index
    %182 = vector.load %arg33[%c0_141, %c2_142, %c0_143] : memref<14x22x16xf32, #tpu.memory_space<vmem>>, vector<8x16x16xf32>
    %c2_144 = arith.constant 2 : index
    %c0_145 = arith.constant 0 : index
    %183 = vector.load %arg12[%c2_144, %c0_145] : memref<49x16xf32, #tpu.memory_space<vmem>>, vector<1x16xf32>
    %184 = vector.shape_cast %183 : vector<1x16xf32> to vector<16xf32>
    %185 = vector.shape_cast %184 : vector<16xf32> to vector<1x1x16xf32>
    %186 = vector.broadcast %185 : vector<1x1x16xf32> to vector<8x16x16xf32>
    %187 = arith.mulf %182, %186 : vector<8x16x16xf32>
    %188 = arith.addf %181, %187 : vector<8x16x16xf32>
    %c0_146 = arith.constant 0 : index
    %c3_147 = arith.constant 3 : index
    %c0_148 = arith.constant 0 : index
    %189 = vector.load %arg33[%c0_146, %c3_147, %c0_148] : memref<14x22x16xf32, #tpu.memory_space<vmem>>, vector<8x16x16xf32>
    %c3_149 = arith.constant 3 : index
    %c0_150 = arith.constant 0 : index
    %190 = vector.load %arg12[%c3_149, %c0_150] : memref<49x16xf32, #tpu.memory_space<vmem>>, vector<1x16xf32>
    %191 = vector.shape_cast %190 : vector<1x16xf32> to vector<16xf32>
    %192 = vector.shape_cast %191 : vector<16xf32> to vector<1x1x16xf32>
    %193 = vector.broadcast %192 : vector<1x1x16xf32> to vector<8x16x16xf32>
    %194 = arith.mulf %189, %193 : vector<8x16x16xf32>
    %195 = arith.addf %188, %194 : vector<8x16x16xf32>
    %c0_151 = arith.constant 0 : index
    %c4_152 = arith.constant 4 : index
    %c0_153 = arith.constant 0 : index
    %196 = vector.load %arg33[%c0_151, %c4_152, %c0_153] : memref<14x22x16xf32, #tpu.memory_space<vmem>>, vector<8x16x16xf32>
    %c4_154 = arith.constant 4 : index
    %c0_155 = arith.constant 0 : index
    %197 = vector.load %arg12[%c4_154, %c0_155] : memref<49x16xf32, #tpu.memory_space<vmem>>, vector<1x16xf32>
    %198 = vector.shape_cast %197 : vector<1x16xf32> to vector<16xf32>
    %199 = vector.shape_cast %198 : vector<16xf32> to vector<1x1x16xf32>
    %200 = vector.broadcast %199 : vector<1x1x16xf32> to vector<8x16x16xf32>
    %201 = arith.mulf %196, %200 : vector<8x16x16xf32>
    %202 = arith.addf %195, %201 : vector<8x16x16xf32>
    %c0_156 = arith.constant 0 : index
    %c5_157 = arith.constant 5 : index
    %c0_158 = arith.constant 0 : index
    %203 = vector.load %arg33[%c0_156, %c5_157, %c0_158] : memref<14x22x16xf32, #tpu.memory_space<vmem>>, vector<8x16x16xf32>
    %c5_159 = arith.constant 5 : index
    %c0_160 = arith.constant 0 : index
    %204 = vector.load %arg12[%c5_159, %c0_160] : memref<49x16xf32, #tpu.memory_space<vmem>>, vector<1x16xf32>
    %205 = vector.shape_cast %204 : vector<1x16xf32> to vector<16xf32>
    %206 = vector.shape_cast %205 : vector<16xf32> to vector<1x1x16xf32>
    %207 = vector.broadcast %206 : vector<1x1x16xf32> to vector<8x16x16xf32>
    %208 = arith.mulf %203, %207 : vector<8x16x16xf32>
    %209 = arith.addf %202, %208 : vector<8x16x16xf32>
    %c0_161 = arith.constant 0 : index
    %c6_162 = arith.constant 6 : index
    %c0_163 = arith.constant 0 : index
    %210 = vector.load %arg33[%c0_161, %c6_162, %c0_163] : memref<14x22x16xf32, #tpu.memory_space<vmem>>, vector<8x16x16xf32>
    %c6_164 = arith.constant 6 : index
    %c0_165 = arith.constant 0 : index
    %211 = vector.load %arg12[%c6_164, %c0_165] : memref<49x16xf32, #tpu.memory_space<vmem>>, vector<1x16xf32>
    %212 = vector.shape_cast %211 : vector<1x16xf32> to vector<16xf32>
    %213 = vector.shape_cast %212 : vector<16xf32> to vector<1x1x16xf32>
    %214 = vector.broadcast %213 : vector<1x1x16xf32> to vector<8x16x16xf32>
    %215 = arith.mulf %210, %214 : vector<8x16x16xf32>
    %216 = arith.addf %209, %215 : vector<8x16x16xf32>
    %c1_166 = arith.constant 1 : index
    %c0_167 = arith.constant 0 : index
    %c0_168 = arith.constant 0 : index
    %217 = vector.load %arg33[%c1_166, %c0_167, %c0_168] : memref<14x22x16xf32, #tpu.memory_space<vmem>>, vector<8x16x16xf32>
    %c7_169 = arith.constant 7 : index
    %c0_170 = arith.constant 0 : index
    %218 = vector.load %arg12[%c7_169, %c0_170] : memref<49x16xf32, #tpu.memory_space<vmem>>, vector<1x16xf32>
    %219 = vector.shape_cast %218 : vector<1x16xf32> to vector<16xf32>
    %220 = vector.shape_cast %219 : vector<16xf32> to vector<1x1x16xf32>
    %221 = vector.broadcast %220 : vector<1x1x16xf32> to vector<8x16x16xf32>
    %222 = arith.mulf %217, %221 : vector<8x16x16xf32>
    %223 = arith.addf %216, %222 : vector<8x16x16xf32>
    %c1_171 = arith.constant 1 : index
    %c1_172 = arith.constant 1 : index
    %c0_173 = arith.constant 0 : index
    %224 = vector.load %arg33[%c1_171, %c1_172, %c0_173] : memref<14x22x16xf32, #tpu.memory_space<vmem>>, vector<8x16x16xf32>
    %c8_174 = arith.constant 8 : index
    %c0_175 = arith.constant 0 : index
    %225 = vector.load %arg12[%c8_174, %c0_175] : memref<49x16xf32, #tpu.memory_space<vmem>>, vector<1x16xf32>
    %226 = vector.shape_cast %225 : vector<1x16xf32> to vector<16xf32>
    %227 = vector.shape_cast %226 : vector<16xf32> to vector<1x1x16xf32>
    %228 = vector.broadcast %227 : vector<1x1x16xf32> to vector<8x16x16xf32>
    %229 = arith.mulf %224, %228 : vector<8x16x16xf32>
    %230 = arith.addf %223, %229 : vector<8x16x16xf32>
    %c1_176 = arith.constant 1 : index
    %c2_177 = arith.constant 2 : index
    %c0_178 = arith.constant 0 : index
    %231 = vector.load %arg33[%c1_176, %c2_177, %c0_178] : memref<14x22x16xf32, #tpu.memory_space<vmem>>, vector<8x16x16xf32>
    %c9_179 = arith.constant 9 : index
    %c0_180 = arith.constant 0 : index
    %232 = vector.load %arg12[%c9_179, %c0_180] : memref<49x16xf32, #tpu.memory_space<vmem>>, vector<1x16xf32>
    %233 = vector.shape_cast %232 : vector<1x16xf32> to vector<16xf32>
    %234 = vector.shape_cast %233 : vector<16xf32> to vector<1x1x16xf32>
    %235 = vector.broadcast %234 : vector<1x1x16xf32> to vector<8x16x16xf32>
    %236 = arith.mulf %231, %235 : vector<8x16x16xf32>
    %237 = arith.addf %230, %236 : vector<8x16x16xf32>
    %c1_181 = arith.constant 1 : index
    %c3_182 = arith.constant 3 : index
    %c0_183 = arith.constant 0 : index
    %238 = vector.load %arg33[%c1_181, %c3_182, %c0_183] : memref<14x22x16xf32, #tpu.memory_space<vmem>>, vector<8x16x16xf32>
    %c10 = arith.constant 10 : index
    %c0_184 = arith.constant 0 : index
    %239 = vector.load %arg12[%c10, %c0_184] : memref<49x16xf32, #tpu.memory_space<vmem>>, vector<1x16xf32>
    %240 = vector.shape_cast %239 : vector<1x16xf32> to vector<16xf32>
    %241 = vector.shape_cast %240 : vector<16xf32> to vector<1x1x16xf32>
    %242 = vector.broadcast %241 : vector<1x1x16xf32> to vector<8x16x16xf32>
    %243 = arith.mulf %238, %242 : vector<8x16x16xf32>
    %244 = arith.addf %237, %243 : vector<8x16x16xf32>
    %c1_185 = arith.constant 1 : index
    %c4_186 = arith.constant 4 : index
    %c0_187 = arith.constant 0 : index
    %245 = vector.load %arg33[%c1_185, %c4_186, %c0_187] : memref<14x22x16xf32, #tpu.memory_space<vmem>>, vector<8x16x16xf32>
    %c11_188 = arith.constant 11 : index
    %c0_189 = arith.constant 0 : index
    %246 = vector.load %arg12[%c11_188, %c0_189] : memref<49x16xf32, #tpu.memory_space<vmem>>, vector<1x16xf32>
    %247 = vector.shape_cast %246 : vector<1x16xf32> to vector<16xf32>
    %248 = vector.shape_cast %247 : vector<16xf32> to vector<1x1x16xf32>
    %249 = vector.broadcast %248 : vector<1x1x16xf32> to vector<8x16x16xf32>
    %250 = arith.mulf %245, %249 : vector<8x16x16xf32>
    %251 = arith.addf %244, %250 : vector<8x16x16xf32>
    %c1_190 = arith.constant 1 : index
    %c5_191 = arith.constant 5 : index
    %c0_192 = arith.constant 0 : index
    %252 = vector.load %arg33[%c1_190, %c5_191, %c0_192] : memref<14x22x16xf32, #tpu.memory_space<vmem>>, vector<8x16x16xf32>
    %c12 = arith.constant 12 : index
    %c0_193 = arith.constant 0 : index
    %253 = vector.load %arg12[%c12, %c0_193] : memref<49x16xf32, #tpu.memory_space<vmem>>, vector<1x16xf32>
    %254 = vector.shape_cast %253 : vector<1x16xf32> to vector<16xf32>
    %255 = vector.shape_cast %254 : vector<16xf32> to vector<1x1x16xf32>
    %256 = vector.broadcast %255 : vector<1x1x16xf32> to vector<8x16x16xf32>
    %257 = arith.mulf %252, %256 : vector<8x16x16xf32>
    %258 = arith.addf %251, %257 : vector<8x16x16xf32>
    %c1_194 = arith.constant 1 : index
    %c6_195 = arith.constant 6 : index
    %c0_196 = arith.constant 0 : index
    %259 = vector.load %arg33[%c1_194, %c6_195, %c0_196] : memref<14x22x16xf32, #tpu.memory_space<vmem>>, vector<8x16x16xf32>
    %c13 = arith.constant 13 : index
    %c0_197 = arith.constant 0 : index
    %260 = vector.load %arg12[%c13, %c0_197] : memref<49x16xf32, #tpu.memory_space<vmem>>, vector<1x16xf32>
    %261 = vector.shape_cast %260 : vector<1x16xf32> to vector<16xf32>
    %262 = vector.shape_cast %261 : vector<16xf32> to vector<1x1x16xf32>
    %263 = vector.broadcast %262 : vector<1x1x16xf32> to vector<8x16x16xf32>
    %264 = arith.mulf %259, %263 : vector<8x16x16xf32>
    %265 = arith.addf %258, %264 : vector<8x16x16xf32>
    %c2_198 = arith.constant 2 : index
    %c0_199 = arith.constant 0 : index
    %c0_200 = arith.constant 0 : index
    %266 = vector.load %arg33[%c2_198, %c0_199, %c0_200] : memref<14x22x16xf32, #tpu.memory_space<vmem>>, vector<8x16x16xf32>
    %c14 = arith.constant 14 : index
    %c0_201 = arith.constant 0 : index
    %267 = vector.load %arg12[%c14, %c0_201] : memref<49x16xf32, #tpu.memory_space<vmem>>, vector<1x16xf32>
    %268 = vector.shape_cast %267 : vector<1x16xf32> to vector<16xf32>
    %269 = vector.shape_cast %268 : vector<16xf32> to vector<1x1x16xf32>
    %270 = vector.broadcast %269 : vector<1x1x16xf32> to vector<8x16x16xf32>
    %271 = arith.mulf %266, %270 : vector<8x16x16xf32>
    %272 = arith.addf %265, %271 : vector<8x16x16xf32>
    %c2_202 = arith.constant 2 : index
    %c1_203 = arith.constant 1 : index
    %c0_204 = arith.constant 0 : index
    %273 = vector.load %arg33[%c2_202, %c1_203, %c0_204] : memref<14x22x16xf32, #tpu.memory_space<vmem>>, vector<8x16x16xf32>
    %c15 = arith.constant 15 : index
    %c0_205 = arith.constant 0 : index
    %274 = vector.load %arg12[%c15, %c0_205] : memref<49x16xf32, #tpu.memory_space<vmem>>, vector<1x16xf32>
    %275 = vector.shape_cast %274 : vector<1x16xf32> to vector<16xf32>
    %276 = vector.shape_cast %275 : vector<16xf32> to vector<1x1x16xf32>
    %277 = vector.broadcast %276 : vector<1x1x16xf32> to vector<8x16x16xf32>
    %278 = arith.mulf %273, %277 : vector<8x16x16xf32>
    %279 = arith.addf %272, %278 : vector<8x16x16xf32>
    %c2_206 = arith.constant 2 : index
    %c2_207 = arith.constant 2 : index
    %c0_208 = arith.constant 0 : index
    %280 = vector.load %arg33[%c2_206, %c2_207, %c0_208] : memref<14x22x16xf32, #tpu.memory_space<vmem>>, vector<8x16x16xf32>
    %c16 = arith.constant 16 : index
    %c0_209 = arith.constant 0 : index
    %281 = vector.load %arg12[%c16, %c0_209] : memref<49x16xf32, #tpu.memory_space<vmem>>, vector<1x16xf32>
    %282 = vector.shape_cast %281 : vector<1x16xf32> to vector<16xf32>
    %283 = vector.shape_cast %282 : vector<16xf32> to vector<1x1x16xf32>
    %284 = vector.broadcast %283 : vector<1x1x16xf32> to vector<8x16x16xf32>
    %285 = arith.mulf %280, %284 : vector<8x16x16xf32>
    %286 = arith.addf %279, %285 : vector<8x16x16xf32>
    %c2_210 = arith.constant 2 : index
    %c3_211 = arith.constant 3 : index
    %c0_212 = arith.constant 0 : index
    %287 = vector.load %arg33[%c2_210, %c3_211, %c0_212] : memref<14x22x16xf32, #tpu.memory_space<vmem>>, vector<8x16x16xf32>
    %c17_213 = arith.constant 17 : index
    %c0_214 = arith.constant 0 : index
    %288 = vector.load %arg12[%c17_213, %c0_214] : memref<49x16xf32, #tpu.memory_space<vmem>>, vector<1x16xf32>
    %289 = vector.shape_cast %288 : vector<1x16xf32> to vector<16xf32>
    %290 = vector.shape_cast %289 : vector<16xf32> to vector<1x1x16xf32>
    %291 = vector.broadcast %290 : vector<1x1x16xf32> to vector<8x16x16xf32>
    %292 = arith.mulf %287, %291 : vector<8x16x16xf32>
    %293 = arith.addf %286, %292 : vector<8x16x16xf32>
    %c2_215 = arith.constant 2 : index
    %c4_216 = arith.constant 4 : index
    %c0_217 = arith.constant 0 : index
    %294 = vector.load %arg33[%c2_215, %c4_216, %c0_217] : memref<14x22x16xf32, #tpu.memory_space<vmem>>, vector<8x16x16xf32>
    %c18 = arith.constant 18 : index
    %c0_218 = arith.constant 0 : index
    %295 = vector.load %arg12[%c18, %c0_218] : memref<49x16xf32, #tpu.memory_space<vmem>>, vector<1x16xf32>
    %296 = vector.shape_cast %295 : vector<1x16xf32> to vector<16xf32>
    %297 = vector.shape_cast %296 : vector<16xf32> to vector<1x1x16xf32>
    %298 = vector.broadcast %297 : vector<1x1x16xf32> to vector<8x16x16xf32>
    %299 = arith.mulf %294, %298 : vector<8x16x16xf32>
    %300 = arith.addf %293, %299 : vector<8x16x16xf32>
    %c2_219 = arith.constant 2 : index
    %c5_220 = arith.constant 5 : index
    %c0_221 = arith.constant 0 : index
    %301 = vector.load %arg33[%c2_219, %c5_220, %c0_221] : memref<14x22x16xf32, #tpu.memory_space<vmem>>, vector<8x16x16xf32>
    %c19_222 = arith.constant 19 : index
    %c0_223 = arith.constant 0 : index
    %302 = vector.load %arg12[%c19_222, %c0_223] : memref<49x16xf32, #tpu.memory_space<vmem>>, vector<1x16xf32>
    %303 = vector.shape_cast %302 : vector<1x16xf32> to vector<16xf32>
    %304 = vector.shape_cast %303 : vector<16xf32> to vector<1x1x16xf32>
    %305 = vector.broadcast %304 : vector<1x1x16xf32> to vector<8x16x16xf32>
    %306 = arith.mulf %301, %305 : vector<8x16x16xf32>
    %307 = arith.addf %300, %306 : vector<8x16x16xf32>
    %c2_224 = arith.constant 2 : index
    %c6_225 = arith.constant 6 : index
    %c0_226 = arith.constant 0 : index
    %308 = vector.load %arg33[%c2_224, %c6_225, %c0_226] : memref<14x22x16xf32, #tpu.memory_space<vmem>>, vector<8x16x16xf32>
    %c20 = arith.constant 20 : index
    %c0_227 = arith.constant 0 : index
    %309 = vector.load %arg12[%c20, %c0_227] : memref<49x16xf32, #tpu.memory_space<vmem>>, vector<1x16xf32>
    %310 = vector.shape_cast %309 : vector<1x16xf32> to vector<16xf32>
    %311 = vector.shape_cast %310 : vector<16xf32> to vector<1x1x16xf32>
    %312 = vector.broadcast %311 : vector<1x1x16xf32> to vector<8x16x16xf32>
    %313 = arith.mulf %308, %312 : vector<8x16x16xf32>
    %314 = arith.addf %307, %313 : vector<8x16x16xf32>
    %c3_228 = arith.constant 3 : index
    %c0_229 = arith.constant 0 : index
    %c0_230 = arith.constant 0 : index
    %315 = vector.load %arg33[%c3_228, %c0_229, %c0_230] : memref<14x22x16xf32, #tpu.memory_space<vmem>>, vector<8x16x16xf32>
    %c21 = arith.constant 21 : index
    %c0_231 = arith.constant 0 : index
    %316 = vector.load %arg12[%c21, %c0_231] : memref<49x16xf32, #tpu.memory_space<vmem>>, vector<1x16xf32>
    %317 = vector.shape_cast %316 : vector<1x16xf32> to vector<16xf32>
    %318 = vector.shape_cast %317 : vector<16xf32> to vector<1x1x16xf32>
    %319 = vector.broadcast %318 : vector<1x1x16xf32> to vector<8x16x16xf32>
    %320 = arith.mulf %315, %319 : vector<8x16x16xf32>
    %321 = arith.addf %314, %320 : vector<8x16x16xf32>
    %c3_232 = arith.constant 3 : index
    %c1_233 = arith.constant 1 : index
    %c0_234 = arith.constant 0 : index
    %322 = vector.load %arg33[%c3_232, %c1_233, %c0_234] : memref<14x22x16xf32, #tpu.memory_space<vmem>>, vector<8x16x16xf32>
    %c22 = arith.constant 22 : index
    %c0_235 = arith.constant 0 : index
    %323 = vector.load %arg12[%c22, %c0_235] : memref<49x16xf32, #tpu.memory_space<vmem>>, vector<1x16xf32>
    %324 = vector.shape_cast %323 : vector<1x16xf32> to vector<16xf32>
    %325 = vector.shape_cast %324 : vector<16xf32> to vector<1x1x16xf32>
    %326 = vector.broadcast %325 : vector<1x1x16xf32> to vector<8x16x16xf32>
    %327 = arith.mulf %322, %326 : vector<8x16x16xf32>
    %328 = arith.addf %321, %327 : vector<8x16x16xf32>
    %c3_236 = arith.constant 3 : index
    %c2_237 = arith.constant 2 : index
    %c0_238 = arith.constant 0 : index
    %329 = vector.load %arg33[%c3_236, %c2_237, %c0_238] : memref<14x22x16xf32, #tpu.memory_space<vmem>>, vector<8x16x16xf32>
    %c23 = arith.constant 23 : index
    %c0_239 = arith.constant 0 : index
    %330 = vector.load %arg12[%c23, %c0_239] : memref<49x16xf32, #tpu.memory_space<vmem>>, vector<1x16xf32>
    %331 = vector.shape_cast %330 : vector<1x16xf32> to vector<16xf32>
    %332 = vector.shape_cast %331 : vector<16xf32> to vector<1x1x16xf32>
    %333 = vector.broadcast %332 : vector<1x1x16xf32> to vector<8x16x16xf32>
    %334 = arith.mulf %329, %333 : vector<8x16x16xf32>
    %335 = arith.addf %328, %334 : vector<8x16x16xf32>
    %c3_240 = arith.constant 3 : index
    %c3_241 = arith.constant 3 : index
    %c0_242 = arith.constant 0 : index
    %336 = vector.load %arg33[%c3_240, %c3_241, %c0_242] : memref<14x22x16xf32, #tpu.memory_space<vmem>>, vector<8x16x16xf32>
    %c24 = arith.constant 24 : index
    %c0_243 = arith.constant 0 : index
    %337 = vector.load %arg12[%c24, %c0_243] : memref<49x16xf32, #tpu.memory_space<vmem>>, vector<1x16xf32>
    %338 = vector.shape_cast %337 : vector<1x16xf32> to vector<16xf32>
    %339 = vector.shape_cast %338 : vector<16xf32> to vector<1x1x16xf32>
    %340 = vector.broadcast %339 : vector<1x1x16xf32> to vector<8x16x16xf32>
    %341 = arith.mulf %336, %340 : vector<8x16x16xf32>
    %342 = arith.addf %335, %341 : vector<8x16x16xf32>
    %c3_244 = arith.constant 3 : index
    %c4_245 = arith.constant 4 : index
    %c0_246 = arith.constant 0 : index
    %343 = vector.load %arg33[%c3_244, %c4_245, %c0_246] : memref<14x22x16xf32, #tpu.memory_space<vmem>>, vector<8x16x16xf32>
    %c25 = arith.constant 25 : index
    %c0_247 = arith.constant 0 : index
    %344 = vector.load %arg12[%c25, %c0_247] : memref<49x16xf32, #tpu.memory_space<vmem>>, vector<1x16xf32>
    %345 = vector.shape_cast %344 : vector<1x16xf32> to vector<16xf32>
    %346 = vector.shape_cast %345 : vector<16xf32> to vector<1x1x16xf32>
    %347 = vector.broadcast %346 : vector<1x1x16xf32> to vector<8x16x16xf32>
    %348 = arith.mulf %343, %347 : vector<8x16x16xf32>
    %349 = arith.addf %342, %348 : vector<8x16x16xf32>
    %c3_248 = arith.constant 3 : index
    %c5_249 = arith.constant 5 : index
    %c0_250 = arith.constant 0 : index
    %350 = vector.load %arg33[%c3_248, %c5_249, %c0_250] : memref<14x22x16xf32, #tpu.memory_space<vmem>>, vector<8x16x16xf32>
    %c26 = arith.constant 26 : index
    %c0_251 = arith.constant 0 : index
    %351 = vector.load %arg12[%c26, %c0_251] : memref<49x16xf32, #tpu.memory_space<vmem>>, vector<1x16xf32>
    %352 = vector.shape_cast %351 : vector<1x16xf32> to vector<16xf32>
    %353 = vector.shape_cast %352 : vector<16xf32> to vector<1x1x16xf32>
    %354 = vector.broadcast %353 : vector<1x1x16xf32> to vector<8x16x16xf32>
    %355 = arith.mulf %350, %354 : vector<8x16x16xf32>
    %356 = arith.addf %349, %355 : vector<8x16x16xf32>
    %c3_252 = arith.constant 3 : index
    %c6_253 = arith.constant 6 : index
    %c0_254 = arith.constant 0 : index
    %357 = vector.load %arg33[%c3_252, %c6_253, %c0_254] : memref<14x22x16xf32, #tpu.memory_space<vmem>>, vector<8x16x16xf32>
    %c27 = arith.constant 27 : index
    %c0_255 = arith.constant 0 : index
    %358 = vector.load %arg12[%c27, %c0_255] : memref<49x16xf32, #tpu.memory_space<vmem>>, vector<1x16xf32>
    %359 = vector.shape_cast %358 : vector<1x16xf32> to vector<16xf32>
    %360 = vector.shape_cast %359 : vector<16xf32> to vector<1x1x16xf32>
    %361 = vector.broadcast %360 : vector<1x1x16xf32> to vector<8x16x16xf32>
    %362 = arith.mulf %357, %361 : vector<8x16x16xf32>
    %363 = arith.addf %356, %362 : vector<8x16x16xf32>
    %c4_256 = arith.constant 4 : index
    %c0_257 = arith.constant 0 : index
    %c0_258 = arith.constant 0 : index
    %364 = vector.load %arg33[%c4_256, %c0_257, %c0_258] : memref<14x22x16xf32, #tpu.memory_space<vmem>>, vector<8x16x16xf32>
    %c28 = arith.constant 28 : index
    %c0_259 = arith.constant 0 : index
    %365 = vector.load %arg12[%c28, %c0_259] : memref<49x16xf32, #tpu.memory_space<vmem>>, vector<1x16xf32>
    %366 = vector.shape_cast %365 : vector<1x16xf32> to vector<16xf32>
    %367 = vector.shape_cast %366 : vector<16xf32> to vector<1x1x16xf32>
    %368 = vector.broadcast %367 : vector<1x1x16xf32> to vector<8x16x16xf32>
    %369 = arith.mulf %364, %368 : vector<8x16x16xf32>
    %370 = arith.addf %363, %369 : vector<8x16x16xf32>
    %c4_260 = arith.constant 4 : index
    %c1_261 = arith.constant 1 : index
    %c0_262 = arith.constant 0 : index
    %371 = vector.load %arg33[%c4_260, %c1_261, %c0_262] : memref<14x22x16xf32, #tpu.memory_space<vmem>>, vector<8x16x16xf32>
    %c29 = arith.constant 29 : index
    %c0_263 = arith.constant 0 : index
    %372 = vector.load %arg12[%c29, %c0_263] : memref<49x16xf32, #tpu.memory_space<vmem>>, vector<1x16xf32>
    %373 = vector.shape_cast %372 : vector<1x16xf32> to vector<16xf32>
    %374 = vector.shape_cast %373 : vector<16xf32> to vector<1x1x16xf32>
    %375 = vector.broadcast %374 : vector<1x1x16xf32> to vector<8x16x16xf32>
    %376 = arith.mulf %371, %375 : vector<8x16x16xf32>
    %377 = arith.addf %370, %376 : vector<8x16x16xf32>
    %c4_264 = arith.constant 4 : index
    %c2_265 = arith.constant 2 : index
    %c0_266 = arith.constant 0 : index
    %378 = vector.load %arg33[%c4_264, %c2_265, %c0_266] : memref<14x22x16xf32, #tpu.memory_space<vmem>>, vector<8x16x16xf32>
    %c30 = arith.constant 30 : index
    %c0_267 = arith.constant 0 : index
    %379 = vector.load %arg12[%c30, %c0_267] : memref<49x16xf32, #tpu.memory_space<vmem>>, vector<1x16xf32>
    %380 = vector.shape_cast %379 : vector<1x16xf32> to vector<16xf32>
    %381 = vector.shape_cast %380 : vector<16xf32> to vector<1x1x16xf32>
    %382 = vector.broadcast %381 : vector<1x1x16xf32> to vector<8x16x16xf32>
    %383 = arith.mulf %378, %382 : vector<8x16x16xf32>
    %384 = arith.addf %377, %383 : vector<8x16x16xf32>
    %c4_268 = arith.constant 4 : index
    %c3_269 = arith.constant 3 : index
    %c0_270 = arith.constant 0 : index
    %385 = vector.load %arg33[%c4_268, %c3_269, %c0_270] : memref<14x22x16xf32, #tpu.memory_space<vmem>>, vector<8x16x16xf32>
    %c31 = arith.constant 31 : index
    %c0_271 = arith.constant 0 : index
    %386 = vector.load %arg12[%c31, %c0_271] : memref<49x16xf32, #tpu.memory_space<vmem>>, vector<1x16xf32>
    %387 = vector.shape_cast %386 : vector<1x16xf32> to vector<16xf32>
    %388 = vector.shape_cast %387 : vector<16xf32> to vector<1x1x16xf32>
    %389 = vector.broadcast %388 : vector<1x1x16xf32> to vector<8x16x16xf32>
    %390 = arith.mulf %385, %389 : vector<8x16x16xf32>
    %391 = arith.addf %384, %390 : vector<8x16x16xf32>
    %c4_272 = arith.constant 4 : index
    %c4_273 = arith.constant 4 : index
    %c0_274 = arith.constant 0 : index
    %392 = vector.load %arg33[%c4_272, %c4_273, %c0_274] : memref<14x22x16xf32, #tpu.memory_space<vmem>>, vector<8x16x16xf32>
    %c32 = arith.constant 32 : index
    %c0_275 = arith.constant 0 : index
    %393 = vector.load %arg12[%c32, %c0_275] : memref<49x16xf32, #tpu.memory_space<vmem>>, vector<1x16xf32>
    %394 = vector.shape_cast %393 : vector<1x16xf32> to vector<16xf32>
    %395 = vector.shape_cast %394 : vector<16xf32> to vector<1x1x16xf32>
    %396 = vector.broadcast %395 : vector<1x1x16xf32> to vector<8x16x16xf32>
    %397 = arith.mulf %392, %396 : vector<8x16x16xf32>
    %398 = arith.addf %391, %397 : vector<8x16x16xf32>
    %c4_276 = arith.constant 4 : index
    %c5_277 = arith.constant 5 : index
    %c0_278 = arith.constant 0 : index
    %399 = vector.load %arg33[%c4_276, %c5_277, %c0_278] : memref<14x22x16xf32, #tpu.memory_space<vmem>>, vector<8x16x16xf32>
    %c33 = arith.constant 33 : index
    %c0_279 = arith.constant 0 : index
    %400 = vector.load %arg12[%c33, %c0_279] : memref<49x16xf32, #tpu.memory_space<vmem>>, vector<1x16xf32>
    %401 = vector.shape_cast %400 : vector<1x16xf32> to vector<16xf32>
    %402 = vector.shape_cast %401 : vector<16xf32> to vector<1x1x16xf32>
    %403 = vector.broadcast %402 : vector<1x1x16xf32> to vector<8x16x16xf32>
    %404 = arith.mulf %399, %403 : vector<8x16x16xf32>
    %405 = arith.addf %398, %404 : vector<8x16x16xf32>
    %c4_280 = arith.constant 4 : index
    %c6_281 = arith.constant 6 : index
    %c0_282 = arith.constant 0 : index
    %406 = vector.load %arg33[%c4_280, %c6_281, %c0_282] : memref<14x22x16xf32, #tpu.memory_space<vmem>>, vector<8x16x16xf32>
    %c34 = arith.constant 34 : index
    %c0_283 = arith.constant 0 : index
    %407 = vector.load %arg12[%c34, %c0_283] : memref<49x16xf32, #tpu.memory_space<vmem>>, vector<1x16xf32>
    %408 = vector.shape_cast %407 : vector<1x16xf32> to vector<16xf32>
    %409 = vector.shape_cast %408 : vector<16xf32> to vector<1x1x16xf32>
    %410 = vector.broadcast %409 : vector<1x1x16xf32> to vector<8x16x16xf32>
    %411 = arith.mulf %406, %410 : vector<8x16x16xf32>
    %412 = arith.addf %405, %411 : vector<8x16x16xf32>
    %c5_284 = arith.constant 5 : index
    %c0_285 = arith.constant 0 : index
    %c0_286 = arith.constant 0 : index
    %413 = vector.load %arg33[%c5_284, %c0_285, %c0_286] : memref<14x22x16xf32, #tpu.memory_space<vmem>>, vector<8x16x16xf32>
    %c35 = arith.constant 35 : index
    %c0_287 = arith.constant 0 : index
    %414 = vector.load %arg12[%c35, %c0_287] : memref<49x16xf32, #tpu.memory_space<vmem>>, vector<1x16xf32>
    %415 = vector.shape_cast %414 : vector<1x16xf32> to vector<16xf32>
    %416 = vector.shape_cast %415 : vector<16xf32> to vector<1x1x16xf32>
    %417 = vector.broadcast %416 : vector<1x1x16xf32> to vector<8x16x16xf32>
    %418 = arith.mulf %413, %417 : vector<8x16x16xf32>
    %419 = arith.addf %412, %418 : vector<8x16x16xf32>
    %c5_288 = arith.constant 5 : index
    %c1_289 = arith.constant 1 : index
    %c0_290 = arith.constant 0 : index
    %420 = vector.load %arg33[%c5_288, %c1_289, %c0_290] : memref<14x22x16xf32, #tpu.memory_space<vmem>>, vector<8x16x16xf32>
    %c36 = arith.constant 36 : index
    %c0_291 = arith.constant 0 : index
    %421 = vector.load %arg12[%c36, %c0_291] : memref<49x16xf32, #tpu.memory_space<vmem>>, vector<1x16xf32>
    %422 = vector.shape_cast %421 : vector<1x16xf32> to vector<16xf32>
    %423 = vector.shape_cast %422 : vector<16xf32> to vector<1x1x16xf32>
    %424 = vector.broadcast %423 : vector<1x1x16xf32> to vector<8x16x16xf32>
    %425 = arith.mulf %420, %424 : vector<8x16x16xf32>
    %426 = arith.addf %419, %425 : vector<8x16x16xf32>
    %c5_292 = arith.constant 5 : index
    %c2_293 = arith.constant 2 : index
    %c0_294 = arith.constant 0 : index
    %427 = vector.load %arg33[%c5_292, %c2_293, %c0_294] : memref<14x22x16xf32, #tpu.memory_space<vmem>>, vector<8x16x16xf32>
    %c37 = arith.constant 37 : index
    %c0_295 = arith.constant 0 : index
    %428 = vector.load %arg12[%c37, %c0_295] : memref<49x16xf32, #tpu.memory_space<vmem>>, vector<1x16xf32>
    %429 = vector.shape_cast %428 : vector<1x16xf32> to vector<16xf32>
    %430 = vector.shape_cast %429 : vector<16xf32> to vector<1x1x16xf32>
    %431 = vector.broadcast %430 : vector<1x1x16xf32> to vector<8x16x16xf32>
    %432 = arith.mulf %427, %431 : vector<8x16x16xf32>
    %433 = arith.addf %426, %432 : vector<8x16x16xf32>
    %c5_296 = arith.constant 5 : index
    %c3_297 = arith.constant 3 : index
    %c0_298 = arith.constant 0 : index
    %434 = vector.load %arg33[%c5_296, %c3_297, %c0_298] : memref<14x22x16xf32, #tpu.memory_space<vmem>>, vector<8x16x16xf32>
    %c38 = arith.constant 38 : index
    %c0_299 = arith.constant 0 : index
    %435 = vector.load %arg12[%c38, %c0_299] : memref<49x16xf32, #tpu.memory_space<vmem>>, vector<1x16xf32>
    %436 = vector.shape_cast %435 : vector<1x16xf32> to vector<16xf32>
    %437 = vector.shape_cast %436 : vector<16xf32> to vector<1x1x16xf32>
    %438 = vector.broadcast %437 : vector<1x1x16xf32> to vector<8x16x16xf32>
    %439 = arith.mulf %434, %438 : vector<8x16x16xf32>
    %440 = arith.addf %433, %439 : vector<8x16x16xf32>
    %c5_300 = arith.constant 5 : index
    %c4_301 = arith.constant 4 : index
    %c0_302 = arith.constant 0 : index
    %441 = vector.load %arg33[%c5_300, %c4_301, %c0_302] : memref<14x22x16xf32, #tpu.memory_space<vmem>>, vector<8x16x16xf32>
    %c39 = arith.constant 39 : index
    %c0_303 = arith.constant 0 : index
    %442 = vector.load %arg12[%c39, %c0_303] : memref<49x16xf32, #tpu.memory_space<vmem>>, vector<1x16xf32>
    %443 = vector.shape_cast %442 : vector<1x16xf32> to vector<16xf32>
    %444 = vector.shape_cast %443 : vector<16xf32> to vector<1x1x16xf32>
    %445 = vector.broadcast %444 : vector<1x1x16xf32> to vector<8x16x16xf32>
    %446 = arith.mulf %441, %445 : vector<8x16x16xf32>
    %447 = arith.addf %440, %446 : vector<8x16x16xf32>
    %c5_304 = arith.constant 5 : index
    %c5_305 = arith.constant 5 : index
    %c0_306 = arith.constant 0 : index
    %448 = vector.load %arg33[%c5_304, %c5_305, %c0_306] : memref<14x22x16xf32, #tpu.memory_space<vmem>>, vector<8x16x16xf32>
    %c40 = arith.constant 40 : index
    %c0_307 = arith.constant 0 : index
    %449 = vector.load %arg12[%c40, %c0_307] : memref<49x16xf32, #tpu.memory_space<vmem>>, vector<1x16xf32>
    %450 = vector.shape_cast %449 : vector<1x16xf32> to vector<16xf32>
    %451 = vector.shape_cast %450 : vector<16xf32> to vector<1x1x16xf32>
    %452 = vector.broadcast %451 : vector<1x1x16xf32> to vector<8x16x16xf32>
    %453 = arith.mulf %448, %452 : vector<8x16x16xf32>
    %454 = arith.addf %447, %453 : vector<8x16x16xf32>
    %c5_308 = arith.constant 5 : index
    %c6_309 = arith.constant 6 : index
    %c0_310 = arith.constant 0 : index
    %455 = vector.load %arg33[%c5_308, %c6_309, %c0_310] : memref<14x22x16xf32, #tpu.memory_space<vmem>>, vector<8x16x16xf32>
    %c41 = arith.constant 41 : index
    %c0_311 = arith.constant 0 : index
    %456 = vector.load %arg12[%c41, %c0_311] : memref<49x16xf32, #tpu.memory_space<vmem>>, vector<1x16xf32>
    %457 = vector.shape_cast %456 : vector<1x16xf32> to vector<16xf32>
    %458 = vector.shape_cast %457 : vector<16xf32> to vector<1x1x16xf32>
    %459 = vector.broadcast %458 : vector<1x1x16xf32> to vector<8x16x16xf32>
    %460 = arith.mulf %455, %459 : vector<8x16x16xf32>
    %461 = arith.addf %454, %460 : vector<8x16x16xf32>
    %c6_312 = arith.constant 6 : index
    %c0_313 = arith.constant 0 : index
    %c0_314 = arith.constant 0 : index
    %462 = vector.load %arg33[%c6_312, %c0_313, %c0_314] : memref<14x22x16xf32, #tpu.memory_space<vmem>>, vector<8x16x16xf32>
    %c42 = arith.constant 42 : index
    %c0_315 = arith.constant 0 : index
    %463 = vector.load %arg12[%c42, %c0_315] : memref<49x16xf32, #tpu.memory_space<vmem>>, vector<1x16xf32>
    %464 = vector.shape_cast %463 : vector<1x16xf32> to vector<16xf32>
    %465 = vector.shape_cast %464 : vector<16xf32> to vector<1x1x16xf32>
    %466 = vector.broadcast %465 : vector<1x1x16xf32> to vector<8x16x16xf32>
    %467 = arith.mulf %462, %466 : vector<8x16x16xf32>
    %468 = arith.addf %461, %467 : vector<8x16x16xf32>
    %c6_316 = arith.constant 6 : index
    %c1_317 = arith.constant 1 : index
    %c0_318 = arith.constant 0 : index
    %469 = vector.load %arg33[%c6_316, %c1_317, %c0_318] : memref<14x22x16xf32, #tpu.memory_space<vmem>>, vector<8x16x16xf32>
    %c43 = arith.constant 43 : index
    %c0_319 = arith.constant 0 : index
    %470 = vector.load %arg12[%c43, %c0_319] : memref<49x16xf32, #tpu.memory_space<vmem>>, vector<1x16xf32>
    %471 = vector.shape_cast %470 : vector<1x16xf32> to vector<16xf32>
    %472 = vector.shape_cast %471 : vector<16xf32> to vector<1x1x16xf32>
    %473 = vector.broadcast %472 : vector<1x1x16xf32> to vector<8x16x16xf32>
    %474 = arith.mulf %469, %473 : vector<8x16x16xf32>
    %475 = arith.addf %468, %474 : vector<8x16x16xf32>
    %c6_320 = arith.constant 6 : index
    %c2_321 = arith.constant 2 : index
    %c0_322 = arith.constant 0 : index
    %476 = vector.load %arg33[%c6_320, %c2_321, %c0_322] : memref<14x22x16xf32, #tpu.memory_space<vmem>>, vector<8x16x16xf32>
    %c44 = arith.constant 44 : index
    %c0_323 = arith.constant 0 : index
    %477 = vector.load %arg12[%c44, %c0_323] : memref<49x16xf32, #tpu.memory_space<vmem>>, vector<1x16xf32>
    %478 = vector.shape_cast %477 : vector<1x16xf32> to vector<16xf32>
    %479 = vector.shape_cast %478 : vector<16xf32> to vector<1x1x16xf32>
    %480 = vector.broadcast %479 : vector<1x1x16xf32> to vector<8x16x16xf32>
    %481 = arith.mulf %476, %480 : vector<8x16x16xf32>
    %482 = arith.addf %475, %481 : vector<8x16x16xf32>
    %c6_324 = arith.constant 6 : index
    %c3_325 = arith.constant 3 : index
    %c0_326 = arith.constant 0 : index
    %483 = vector.load %arg33[%c6_324, %c3_325, %c0_326] : memref<14x22x16xf32, #tpu.memory_space<vmem>>, vector<8x16x16xf32>
    %c45 = arith.constant 45 : index
    %c0_327 = arith.constant 0 : index
    %484 = vector.load %arg12[%c45, %c0_327] : memref<49x16xf32, #tpu.memory_space<vmem>>, vector<1x16xf32>
    %485 = vector.shape_cast %484 : vector<1x16xf32> to vector<16xf32>
    %486 = vector.shape_cast %485 : vector<16xf32> to vector<1x1x16xf32>
    %487 = vector.broadcast %486 : vector<1x1x16xf32> to vector<8x16x16xf32>
    %488 = arith.mulf %483, %487 : vector<8x16x16xf32>
    %489 = arith.addf %482, %488 : vector<8x16x16xf32>
    %c6_328 = arith.constant 6 : index
    %c4_329 = arith.constant 4 : index
    %c0_330 = arith.constant 0 : index
    %490 = vector.load %arg33[%c6_328, %c4_329, %c0_330] : memref<14x22x16xf32, #tpu.memory_space<vmem>>, vector<8x16x16xf32>
    %c46 = arith.constant 46 : index
    %c0_331 = arith.constant 0 : index
    %491 = vector.load %arg12[%c46, %c0_331] : memref<49x16xf32, #tpu.memory_space<vmem>>, vector<1x16xf32>
    %492 = vector.shape_cast %491 : vector<1x16xf32> to vector<16xf32>
    %493 = vector.shape_cast %492 : vector<16xf32> to vector<1x1x16xf32>
    %494 = vector.broadcast %493 : vector<1x1x16xf32> to vector<8x16x16xf32>
    %495 = arith.mulf %490, %494 : vector<8x16x16xf32>
    %496 = arith.addf %489, %495 : vector<8x16x16xf32>
    %c6_332 = arith.constant 6 : index
    %c5_333 = arith.constant 5 : index
    %c0_334 = arith.constant 0 : index
    %497 = vector.load %arg33[%c6_332, %c5_333, %c0_334] : memref<14x22x16xf32, #tpu.memory_space<vmem>>, vector<8x16x16xf32>
    %c47 = arith.constant 47 : index
    %c0_335 = arith.constant 0 : index
    %498 = vector.load %arg12[%c47, %c0_335] : memref<49x16xf32, #tpu.memory_space<vmem>>, vector<1x16xf32>
    %499 = vector.shape_cast %498 : vector<1x16xf32> to vector<16xf32>
    %500 = vector.shape_cast %499 : vector<16xf32> to vector<1x1x16xf32>
    %501 = vector.broadcast %500 : vector<1x1x16xf32> to vector<8x16x16xf32>
    %502 = arith.mulf %497, %501 : vector<8x16x16xf32>
    %503 = arith.addf %496, %502 : vector<8x16x16xf32>
    %c6_336 = arith.constant 6 : index
    %c6_337 = arith.constant 6 : index
    %c0_338 = arith.constant 0 : index
    %504 = vector.load %arg33[%c6_336, %c6_337, %c0_338] : memref<14x22x16xf32, #tpu.memory_space<vmem>>, vector<8x16x16xf32>
    %c48 = arith.constant 48 : index
    %c0_339 = arith.constant 0 : index
    %505 = vector.load %arg12[%c48, %c0_339] : memref<49x16xf32, #tpu.memory_space<vmem>>, vector<1x16xf32>
    %506 = vector.shape_cast %505 : vector<1x16xf32> to vector<16xf32>
    %507 = vector.shape_cast %506 : vector<16xf32> to vector<1x1x16xf32>
    %508 = vector.broadcast %507 : vector<1x1x16xf32> to vector<8x16x16xf32>
    %509 = arith.mulf %504, %508 : vector<8x16x16xf32>
    %510 = arith.addf %503, %509 : vector<8x16x16xf32>
    %c0_340 = arith.constant 0 : index
    %c0_341 = arith.constant 0 : index
    %511 = vector.load %arg13[%c0_340, %c0_341] : memref<1x16xf32, #tpu.memory_space<vmem>>, vector<1x16xf32>
    %512 = vector.shape_cast %511 : vector<1x16xf32> to vector<16xf32>
    %513 = vector.shape_cast %512 : vector<16xf32> to vector<1x1x16xf32>
    %514 = vector.broadcast %513 : vector<1x1x16xf32> to vector<8x16x16xf32>
    %515 = arith.addf %510, %514 : vector<8x16x16xf32>
    %cst_342 = arith.constant dense<0.000000e+00> : vector<8x16xf32>
    %516 = vector.multi_reduction <add>, %515, %cst_342 [1] : vector<8x16x16xf32> to vector<8x16xf32>
    %517 = vector.shape_cast %516 : vector<8x16xf32> to vector<8x1x16xf32>
    %cst_343 = arith.constant 1.600000e+01 : f32
    %518 = vector.broadcast %cst_343 : f32 to vector<8x1x16xf32>
    %519 = arith.divf %517, %518 : vector<8x1x16xf32>
    %520 = arith.mulf %515, %515 : vector<8x16x16xf32>
    %cst_344 = arith.constant dense<0.000000e+00> : vector<8x16xf32>
    %521 = vector.multi_reduction <add>, %520, %cst_344 [1] : vector<8x16x16xf32> to vector<8x16xf32>
    %522 = vector.shape_cast %521 : vector<8x16xf32> to vector<8x1x16xf32>
    %cst_345 = arith.constant 1.600000e+01 : f32
    %523 = vector.broadcast %cst_345 : f32 to vector<8x1x16xf32>
    %524 = arith.divf %522, %523 : vector<8x1x16xf32>
    %525 = arith.mulf %519, %519 : vector<8x1x16xf32>
    %526 = arith.subf %524, %525 : vector<8x1x16xf32>
    %cst_346 = arith.constant 0.000000e+00 : f32
    %527 = vector.broadcast %cst_346 : f32 to vector<8x1x16xf32>
    %528 = arith.maximumf %526, %527 : vector<8x1x16xf32>
    %529 = vector.broadcast %519 : vector<8x1x16xf32> to vector<8x16x16xf32>
    %530 = arith.subf %515, %529 : vector<8x16x16xf32>
    %cst_347 = arith.constant 9.99999974E-6 : f32
    %531 = vector.broadcast %cst_347 : f32 to vector<8x1x16xf32>
    %532 = arith.addf %528, %531 : vector<8x1x16xf32>
    %533 = math.rsqrt %532 : vector<8x1x16xf32>
    %534 = vector.broadcast %533 : vector<8x1x16xf32> to vector<8x16x16xf32>
    %535 = arith.mulf %530, %534 : vector<8x16x16xf32>
    %c0_348 = arith.constant 0 : index
    %c0_349 = arith.constant 0 : index
    %536 = vector.load %arg14[%c0_348, %c0_349] : memref<16x1xf32, #tpu.memory_space<vmem>>, vector<16x1xf32>
    %537 = vector.shape_cast %536 : vector<16x1xf32> to vector<1x16x1xf32>
    %538 = vector.broadcast %537 : vector<1x16x1xf32> to vector<8x16x16xf32>
    %539 = arith.mulf %535, %538 : vector<8x16x16xf32>
    %c0_350 = arith.constant 0 : index
    %c0_351 = arith.constant 0 : index
    %540 = vector.load %arg15[%c0_350, %c0_351] : memref<16x1xf32, #tpu.memory_space<vmem>>, vector<16x1xf32>
    %541 = vector.shape_cast %540 : vector<16x1xf32> to vector<1x16x1xf32>
    %542 = vector.broadcast %541 : vector<1x16x1xf32> to vector<8x16x16xf32>
    %543 = arith.addf %539, %542 : vector<8x16x16xf32>
    %544 = vector.shape_cast %543 : vector<8x16x16xf32> to vector<128x16xf32>
    %545 = arith.truncf %544 : vector<128x16xf32> to vector<128x16xbf16>
    %c0_352 = arith.constant 0 : index
    %c0_353 = arith.constant 0 : index
    %546 = vector.load %arg16[%c0_352, %c0_353] : memref<16x32xbf16, #tpu.memory_space<vmem>>, vector<16x32xbf16>
    %cst_354 = arith.constant dense<0.000000e+00> : vector<128x32xf32>
    %547 = tpu.matmul %545, %546, %cst_354 {dimension_numbers = #tpu.dot_dimension_numbers<[1], [0], [0], [1], [0, 0, 1, 1], [], []>} : vector<128x16xbf16>, vector<16x32xbf16>, vector<128x32xf32> -> vector<128x32xf32>
    %c0_355 = arith.constant 0 : index
    %c0_356 = arith.constant 0 : index
    %548 = vector.load %arg17[%c0_355, %c0_356] : memref<1x32xf32, #tpu.memory_space<vmem>>, vector<1x32xf32>
    %549 = vector.shape_cast %548 : vector<1x32xf32> to vector<32xf32>
    %550 = vector.shape_cast %549 : vector<32xf32> to vector<1x32xf32>
    %551 = vector.broadcast %550 : vector<1x32xf32> to vector<128x32xf32>
    %552 = arith.addf %547, %551 : vector<128x32xf32>
    %553 = vector.shape_cast %552 : vector<128x32xf32> to vector<8x16x32xf32>
    %554 = arith.mulf %553, %553 : vector<8x16x32xf32>
    %cst_357 = arith.constant dense<0.000000e+00> : vector<16x32xf32>
    %555 = vector.multi_reduction <add>, %554, %cst_357 [0] : vector<8x16x32xf32> to vector<16x32xf32>
    %556 = vector.shape_cast %555 : vector<16x32xf32> to vector<1x16x32xf32>
    %cst_358 = arith.constant dense<0.000000e+00> : vector<1x32xf32>
    %557 = vector.multi_reduction <add>, %556, %cst_358 [1] : vector<1x16x32xf32> to vector<1x32xf32>
    %558 = vector.shape_cast %557 : vector<1x32xf32> to vector<1x1x32xf32>
    %559 = math.sqrt %558 : vector<1x1x32xf32>
    %cst_359 = arith.constant dense<0.000000e+00> : vector<1x1xf32>
    %560 = vector.multi_reduction <add>, %559, %cst_359 [2] : vector<1x1x32xf32> to vector<1x1xf32>
    %561 = vector.shape_cast %560 : vector<1x1xf32> to vector<1x1x1xf32>
    %cst_360 = arith.constant 3.200000e+01 : f32
    %562 = vector.broadcast %cst_360 : f32 to vector<1x1x1xf32>
    %563 = arith.divf %561, %562 : vector<1x1x1xf32>
    %cst_361 = arith.constant 9.99999997E-7 : f32
    %564 = vector.broadcast %cst_361 : f32 to vector<1x1x1xf32>
    %565 = arith.addf %563, %564 : vector<1x1x1xf32>
    %566 = vector.broadcast %565 : vector<1x1x1xf32> to vector<1x1x32xf32>
    %567 = arith.divf %559, %566 : vector<1x1x32xf32>
    %c0_362 = arith.constant 0 : index
    %c0_363 = arith.constant 0 : index
    %568 = vector.load %arg18[%c0_362, %c0_363] : memref<1x32xf32, #tpu.memory_space<vmem>>, vector<1x32xf32>
    %569 = vector.shape_cast %568 : vector<1x32xf32> to vector<32xf32>
    %570 = vector.shape_cast %569 : vector<32xf32> to vector<1x1x32xf32>
    %571 = vector.broadcast %567 : vector<1x1x32xf32> to vector<8x16x32xf32>
    %572 = arith.mulf %553, %571 : vector<8x16x32xf32>
    %573 = vector.broadcast %570 : vector<1x1x32xf32> to vector<8x16x32xf32>
    %574 = arith.mulf %573, %572 : vector<8x16x32xf32>
    %c0_364 = arith.constant 0 : index
    %c0_365 = arith.constant 0 : index
    %575 = vector.load %arg19[%c0_364, %c0_365] : memref<1x32xf32, #tpu.memory_space<vmem>>, vector<1x32xf32>
    %576 = vector.shape_cast %575 : vector<1x32xf32> to vector<32xf32>
    %577 = vector.shape_cast %576 : vector<32xf32> to vector<1x1x32xf32>
    %578 = vector.broadcast %577 : vector<1x1x32xf32> to vector<8x16x32xf32>
    %579 = arith.addf %574, %578 : vector<8x16x32xf32>
    %580 = arith.addf %579, %553 : vector<8x16x32xf32>
    %581 = vector.shape_cast %580 : vector<8x16x32xf32> to vector<128x32xf32>
    %582 = arith.truncf %581 : vector<128x32xf32> to vector<128x32xbf16>
    %c0_366 = arith.constant 0 : index
    %c0_367 = arith.constant 0 : index
    %583 = vector.load %arg20[%c0_366, %c0_367] : memref<32x16xbf16, #tpu.memory_space<vmem>>, vector<32x16xbf16>
    %cst_368 = arith.constant dense<0.000000e+00> : vector<128x16xf32>
    %584 = tpu.matmul %582, %583, %cst_368 {dimension_numbers = #tpu.dot_dimension_numbers<[1], [0], [0], [1], [0, 0, 1, 1], [], []>} : vector<128x32xbf16>, vector<32x16xbf16>, vector<128x16xf32> -> vector<128x16xf32>
    %c0_369 = arith.constant 0 : index
    %c0_370 = arith.constant 0 : index
    %585 = vector.load %arg21[%c0_369, %c0_370] : memref<1x16xf32, #tpu.memory_space<vmem>>, vector<1x16xf32>
    %586 = vector.shape_cast %585 : vector<1x16xf32> to vector<16xf32>
    %587 = vector.shape_cast %586 : vector<16xf32> to vector<1x16xf32>
    %588 = vector.broadcast %587 : vector<1x16xf32> to vector<128x16xf32>
    %589 = arith.addf %584, %588 : vector<128x16xf32>
    %590 = vector.shape_cast %589 : vector<128x16xf32> to vector<8x16x16xf32>
    %c0_371 = arith.constant 0 : index
    %c0_372 = arith.constant 0 : index
    %c0_373 = arith.constant 0 : index
    %591 = vector.load %arg31[%c0_371, %c0_372, %c0_373] : memref<8x16x16xf32, #tpu.memory_space<vmem>>, vector<8x16x16xf32>
    %592 = arith.addf %591, %590 : vector<8x16x16xf32>
    %c0_374 = arith.constant 0 : index
    %c0_375 = arith.constant 0 : index
    %c0_376 = arith.constant 0 : index
    %593 = vector.load %arg31[%c0_374, %c0_375, %c0_376] : memref<8x16x16xf32, #tpu.memory_space<vmem>>, vector<8x16x16xf32>
    tpu.vector_store %arg31[%c0_374, %c0_375, %c0_376], %592 {strides = array<i32>} : memref<8x16x16xf32, #tpu.memory_space<vmem>>, vector<8x16x16xf32>,
    %c0_377 = arith.constant 0 : index
    %c0_378 = arith.constant 0 : index
    %c0_379 = arith.constant 0 : index
    %594 = vector.load %arg31[%c0_377, %c0_378, %c0_379] : memref<8x16x16xf32, #tpu.memory_space<vmem>>, vector<8x16x16xf32>
    %cst_380 = arith.constant dense<0.000000e+00> : vector<8x16xf32>
    %595 = vector.multi_reduction <add>, %594, %cst_380 [1] : vector<8x16x16xf32> to vector<8x16xf32>
    %596 = vector.shape_cast %595 : vector<8x16xf32> to vector<8x1x16xf32>
    %cst_381 = arith.constant 1.600000e+01 : f32
    %597 = vector.broadcast %cst_381 : f32 to vector<8x1x16xf32>
    %598 = arith.divf %596, %597 : vector<8x1x16xf32>
    %599 = arith.mulf %594, %594 : vector<8x16x16xf32>
    %cst_382 = arith.constant dense<0.000000e+00> : vector<8x16xf32>
    %600 = vector.multi_reduction <add>, %599, %cst_382 [1] : vector<8x16x16xf32> to vector<8x16xf32>
    %601 = vector.shape_cast %600 : vector<8x16xf32> to vector<8x1x16xf32>
    %cst_383 = arith.constant 1.600000e+01 : f32
    %602 = vector.broadcast %cst_383 : f32 to vector<8x1x16xf32>
    %603 = arith.divf %601, %602 : vector<8x1x16xf32>
    %604 = arith.mulf %598, %598 : vector<8x1x16xf32>
    %605 = arith.subf %603, %604 : vector<8x1x16xf32>
    %cst_384 = arith.constant 0.000000e+00 : f32
    %606 = vector.broadcast %cst_384 : f32 to vector<8x1x16xf32>
    %607 = arith.maximumf %605, %606 : vector<8x1x16xf32>
    %608 = vector.broadcast %598 : vector<8x1x16xf32> to vector<8x16x16xf32>
    %609 = arith.subf %594, %608 : vector<8x16x16xf32>
    %cst_385 = arith.constant 9.99999974E-6 : f32
    %610 = vector.broadcast %cst_385 : f32 to vector<8x1x16xf32>
    %611 = arith.addf %607, %610 : vector<8x1x16xf32>
    %612 = math.rsqrt %611 : vector<8x1x16xf32>
    %613 = vector.broadcast %612 : vector<8x1x16xf32> to vector<8x16x16xf32>
    %614 = arith.mulf %609, %613 : vector<8x16x16xf32>
    %c0_386 = arith.constant 0 : index
    %c0_387 = arith.constant 0 : index
    %615 = vector.load %arg22[%c0_386, %c0_387] : memref<16x1xf32, #tpu.memory_space<vmem>>, vector<16x1xf32>
    %616 = vector.shape_cast %615 : vector<16x1xf32> to vector<1x16x1xf32>
    %617 = vector.broadcast %616 : vector<1x16x1xf32> to vector<8x16x16xf32>
    %618 = arith.mulf %614, %617 : vector<8x16x16xf32>
    %c0_388 = arith.constant 0 : index
    %c0_389 = arith.constant 0 : index
    %619 = vector.load %arg23[%c0_388, %c0_389] : memref<16x1xf32, #tpu.memory_space<vmem>>, vector<16x1xf32>
    %620 = vector.shape_cast %619 : vector<16x1xf32> to vector<1x16x1xf32>
    %621 = vector.broadcast %620 : vector<1x16x1xf32> to vector<8x16x16xf32>
    %622 = arith.addf %618, %621 : vector<8x16x16xf32>
    %623 = vector.shape_cast %622 : vector<8x16x16xf32> to vector<128x16xf32>
    %624 = arith.truncf %623 : vector<128x16xf32> to vector<128x16xbf16>
    %c0_390 = arith.constant 0 : index
    %c0_391 = arith.constant 0 : index
    %625 = vector.load %arg24[%c0_390, %c0_391] : memref<16x128xbf16, #tpu.memory_space<vmem>>, vector<16x128xbf16>
    %cst_392 = arith.constant dense<0.000000e+00> : vector<128x128xf32>
    %626 = tpu.matmul %624, %625, %cst_392 {dimension_numbers = #tpu.dot_dimension_numbers<[1], [0], [0], [1], [0, 0, 1, 1], [], []>} : vector<128x16xbf16>, vector<16x128xbf16>, vector<128x128xf32> -> vector<128x128xf32>
    %c0_393 = arith.constant 0 : index
    %c0_394 = arith.constant 0 : index
    %627 = vector.load %arg25[%c0_393, %c0_394] : memref<1x128xf32, #tpu.memory_space<vmem>>, vector<1x128xf32>
    %628 = vector.shape_cast %627 : vector<1x128xf32> to vector<128xf32>
    %629 = vector.shape_cast %628 : vector<128xf32> to vector<1x128xf32>
    %630 = vector.broadcast %629 : vector<1x128xf32> to vector<128x128xf32>
    %631 = arith.addf %626, %630 : vector<128x128xf32>
    %632 = vector.shape_cast %631 : vector<128x128xf32> to vector<8x16x128xf32>
    %c1_395 = arith.constant 1 : index
    %c1_396 = arith.constant 1 : index
    %c0_397 = arith.constant 0 : index
    %633 = vector.load %arg34[%c1_395, %c1_396, %c0_397] : memref<10x18x128xf32, #tpu.memory_space<vmem>>, vector<8x16x128xf32>
    tpu.vector_store %arg34[%c1_395, %c1_396, %c0_397], %632 {strides = array<i32>} : memref<10x18x128xf32, #tpu.memory_space<vmem>>, vector<8x16x128xf32>,
    %cst_398 = arith.constant 0.000000e+00 : f32
    %634 = vector.broadcast %cst_398 : f32 to vector<8x16x128xf32>
    %c0_399 = arith.constant 0 : index
    %c0_400 = arith.constant 0 : index
    %c0_401 = arith.constant 0 : index
    %635 = vector.load %arg34[%c0_399, %c0_400, %c0_401] : memref<10x18x128xf32, #tpu.memory_space<vmem>>, vector<8x16x128xf32>
    %c0_402 = arith.constant 0 : index
    %c0_403 = arith.constant 0 : index
    %636 = vector.load %arg26[%c0_402, %c0_403] : memref<9x128xf32, #tpu.memory_space<vmem>>, vector<1x128xf32>
    %637 = vector.shape_cast %636 : vector<1x128xf32> to vector<128xf32>
    %638 = vector.shape_cast %637 : vector<128xf32> to vector<1x1x128xf32>
    %639 = vector.broadcast %638 : vector<1x1x128xf32> to vector<8x16x128xf32>
    %640 = arith.mulf %635, %639 : vector<8x16x128xf32>
    %641 = arith.addf %634, %640 : vector<8x16x128xf32>
    %c0_404 = arith.constant 0 : index
    %c1_405 = arith.constant 1 : index
    %c0_406 = arith.constant 0 : index
    %642 = vector.load %arg34[%c0_404, %c1_405, %c0_406] : memref<10x18x128xf32, #tpu.memory_space<vmem>>, vector<8x16x128xf32>
    %c1_407 = arith.constant 1 : index
    %c0_408 = arith.constant 0 : index
    %643 = vector.load %arg26[%c1_407, %c0_408] : memref<9x128xf32, #tpu.memory_space<vmem>>, vector<1x128xf32>
    %644 = vector.shape_cast %643 : vector<1x128xf32> to vector<128xf32>
    %645 = vector.shape_cast %644 : vector<128xf32> to vector<1x1x128xf32>
    %646 = vector.broadcast %645 : vector<1x1x128xf32> to vector<8x16x128xf32>
    %647 = arith.mulf %642, %646 : vector<8x16x128xf32>
    %648 = arith.addf %641, %647 : vector<8x16x128xf32>
    %c0_409 = arith.constant 0 : index
    %c2_410 = arith.constant 2 : index
    %c0_411 = arith.constant 0 : index
    %649 = vector.load %arg34[%c0_409, %c2_410, %c0_411] : memref<10x18x128xf32, #tpu.memory_space<vmem>>, vector<8x16x128xf32>
    %c2_412 = arith.constant 2 : index
    %c0_413 = arith.constant 0 : index
    %650 = vector.load %arg26[%c2_412, %c0_413] : memref<9x128xf32, #tpu.memory_space<vmem>>, vector<1x128xf32>
    %651 = vector.shape_cast %650 : vector<1x128xf32> to vector<128xf32>
    %652 = vector.shape_cast %651 : vector<128xf32> to vector<1x1x128xf32>
    %653 = vector.broadcast %652 : vector<1x1x128xf32> to vector<8x16x128xf32>
    %654 = arith.mulf %649, %653 : vector<8x16x128xf32>
    %655 = arith.addf %648, %654 : vector<8x16x128xf32>
    %c1_414 = arith.constant 1 : index
    %c0_415 = arith.constant 0 : index
    %c0_416 = arith.constant 0 : index
    %656 = vector.load %arg34[%c1_414, %c0_415, %c0_416] : memref<10x18x128xf32, #tpu.memory_space<vmem>>, vector<8x16x128xf32>
    %c3_417 = arith.constant 3 : index
    %c0_418 = arith.constant 0 : index
    %657 = vector.load %arg26[%c3_417, %c0_418] : memref<9x128xf32, #tpu.memory_space<vmem>>, vector<1x128xf32>
    %658 = vector.shape_cast %657 : vector<1x128xf32> to vector<128xf32>
    %659 = vector.shape_cast %658 : vector<128xf32> to vector<1x1x128xf32>
    %660 = vector.broadcast %659 : vector<1x1x128xf32> to vector<8x16x128xf32>
    %661 = arith.mulf %656, %660 : vector<8x16x128xf32>
    %662 = arith.addf %655, %661 : vector<8x16x128xf32>
    %c1_419 = arith.constant 1 : index
    %c1_420 = arith.constant 1 : index
    %c0_421 = arith.constant 0 : index
    %663 = vector.load %arg34[%c1_419, %c1_420, %c0_421] : memref<10x18x128xf32, #tpu.memory_space<vmem>>, vector<8x16x128xf32>
    %c4_422 = arith.constant 4 : index
    %c0_423 = arith.constant 0 : index
    %664 = vector.load %arg26[%c4_422, %c0_423] : memref<9x128xf32, #tpu.memory_space<vmem>>, vector<1x128xf32>
    %665 = vector.shape_cast %664 : vector<1x128xf32> to vector<128xf32>
    %666 = vector.shape_cast %665 : vector<128xf32> to vector<1x1x128xf32>
    %667 = vector.broadcast %666 : vector<1x1x128xf32> to vector<8x16x128xf32>
    %668 = arith.mulf %663, %667 : vector<8x16x128xf32>
    %669 = arith.addf %662, %668 : vector<8x16x128xf32>
    %c1_424 = arith.constant 1 : index
    %c2_425 = arith.constant 2 : index
    %c0_426 = arith.constant 0 : index
    %670 = vector.load %arg34[%c1_424, %c2_425, %c0_426] : memref<10x18x128xf32, #tpu.memory_space<vmem>>, vector<8x16x128xf32>
    %c5_427 = arith.constant 5 : index
    %c0_428 = arith.constant 0 : index
    %671 = vector.load %arg26[%c5_427, %c0_428] : memref<9x128xf32, #tpu.memory_space<vmem>>, vector<1x128xf32>
    %672 = vector.shape_cast %671 : vector<1x128xf32> to vector<128xf32>
    %673 = vector.shape_cast %672 : vector<128xf32> to vector<1x1x128xf32>
    %674 = vector.broadcast %673 : vector<1x1x128xf32> to vector<8x16x128xf32>
    %675 = arith.mulf %670, %674 : vector<8x16x128xf32>
    %676 = arith.addf %669, %675 : vector<8x16x128xf32>
    %c2_429 = arith.constant 2 : index
    %c0_430 = arith.constant 0 : index
    %c0_431 = arith.constant 0 : index
    %677 = vector.load %arg34[%c2_429, %c0_430, %c0_431] : memref<10x18x128xf32, #tpu.memory_space<vmem>>, vector<8x16x128xf32>
    %c6_432 = arith.constant 6 : index
    %c0_433 = arith.constant 0 : index
    %678 = vector.load %arg26[%c6_432, %c0_433] : memref<9x128xf32, #tpu.memory_space<vmem>>, vector<1x128xf32>
    %679 = vector.shape_cast %678 : vector<1x128xf32> to vector<128xf32>
    %680 = vector.shape_cast %679 : vector<128xf32> to vector<1x1x128xf32>
    %681 = vector.broadcast %680 : vector<1x1x128xf32> to vector<8x16x128xf32>
    %682 = arith.mulf %677, %681 : vector<8x16x128xf32>
    %683 = arith.addf %676, %682 : vector<8x16x128xf32>
    %c2_434 = arith.constant 2 : index
    %c1_435 = arith.constant 1 : index
    %c0_436 = arith.constant 0 : index
    %684 = vector.load %arg34[%c2_434, %c1_435, %c0_436] : memref<10x18x128xf32, #tpu.memory_space<vmem>>, vector<8x16x128xf32>
    %c7_437 = arith.constant 7 : index
    %c0_438 = arith.constant 0 : index
    %685 = vector.load %arg26[%c7_437, %c0_438] : memref<9x128xf32, #tpu.memory_space<vmem>>, vector<1x128xf32>
    %686 = vector.shape_cast %685 : vector<1x128xf32> to vector<128xf32>
    %687 = vector.shape_cast %686 : vector<128xf32> to vector<1x1x128xf32>
    %688 = vector.broadcast %687 : vector<1x1x128xf32> to vector<8x16x128xf32>
    %689 = arith.mulf %684, %688 : vector<8x16x128xf32>
    %690 = arith.addf %683, %689 : vector<8x16x128xf32>
    %c2_439 = arith.constant 2 : index
    %c2_440 = arith.constant 2 : index
    %c0_441 = arith.constant 0 : index
    %691 = vector.load %arg34[%c2_439, %c2_440, %c0_441] : memref<10x18x128xf32, #tpu.memory_space<vmem>>, vector<8x16x128xf32>
    %c8_442 = arith.constant 8 : index
    %c0_443 = arith.constant 0 : index
    %692 = vector.load %arg26[%c8_442, %c0_443] : memref<9x128xf32, #tpu.memory_space<vmem>>, vector<1x128xf32>
    %693 = vector.shape_cast %692 : vector<1x128xf32> to vector<128xf32>
    %694 = vector.shape_cast %693 : vector<128xf32> to vector<1x1x128xf32>
    %695 = vector.broadcast %694 : vector<1x1x128xf32> to vector<8x16x128xf32>
    %696 = arith.mulf %691, %695 : vector<8x16x128xf32>
    %697 = arith.addf %690, %696 : vector<8x16x128xf32>
    %c0_444 = arith.constant 0 : index
    %c0_445 = arith.constant 0 : index
    %698 = vector.load %arg27[%c0_444, %c0_445] : memref<1x128xf32, #tpu.memory_space<vmem>>, vector<1x128xf32>
    %699 = vector.shape_cast %698 : vector<1x128xf32> to vector<128xf32>
    %700 = vector.shape_cast %699 : vector<128xf32> to vector<1x1x128xf32>
    %701 = vector.broadcast %700 : vector<1x1x128xf32> to vector<8x16x128xf32>
    %702 = arith.addf %697, %701 : vector<8x16x128xf32>
    %703 = vector.extract_strided_slice %702 {offsets = [0, 0, 0], sizes = [8, 16, 64], strides = [1, 1, 1]} : vector<8x16x128xf32> to vector<8x16x64xf32>
    %cst_446 = arith.constant 5.000000e-01 : f32
    %704 = vector.broadcast %cst_446 : f32 to vector<8x16x64xf32>
    %705 = arith.mulf %704, %703 : vector<8x16x64xf32>
    %cst_447 = arith.constant 0.707106769 : f32
    %706 = vector.broadcast %cst_447 : f32 to vector<8x16x64xf32>
    %707 = arith.mulf %703, %706 : vector<8x16x64xf32>
    %cst_448 = arith.constant 0.000000e+00 : f32
    %708 = vector.broadcast %cst_448 : f32 to vector<8x16x64xf32>
    %709 = arith.cmpf olt, %707, %708 : vector<8x16x64xf32>
    %cst_449 = arith.constant -1.000000e+00 : f32
    %cst_450 = arith.constant 1.000000e+00 : f32
    %710 = vector.broadcast %cst_449 : f32 to vector<8x16x64xf32>
    %711 = vector.broadcast %cst_450 : f32 to vector<8x16x64xf32>
    %712 = arith.select %709, %710, %711 : vector<8x16x64xi1>, vector<8x16x64xf32>
    %713 = math.absf %707 : vector<8x16x64xf32>
    %cst_451 = arith.constant 0.327591091 : f32
    %714 = vector.broadcast %cst_451 : f32 to vector<8x16x64xf32>
    %715 = arith.mulf %714, %713 : vector<8x16x64xf32>
    %cst_452 = arith.constant 1.000000e+00 : f32
    %716 = vector.broadcast %cst_452 : f32 to vector<8x16x64xf32>
    %717 = arith.addf %716, %715 : vector<8x16x64xf32>
    %cst_453 = arith.constant 1.000000e+00 : f32
    %718 = vector.broadcast %cst_453 : f32 to vector<8x16x64xf32>
    %719 = arith.divf %718, %717 : vector<8x16x64xf32>
    %cst_454 = arith.constant 1.06140542 : f32
    %720 = vector.broadcast %cst_454 : f32 to vector<8x16x64xf32>
    %721 = arith.mulf %720, %719 : vector<8x16x64xf32>
    %cst_455 = arith.constant -1.45315206 : f32
    %722 = vector.broadcast %cst_455 : f32 to vector<8x16x64xf32>
    %723 = arith.addf %721, %722 : vector<8x16x64xf32>
    %724 = arith.mulf %723, %719 : vector<8x16x64xf32>
    %cst_456 = arith.constant 1.42141378 : f32
    %725 = vector.broadcast %cst_456 : f32 to vector<8x16x64xf32>
    %726 = arith.addf %724, %725 : vector<8x16x64xf32>
    %727 = arith.mulf %726, %719 : vector<8x16x64xf32>
    %cst_457 = arith.constant -0.284496725 : f32
    %728 = vector.broadcast %cst_457 : f32 to vector<8x16x64xf32>
    %729 = arith.addf %727, %728 : vector<8x16x64xf32>
    %730 = arith.mulf %729, %719 : vector<8x16x64xf32>
    %cst_458 = arith.constant 0.254829586 : f32
    %731 = vector.broadcast %cst_458 : f32 to vector<8x16x64xf32>
    %732 = arith.addf %730, %731 : vector<8x16x64xf32>
    %733 = arith.mulf %732, %719 : vector<8x16x64xf32>
    %cst_459 = arith.constant 0.000000e+00 : f32
    %734 = vector.broadcast %cst_459 : f32 to vector<8x16x64xf32>
    %735 = arith.subf %734, %713 : vector<8x16x64xf32>
    %736 = arith.mulf %735, %713 : vector<8x16x64xf32>
    %737 = math.exp %736 : vector<8x16x64xf32>
    %738 = arith.mulf %733, %737 : vector<8x16x64xf32>
    %cst_460 = arith.constant 1.000000e+00 : f32
    %739 = vector.broadcast %cst_460 : f32 to vector<8x16x64xf32>
    %740 = arith.subf %739, %738 : vector<8x16x64xf32>
    %741 = arith.mulf %712, %740 : vector<8x16x64xf32>
    %cst_461 = arith.constant 1.000000e+00 : f32
    %742 = vector.broadcast %cst_461 : f32 to vector<8x16x64xf32>
    %743 = arith.addf %742, %741 : vector<8x16x64xf32>
    %744 = arith.mulf %705, %743 : vector<8x16x64xf32>
    %745 = vector.extract_strided_slice %702 {offsets = [0, 0, 64], sizes = [8, 16, 64], strides = [1, 1, 1]} : vector<8x16x128xf32> to vector<8x16x64xf32>
    %746 = arith.mulf %744, %745 : vector<8x16x64xf32>
    %747 = vector.shape_cast %746 : vector<8x16x64xf32> to vector<128x64xf32>
    %748 = arith.truncf %747 : vector<128x64xf32> to vector<128x64xbf16>
    %c0_462 = arith.constant 0 : index
    %c0_463 = arith.constant 0 : index
    %749 = vector.load %arg28[%c0_462, %c0_463] : memref<64x16xbf16, #tpu.memory_space<vmem>>, vector<64x16xbf16>
    %cst_464 = arith.constant dense<0.000000e+00> : vector<128x16xf32>
    %750 = tpu.matmul %748, %749, %cst_464 {dimension_numbers = #tpu.dot_dimension_numbers<[1], [0], [0], [1], [0, 0, 1, 1], [], []>} : vector<128x64xbf16>, vector<64x16xbf16>, vector<128x16xf32> -> vector<128x16xf32>
    %c0_465 = arith.constant 0 : index
    %c0_466 = arith.constant 0 : index
    %751 = vector.load %arg29[%c0_465, %c0_466] : memref<1x16xf32, #tpu.memory_space<vmem>>, vector<1x16xf32>
    %752 = vector.shape_cast %751 : vector<1x16xf32> to vector<16xf32>
    %753 = vector.shape_cast %752 : vector<16xf32> to vector<1x16xf32>
    %754 = vector.broadcast %753 : vector<1x16xf32> to vector<128x16xf32>
    %755 = arith.addf %750, %754 : vector<128x16xf32>
    %756 = vector.shape_cast %755 : vector<128x16xf32> to vector<8x16x16xf32>
    %c0_467 = arith.constant 0 : index
    %c0_468 = arith.constant 0 : index
    %c0_469 = arith.constant 0 : index
    %757 = vector.load %arg31[%c0_467, %c0_468, %c0_469] : memref<8x16x16xf32, #tpu.memory_space<vmem>>, vector<8x16x16xf32>
    %758 = arith.addf %757, %756 : vector<8x16x16xf32>
    %c0_470 = arith.constant 0 : index
    %c0_471 = arith.constant 0 : index
    %c0_472 = arith.constant 0 : index
    %c0_473 = arith.constant 0 : index
    %759 = vector.load %arg30[%c0_470, %c0_471, %c0_472, %c0_473] : memref<1x8x16x16xf32, #tpu.memory_space<vmem>>, vector<1x8x16x16xf32>
    %760 = vector.shape_cast %759 : vector<1x8x16x16xf32> to vector<8x16x16xf32>
    %761 = vector.shape_cast %758 : vector<8x16x16xf32> to vector<1x8x16x16xf32>
    tpu.vector_store %arg30[%c0_470, %c0_471, %c0_472, %c0_473], %761 {strides = array<i32>} : memref<1x8x16x16xf32, #tpu.memory_space<vmem>>, vector<1x8x16x16xf32>,
    return
  }
  func.func @transform_0(%arg0: i32) -> (i32, i32, i32, i32) {
    %c0_i32 = arith.constant 0 : i32
    %c0_i32_0 = arith.constant 0 : i32
    %c0_i32_1 = arith.constant 0 : i32
    %c0_i32_2 = arith.constant 0 : i32
    return %arg0, %c0_i32, %c0_i32_0, %c0_i32_1 : i32, i32, i32, i32
  }
  func.func @transform_1(%arg0: i32) -> (i32, i32) {
    %c0_i32 = arith.constant 0 : i32
    %c0_i32_0 = arith.constant 0 : i32
    %c0_i32_1 = arith.constant 0 : i32
    return %c0_i32, %c0_i32_0 : i32, i32
  }
  func.func @transform_2(%arg0: i32) -> (i32, i32) {
    %c0_i32 = arith.constant 0 : i32
    %c0_i32_0 = arith.constant 0 : i32
    %c0_i32_1 = arith.constant 0 : i32
    return %c0_i32, %c0_i32_0 : i32, i32
  }
  func.func @transform_3(%arg0: i32) -> (i32, i32) {
    %c0_i32 = arith.constant 0 : i32
    %c0_i32_0 = arith.constant 0 : i32
    %c0_i32_1 = arith.constant 0 : i32
    return %c0_i32, %c0_i32_0 : i32, i32
  }
  func.func @transform_4(%arg0: i32) -> (i32, i32) {
    %c0_i32 = arith.constant 0 : i32
    %c0_i32_0 = arith.constant 0 : i32
    %c0_i32_1 = arith.constant 0 : i32
    return %c0_i32, %c0_i32_0 : i32, i32
  }
  func.func @transform_5(%arg0: i32) -> (i32, i32) {
    %c0_i32 = arith.constant 0 : i32
    %c0_i32_0 = arith.constant 0 : i32
    %c0_i32_1 = arith.constant 0 : i32
    return %c0_i32, %c0_i32_0 : i32, i32
  }
  func.func @transform_6(%arg0: i32) -> (i32, i32) {
    %c0_i32 = arith.constant 0 : i32
    %c0_i32_0 = arith.constant 0 : i32
    %c0_i32_1 = arith.constant 0 : i32
    return %c0_i32, %c0_i32_0 : i32, i32
  }
  func.func @transform_7(%arg0: i32) -> (i32, i32) {
    %c0_i32 = arith.constant 0 : i32
    %c0_i32_0 = arith.constant 0 : i32
    %c0_i32_1 = arith.constant 0 : i32
    return %c0_i32, %c0_i32_0 : i32, i32
  }
  func.func @transform_8(%arg0: i32) -> (i32, i32) {
    %c0_i32 = arith.constant 0 : i32
    %c0_i32_0 = arith.constant 0 : i32
    %c0_i32_1 = arith.constant 0 : i32
    return %c0_i32, %c0_i32_0 : i32, i32
  }
  func.func @transform_9(%arg0: i32) -> (i32, i32) {
    %c0_i32 = arith.constant 0 : i32
    %c0_i32_0 = arith.constant 0 : i32
    %c0_i32_1 = arith.constant 0 : i32
    return %c0_i32, %c0_i32_0 : i32, i32
  }
  func.func @transform_10(%arg0: i32) -> (i32, i32) {
    %c0_i32 = arith.constant 0 : i32
    %c0_i32_0 = arith.constant 0 : i32
    %c0_i32_1 = arith.constant 0 : i32
    return %c0_i32, %c0_i32_0 : i32, i32
  }
  func.func @transform_11(%arg0: i32) -> (i32, i32) {
    %c0_i32 = arith.constant 0 : i32
    %c0_i32_0 = arith.constant 0 : i32
    %c0_i32_1 = arith.constant 0 : i32
    return %c0_i32, %c0_i32_0 : i32, i32
  }
  func.func @transform_12(%arg0: i32) -> (i32, i32) {
    %c0_i32 = arith.constant 0 : i32
    %c0_i32_0 = arith.constant 0 : i32
    %c0_i32_1 = arith.constant 0 : i32
    return %c0_i32, %c0_i32_0 : i32, i32
  }
  func.func @transform_13(%arg0: i32) -> (i32, i32) {
    %c0_i32 = arith.constant 0 : i32
    %c0_i32_0 = arith.constant 0 : i32
    %c0_i32_1 = arith.constant 0 : i32
    return %c0_i32, %c0_i32_0 : i32, i32
  }
  func.func @transform_14(%arg0: i32) -> (i32, i32) {
    %c0_i32 = arith.constant 0 : i32
    %c0_i32_0 = arith.constant 0 : i32
    %c0_i32_1 = arith.constant 0 : i32
    return %c0_i32, %c0_i32_0 : i32, i32
  }
  func.func @transform_15(%arg0: i32) -> (i32, i32) {
    %c0_i32 = arith.constant 0 : i32
    %c0_i32_0 = arith.constant 0 : i32
    %c0_i32_1 = arith.constant 0 : i32
    return %c0_i32, %c0_i32_0 : i32, i32
  }
  func.func @transform_16(%arg0: i32) -> (i32, i32) {
    %c0_i32 = arith.constant 0 : i32
    %c0_i32_0 = arith.constant 0 : i32
    %c0_i32_1 = arith.constant 0 : i32
    return %c0_i32, %c0_i32_0 : i32, i32
  }
  func.func @transform_17(%arg0: i32) -> (i32, i32) {
    %c0_i32 = arith.constant 0 : i32
    %c0_i32_0 = arith.constant 0 : i32
    %c0_i32_1 = arith.constant 0 : i32
    return %c0_i32, %c0_i32_0 : i32, i32
  }
  func.func @transform_18(%arg0: i32) -> (i32, i32) {
    %c0_i32 = arith.constant 0 : i32
    %c0_i32_0 = arith.constant 0 : i32
    %c0_i32_1 = arith.constant 0 : i32
    return %c0_i32, %c0_i32_0 : i32, i32
  }
  func.func @transform_19(%arg0: i32) -> (i32, i32) {
    %c0_i32 = arith.constant 0 : i32
    %c0_i32_0 = arith.constant 0 : i32
    %c0_i32_1 = arith.constant 0 : i32
    return %c0_i32, %c0_i32_0 : i32, i32
  }
  func.func @transform_20(%arg0: i32) -> (i32, i32) {
    %c0_i32 = arith.constant 0 : i32
    %c0_i32_0 = arith.constant 0 : i32
    %c0_i32_1 = arith.constant 0 : i32
    return %c0_i32, %c0_i32_0 : i32, i32
  }
  func.func @transform_21(%arg0: i32) -> (i32, i32) {
    %c0_i32 = arith.constant 0 : i32
    %c0_i32_0 = arith.constant 0 : i32
    %c0_i32_1 = arith.constant 0 : i32
    return %c0_i32, %c0_i32_0 : i32, i32
  }
  func.func @transform_22(%arg0: i32) -> (i32, i32) {
    %c0_i32 = arith.constant 0 : i32
    %c0_i32_0 = arith.constant 0 : i32
    %c0_i32_1 = arith.constant 0 : i32
    return %c0_i32, %c0_i32_0 : i32, i32
  }
  func.func @transform_23(%arg0: i32) -> (i32, i32) {
    %c0_i32 = arith.constant 0 : i32
    %c0_i32_0 = arith.constant 0 : i32
    %c0_i32_1 = arith.constant 0 : i32
    return %c0_i32, %c0_i32_0 : i32, i32
  }
  func.func @transform_24(%arg0: i32) -> (i32, i32) {
    %c0_i32 = arith.constant 0 : i32
    %c0_i32_0 = arith.constant 0 : i32
    %c0_i32_1 = arith.constant 0 : i32
    return %c0_i32, %c0_i32_0 : i32, i32
  }
  func.func @transform_25(%arg0: i32) -> (i32, i32) {
    %c0_i32 = arith.constant 0 : i32
    %c0_i32_0 = arith.constant 0 : i32
    %c0_i32_1 = arith.constant 0 : i32
    return %c0_i32, %c0_i32_0 : i32, i32
  }
  func.func @transform_26(%arg0: i32) -> (i32, i32) {
    %c0_i32 = arith.constant 0 : i32
    %c0_i32_0 = arith.constant 0 : i32
    %c0_i32_1 = arith.constant 0 : i32
    return %c0_i32, %c0_i32_0 : i32, i32
  }
  func.func @transform_27(%arg0: i32) -> (i32, i32) {
    %c0_i32 = arith.constant 0 : i32
    %c0_i32_0 = arith.constant 0 : i32
    %c0_i32_1 = arith.constant 0 : i32
    return %c0_i32, %c0_i32_0 : i32, i32
  }
  func.func @transform_28(%arg0: i32) -> (i32, i32) {
    %c0_i32 = arith.constant 0 : i32
    %c0_i32_0 = arith.constant 0 : i32
    %c0_i32_1 = arith.constant 0 : i32
    return %c0_i32, %c0_i32_0 : i32, i32
  }
  func.func @transform_29(%arg0: i32) -> (i32, i32, i32, i32) {
    %c0_i32 = arith.constant 0 : i32
    %c0_i32_0 = arith.constant 0 : i32
    %c0_i32_1 = arith.constant 0 : i32
    %c0_i32_2 = arith.constant 0 : i32
    return %arg0, %c0_i32, %c0_i32_0, %c0_i32_1 : i32, i32, i32, i32
  }
}

</mosaic_0001>

<llo_original>
// kernel: tpu_custom_call.1
$region0: #{tpu_custom_call.1}
  #allocation0 [shape = 'u32[]', space=smem, size = 0x4, offset = 0x4, fixed_abs, tag = 'smem constant byte address 0x4 - core index']
  #allocation1 [shape = 'u32[144,128]{1,0:T(1,128)}', space=vmem, size = 0x12000, scoped, tag = 'internal scratch']
  #allocation2 [shape = 'f32[8,16,16]{2,1,0:T(8,128)}', space=vmem, size = 0x10000, scoped, tag = 'scratch operand']
  #allocation3 [shape = 'f32[10,18,32]{2,1,0:T(8,128)}', space=vmem, size = 0x1e000, scoped, tag = 'scratch operand']
  #allocation4 [shape = 'f32[14,22,16]{2,1,0:T(8,128)}', space=vmem, size = 0x2a000, scoped, tag = 'scratch operand']
  #allocation5 [shape = 'f32[10,18,128]{2,1,0:T(8,128)}', space=vmem, size = 0x1e000, scoped, tag = 'scratch operand']
  %s0 = inlined_call_operand.smem [shape: u32[30], index: -1, kind: input, shape index: {}]
  %s1 = sld [smem:[%s0]]
  %s2 = scalar_lea.smem %s0, 1
  %s3 = sld [smem:[%s2]]
  %s4 = scalar_lea.smem %s0, 2
  %s5 = sld [smem:[%s4]]
  %s6 = scalar_lea.smem %s0, 3
  %s7 = sld [smem:[%s6]]
  %s8 = scalar_lea.smem %s0, 4
  %s9 = sld [smem:[%s8]]
  %s10 = scalar_lea.smem %s0, 5
  %s11 = sld [smem:[%s10]]
  %s12 = scalar_lea.smem %s0, 6
  %s13 = sld [smem:[%s12]]
  %s14 = scalar_lea.smem %s0, 7
  %s15 = sld [smem:[%s14]]
  %s16 = scalar_lea.smem %s0, 8
  %s17 = sld [smem:[%s16]]
  %s18 = scalar_lea.smem %s0, 9
  %s19 = sld [smem:[%s18]]
  %s20 = scalar_lea.smem %s0, 10
  %s21 = sld [smem:[%s20]]
  %s22 = scalar_lea.smem %s0, 11
  %s23 = sld [smem:[%s22]]
  %s24 = scalar_lea.smem %s0, 12
  %s25 = sld [smem:[%s24]]
  %s26 = scalar_lea.smem %s0, 13
  %s27 = sld [smem:[%s26]]
  %s28 = scalar_lea.smem %s0, 14
  %s29 = sld [smem:[%s28]]
  %s30 = scalar_lea.smem %s0, 15
  %s31 = sld [smem:[%s30]]
  %s32 = scalar_lea.smem %s0, 16
  %s33 = sld [smem:[%s32]]
  %s34 = scalar_lea.smem %s0, 17
  %s35 = sld [smem:[%s34]]
  %s36 = scalar_lea.smem %s0, 18
  %s37 = sld [smem:[%s36]]
  %s38 = scalar_lea.smem %s0, 19
  %s39 = sld [smem:[%s38]]
  %s40 = scalar_lea.smem %s0, 20
  %s41 = sld [smem:[%s40]]
  %s42 = scalar_lea.smem %s0, 21
  %s43 = sld [smem:[%s42]]
  %s44 = scalar_lea.smem %s0, 22
  %s45 = sld [smem:[%s44]]
  %s46 = scalar_lea.smem %s0, 23
  %s47 = sld [smem:[%s46]]
  %s48 = scalar_lea.smem %s0, 24
  %s49 = sld [smem:[%s48]]
  %s50 = scalar_lea.smem %s0, 25
  %s51 = sld [smem:[%s50]]
  %s52 = scalar_lea.smem %s0, 26
  %s53 = sld [smem:[%s52]]
  %s54 = scalar_lea.smem %s0, 27
  %s55 = sld [smem:[%s54]]
  %s56 = scalar_lea.smem %s0, 28
  %s57 = sld [smem:[%s56]]
  %s58 = scalar_lea.smem %s0, 29
  %s59 = sld [smem:[%s58]]
  %s60 = sld [smem:[#allocation0]]
  $region153: #{tpu_custom_call.1} parent=0
    _
  %s62 = ssub.s32 1, %s60
  %s63 = scalar_select 0, %s62, %s60
  $region1: #{tpu_custom_call.1} parent=0
    #allocation6 [shape = 'u8[131072]{0}', space=vmem, size = 0x20000, scoped, tag = 'input window, operand 0']
    #allocation7 [shape = 's32[2]{0}', space=sflag, size = 0x8, scoped, tag = 'scoped memory for tpu_custom_call.1']
    #allocation8 [shape = 's32[2]{0}', space=sflag, size = 0x8, scoped, tag = 'scoped memory for tpu_custom_call.1']
    #allocation9 [shape = 'u8[131072]{0}', space=vmem, size = 0x20000, scoped, tag = 'output window, operand 0']
    %64 = vsyncpa [#allocation7], 0
    %s65 = scalar_lea.sflag [#allocation7], 1
    %66 = vsyncpa %s65, 0
    %67 = vsyncpa [#allocation8], 0
    %s68 = scalar_lea.sflag [#allocation8], 1
    %69 = vsyncpa %s68, 0
    loop: start=0, step=1, limit=4
    $region2: #{tpu_custom_call.1} parent=1 // loop_pre_header
      _
    $region3: #{tpu_custom_call.1} parent=1 // loop_header
      %s71 = sphi 0, %s75
      %p72 = scmp.ge.s32.totalorder %s71, 4
      %s81 = sphi 0, %s83
      %s84 = sphi 0, %s81
      %s85 = sphi 0, %s84
      %s101 = sphi 0, %s85
      %s105 = sphi 0, %s105
      %s107 = sphi 0, %s105
      %s108 = sphi 0, %s107
      %s122 = sphi 0, %s108
      %s126 = sphi 0, %s126
      %s128 = sphi 0, %s126
      %s129 = sphi 0, %s128
      %s143 = sphi 0, %s129
      %s147 = sphi 0, %s147
      %s149 = sphi 0, %s147
      %s150 = sphi 0, %s149
      %s164 = sphi 0, %s150
      %s168 = sphi 0, %s168
      %s170 = sphi 0, %s168
      %s171 = sphi 0, %s170
      %s185 = sphi 0, %s171
      %s189 = sphi 0, %s189
      %s191 = sphi 0, %s189
      %s192 = sphi 0, %s191
      %s206 = sphi 0, %s192
      %s210 = sphi 0, %s210
      %s212 = sphi 0, %s210
      %s213 = sphi 0, %s212
      %s227 = sphi 0, %s213
      %s231 = sphi 0, %s231
      %s233 = sphi 0, %s231
      %s234 = sphi 0, %s233
      %s248 = sphi 0, %s234
      %s252 = sphi 0, %s252
      %s254 = sphi 0, %s252
      %s255 = sphi 0, %s254
      %s269 = sphi 0, %s255
      %s273 = sphi 0, %s273
      %s275 = sphi 0, %s273
      %s276 = sphi 0, %s275
      %s290 = sphi 0, %s276
      %s294 = sphi 0, %s294
      %s296 = sphi 0, %s294
      %s297 = sphi 0, %s296
      %s311 = sphi 0, %s297
      %s315 = sphi 0, %s315
      %s317 = sphi 0, %s315
      %s318 = sphi 0, %s317
      %s332 = sphi 0, %s318
      %s336 = sphi 0, %s336
      %s338 = sphi 0, %s336
      %s339 = sphi 0, %s338
      %s353 = sphi 0, %s339
      %s357 = sphi 0, %s357
      %s359 = sphi 0, %s357
      %s360 = sphi 0, %s359
      %s374 = sphi 0, %s360
      %s378 = sphi 0, %s378
      %s380 = sphi 0, %s378
      %s381 = sphi 0, %s380
      %s395 = sphi 0, %s381
      %s399 = sphi 0, %s399
      %s401 = sphi 0, %s399
      %s402 = sphi 0, %s401
      %s416 = sphi 0, %s402
      %s420 = sphi 0, %s420
      %s422 = sphi 0, %s420
      %s423 = sphi 0, %s422
      %s437 = sphi 0, %s423
      %s441 = sphi 0, %s441
      %s443 = sphi 0, %s441
      %s444 = sphi 0, %s443
      %s458 = sphi 0, %s444
      %s462 = sphi 0, %s462
      %s464 = sphi 0, %s462
      %s465 = sphi 0, %s464
      %s479 = sphi 0, %s465
      %s483 = sphi 0, %s483
      %s485 = sphi 0, %s483
      %s486 = sphi 0, %s485
      %s500 = sphi 0, %s486
      %s504 = sphi 0, %s504
      %s506 = sphi 0, %s504
      %s507 = sphi 0, %s506
      %s521 = sphi 0, %s507
      %s525 = sphi 0, %s525
      %s527 = sphi 0, %s525
      %s528 = sphi 0, %s527
      %s542 = sphi 0, %s528
      %s546 = sphi 0, %s546
      %s548 = sphi 0, %s546
      %s549 = sphi 0, %s548
      %s563 = sphi 0, %s549
      %s567 = sphi 0, %s567
      %s569 = sphi 0, %s567
      %s570 = sphi 0, %s569
      %s584 = sphi 0, %s570
      %s588 = sphi 0, %s588
      %s590 = sphi 0, %s588
      %s591 = sphi 0, %s590
      %s605 = sphi 0, %s591
      %s609 = sphi 0, %s609
      %s611 = sphi 0, %s609
      %s612 = sphi 0, %s611
      %s626 = sphi 0, %s612
      %s630 = sphi 0, %s630
      %s632 = sphi 0, %s630
      %s633 = sphi 0, %s632
      %s647 = sphi 0, %s633
      %s651 = sphi 0, %s651
      %s653 = sphi 0, %s651
      %s654 = sphi 0, %s653
      %s668 = sphi 0, %s654
      %s672 = sphi 0, %s672
      %s674 = sphi 0, %s672
      %s675 = sphi 0, %s674
      %s689 = sphi 0, %s675
      %s695 = sphi 0, %s697
      %s698 = sphi 0, %s695
      %s699 = sphi 0, %s698
      %s715 = sphi 0, %s699
    $region4: #{tpu_custom_call.1} parent=1 // loop_header_branch
      %74 = sbr.rel (%p72) target = $region8
    $region5: #{tpu_custom_call.1} parent=1 // loop_body
      %s76 = ssub.s32 %s71, 1
      %s77 = ssub.s32 %s71, 2
      %s78 = sadd.s32 %s71, 1
      %s79 = ssub.s32 %s71, %s78
      %p80 = scmp.eq.s32.totalorder %s79, 0
      %s82 = sadd.s32 %s81, 1
      %s83 = scalar_select %p80, %s81, %s82
      %p86 = pneg %p80
      %p87 = scmp.eq.s32.totalorder %s71, 1
      %p88 = por %p86, %p87
      %p89 = scmp.ne.s32.totalorder %s81, %s84
      %p90 = scmp.eq.s32.totalorder %s71, 0
      %p91 = por %p89, %p90
      %p92 = scmp.ne.s32.totalorder %s81, %s84
      %p93 = scmp.eq.s32.totalorder %s76, 1
      %p94 = por %p92, %p93
      %p95 = scmp.ne.s32.totalorder %s84, %s85
      %p96 = scmp.eq.s32.totalorder %s76, 0
      %p97 = por %p95, %p96
      %p98 = scmp.ne.s32.totalorder %s84, %s85
      %p99 = scmp.eq.s32.totalorder %s77, 1
      %p100 = por %p98, %p99
      %p102 = scmp.ne.s32.totalorder %s85, %s101
      %p103 = scmp.eq.s32.totalorder %s77, 0
      %p104 = por %p102, %p103
      %s106 = sadd.s32 %s105, 1
      %p109 = scmp.eq.s32.totalorder %s71, 1
      %p110 = scmp.ne.s32.totalorder %s105, %s107
      %p111 = scmp.eq.s32.totalorder %s71, 0
      %p112 = por %p110, %p111
      %p113 = scmp.ne.s32.totalorder %s105, %s107
      %p114 = scmp.eq.s32.totalorder %s76, 1
      %p115 = por %p113, %p114
      %p116 = scmp.ne.s32.totalorder %s107, %s108
      %p117 = scmp.eq.s32.totalorder %s76, 0
      %p118 = por %p116, %p117
      %p119 = scmp.ne.s32.totalorder %s107, %s108
      %p120 = scmp.eq.s32.totalorder %s77, 1
      %p121 = por %p119, %p120
      %p123 = scmp.ne.s32.totalorder %s108, %s122
      %p124 = scmp.eq.s32.totalorder %s77, 0
      %p125 = por %p123, %p124
      %s127 = sadd.s32 %s126, 1
      %p130 = scmp.eq.s32.totalorder %s71, 1
      %p131 = scmp.ne.s32.totalorder %s126, %s128
      %p132 = scmp.eq.s32.totalorder %s71, 0
      %p133 = por %p131, %p132
      %p134 = scmp.ne.s32.totalorder %s126, %s128
      %p135 = scmp.eq.s32.totalorder %s76, 1
      %p136 = por %p134, %p135
      %p137 = scmp.ne.s32.totalorder %s128, %s129
      %p138 = scmp.eq.s32.totalorder %s76, 0
      %p139 = por %p137, %p138
      %p140 = scmp.ne.s32.totalorder %s128, %s129
      %p141 = scmp.eq.s32.totalorder %s77, 1
      %p142 = por %p140, %p141
      %p144 = scmp.ne.s32.totalorder %s129, %s143
      %p145 = scmp.eq.s32.totalorder %s77, 0
      %p146 = por %p144, %p145
      %s148 = sadd.s32 %s147, 1
      %p151 = scmp.eq.s32.totalorder %s71, 1
      %p152 = scmp.ne.s32.totalorder %s147, %s149
      %p153 = scmp.eq.s32.totalorder %s71, 0
      %p154 = por %p152, %p153
      %p155 = scmp.ne.s32.totalorder %s147, %s149
      %p156 = scmp.eq.s32.totalorder %s76, 1
      %p157 = por %p155, %p156
      %p158 = scmp.ne.s32.totalorder %s149, %s150
      %p159 = scmp.eq.s32.totalorder %s76, 0
      %p160 = por %p158, %p159
      %p161 = scmp.ne.s32.totalorder %s149, %s150
      %p162 = scmp.eq.s32.totalorder %s77, 1
      %p163 = por %p161, %p162
      %p165 = scmp.ne.s32.totalorder %s150, %s164
      %p166 = scmp.eq.s32.totalorder %s77, 0
      %p167 = por %p165, %p166
      %s169 = sadd.s32 %s168, 1
      %p172 = scmp.eq.s32.totalorder %s71, 1
      %p173 = scmp.ne.s32.totalorder %s168, %s170
      %p174 = scmp.eq.s32.totalorder %s71, 0
      %p175 = por %p173, %p174
      %p176 = scmp.ne.s32.totalorder %s168, %s170
      %p177 = scmp.eq.s32.totalorder %s76, 1
      %p178 = por %p176, %p177
      %p179 = scmp.ne.s32.totalorder %s170, %s171
      %p180 = scmp.eq.s32.totalorder %s76, 0
      %p181 = por %p179, %p180
      %p182 = scmp.ne.s32.totalorder %s170, %s171
      %p183 = scmp.eq.s32.totalorder %s77, 1
      %p184 = por %p182, %p183
      %p186 = scmp.ne.s32.totalorder %s171, %s185
      %p187 = scmp.eq.s32.totalorder %s77, 0
      %p188 = por %p186, %p187
      %s190 = sadd.s32 %s189, 1
      %p193 = scmp.eq.s32.totalorder %s71, 1
      %p194 = scmp.ne.s32.totalorder %s189, %s191
      %p195 = scmp.eq.s32.totalorder %s71, 0
      %p196 = por %p194, %p195
      %p197 = scmp.ne.s32.totalorder %s189, %s191
      %p198 = scmp.eq.s32.totalorder %s76, 1
      %p199 = por %p197, %p198
      %p200 = scmp.ne.s32.totalorder %s191, %s192
      %p201 = scmp.eq.s32.totalorder %s76, 0
      %p202 = por %p200, %p201
      %p203 = scmp.ne.s32.totalorder %s191, %s192
      %p204 = scmp.eq.s32.totalorder %s77, 1
      %p205 = por %p203, %p204
      %p207 = scmp.ne.s32.totalorder %s192, %s206
      %p208 = scmp.eq.s32.totalorder %s77, 0
      %p209 = por %p207, %p208
      %s211 = sadd.s32 %s210, 1
      %p214 = scmp.eq.s32.totalorder %s71, 1
      %p215 = scmp.ne.s32.totalorder %s210, %s212
      %p216 = scmp.eq.s32.totalorder %s71, 0
      %p217 = por %p215, %p216
      %p218 = scmp.ne.s32.totalorder %s210, %s212
      %p219 = scmp.eq.s32.totalorder %s76, 1
      %p220 = por %p218, %p219
      %p221 = scmp.ne.s32.totalorder %s212, %s213
      %p222 = scmp.eq.s32.totalorder %s76, 0
      %p223 = por %p221, %p222
      %p224 = scmp.ne.s32.totalorder %s212, %s213
      %p225 = scmp.eq.s32.totalorder %s77, 1
      %p226 = por %p224, %p225
      %p228 = scmp.ne.s32.totalorder %s213, %s227
      %p229 = scmp.eq.s32.totalorder %s77, 0
      %p230 = por %p228, %p229
      %s232 = sadd.s32 %s231, 1
      %p235 = scmp.eq.s32.totalorder %s71, 1
      %p236 = scmp.ne.s32.totalorder %s231, %s233
      %p237 = scmp.eq.s32.totalorder %s71, 0
      %p238 = por %p236, %p237
      %p239 = scmp.ne.s32.totalorder %s231, %s233
      %p240 = scmp.eq.s32.totalorder %s76, 1
      %p241 = por %p239, %p240
      %p242 = scmp.ne.s32.totalorder %s233, %s234
      %p243 = scmp.eq.s32.totalorder %s76, 0
      %p244 = por %p242, %p243
      %p245 = scmp.ne.s32.totalorder %s233, %s234
      %p246 = scmp.eq.s32.totalorder %s77, 1
      %p247 = por %p245, %p246
      %p249 = scmp.ne.s32.totalorder %s234, %s248
      %p250 = scmp.eq.s32.totalorder %s77, 0
      %p251 = por %p249, %p250
      %s253 = sadd.s32 %s252, 1
      %p256 = scmp.eq.s32.totalorder %s71, 1
      %p257 = scmp.ne.s32.totalorder %s252, %s254
      %p258 = scmp.eq.s32.totalorder %s71, 0
      %p259 = por %p257, %p258
      %p260 = scmp.ne.s32.totalorder %s252, %s254
      %p261 = scmp.eq.s32.totalorder %s76, 1
      %p262 = por %p260, %p261
      %p263 = scmp.ne.s32.totalorder %s254, %s255
      %p264 = scmp.eq.s32.totalorder %s76, 0
      %p265 = por %p263, %p264
      %p266 = scmp.ne.s32.totalorder %s254, %s255
      %p267 = scmp.eq.s32.totalorder %s77, 1
      %p268 = por %p266, %p267
      %p270 = scmp.ne.s32.totalorder %s255, %s269
      %p271 = scmp.eq.s32.totalorder %s77, 0
      %p272 = por %p270, %p271
      %s274 = sadd.s32 %s273, 1
      %p277 = scmp.eq.s32.totalorder %s71, 1
      %p278 = scmp.ne.s32.totalorder %s273, %s275
      %p279 = scmp.eq.s32.totalorder %s71, 0
      %p280 = por %p278, %p279
      %p281 = scmp.ne.s32.totalorder %s273, %s275
      %p282 = scmp.eq.s32.totalorder %s76, 1
      %p283 = por %p281, %p282
      %p284 = scmp.ne.s32.totalorder %s275, %s276
      %p285 = scmp.eq.s32.totalorder %s76, 0
      %p286 = por %p284, %p285
      %p287 = scmp.ne.s32.totalorder %s275, %s276
      %p288 = scmp.eq.s32.totalorder %s77, 1
      %p289 = por %p287, %p288
      %p291 = scmp.ne.s32.totalorder %s276, %s290
      %p292 = scmp.eq.s32.totalorder %s77, 0
      %p293 = por %p291, %p292
      %s295 = sadd.s32 %s294, 1
      %p298 = scmp.eq.s32.totalorder %s71, 1
      %p299 = scmp.ne.s32.totalorder %s294, %s296
      %p300 = scmp.eq.s32.totalorder %s71, 0
      %p301 = por %p299, %p300
      %p302 = scmp.ne.s32.totalorder %s294, %s296
      %p303 = scmp.eq.s32.totalorder %s76, 1
      %p304 = por %p302, %p303
      %p305 = scmp.ne.s32.totalorder %s296, %s297
      %p306 = scmp.eq.s32.totalorder %s76, 0
      %p307 = por %p305, %p306
      %p308 = scmp.ne.s32.totalorder %s296, %s297
      %p309 = scmp.eq.s32.totalorder %s77, 1
      %p310 = por %p308, %p309
      %p312 = scmp.ne.s32.totalorder %s297, %s311
      %p313 = scmp.eq.s32.totalorder %s77, 0
      %p314 = por %p312, %p313
      %s316 = sadd.s32 %s315, 1
      %p319 = scmp.eq.s32.totalorder %s71, 1
      %p320 = scmp.ne.s32.totalorder %s315, %s317
      %p321 = scmp.eq.s32.totalorder %s71, 0
      %p322 = por %p320, %p321
      %p323 = scmp.ne.s32.totalorder %s315, %s317
      %p324 = scmp.eq.s32.totalorder %s76, 1
      %p325 = por %p323, %p324
      %p326 = scmp.ne.s32.totalorder %s317, %s318
      %p327 = scmp.eq.s32.totalorder %s76, 0
      %p328 = por %p326, %p327
      %p329 = scmp.ne.s32.totalorder %s317, %s318
      %p330 = scmp.eq.s32.totalorder %s77, 1
      %p331 = por %p329, %p330
      %p333 = scmp.ne.s32.totalorder %s318, %s332
      %p334 = scmp.eq.s32.totalorder %s77, 0
      %p335 = por %p333, %p334
      %s337 = sadd.s32 %s336, 1
      %p340 = scmp.eq.s32.totalorder %s71, 1
      %p341 = scmp.ne.s32.totalorder %s336, %s338
      %p342 = scmp.eq.s32.totalorder %s71, 0
      %p343 = por %p341, %p342
      %p344 = scmp.ne.s32.totalorder %s336, %s338
      %p345 = scmp.eq.s32.totalorder %s76, 1
      %p346 = por %p344, %p345
      %p347 = scmp.ne.s32.totalorder %s338, %s339
      %p348 = scmp.eq.s32.totalorder %s76, 0
      %p349 = por %p347, %p348
      %p350 = scmp.ne.s32.totalorder %s338, %s339
      %p351 = scmp.eq.s32.totalorder %s77, 1
      %p352 = por %p350, %p351
      %p354 = scmp.ne.s32.totalorder %s339, %s353
      %p355 = scmp.eq.s32.totalorder %s77, 0
      %p356 = por %p354, %p355
      %s358 = sadd.s32 %s357, 1
      %p361 = scmp.eq.s32.totalorder %s71, 1
      %p362 = scmp.ne.s32.totalorder %s357, %s359
      %p363 = scmp.eq.s32.totalorder %s71, 0
      %p364 = por %p362, %p363
      %p365 = scmp.ne.s32.totalorder %s357, %s359
      %p366 = scmp.eq.s32.totalorder %s76, 1
      %p367 = por %p365, %p366
      %p368 = scmp.ne.s32.totalorder %s359, %s360
      %p369 = scmp.eq.s32.totalorder %s76, 0
      %p370 = por %p368, %p369
      %p371 = scmp.ne.s32.totalorder %s359, %s360
      %p372 = scmp.eq.s32.totalorder %s77, 1
      %p373 = por %p371, %p372
      %p375 = scmp.ne.s32.totalorder %s360, %s374
      %p376 = scmp.eq.s32.totalorder %s77, 0
      %p377 = por %p375, %p376
      %s379 = sadd.s32 %s378, 1
      %p382 = scmp.eq.s32.totalorder %s71, 1
      %p383 = scmp.ne.s32.totalorder %s378, %s380
      %p384 = scmp.eq.s32.totalorder %s71, 0
      %p385 = por %p383, %p384
      %p386 = scmp.ne.s32.totalorder %s378, %s380
      %p387 = scmp.eq.s32.totalorder %s76, 1
      %p388 = por %p386, %p387
      %p389 = scmp.ne.s32.totalorder %s380, %s381
      %p390 = scmp.eq.s32.totalorder %s76, 0
      %p391 = por %p389, %p390
      %p392 = scmp.ne.s32.totalorder %s380, %s381
      %p393 = scmp.eq.s32.totalorder %s77, 1
      %p394 = por %p392, %p393
      %p396 = scmp.ne.s32.totalorder %s381, %s395
      %p397 = scmp.eq.s32.totalorder %s77, 0
      %p398 = por %p396, %p397
      %s400 = sadd.s32 %s399, 1
      %p403 = scmp.eq.s32.totalorder %s71, 1
      %p404 = scmp.ne.s32.totalorder %s399, %s401
      %p405 = scmp.eq.s32.totalorder %s71, 0
      %p406 = por %p404, %p405
      %p407 = scmp.ne.s32.totalorder %s399, %s401
      %p408 = scmp.eq.s32.totalorder %s76, 1
      %p409 = por %p407, %p408
      %p410 = scmp.ne.s32.totalorder %s401, %s402
      %p411 = scmp.eq.s32.totalorder %s76, 0
      %p412 = por %p410, %p411
      %p413 = scmp.ne.s32.totalorder %s401, %s402
      %p414 = scmp.eq.s32.totalorder %s77, 1
      %p415 = por %p413, %p414
      %p417 = scmp.ne.s32.totalorder %s402, %s416
      %p418 = scmp.eq.s32.totalorder %s77, 0
      %p419 = por %p417, %p418
      %s421 = sadd.s32 %s420, 1
      %p424 = scmp.eq.s32.totalorder %s71, 1
      %p425 = scmp.ne.s32.totalorder %s420, %s422
      %p426 = scmp.eq.s32.totalorder %s71, 0
      %p427 = por %p425, %p426
      %p428 = scmp.ne.s32.totalorder %s420, %s422
      %p429 = scmp.eq.s32.totalorder %s76, 1
      %p430 = por %p428, %p429
      %p431 = scmp.ne.s32.totalorder %s422, %s423
      %p432 = scmp.eq.s32.totalorder %s76, 0
      %p433 = por %p431, %p432
      %p434 = scmp.ne.s32.totalorder %s422, %s423
      %p435 = scmp.eq.s32.totalorder %s77, 1
      %p436 = por %p434, %p435
      %p438 = scmp.ne.s32.totalorder %s423, %s437
      %p439 = scmp.eq.s32.totalorder %s77, 0
      %p440 = por %p438, %p439
      %s442 = sadd.s32 %s441, 1
      %p445 = scmp.eq.s32.totalorder %s71, 1
      %p446 = scmp.ne.s32.totalorder %s441, %s443
      %p447 = scmp.eq.s32.totalorder %s71, 0
      %p448 = por %p446, %p447
      %p449 = scmp.ne.s32.totalorder %s441, %s443
      %p450 = scmp.eq.s32.totalorder %s76, 1
      %p451 = por %p449, %p450
      %p452 = scmp.ne.s32.totalorder %s443, %s444
      %p453 = scmp.eq.s32.totalorder %s76, 0
      %p454 = por %p452, %p453
      %p455 = scmp.ne.s32.totalorder %s443, %s444
      %p456 = scmp.eq.s32.totalorder %s77, 1
      %p457 = por %p455, %p456
      %p459 = scmp.ne.s32.totalorder %s444, %s458
      %p460 = scmp.eq.s32.totalorder %s77, 0
      %p461 = por %p459, %p460
      %s463 = sadd.s32 %s462, 1
      %p466 = scmp.eq.s32.totalorder %s71, 1
      %p467 = scmp.ne.s32.totalorder %s462, %s464
      %p468 = scmp.eq.s32.totalorder %s71, 0
      %p469 = por %p467, %p468
      %p470 = scmp.ne.s32.totalorder %s462, %s464
      %p471 = scmp.eq.s32.totalorder %s76, 1
      %p472 = por %p470, %p471
      %p473 = scmp.ne.s32.totalorder %s464, %s465
      %p474 = scmp.eq.s32.totalorder %s76, 0
      %p475 = por %p473, %p474
      %p476 = scmp.ne.s32.totalorder %s464, %s465
      %p477 = scmp.eq.s32.totalorder %s77, 1
      %p478 = por %p476, %p477
      %p480 = scmp.ne.s32.totalorder %s465, %s479
      %p481 = scmp.eq.s32.totalorder %s77, 0
      %p482 = por %p480, %p481
      %s484 = sadd.s32 %s483, 1
      %p487 = scmp.eq.s32.totalorder %s71, 1
      %p488 = scmp.ne.s32.totalorder %s483, %s485
      %p489 = scmp.eq.s32.totalorder %s71, 0
      %p490 = por %p488, %p489
      %p491 = scmp.ne.s32.totalorder %s483, %s485
      %p492 = scmp.eq.s32.totalorder %s76, 1
      %p493 = por %p491, %p492
      %p494 = scmp.ne.s32.totalorder %s485, %s486
      %p495 = scmp.eq.s32.totalorder %s76, 0
      %p496 = por %p494, %p495
      %p497 = scmp.ne.s32.totalorder %s485, %s486
      %p498 = scmp.eq.s32.totalorder %s77, 1
      %p499 = por %p497, %p498
      %p501 = scmp.ne.s32.totalorder %s486, %s500
      %p502 = scmp.eq.s32.totalorder %s77, 0
      %p503 = por %p501, %p502
      %s505 = sadd.s32 %s504, 1
      %p508 = scmp.eq.s32.totalorder %s71, 1
      %p509 = scmp.ne.s32.totalorder %s504, %s506
      %p510 = scmp.eq.s32.totalorder %s71, 0
      %p511 = por %p509, %p510
      %p512 = scmp.ne.s32.totalorder %s504, %s506
      %p513 = scmp.eq.s32.totalorder %s76, 1
      %p514 = por %p512, %p513
      %p515 = scmp.ne.s32.totalorder %s506, %s507
      %p516 = scmp.eq.s32.totalorder %s76, 0
      %p517 = por %p515, %p516
      %p518 = scmp.ne.s32.totalorder %s506, %s507
      %p519 = scmp.eq.s32.totalorder %s77, 1
      %p520 = por %p518, %p519
      %p522 = scmp.ne.s32.totalorder %s507, %s521
      %p523 = scmp.eq.s32.totalorder %s77, 0
      %p524 = por %p522, %p523
      %s526 = sadd.s32 %s525, 1
      %p529 = scmp.eq.s32.totalorder %s71, 1
      %p530 = scmp.ne.s32.totalorder %s525, %s527
      %p531 = scmp.eq.s32.totalorder %s71, 0
      %p532 = por %p530, %p531
      %p533 = scmp.ne.s32.totalorder %s525, %s527
      %p534 = scmp.eq.s32.totalorder %s76, 1
      %p535 = por %p533, %p534
      %p536 = scmp.ne.s32.totalorder %s527, %s528
      %p537 = scmp.eq.s32.totalorder %s76, 0
      %p538 = por %p536, %p537
      %p539 = scmp.ne.s32.totalorder %s527, %s528
      %p540 = scmp.eq.s32.totalorder %s77, 1
      %p541 = por %p539, %p540
      %p543 = scmp.ne.s32.totalorder %s528, %s542
      %p544 = scmp.eq.s32.totalorder %s77, 0
      %p545 = por %p543, %p544
      %s547 = sadd.s32 %s546, 1
      %p550 = scmp.eq.s32.totalorder %s71, 1
      %p551 = scmp.ne.s32.totalorder %s546, %s548
      %p552 = scmp.eq.s32.totalorder %s71, 0
      %p553 = por %p551, %p552
      %p554 = scmp.ne.s32.totalorder %s546, %s548
      %p555 = scmp.eq.s32.totalorder %s76, 1
      %p556 = por %p554, %p555
      %p557 = scmp.ne.s32.totalorder %s548, %s549
      %p558 = scmp.eq.s32.totalorder %s76, 0
      %p559 = por %p557, %p558
      %p560 = scmp.ne.s32.totalorder %s548, %s549
      %p561 = scmp.eq.s32.totalorder %s77, 1
      %p562 = por %p560, %p561
      %p564 = scmp.ne.s32.totalorder %s549, %s563
      %p565 = scmp.eq.s32.totalorder %s77, 0
      %p566 = por %p564, %p565
      %s568 = sadd.s32 %s567, 1
      %p571 = scmp.eq.s32.totalorder %s71, 1
      %p572 = scmp.ne.s32.totalorder %s567, %s569
      %p573 = scmp.eq.s32.totalorder %s71, 0
      %p574 = por %p572, %p573
      %p575 = scmp.ne.s32.totalorder %s567, %s569
      %p576 = scmp.eq.s32.totalorder %s76, 1
      %p577 = por %p575, %p576
      %p578 = scmp.ne.s32.totalorder %s569, %s570
      %p579 = scmp.eq.s32.totalorder %s76, 0
      %p580 = por %p578, %p579
      %p581 = scmp.ne.s32.totalorder %s569, %s570
      %p582 = scmp.eq.s32.totalorder %s77, 1
      %p583 = por %p581, %p582
      %p585 = scmp.ne.s32.totalorder %s570, %s584
      %p586 = scmp.eq.s32.totalorder %s77, 0
      %p587 = por %p585, %p586
      %s589 = sadd.s32 %s588, 1
      %p592 = scmp.eq.s32.totalorder %s71, 1
      %p593 = scmp.ne.s32.totalorder %s588, %s590
      %p594 = scmp.eq.s32.totalorder %s71, 0
      %p595 = por %p593, %p594
      %p596 = scmp.ne.s32.totalorder %s588, %s590
      %p597 = scmp.eq.s32.totalorder %s76, 1
      %p598 = por %p596, %p597
      %p599 = scmp.ne.s32.totalorder %s590, %s591
      %p600 = scmp.eq.s32.totalorder %s76, 0
      %p601 = por %p599, %p600
      %p602 = scmp.ne.s32.totalorder %s590, %s591
      %p603 = scmp.eq.s32.totalorder %s77, 1
      %p604 = por %p602, %p603
      %p606 = scmp.ne.s32.totalorder %s591, %s605
      %p607 = scmp.eq.s32.totalorder %s77, 0
      %p608 = por %p606, %p607
      %s610 = sadd.s32 %s609, 1
      %p613 = scmp.eq.s32.totalorder %s71, 1
      %p614 = scmp.ne.s32.totalorder %s609, %s611
      %p615 = scmp.eq.s32.totalorder %s71, 0
      %p616 = por %p614, %p615
      %p617 = scmp.ne.s32.totalorder %s609, %s611
      %p618 = scmp.eq.s32.totalorder %s76, 1
      %p619 = por %p617, %p618
      %p620 = scmp.ne.s32.totalorder %s611, %s612
      %p621 = scmp.eq.s32.totalorder %s76, 0
      %p622 = por %p620, %p621
      %p623 = scmp.ne.s32.totalorder %s611, %s612
      %p624 = scmp.eq.s32.totalorder %s77, 1
      %p625 = por %p623, %p624
      %p627 = scmp.ne.s32.totalorder %s612, %s626
      %p628 = scmp.eq.s32.totalorder %s77, 0
      %p629 = por %p627, %p628
      %s631 = sadd.s32 %s630, 1
      %p634 = scmp.eq.s32.totalorder %s71, 1
      %p635 = scmp.ne.s32.totalorder %s630, %s632
      %p636 = scmp.eq.s32.totalorder %s71, 0
      %p637 = por %p635, %p636
      %p638 = scmp.ne.s32.totalorder %s630, %s632
      %p639 = scmp.eq.s32.totalorder %s76, 1
      %p640 = por %p638, %p639
      %p641 = scmp.ne.s32.totalorder %s632, %s633
      %p642 = scmp.eq.s32.totalorder %s76, 0
      %p643 = por %p641, %p642
      %p644 = scmp.ne.s32.totalorder %s632, %s633
      %p645 = scmp.eq.s32.totalorder %s77, 1
      %p646 = por %p644, %p645
      %p648 = scmp.ne.s32.totalorder %s633, %s647
      %p649 = scmp.eq.s32.totalorder %s77, 0
      %p650 = por %p648, %p649
      %s652 = sadd.s32 %s651, 1
      %p655 = scmp.eq.s32.totalorder %s71, 1
      %p656 = scmp.ne.s32.totalorder %s651, %s653
      %p657 = scmp.eq.s32.totalorder %s71, 0
      %p658 = por %p656, %p657
      %p659 = scmp.ne.s32.totalorder %s651, %s653
      %p660 = scmp.eq.s32.totalorder %s76, 1
      %p661 = por %p659, %p660
      %p662 = scmp.ne.s32.totalorder %s653, %s654
      %p663 = scmp.eq.s32.totalorder %s76, 0
      %p664 = por %p662, %p663
      %p665 = scmp.ne.s32.totalorder %s653, %s654
      %p666 = scmp.eq.s32.totalorder %s77, 1
      %p667 = por %p665, %p666
      %p669 = scmp.ne.s32.totalorder %s654, %s668
      %p670 = scmp.eq.s32.totalorder %s77, 0
      %p671 = por %p669, %p670
      %s673 = sadd.s32 %s672, 1
      %p676 = scmp.eq.s32.totalorder %s71, 1
      %p677 = scmp.ne.s32.totalorder %s672, %s674
      %p678 = scmp.eq.s32.totalorder %s71, 0
      %p679 = por %p677, %p678
      %p680 = scmp.ne.s32.totalorder %s672, %s674
      %p681 = scmp.eq.s32.totalorder %s76, 1
      %p682 = por %p680, %p681
      %p683 = scmp.ne.s32.totalorder %s674, %s675
      %p684 = scmp.eq.s32.totalorder %s76, 0
      %p685 = por %p683, %p684
      %p686 = scmp.ne.s32.totalorder %s674, %s675
      %p687 = scmp.eq.s32.totalorder %s77, 1
      %p688 = por %p686, %p687
      %p690 = scmp.ne.s32.totalorder %s675, %s689
      %p691 = scmp.eq.s32.totalorder %s77, 0
      %p692 = por %p690, %p691
      %s693 = ssub.s32 %s71, %s78
      %p694 = scmp.eq.s32.totalorder %s693, 0
      %s696 = sadd.s32 %s695, 1
      %s697 = scalar_select %p694, %s695, %s696
      %p700 = pneg %p694
      %p701 = scmp.eq.s32.totalorder %s71, 1
      %p702 = por %p700, %p701
      %p703 = scmp.ne.s32.totalorder %s695, %s698
      %p704 = scmp.eq.s32.totalorder %s71, 0
      %p705 = por %p703, %p704
      %p706 = scmp.ne.s32.totalorder %s695, %s698
      %p707 = scmp.eq.s32.totalorder %s76, 1
      %p708 = por %p706, %p707
      %p709 = scmp.ne.s32.totalorder %s698, %s699
      %p710 = scmp.eq.s32.totalorder %s76, 0
      %p711 = por %p709, %p710
      %p712 = scmp.ne.s32.totalorder %s698, %s699
      %p713 = scmp.eq.s32.totalorder %s77, 1
      %p714 = por %p712, %p713
      %p716 = scmp.ne.s32.totalorder %s699, %s715
      %p717 = scmp.eq.s32.totalorder %s77, 0
      %p718 = por %p716, %p717
      %p719 = scmp.le.s32.totalorder 1, %s71
      %p720 = scmp.lt.s32.totalorder %s71, 3
      %p721 = pnand %p719, %p720
      %p722 = pneg %p721
      // Predicated region
      $region9: #{tpu_custom_call.1} parent=5 // pred_check
        _
      $region10: #{tpu_custom_call.1} parent=5 // pred_check_branch
        %724 = sbr.rel (%p721) target = $region12
      $region11: #{tpu_custom_call.1} parent=5 // pred_region
        %s725 = ssub.s32 %s71, 1
        // Predicated region
        $region13: #{tpu_custom_call.1} parent=11 // pred_check
          %p726 = pneg %p118
        $region14: #{tpu_custom_call.1} parent=11 // pred_check_branch
          %728 = sbr.rel (%p726) target = $region16
        $region15: #{tpu_custom_call.1} parent=11 // pred_region
          _
        $region16: #{tpu_custom_call.1} parent=11 // pred_fallthru
          _
        // Predicated region
        $region17: #{tpu_custom_call.1} parent=11 // pred_check
          %p729 = pneg %p139
        $region18: #{tpu_custom_call.1} parent=11 // pred_check_branch
          %731 = sbr.rel (%p729) target = $region20
        $region19: #{tpu_custom_call.1} parent=11 // pred_region
          _
        $region20: #{tpu_custom_call.1} parent=11 // pred_fallthru
          _
        // Predicated region
        $region21: #{tpu_custom_call.1} parent=11 // pred_check
          %p732 = pneg %p160
        $region22: #{tpu_custom_call.1} parent=11 // pred_check_branch
          %734 = sbr.rel (%p732) target = $region24
        $region23: #{tpu_custom_call.1} parent=11 // pred_region
          _
        $region24: #{tpu_custom_call.1} parent=11 // pred_fallthru
          _
        // Predicated region
        $region25: #{tpu_custom_call.1} parent=11 // pred_check
          %p735 = pneg %p181
        $region26: #{tpu_custom_call.1} parent=11 // pred_check_branch
          %737 = sbr.rel (%p735) target = $region28
        $region27: #{tpu_custom_call.1} parent=11 // pred_region
          _
        $region28: #{tpu_custom_call.1} parent=11 // pred_fallthru
          _
        // Predicated region
        $region29: #{tpu_custom_call.1} parent=11 // pred_check
          %p738 = pneg %p202
        $region30: #{tpu_custom_call.1} parent=11 // pred_check_branch
          %740 = sbr.rel (%p738) target = $region32
        $region31: #{tpu_custom_call.1} parent=11 // pred_region
          _
        $region32: #{tpu_custom_call.1} parent=11 // pred_fallthru
          _
        // Predicated region
        $region33: #{tpu_custom_call.1} parent=11 // pred_check
          %p741 = pneg %p223
        $region34: #{tpu_custom_call.1} parent=11 // pred_check_branch
          %743 = sbr.rel (%p741) target = $region36
        $region35: #{tpu_custom_call.1} parent=11 // pred_region
          _
        $region36: #{tpu_custom_call.1} parent=11 // pred_fallthru
          _
        // Predicated region
        $region37: #{tpu_custom_call.1} parent=11 // pred_check
          %p744 = pneg %p244
        $region38: #{tpu_custom_call.1} parent=11 // pred_check_branch
          %746 = sbr.rel (%p744) target = $region40
        $region39: #{tpu_custom_call.1} parent=11 // pred_region
          _
        $region40: #{tpu_custom_call.1} parent=11 // pred_fallthru
          _
        // Predicated region
        $region41: #{tpu_custom_call.1} parent=11 // pred_check
          %p747 = pneg %p265
        $region42: #{tpu_custom_call.1} parent=11 // pred_check_branch
          %749 = sbr.rel (%p747) target = $region44
        $region43: #{tpu_custom_call.1} parent=11 // pred_region
          _
        $region44: #{tpu_custom_call.1} parent=11 // pred_fallthru
          _
        // Predicated region
        $region45: #{tpu_custom_call.1} parent=11 // pred_check
          %p750 = pneg %p286
        $region46: #{tpu_custom_call.1} parent=11 // pred_check_branch
          %752 = sbr.rel (%p750) target = $region48
        $region47: #{tpu_custom_call.1} parent=11 // pred_region
          _
        $region48: #{tpu_custom_call.1} parent=11 // pred_fallthru
          _
        // Predicated region
        $region49: #{tpu_custom_call.1} parent=11 // pred_check
          %p753 = pneg %p307
        $region50: #{tpu_custom_call.1} parent=11 // pred_check_branch
          %755 = sbr.rel (%p753) target = $region52
        $region51: #{tpu_custom_call.1} parent=11 // pred_region
          _
        $region52: #{tpu_custom_call.1} parent=11 // pred_fallthru
          _
        // Predicated region
        $region53: #{tpu_custom_call.1} parent=11 // pred_check
          %p756 = pneg %p328
        $region54: #{tpu_custom_call.1} parent=11 // pred_check_branch
          %758 = sbr.rel (%p756) target = $region56
        $region55: #{tpu_custom_call.1} parent=11 // pred_region
          _
        $region56: #{tpu_custom_call.1} parent=11 // pred_fallthru
          _
        // Predicated region
        $region57: #{tpu_custom_call.1} parent=11 // pred_check
          %p759 = pneg %p349
        $region58: #{tpu_custom_call.1} parent=11 // pred_check_branch
          %761 = sbr.rel (%p759) target = $region60
        $region59: #{tpu_custom_call.1} parent=11 // pred_region
          _
        $region60: #{tpu_custom_call.1} parent=11 // pred_fallthru
          _
        // Predicated region
        $region61: #{tpu_custom_call.1} parent=11 // pred_check
          %p762 = pneg %p370
        $region62: #{tpu_custom_call.1} parent=11 // pred_check_branch
          %764 = sbr.rel (%p762) target = $region64
        $region63: #{tpu_custom_call.1} parent=11 // pred_region
          _
        $region64: #{tpu_custom_call.1} parent=11 // pred_fallthru
          _
        // Predicated region
        $region65: #{tpu_custom_call.1} parent=11 // pred_check
          %p765 = pneg %p391
        $region66: #{tpu_custom_call.1} parent=11 // pred_check_branch
          %767 = sbr.rel (%p765) target = $region68
        $region67: #{tpu_custom_call.1} parent=11 // pred_region
          _
        $region68: #{tpu_custom_call.1} parent=11 // pred_fallthru
          _
        // Predicated region
        $region69: #{tpu_custom_call.1} parent=11 // pred_check
          %p768 = pneg %p412
        $region70: #{tpu_custom_call.1} parent=11 // pred_check_branch
          %770 = sbr.rel (%p768) target = $region72
        $region71: #{tpu_custom_call.1} parent=11 // pred_region
          _
        $region72: #{tpu_custom_call.1} parent=11 // pred_fallthru
          _
        // Predicated region
        $region73: #{tpu_custom_call.1} parent=11 // pred_check
          %p771 = pneg %p433
        $region74: #{tpu_custom_call.1} parent=11 // pred_check_branch
          %773 = sbr.rel (%p771) target = $region76
        $region75: #{tpu_custom_call.1} parent=11 // pred_region
          _
        $region76: #{tpu_custom_call.1} parent=11 // pred_fallthru
          _
        // Predicated region
        $region77: #{tpu_custom_call.1} parent=11 // pred_check
          %p774 = pneg %p454
        $region78: #{tpu_custom_call.1} parent=11 // pred_check_branch
          %776 = sbr.rel (%p774) target = $region80
        $region79: #{tpu_custom_call.1} parent=11 // pred_region
          _
        $region80: #{tpu_custom_call.1} parent=11 // pred_fallthru
          _
        // Predicated region
        $region81: #{tpu_custom_call.1} parent=11 // pred_check
          %p777 = pneg %p475
        $region82: #{tpu_custom_call.1} parent=11 // pred_check_branch
          %779 = sbr.rel (%p777) target = $region84
        $region83: #{tpu_custom_call.1} parent=11 // pred_region
          _
        $region84: #{tpu_custom_call.1} parent=11 // pred_fallthru
          _
        // Predicated region
        $region85: #{tpu_custom_call.1} parent=11 // pred_check
          %p780 = pneg %p496
        $region86: #{tpu_custom_call.1} parent=11 // pred_check_branch
          %782 = sbr.rel (%p780) target = $region88
        $region87: #{tpu_custom_call.1} parent=11 // pred_region
          _
        $region88: #{tpu_custom_call.1} parent=11 // pred_fallthru
          _
        // Predicated region
        $region89: #{tpu_custom_call.1} parent=11 // pred_check
          %p783 = pneg %p517
        $region90: #{tpu_custom_call.1} parent=11 // pred_check_branch
          %785 = sbr.rel (%p783) target = $region92
        $region91: #{tpu_custom_call.1} parent=11 // pred_region
          _
        $region92: #{tpu_custom_call.1} parent=11 // pred_fallthru
          _
        // Predicated region
        $region93: #{tpu_custom_call.1} parent=11 // pred_check
          %p786 = pneg %p538
        $region94: #{tpu_custom_call.1} parent=11 // pred_check_branch
          %788 = sbr.rel (%p786) target = $region96
        $region95: #{tpu_custom_call.1} parent=11 // pred_region
          _
        $region96: #{tpu_custom_call.1} parent=11 // pred_fallthru
          _
        // Predicated region
        $region97: #{tpu_custom_call.1} parent=11 // pred_check
          %p789 = pneg %p559
        $region98: #{tpu_custom_call.1} parent=11 // pred_check_branch
          %791 = sbr.rel (%p789) target = $region100
        $region99: #{tpu_custom_call.1} parent=11 // pred_region
          _
        $region100: #{tpu_custom_call.1} parent=11 // pred_fallthru
          _
        // Predicated region
        $region101: #{tpu_custom_call.1} parent=11 // pred_check
          %p792 = pneg %p580
        $region102: #{tpu_custom_call.1} parent=11 // pred_check_branch
          %794 = sbr.rel (%p792) target = $region104
        $region103: #{tpu_custom_call.1} parent=11 // pred_region
          _
        $region104: #{tpu_custom_call.1} parent=11 // pred_fallthru
          _
        // Predicated region
        $region105: #{tpu_custom_call.1} parent=11 // pred_check
          %p795 = pneg %p601
        $region106: #{tpu_custom_call.1} parent=11 // pred_check_branch
          %797 = sbr.rel (%p795) target = $region108
        $region107: #{tpu_custom_call.1} parent=11 // pred_region
          _
        $region108: #{tpu_custom_call.1} parent=11 // pred_fallthru
          _
        // Predicated region
        $region109: #{tpu_custom_call.1} parent=11 // pred_check
          %p798 = pneg %p622
        $region110: #{tpu_custom_call.1} parent=11 // pred_check_branch
          %800 = sbr.rel (%p798) target = $region112
        $region111: #{tpu_custom_call.1} parent=11 // pred_region
          _
        $region112: #{tpu_custom_call.1} parent=11 // pred_fallthru
          _
        // Predicated region
        $region113: #{tpu_custom_call.1} parent=11 // pred_check
          %p801 = pneg %p643
        $region114: #{tpu_custom_call.1} parent=11 // pred_check_branch
          %803 = sbr.rel (%p801) target = $region116
        $region115: #{tpu_custom_call.1} parent=11 // pred_region
          _
        $region116: #{tpu_custom_call.1} parent=11 // pred_fallthru
          _
        // Predicated region
        $region117: #{tpu_custom_call.1} parent=11 // pred_check
          %p804 = pneg %p664
        $region118: #{tpu_custom_call.1} parent=11 // pred_check_branch
          %806 = sbr.rel (%p804) target = $region120
        $region119: #{tpu_custom_call.1} parent=11 // pred_region
          _
        $region120: #{tpu_custom_call.1} parent=11 // pred_fallthru
          _
        // Predicated region
        $region121: #{tpu_custom_call.1} parent=11 // pred_check
          %p807 = pneg %p685
        $region122: #{tpu_custom_call.1} parent=11 // pred_check_branch
          %809 = sbr.rel (%p807) target = $region124
        $region123: #{tpu_custom_call.1} parent=11 // pred_region
          _
        $region124: #{tpu_custom_call.1} parent=11 // pred_fallthru
          _
      $region12: #{tpu_custom_call.1} parent=5 // pred_fallthru
        _
      %p810 = scmp.lt.s32.totalorder %s71, 2
      // Predicated region
      $region125: #{tpu_custom_call.1} parent=5 // pred_check
        %p811 = pneg %p810
      $region126: #{tpu_custom_call.1} parent=5 // pred_check_branch
        %813 = sbr.rel (%p811) target = $region128
      $region127: #{tpu_custom_call.1} parent=5 // pred_region
        // Predicated region
        $region129: #{tpu_custom_call.1} parent=127 // pred_check
          %p814 = pneg %p91
        $region130: #{tpu_custom_call.1} parent=127 // pred_check_branch
          %816 = sbr.rel (%p814) target = $region132
        $region131: #{tpu_custom_call.1} parent=127 // pred_region
          %s817 = sand.u32 %s81, 1
          %s818 = scalar_lea.sflag [#allocation7], %s817
          %s819 = sand.u32 %s81, 1
          %s820 = smul.addr %s819, 128
          %s821 = scalar_lea.vmem [#allocation6], %s820
          %s823 = ssub.s32 2048, 2048
          %824 = vsyncadd %s818, %s823
          %s825 = smul.addr %s71, 16
          %s826 = smul.addr %s825, 128
          %s827 = scalar_lea.hbm %s1, %s826
          %s828 = sshll.u32 %s821, 4
          %s829 = int_to_ptr.vmem [resolvable:$true] %s828
          %834 = dma.hbm_to_vmem [thread:$0]  %s827, 2048, %s829, %s818, 128, 128, 8
        $region132: #{tpu_custom_call.1} parent=127 // pred_fallthru
          _
      $region128: #{tpu_custom_call.1} parent=5 // pred_fallthru
        _
      %p835 = scmp.le.s32.totalorder 1, %s71
      %p836 = scmp.lt.s32.totalorder %s71, 3
      %p837 = pnand %p835, %p836
      %p838 = pneg %p837
      // Predicated region
      $region133: #{tpu_custom_call.1} parent=5 // pred_check
        _
      $region134: #{tpu_custom_call.1} parent=5 // pred_check_branch
        %840 = sbr.rel (%p837) target = $region136
      $region135: #{tpu_custom_call.1} parent=5 // pred_region
        %s841 = ssub.s32 %s71, 1
        %s842 = sand.u32 %s84, 1
        %s843 = scalar_lea.sflag [#allocation7], %s842
        %s844 = sand.u32 %s84, 1
        %s845 = smul.addr %s844, 128
        %s846 = scalar_lea.vmem [#allocation6], %s845
        // Predicated region
        $region137: #{tpu_custom_call.1} parent=135 // pred_check
          %p847 = pneg %p97
        $region138: #{tpu_custom_call.1} parent=135 // pred_check_branch
          %849 = sbr.rel (%p847) target = $region140
        $region139: #{tpu_custom_call.1} parent=135 // pred_region
          %850 = dma.done %s843, 2048
        $region140: #{tpu_custom_call.1} parent=135 // pred_fallthru
          _
        %s851 = sand.u32 %s84, 1
        %s852 = scalar_lea.sflag [#allocation7], %s851
        %s853 = sand.u32 %s84, 1
        %s854 = smul.addr %s853, 128
        %s855 = scalar_lea.vmem [#allocation6], %s854
        %p856 = pneg %p97
        %p857 = pneg %p94
        %p858 = pneg %p118
        %p859 = pneg %p115
        %p860 = pneg %p139
        %p861 = pneg %p136
        %p862 = pneg %p160
        %p863 = pneg %p157
        %p864 = pneg %p181
        %p865 = pneg %p178
        %p866 = pneg %p202
        %p867 = pneg %p199
        %p868 = pneg %p223
        %p869 = pneg %p220
        %p870 = pneg %p244
        %p871 = pneg %p241
        %p872 = pneg %p265
        %p873 = pneg %p262
        %p874 = pneg %p286
        %p875 = pneg %p283
        %p876 = pneg %p307
        %p877 = pneg %p304
        %p878 = pneg %p328
        %p879 = pneg %p325
        %p880 = pneg %p349
        %p881 = pneg %p346
        %p882 = pneg %p370
        %p883 = pneg %p367
        %p884 = pneg %p391
        %p885 = pneg %p388
        %p886 = pneg %p412
        %p887 = pneg %p409
        %p888 = pneg %p433
        %p889 = pneg %p430
        %p890 = pneg %p454
        %p891 = pneg %p451
        %p892 = pneg %p475
        %p893 = pneg %p472
        %p894 = pneg %p496
        %p895 = pneg %p493
        %p896 = pneg %p517
        %p897 = pneg %p514
        %p898 = pneg %p538
        %p899 = pneg %p535
        %p900 = pneg %p559
        %p901 = pneg %p556
        %p902 = pneg %p580
        %p903 = pneg %p577
        %p904 = pneg %p601
        %p905 = pneg %p598
        %p906 = pneg %p622
        %p907 = pneg %p619
        %p908 = pneg %p643
        %p909 = pneg %p640
        %p910 = pneg %p664
        %p911 = pneg %p661
        %p912 = pneg %p685
        %p913 = pneg %p682
        %p914 = pneg %p711
        %p915 = pneg %p708
        %s916 = sand.u32 %s698, 1
        %s917 = scalar_lea.sflag [#allocation8], %s916
        %s918 = sand.u32 %s698, 1
        %s919 = smul.addr %s918, 128
        %s920 = scalar_lea.vmem [#allocation9], %s919
        %vm922 = vcmask 261120
        %923 = vst.msk [vmem:[#allocation3] sm:$0xff] %vm922, 0.0
        %924 = vst.msk [vmem:[#allocation3 + $0x8] sm:$0xff] %vm922, 0.0
        %vm925 = vcmask 254976
        %926 = vst.msk [vmem:[#allocation3 + $0x10] sm:$0x3] %vm925, 0.0
        %s927 = scalar_lea.vmem [#allocation3], 216
        %928 = vst.msk [vmem:[%s927] sm:$0xff] %vm922, 0.0
        %929 = vst.msk [vmem:[%s927 + $0x8] sm:$0xff] %vm922, 0.0
        %930 = vst.msk [vmem:[%s927 + $0x10] sm:$0x3] %vm925, 0.0
        %vm931 = vcmask 253952
        %932 = vst.msk [vmem:[#allocation3] sm:$0x1] %vm931, 0.0
        %933 = vst.msk [vmem:[#allocation3 + $0x18] sm:$0x1] %vm931, 0.0
        %934 = vst.msk [vmem:[#allocation3 + $0x30] sm:$0x1] %vm931, 0.0
        %935 = vst.msk [vmem:[#allocation3 + $0x48] sm:$0x1] %vm931, 0.0
        %936 = vst.msk [vmem:[#allocation3 + $0x60] sm:$0x1] %vm931, 0.0
        %937 = vst.msk [vmem:[#allocation3 + $0x78] sm:$0x1] %vm931, 0.0
        %938 = vst.msk [vmem:[#allocation3 + $0x90] sm:$0x1] %vm931, 0.0
        %939 = vst.msk [vmem:[#allocation3 + $0xa8] sm:$0x1] %vm931, 0.0
        %940 = vst.msk [vmem:[#allocation3 + $0xc0] sm:$0x1] %vm931, 0.0
        %941 = vst.msk [vmem:[#allocation3 + $0xd8] sm:$0x1] %vm931, 0.0
        %942 = vst.msk [vmem:[#allocation3 + $0x11] sm:$0x1] %vm931, 0.0
        %943 = vst.msk [vmem:[#allocation3 + $0x29] sm:$0x1] %vm931, 0.0
        %944 = vst.msk [vmem:[#allocation3 + $0x41] sm:$0x1] %vm931, 0.0
        %945 = vst.msk [vmem:[#allocation3 + $0x59] sm:$0x1] %vm931, 0.0
        %946 = vst.msk [vmem:[#allocation3 + $0x71] sm:$0x1] %vm931, 0.0
        %947 = vst.msk [vmem:[#allocation3 + $0x89] sm:$0x1] %vm931, 0.0
        %948 = vst.msk [vmem:[#allocation3 + $0xa1] sm:$0x1] %vm931, 0.0
        %949 = vst.msk [vmem:[#allocation3 + $0xb9] sm:$0x1] %vm931, 0.0
        %950 = vst.msk [vmem:[#allocation3 + $0xd1] sm:$0x1] %vm931, 0.0
        %951 = vst.msk [vmem:[#allocation3 + $0xe9] sm:$0x1] %vm931, 0.0
        %vm952 = vcmask 130048
        %953 = vst.msk [vmem:[#allocation4] sm:$0xff] %vm952, 0.0
        %954 = vst.msk [vmem:[#allocation4 + $0x8] sm:$0xff] %vm952, 0.0
        %vm955 = vcmask 128000
        %956 = vst.msk [vmem:[#allocation4 + $0x10] sm:$0x3f] %vm955, 0.0
        %957 = vst.msk [vmem:[#allocation4 + $0x18] sm:$0xff] %vm952, 0.0
        %958 = vst.msk [vmem:[#allocation4 + $0x20] sm:$0xff] %vm952, 0.0
        %959 = vst.msk [vmem:[#allocation4 + $0x28] sm:$0x3f] %vm955, 0.0
        %960 = vst.msk [vmem:[#allocation4 + $0x30] sm:$0xff] %vm952, 0.0
        %961 = vst.msk [vmem:[#allocation4 + $0x38] sm:$0xff] %vm952, 0.0
        %962 = vst.msk [vmem:[#allocation4 + $0x40] sm:$0x3f] %vm955, 0.0
        %s963 = scalar_lea.vmem [#allocation4], 264
        %964 = vst.msk [vmem:[%s963] sm:$0xff] %vm952, 0.0
        %965 = vst.msk [vmem:[%s963 + $0x8] sm:$0xff] %vm952, 0.0
        %966 = vst.msk [vmem:[%s963 + $0x10] sm:$0x3f] %vm955, 0.0
        %967 = vst.msk [vmem:[%s963 + $0x18] sm:$0xff] %vm952, 0.0
        %968 = vst.msk [vmem:[%s963 + $0x20] sm:$0xff] %vm952, 0.0
        %969 = vst.msk [vmem:[%s963 + $0x28] sm:$0x3f] %vm955, 0.0
        %970 = vst.msk [vmem:[%s963 + $0x30] sm:$0xff] %vm952, 0.0
        %971 = vst.msk [vmem:[%s963 + $0x38] sm:$0xff] %vm952, 0.0
        %972 = vst.msk [vmem:[%s963 + $0x40] sm:$0x3f] %vm955, 0.0
        %vm973 = vcmask 124928
        %974 = vst.msk [vmem:[#allocation4] sm:$0x7] %vm973, 0.0
        %975 = vst.msk [vmem:[#allocation4 + $0x18] sm:$0x7] %vm973, 0.0
        %976 = vst.msk [vmem:[#allocation4 + $0x30] sm:$0x7] %vm973, 0.0
        %977 = vst.msk [vmem:[#allocation4 + $0x48] sm:$0x7] %vm973, 0.0
        %978 = vst.msk [vmem:[#allocation4 + $0x60] sm:$0x7] %vm973, 0.0
        %979 = vst.msk [vmem:[#allocation4 + $0x78] sm:$0x7] %vm973, 0.0
        %980 = vst.msk [vmem:[#allocation4 + $0x90] sm:$0x7] %vm973, 0.0
        %981 = vst.msk [vmem:[#allocation4 + $0xa8] sm:$0x7] %vm973, 0.0
        %982 = vst.msk [vmem:[#allocation4 + $0xc0] sm:$0x7] %vm973, 0.0
        %983 = vst.msk [vmem:[#allocation4 + $0xd8] sm:$0x7] %vm973, 0.0
        %984 = vst.msk [vmem:[#allocation4 + $0xf0] sm:$0x7] %vm973, 0.0
        %985 = vst.msk [vmem:[#allocation4 + $0x108] sm:$0x7] %vm973, 0.0
        %986 = vst.msk [vmem:[#allocation4 + $0x120] sm:$0x7] %vm973, 0.0
        %987 = vst.msk [vmem:[#allocation4 + $0x138] sm:$0x7] %vm973, 0.0
        %988 = vst.msk [vmem:[#allocation4 + $0x13] sm:$0x7] %vm973, 0.0
        %989 = vst.msk [vmem:[#allocation4 + $0x2b] sm:$0x7] %vm973, 0.0
        %990 = vst.msk [vmem:[#allocation4 + $0x43] sm:$0x7] %vm973, 0.0
        %991 = vst.msk [vmem:[#allocation4 + $0x5b] sm:$0x7] %vm973, 0.0
        %992 = vst.msk [vmem:[#allocation4 + $0x73] sm:$0x7] %vm973, 0.0
        %993 = vst.msk [vmem:[#allocation4 + $0x8b] sm:$0x7] %vm973, 0.0
        %994 = vst.msk [vmem:[#allocation4 + $0xa3] sm:$0x7] %vm973, 0.0
        %995 = vst.msk [vmem:[#allocation4 + $0xbb] sm:$0x7] %vm973, 0.0
        %996 = vst.msk [vmem:[#allocation4 + $0xd3] sm:$0x7] %vm973, 0.0
        %997 = vst.msk [vmem:[#allocation4 + $0xeb] sm:$0x7] %vm973, 0.0
        %998 = vst.msk [vmem:[#allocation4 + $0x103] sm:$0x7] %vm973, 0.0
        %999 = vst.msk [vmem:[#allocation4 + $0x11b] sm:$0x7] %vm973, 0.0
        %1000 = vst.msk [vmem:[#allocation4 + $0x133] sm:$0x7] %vm973, 0.0
        %1001 = vst.msk [vmem:[#allocation4 + $0x14b] sm:$0x7] %vm973, 0.0
        %1002 = vst [vmem:[#allocation5] sm:$0xff] 0.0
        %1003 = vst [vmem:[#allocation5 + $0x8] sm:$0xff] 0.0
        %1004 = vst [vmem:[#allocation5 + $0x10] sm:$0x3] 0.0
        %s1005 = scalar_lea.vmem [#allocation5], 216
        %1006 = vst [vmem:[%s1005] sm:$0xff] 0.0
        %1007 = vst [vmem:[%s1005 + $0x8] sm:$0xff] 0.0
        %1008 = vst [vmem:[%s1005 + $0x10] sm:$0x3] 0.0
        %1009 = vst [vmem:[#allocation5] sm:$0x1] 0.0
        %1010 = vst [vmem:[#allocation5 + $0x18] sm:$0x1] 0.0
        %1011 = vst [vmem:[#allocation5 + $0x30] sm:$0x1] 0.0
        %1012 = vst [vmem:[#allocation5 + $0x48] sm:$0x1] 0.0
        %1013 = vst [vmem:[#allocation5 + $0x60] sm:$0x1] 0.0
        %1014 = vst [vmem:[#allocation5 + $0x78] sm:$0x1] 0.0
        %1015 = vst [vmem:[#allocation5 + $0x90] sm:$0x1] 0.0
        %1016 = vst [vmem:[#allocation5 + $0xa8] sm:$0x1] 0.0
        %1017 = vst [vmem:[#allocation5 + $0xc0] sm:$0x1] 0.0
        %1018 = vst [vmem:[#allocation5 + $0xd8] sm:$0x1] 0.0
        %1019 = vst [vmem:[#allocation5 + $0x11] sm:$0x1] 0.0
        %1020 = vst [vmem:[#allocation5 + $0x29] sm:$0x1] 0.0
        %1021 = vst [vmem:[#allocation5 + $0x41] sm:$0x1] 0.0
        %1022 = vst [vmem:[#allocation5 + $0x59] sm:$0x1] 0.0
        %1023 = vst [vmem:[#allocation5 + $0x71] sm:$0x1] 0.0
        %1024 = vst [vmem:[#allocation5 + $0x89] sm:$0x1] 0.0
        %1025 = vst [vmem:[#allocation5 + $0xa1] sm:$0x1] 0.0
        %1026 = vst [vmem:[#allocation5 + $0xb9] sm:$0x1] 0.0
        %1027 = vst [vmem:[#allocation5 + $0xd1] sm:$0x1] 0.0
        %1028 = vst [vmem:[#allocation5 + $0xe9] sm:$0x1] 0.0
        %v1029 = vld [vmem:[%s846] sm:$0xff]
        %v1030 = vld [vmem:[%s846 + $0x8] sm:$0xff]
        %v1031 = vld [vmem:[%s846 + $0x10] sm:$0xff]
        %v1032 = vld [vmem:[%s846 + $0x18] sm:$0xff]
        %v1033 = vld [vmem:[%s846 + $0x20] sm:$0xff]
        %v1034 = vld [vmem:[%s846 + $0x28] sm:$0xff]
        %v1035 = vld [vmem:[%s846 + $0x30] sm:$0xff]
        %v1036 = vld [vmem:[%s846 + $0x38] sm:$0xff]
        %v1037 = vld [vmem:[%s846 + $0x40] sm:$0xff]
        %v1038 = vld [vmem:[%s846 + $0x48] sm:$0xff]
        %v1039 = vld [vmem:[%s846 + $0x50] sm:$0xff]
        %v1040 = vld [vmem:[%s846 + $0x58] sm:$0xff]
        %v1041 = vld [vmem:[%s846 + $0x60] sm:$0xff]
        %v1042 = vld [vmem:[%s846 + $0x68] sm:$0xff]
        %v1043 = vld [vmem:[%s846 + $0x70] sm:$0xff]
        %v1044 = vld [vmem:[%s846 + $0x78] sm:$0xff]
        %1045 = vst.msk [vmem:[#allocation2] sm:$0xff] %vm952, %v1029
        %1046 = vst.msk [vmem:[#allocation2 + $0x8] sm:$0xff] %vm952, %v1030
        %1047 = vst.msk [vmem:[#allocation2 + $0x10] sm:$0xff] %vm952, %v1031
        %1048 = vst.msk [vmem:[#allocation2 + $0x18] sm:$0xff] %vm952, %v1032
        %1049 = vst.msk [vmem:[#allocation2 + $0x20] sm:$0xff] %vm952, %v1033
        %1050 = vst.msk [vmem:[#allocation2 + $0x28] sm:$0xff] %vm952, %v1034
        %1051 = vst.msk [vmem:[#allocation2 + $0x30] sm:$0xff] %vm952, %v1035
        %1052 = vst.msk [vmem:[#allocation2 + $0x38] sm:$0xff] %vm952, %v1036
        %1053 = vst.msk [vmem:[#allocation2 + $0x40] sm:$0xff] %vm952, %v1037
        %1054 = vst.msk [vmem:[#allocation2 + $0x48] sm:$0xff] %vm952, %v1038
        %1055 = vst.msk [vmem:[#allocation2 + $0x50] sm:$0xff] %vm952, %v1039
        %1056 = vst.msk [vmem:[#allocation2 + $0x58] sm:$0xff] %vm952, %v1040
        %1057 = vst.msk [vmem:[#allocation2 + $0x60] sm:$0xff] %vm952, %v1041
        %1058 = vst.msk [vmem:[#allocation2 + $0x68] sm:$0xff] %vm952, %v1042
        %1059 = vst.msk [vmem:[#allocation2 + $0x70] sm:$0xff] %vm952, %v1043
        %1060 = vst.msk [vmem:[#allocation2 + $0x78] sm:$0xff] %vm952, %v1044
        %v1061 = vld [vmem:[#allocation2] sm:$0xff]
        %v1062 = vld [vmem:[#allocation2 + $0x8] sm:$0xff]
        %v1063 = vld [vmem:[#allocation2 + $0x10] sm:$0xff]
        %v1064 = vld [vmem:[#allocation2 + $0x18] sm:$0xff]
        %v1065 = vld [vmem:[#allocation2 + $0x20] sm:$0xff]
        %v1066 = vld [vmem:[#allocation2 + $0x28] sm:$0xff]
        %v1067 = vld [vmem:[#allocation2 + $0x30] sm:$0xff]
        %v1068 = vld [vmem:[#allocation2 + $0x38] sm:$0xff]
        %v1069 = vld [vmem:[#allocation2 + $0x40] sm:$0xff]
        %v1070 = vld [vmem:[#allocation2 + $0x48] sm:$0xff]
        %v1071 = vld [vmem:[#allocation2 + $0x50] sm:$0xff]
        %v1072 = vld [vmem:[#allocation2 + $0x58] sm:$0xff]
        %v1073 = vld [vmem:[#allocation2 + $0x60] sm:$0xff]
        %v1074 = vld [vmem:[#allocation2 + $0x68] sm:$0xff]
        %v1075 = vld [vmem:[#allocation2 + $0x70] sm:$0xff]
        %v1076 = vld [vmem:[#allocation2 + $0x78] sm:$0xff]
        %v1077 = vsel %vm952, %v1061, 0.0
        %v1078 = vsel %vm952, %v1062, 0.0
        %v1079 = vadd.f32 %v1077, %v1078
        %v1080 = vrot.slane %v1079, 4
        %v1081 = vadd.f32 %v1079, %v1080
        %v1082 = vrot.slane %v1081, 2
        %v1083 = vadd.f32 %v1081, %v1082
        %v1084 = vrot.slane %v1083, 1
        %v1085 = vadd.f32 %v1083, %v1084
        %v1086 = vsel %vm952, %v1063, 0.0
        %v1087 = vsel %vm952, %v1064, 0.0
        %v1088 = vadd.f32 %v1086, %v1087
        %v1089 = vrot.slane %v1088, 4
        %v1090 = vadd.f32 %v1088, %v1089
        %v1091 = vrot.slane %v1090, 2
        %v1092 = vadd.f32 %v1090, %v1091
        %v1093 = vrot.slane %v1092, 1
        %v1094 = vadd.f32 %v1092, %v1093
        %v1095 = vsel %vm952, %v1065, 0.0
        %v1096 = vsel %vm952, %v1066, 0.0
        %v1097 = vadd.f32 %v1095, %v1096
        %v1098 = vrot.slane %v1097, 4
        %v1099 = vadd.f32 %v1097, %v1098
        %v1100 = vrot.slane %v1099, 2
        %v1101 = vadd.f32 %v1099, %v1100
        %v1102 = vrot.slane %v1101, 1
        %v1103 = vadd.f32 %v1101, %v1102
        %v1104 = vsel %vm952, %v1067, 0.0
        %v1105 = vsel %vm952, %v1068, 0.0
        %v1106 = vadd.f32 %v1104, %v1105
        %v1107 = vrot.slane %v1106, 4
        %v1108 = vadd.f32 %v1106, %v1107
        %v1109 = vrot.slane %v1108, 2
        %v1110 = vadd.f32 %v1108, %v1109
        %v1111 = vrot.slane %v1110, 1
        %v1112 = vadd.f32 %v1110, %v1111
        %v1113 = vsel %vm952, %v1069, 0.0
        %v1114 = vsel %vm952, %v1070, 0.0
        %v1115 = vadd.f32 %v1113, %v1114
        %v1116 = vrot.slane %v1115, 4
        %v1117 = vadd.f32 %v1115, %v1116
        %v1118 = vrot.slane %v1117, 2
        %v1119 = vadd.f32 %v1117, %v1118
        %v1120 = vrot.slane %v1119, 1
        %v1121 = vadd.f32 %v1119, %v1120
        %v1122 = vsel %vm952, %v1071, 0.0
        %v1123 = vsel %vm952, %v1072, 0.0
        %v1124 = vadd.f32 %v1122, %v1123
        %v1125 = vrot.slane %v1124, 4
        %v1126 = vadd.f32 %v1124, %v1125
        %v1127 = vrot.slane %v1126, 2
        %v1128 = vadd.f32 %v1126, %v1127
        %v1129 = vrot.slane %v1128, 1
        %v1130 = vadd.f32 %v1128, %v1129
        %v1131 = vsel %vm952, %v1073, 0.0
        %v1132 = vsel %vm952, %v1074, 0.0
        %v1133 = vadd.f32 %v1131, %v1132
        %v1134 = vrot.slane %v1133, 4
        %v1135 = vadd.f32 %v1133, %v1134
        %v1136 = vrot.slane %v1135, 2
        %v1137 = vadd.f32 %v1135, %v1136
        %v1138 = vrot.slane %v1137, 1
        %v1139 = vadd.f32 %v1137, %v1138
        %v1140 = vsel %vm952, %v1075, 0.0
        %v1141 = vsel %vm952, %v1076, 0.0
        %v1142 = vadd.f32 %v1140, %v1141
        %v1143 = vrot.slane %v1142, 4
        %v1144 = vadd.f32 %v1142, %v1143
        %v1145 = vrot.slane %v1144, 2
        %v1146 = vadd.f32 %v1144, %v1145
        %v1147 = vrot.slane %v1146, 1
        %v1148 = vadd.f32 %v1146, %v1147
        %v1149 = vrcp.pop 16.0
        %v1150 = vmul.f32 %v1085, %v1149
        %v1151 = vmul.f32 %v1094, %v1149
        %v1152 = vmul.f32 %v1103, %v1149
        %v1153 = vmul.f32 %v1112, %v1149
        %v1154 = vmul.f32 %v1121, %v1149
        %v1155 = vmul.f32 %v1130, %v1149
        %v1156 = vmul.f32 %v1139, %v1149
        %v1157 = vmul.f32 %v1148, %v1149
        %v1158 = vmul.f32 %v1061, %v1061
        %v1159 = vmul.f32 %v1062, %v1062
        %v1160 = vmul.f32 %v1063, %v1063
        %v1161 = vmul.f32 %v1064, %v1064
        %v1162 = vmul.f32 %v1065, %v1065
        %v1163 = vmul.f32 %v1066, %v1066
        %v1164 = vmul.f32 %v1067, %v1067
        %v1165 = vmul.f32 %v1068, %v1068
        %v1166 = vmul.f32 %v1069, %v1069
        %v1167 = vmul.f32 %v1070, %v1070
        %v1168 = vmul.f32 %v1071, %v1071
        %v1169 = vmul.f32 %v1072, %v1072
        %v1170 = vmul.f32 %v1073, %v1073
        %v1171 = vmul.f32 %v1074, %v1074
        %v1172 = vmul.f32 %v1075, %v1075
        %v1173 = vmul.f32 %v1076, %v1076
        %v1174 = vsel %vm952, %v1158, 0.0
        %v1175 = vsel %vm952, %v1159, 0.0
        %v1176 = vadd.f32 %v1174, %v1175
        %v1177 = vrot.slane %v1176, 4
        %v1178 = vadd.f32 %v1176, %v1177
        %v1179 = vrot.slane %v1178, 2
        %v1180 = vadd.f32 %v1178, %v1179
        %v1181 = vrot.slane %v1180, 1
        %v1182 = vadd.f32 %v1180, %v1181
        %v1183 = vsel %vm952, %v1160, 0.0
        %v1184 = vsel %vm952, %v1161, 0.0
        %v1185 = vadd.f32 %v1183, %v1184
        %v1186 = vrot.slane %v1185, 4
        %v1187 = vadd.f32 %v1185, %v1186
        %v1188 = vrot.slane %v1187, 2
        %v1189 = vadd.f32 %v1187, %v1188
        %v1190 = vrot.slane %v1189, 1
        %v1191 = vadd.f32 %v1189, %v1190
        %v1192 = vsel %vm952, %v1162, 0.0
        %v1193 = vsel %vm952, %v1163, 0.0
        %v1194 = vadd.f32 %v1192, %v1193
        %v1195 = vrot.slane %v1194, 4
        %v1196 = vadd.f32 %v1194, %v1195
        %v1197 = vrot.slane %v1196, 2
        %v1198 = vadd.f32 %v1196, %v1197
        %v1199 = vrot.slane %v1198, 1
        %v1200 = vadd.f32 %v1198, %v1199
        %v1201 = vsel %vm952, %v1164, 0.0
        %v1202 = vsel %vm952, %v1165, 0.0
        %v1203 = vadd.f32 %v1201, %v1202
        %v1204 = vrot.slane %v1203, 4
        %v1205 = vadd.f32 %v1203, %v1204
        %v1206 = vrot.slane %v1205, 2
        %v1207 = vadd.f32 %v1205, %v1206
        %v1208 = vrot.slane %v1207, 1
        %v1209 = vadd.f32 %v1207, %v1208
        %v1210 = vsel %vm952, %v1166, 0.0
        %v1211 = vsel %vm952, %v1167, 0.0
        %v1212 = vadd.f32 %v1210, %v1211
        %v1213 = vrot.slane %v1212, 4
        %v1214 = vadd.f32 %v1212, %v1213
        %v1215 = vrot.slane %v1214, 2
        %v1216 = vadd.f32 %v1214, %v1215
        %v1217 = vrot.slane %v1216, 1
        %v1218 = vadd.f32 %v1216, %v1217
        %v1219 = vsel %vm952, %v1168, 0.0
        %v1220 = vsel %vm952, %v1169, 0.0
        %v1221 = vadd.f32 %v1219, %v1220
        %v1222 = vrot.slane %v1221, 4
        %v1223 = vadd.f32 %v1221, %v1222
        %v1224 = vrot.slane %v1223, 2
        %v1225 = vadd.f32 %v1223, %v1224
        %v1226 = vrot.slane %v1225, 1
        %v1227 = vadd.f32 %v1225, %v1226
        %v1228 = vsel %vm952, %v1170, 0.0
        %v1229 = vsel %vm952, %v1171, 0.0
        %v1230 = vadd.f32 %v1228, %v1229
        %v1231 = vrot.slane %v1230, 4
        %v1232 = vadd.f32 %v1230, %v1231
        %v1233 = vrot.slane %v1232, 2
        %v1234 = vadd.f32 %v1232, %v1233
        %v1235 = vrot.slane %v1234, 1
        %v1236 = vadd.f32 %v1234, %v1235
        %v1237 = vsel %vm952, %v1172, 0.0
        %v1238 = vsel %vm952, %v1173, 0.0
        %v1239 = vadd.f32 %v1237, %v1238
        %v1240 = vrot.slane %v1239, 4
        %v1241 = vadd.f32 %v1239, %v1240
        %v1242 = vrot.slane %v1241, 2
        %v1243 = vadd.f32 %v1241, %v1242
        %v1244 = vrot.slane %v1243, 1
        %v1245 = vadd.f32 %v1243, %v1244
        %v1246 = vmul.f32 %v1182, %v1149
        %v1247 = vmul.f32 %v1191, %v1149
        %v1248 = vmul.f32 %v1200, %v1149
        %v1249 = vmul.f32 %v1209, %v1149
        %v1250 = vmul.f32 %v1218, %v1149
        %v1251 = vmul.f32 %v1227, %v1149
        %v1252 = vmul.f32 %v1236, %v1149
        %v1253 = vmul.f32 %v1245, %v1149
        %v1254 = vmul.f32 %v1150, %v1150
        %v1255 = vmul.f32 %v1151, %v1151
        %v1256 = vmul.f32 %v1152, %v1152
        %v1257 = vmul.f32 %v1153, %v1153
        %v1258 = vmul.f32 %v1154, %v1154
        %v1259 = vmul.f32 %v1155, %v1155
        %v1260 = vmul.f32 %v1156, %v1156
        %v1261 = vmul.f32 %v1157, %v1157
        %v1262 = vsub.f32 %v1246, %v1254
        %v1263 = vsub.f32 %v1247, %v1255
        %v1264 = vsub.f32 %v1248, %v1256
        %v1265 = vsub.f32 %v1249, %v1257
        %v1266 = vsub.f32 %v1250, %v1258
        %v1267 = vsub.f32 %v1251, %v1259
        %v1268 = vsub.f32 %v1252, %v1260
        %v1269 = vsub.f32 %v1253, %v1261
        %v1270 = vmax.f32 %v1262, 0.0
        %v1271 = vmax.f32 %v1263, 0.0
        %v1272 = vmax.f32 %v1264, 0.0
        %v1273 = vmax.f32 %v1265, 0.0
        %v1274 = vmax.f32 %v1266, 0.0
        %v1275 = vmax.f32 %v1267, 0.0
        %v1276 = vmax.f32 %v1268, 0.0
        %v1277 = vmax.f32 %v1269, 0.0
        %v1278 = vsub.f32 %v1061, %v1150
        %v1279 = vsub.f32 %v1062, %v1150
        %v1280 = vsub.f32 %v1063, %v1151
        %v1281 = vsub.f32 %v1064, %v1151
        %v1282 = vsub.f32 %v1065, %v1152
        %v1283 = vsub.f32 %v1066, %v1152
        %v1284 = vsub.f32 %v1067, %v1153
        %v1285 = vsub.f32 %v1068, %v1153
        %v1286 = vsub.f32 %v1069, %v1154
        %v1287 = vsub.f32 %v1070, %v1154
        %v1288 = vsub.f32 %v1071, %v1155
        %v1289 = vsub.f32 %v1072, %v1155
        %v1290 = vsub.f32 %v1073, %v1156
        %v1291 = vsub.f32 %v1074, %v1156
        %v1292 = vsub.f32 %v1075, %v1157
        %v1293 = vsub.f32 %v1076, %v1157
        %v1294 = vadd.f32 %v1270, 1e-05
        %v1295 = vadd.f32 %v1271, 1e-05
        %v1296 = vadd.f32 %v1272, 1e-05
        %v1297 = vadd.f32 %v1273, 1e-05
        %v1298 = vadd.f32 %v1274, 1e-05
        %v1299 = vadd.f32 %v1275, 1e-05
        %v1300 = vadd.f32 %v1276, 1e-05
        %v1301 = vadd.f32 %v1277, 1e-05
        %v1302 = vrsqrt.pop %v1294
        %v1303 = vrsqrt.pop %v1295
        %v1304 = vrsqrt.pop %v1296
        %v1305 = vrsqrt.pop %v1297
        %v1306 = vrsqrt.pop %v1298
        %v1307 = vrsqrt.pop %v1299
        %v1308 = vrsqrt.pop %v1300
        %v1309 = vrsqrt.pop %v1301
        %v1310 = vmul.f32 %v1278, %v1302
        %v1311 = vmul.f32 %v1279, %v1302
        %v1312 = vmul.f32 %v1280, %v1303
        %v1313 = vmul.f32 %v1281, %v1303
        %v1314 = vmul.f32 %v1282, %v1304
        %v1315 = vmul.f32 %v1283, %v1304
        %v1316 = vmul.f32 %v1284, %v1305
        %v1317 = vmul.f32 %v1285, %v1305
        %v1318 = vmul.f32 %v1286, %v1306
        %v1319 = vmul.f32 %v1287, %v1306
        %v1320 = vmul.f32 %v1288, %v1307
        %v1321 = vmul.f32 %v1289, %v1307
        %v1322 = vmul.f32 %v1290, %v1308
        %v1323 = vmul.f32 %v1291, %v1308
        %v1324 = vmul.f32 %v1292, %v1309
        %v1325 = vmul.f32 %v1293, %v1309
        %v1326 = vld [vmem:[%s3] sm:$0xff]
        %v1327 = vld [vmem:[%s3 + $0x8] sm:$0xff]
        %1329 = vset.pattern.permute.xlu0 0
        %1330 = vperm.xlu0 %1329, %v1326
        %v1331 = vpop.permute.xlu0 %1330
        %1334 = vset.pattern.permute.xlu0 0
        %1335 = vperm.xlu0 %1334, %v1327
        %v1336 = vpop.permute.xlu0 %1335
        %v1338 = vmul.f32 %v1310, %v1331
        %v1339 = vmul.f32 %v1311, %v1336
        %v1340 = vmul.f32 %v1312, %v1331
        %v1341 = vmul.f32 %v1313, %v1336
        %v1342 = vmul.f32 %v1314, %v1331
        %v1343 = vmul.f32 %v1315, %v1336
        %v1344 = vmul.f32 %v1316, %v1331
        %v1345 = vmul.f32 %v1317, %v1336
        %v1346 = vmul.f32 %v1318, %v1331
        %v1347 = vmul.f32 %v1319, %v1336
        %v1348 = vmul.f32 %v1320, %v1331
        %v1349 = vmul.f32 %v1321, %v1336
        %v1350 = vmul.f32 %v1322, %v1331
        %v1351 = vmul.f32 %v1323, %v1336
        %v1352 = vmul.f32 %v1324, %v1331
        %v1353 = vmul.f32 %v1325, %v1336
        %v1354 = vld [vmem:[%s5] sm:$0xff]
        %v1355 = vld [vmem:[%s5 + $0x8] sm:$0xff]
        %1357 = vset.pattern.permute.xlu0 0
        %1358 = vperm.xlu0 %1357, %v1354
        %v1359 = vpop.permute.xlu0 %1358
        %1362 = vset.pattern.permute.xlu0 0
        %1363 = vperm.xlu0 %1362, %v1355
        %v1364 = vpop.permute.xlu0 %1363
        %v1366 = vadd.f32 %v1338, %v1359
        %v1367 = vadd.f32 %v1339, %v1364
        %v1368 = vadd.f32 %v1340, %v1359
        %v1369 = vadd.f32 %v1341, %v1364
        %v1370 = vadd.f32 %v1342, %v1359
        %v1371 = vadd.f32 %v1343, %v1364
        %v1372 = vadd.f32 %v1344, %v1359
        %v1373 = vadd.f32 %v1345, %v1364
        %v1374 = vadd.f32 %v1346, %v1359
        %v1375 = vadd.f32 %v1347, %v1364
        %v1376 = vadd.f32 %v1348, %v1359
        %v1377 = vadd.f32 %v1349, %v1364
        %v1378 = vadd.f32 %v1350, %v1359
        %v1379 = vadd.f32 %v1351, %v1364
        %v1380 = vadd.f32 %v1352, %v1359
        %v1381 = vadd.f32 %v1353, %v1364
        %v1382 = vpack.c.bf16 %v1367, %v1366
        %v1383 = vpack.c.bf16 %v1369, %v1368
        %v1384 = vpack.c.bf16 %v1371, %v1370
        %v1385 = vpack.c.bf16 %v1373, %v1372
        %v1386 = vpack.c.bf16 %v1375, %v1374
        %v1387 = vpack.c.bf16 %v1377, %v1376
        %v1388 = vpack.c.bf16 %v1379, %v1378
        %v1389 = vpack.c.bf16 %v1381, %v1380
        %v1390 = vld [vmem:[%s7] sm:$0xf]
        %v1391 = vld [vmem:[%s7 + $0x4] sm:$0xf]
        %v1392 = vld [vmem:[%s9] sm:$0x1]
        %v1394 = vlaneseq
        %v1395 = vshrl.u32 %v1394, 7
        %v1396 = vsub.s32 0, %v1395
        %v1397 = vrot.slane %v1392, %v1396
        %v1401 = vunpack.c.l.b16 %v1390
        %v1402 = vunpack.c.l.b16 %v1391
        %v1403 = vpack.c.b16 %v1402, %v1401
        %v1406 = vsel %vm952, %v1382, 0
        %v1409 = vsel %vm952, %v1383, 0
        %v1412 = vsel %vm952, %v1384, 0
        %v1415 = vsel %vm952, %v1385, 0
        %v1418 = vsel %vm952, %v1386, 0
        %v1421 = vsel %vm952, %v1387, 0
        %v1424 = vsel %vm952, %v1388, 0
        %v1427 = vsel %vm952, %v1389, 0
        %1429 = vmatprep.subr.bf16.mxu0 0
        %1430 = vmatpush1.bf16.msra.mxu0 %v1403
        %1431 = vmatprep.subr.bf16.mxu0 0
        %1432 = vmatpush1.bf16.msra.mxu0 0
        %1433 = vmatprep.subr.bf16.mxu0 0
        %1434 = vmatpush1.bf16.msra.mxu0 0
        %1435 = vmatprep.subr.bf16.mxu0 0
        %1436 = vmatpush1.bf16.msra.mxu0 0
        %1437 = vmatprep.subr.bf16.mxu0 0
        %1438 = vmatpush1.bf16.msra.mxu0 0
        %1439 = vmatprep.subr.bf16.mxu0 0
        %1440 = vmatpush1.bf16.msra.mxu0 0
        %1441 = vmatprep.subr.bf16.mxu0 0
        %1442 = vmatpush1.bf16.msra.mxu0 0
        %1443 = vmatprep.subr.bf16.mxu0 0
        %1444 = vmatpush1.bf16.msra.mxu0 0
        %1445 = vmatprep.subr.bf16.mxu0 0
        %1446 = vmatpush1.bf16.msra.mxu0 0
        %1447 = vmatprep.subr.bf16.mxu0 0
        %1448 = vmatpush1.bf16.msra.mxu0 0
        %1449 = vmatprep.subr.bf16.mxu0 0
        %1450 = vmatpush1.bf16.msra.mxu0 0
        %1451 = vmatprep.subr.bf16.mxu0 0
        %1452 = vmatpush1.bf16.msra.mxu0 0
        %1453 = vmatprep.subr.bf16.mxu0 0
        %1454 = vmatpush1.bf16.msra.mxu0 0
        %1455 = vmatprep.subr.bf16.mxu0 0
        %1456 = vmatpush1.bf16.msra.mxu0 0
        %1457 = vmatprep.subr.bf16.mxu0 0
        %1458 = vmatpush1.bf16.msra.mxu0 0
        %1459 = vmatprep.subr.bf16.mxu0 0
        %1460 = vmatpush1.bf16.msra.mxu0 0
        %1461 = vmatprep.mubr.bf16.mxu0 0
        %1462 = vmatmul.mubr.bf16.gmra.mrb[0].mxu0 %v1406
        %v1463 = vpop.f32.mrb[0].mxu0
        %v1464 = vadd.f32 %v1397, %v1463
        %v1465 = vpop.f32.mrb[0].mxu0
        %v1466 = vpop.f32.mrb[0].mxu0
        %v1467 = vadd.f32 %v1397, %v1466
        %v1468 = vpop.f32.mrb[0].mxu0
        %1469 = vmatprep.mubr.bf16.mxu0 0
        %1470 = vmatmul.mubr.bf16.gmra.mrb[0].mxu0 %v1409
        %v1471 = vpop.f32.mrb[0].mxu0
        %v1472 = vadd.f32 %v1397, %v1471
        %v1473 = vpop.f32.mrb[0].mxu0
        %v1474 = vpop.f32.mrb[0].mxu0
        %v1475 = vadd.f32 %v1397, %v1474
        %v1476 = vpop.f32.mrb[0].mxu0
        %1477 = vmatprep.mubr.bf16.mxu0 0
        %1478 = vmatmul.mubr.bf16.gmra.mrb[0].mxu0 %v1412
        %v1479 = vpop.f32.mrb[0].mxu0
        %v1480 = vadd.f32 %v1397, %v1479
        %v1481 = vpop.f32.mrb[0].mxu0
        %v1482 = vpop.f32.mrb[0].mxu0
        %v1483 = vadd.f32 %v1397, %v1482
        %v1484 = vpop.f32.mrb[0].mxu0
        %1485 = vmatprep.mubr.bf16.mxu0 0
        %1486 = vmatmul.mubr.bf16.gmra.mrb[0].mxu0 %v1415
        %v1487 = vpop.f32.mrb[0].mxu0
        %v1488 = vadd.f32 %v1397, %v1487
        %v1489 = vpop.f32.mrb[0].mxu0
        %v1490 = vpop.f32.mrb[0].mxu0
        %v1491 = vadd.f32 %v1397, %v1490
        %v1492 = vpop.f32.mrb[0].mxu0
        %1493 = vmatprep.mubr.bf16.mxu0 0
        %1494 = vmatmul.mubr.bf16.gmra.mrb[0].mxu0 %v1418
        %v1495 = vpop.f32.mrb[0].mxu0
        %v1496 = vadd.f32 %v1397, %v1495
        %v1497 = vpop.f32.mrb[0].mxu0
        %v1498 = vpop.f32.mrb[0].mxu0
        %v1499 = vadd.f32 %v1397, %v1498
        %v1500 = vpop.f32.mrb[0].mxu0
        %1501 = vmatprep.mubr.bf16.mxu0 0
        %1502 = vmatmul.mubr.bf16.gmra.mrb[0].mxu0 %v1421
        %v1503 = vpop.f32.mrb[0].mxu0
        %v1504 = vadd.f32 %v1397, %v1503
        %v1505 = vpop.f32.mrb[0].mxu0
        %v1506 = vpop.f32.mrb[0].mxu0
        %v1507 = vadd.f32 %v1397, %v1506
        %v1508 = vpop.f32.mrb[0].mxu0
        %1509 = vmatprep.mubr.bf16.mxu0 0
        %1510 = vmatmul.mubr.bf16.gmra.mrb[0].mxu0 %v1424
        %v1511 = vpop.f32.mrb[0].mxu0
        %v1512 = vadd.f32 %v1397, %v1511
        %v1513 = vpop.f32.mrb[0].mxu0
        %v1514 = vpop.f32.mrb[0].mxu0
        %v1515 = vadd.f32 %v1397, %v1514
        %v1516 = vpop.f32.mrb[0].mxu0
        %1517 = vmatprep.mubr.bf16.mxu0 0
        %1518 = vmatmul.mubr.bf16.gmra.mrb[0].mxu0 %v1427
        %v1519 = vpop.f32.mrb[0].mxu0
        %v1520 = vadd.f32 %v1397, %v1519
        %v1521 = vpop.f32.mrb[0].mxu0
        %v1522 = vpop.f32.mrb[0].mxu0
        %v1523 = vadd.f32 %v1397, %v1522
        %v1524 = vpop.f32.mrb[0].mxu0
        %1525 = vdwg.mxu0
        %s1526 = scalar_lea.vmem [#allocation3], 24
        %1527 = vst.msk [vmem:[%s1526 + $0x1] sm:$0xff] %vm922, %v1464
        %1528 = vst.msk [vmem:[%s1526 + $0x9] sm:$0xff] %vm922, %v1467
        %1529 = vst.msk [vmem:[%s1526 + $0x19] sm:$0xff] %vm922, %v1472
        %1530 = vst.msk [vmem:[%s1526 + $0x21] sm:$0xff] %vm922, %v1475
        %1531 = vst.msk [vmem:[%s1526 + $0x31] sm:$0xff] %vm922, %v1480
        %1532 = vst.msk [vmem:[%s1526 + $0x39] sm:$0xff] %vm922, %v1483
        %1533 = vst.msk [vmem:[%s1526 + $0x49] sm:$0xff] %vm922, %v1488
        %1534 = vst.msk [vmem:[%s1526 + $0x51] sm:$0xff] %vm922, %v1491
        %1535 = vst.msk [vmem:[%s1526 + $0x61] sm:$0xff] %vm922, %v1496
        %1536 = vst.msk [vmem:[%s1526 + $0x69] sm:$0xff] %vm922, %v1499
        %1537 = vst.msk [vmem:[%s1526 + $0x79] sm:$0xff] %vm922, %v1504
        %1538 = vst.msk [vmem:[%s1526 + $0x81] sm:$0xff] %vm922, %v1507
        %1539 = vst.msk [vmem:[%s1526 + $0x91] sm:$0xff] %vm922, %v1512
        %1540 = vst.msk [vmem:[%s1526 + $0x99] sm:$0xff] %vm922, %v1515
        %1541 = vst.msk [vmem:[%s1526 + $0xa9] sm:$0xff] %vm922, %v1520
        %1542 = vst.msk [vmem:[%s1526 + $0xb1] sm:$0xff] %vm922, %v1523
        %v1543 = vld [vmem:[#allocation3] sm:$0xff]
        %v1544 = vld [vmem:[#allocation3 + $0x8] sm:$0xff]
        %v1545 = vld [vmem:[#allocation3 + $0x18] sm:$0xff]
        %v1546 = vld [vmem:[#allocation3 + $0x20] sm:$0xff]
        %v1547 = vld [vmem:[#allocation3 + $0x30] sm:$0xff]
        %v1548 = vld [vmem:[#allocation3 + $0x38] sm:$0xff]
        %v1549 = vld [vmem:[#allocation3 + $0x48] sm:$0xff]
        %v1550 = vld [vmem:[#allocation3 + $0x50] sm:$0xff]
        %v1551 = vld [vmem:[#allocation3 + $0x60] sm:$0xff]
        %v1552 = vld [vmem:[#allocation3 + $0x68] sm:$0xff]
        %v1553 = vld [vmem:[#allocation3 + $0x78] sm:$0xff]
        %v1554 = vld [vmem:[#allocation3 + $0x80] sm:$0xff]
        %v1555 = vld [vmem:[#allocation3 + $0x90] sm:$0xff]
        %v1556 = vld [vmem:[#allocation3 + $0x98] sm:$0xff]
        %v1557 = vld [vmem:[#allocation3 + $0xa8] sm:$0xff]
        %v1558 = vld [vmem:[#allocation3 + $0xb0] sm:$0xff]
        %v1559 = vld [vmem:[%s11] sm:$0x1]
        %v1560 = vlaneseq
        %v1561 = vshrl.u32 %v1560, 7
        %v1562 = vsub.s32 0, %v1561
        %v1563 = vrot.slane %v1559, %v1562
        %v1564 = vmul.f32 %v1543, %v1563
        %v1565 = vmul.f32 %v1544, %v1563
        %v1566 = vmul.f32 %v1545, %v1563
        %v1567 = vmul.f32 %v1546, %v1563
        %v1568 = vmul.f32 %v1547, %v1563
        %v1569 = vmul.f32 %v1548, %v1563
        %v1570 = vmul.f32 %v1549, %v1563
        %v1571 = vmul.f32 %v1550, %v1563
        %v1572 = vmul.f32 %v1551, %v1563
        %v1573 = vmul.f32 %v1552, %v1563
        %v1574 = vmul.f32 %v1553, %v1563
        %v1575 = vmul.f32 %v1554, %v1563
        %v1576 = vmul.f32 %v1555, %v1563
        %v1577 = vmul.f32 %v1556, %v1563
        %v1578 = vmul.f32 %v1557, %v1563
        %v1579 = vmul.f32 %v1558, %v1563
        %v1580 = vadd.f32 %v1564, 0.0
        %v1581 = vadd.f32 %v1565, 0.0
        %v1582 = vadd.f32 %v1566, 0.0
        %v1583 = vadd.f32 %v1567, 0.0
        %v1584 = vadd.f32 %v1568, 0.0
        %v1585 = vadd.f32 %v1569, 0.0
        %v1586 = vadd.f32 %v1570, 0.0
        %v1587 = vadd.f32 %v1571, 0.0
        %v1588 = vadd.f32 %v1572, 0.0
        %v1589 = vadd.f32 %v1573, 0.0
        %v1590 = vadd.f32 %v1574, 0.0
        %v1591 = vadd.f32 %v1575, 0.0
        %v1592 = vadd.f32 %v1576, 0.0
        %v1593 = vadd.f32 %v1577, 0.0
        %v1594 = vadd.f32 %v1578, 0.0
        %v1595 = vadd.f32 %v1579, 0.0
        %v1596 = vld [vmem:[#allocation3 + $0x1] sm:$0xff]
        %v1597 = vld [vmem:[#allocation3 + $0x9] sm:$0xff]
        %v1598 = vld [vmem:[#allocation3 + $0x19] sm:$0xff]
        %v1599 = vld [vmem:[#allocation3 + $0x21] sm:$0xff]
        %v1600 = vld [vmem:[#allocation3 + $0x31] sm:$0xff]
        %v1601 = vld [vmem:[#allocation3 + $0x39] sm:$0xff]
        %v1602 = vld [vmem:[#allocation3 + $0x49] sm:$0xff]
        %v1603 = vld [vmem:[#allocation3 + $0x51] sm:$0xff]
        %v1604 = vld [vmem:[#allocation3 + $0x61] sm:$0xff]
        %v1605 = vld [vmem:[#allocation3 + $0x69] sm:$0xff]
        %v1606 = vld [vmem:[#allocation3 + $0x79] sm:$0xff]
        %v1607 = vld [vmem:[#allocation3 + $0x81] sm:$0xff]
        %v1608 = vld [vmem:[#allocation3 + $0x91] sm:$0xff]
        %v1609 = vld [vmem:[#allocation3 + $0x99] sm:$0xff]
        %v1610 = vld [vmem:[#allocation3 + $0xa9] sm:$0xff]
        %v1611 = vld [vmem:[#allocation3 + $0xb1] sm:$0xff]
        %v1612 = vld [vmem:[%s11 + $0x1] sm:$0x1]
        %v1613 = vlaneseq
        %v1614 = vshrl.u32 %v1613, 7
        %v1615 = vsub.s32 0, %v1614
        %v1616 = vrot.slane %v1612, %v1615
        %v1617 = vmul.f32 %v1596, %v1616
        %v1618 = vmul.f32 %v1597, %v1616
        %v1619 = vmul.f32 %v1598, %v1616
        %v1620 = vmul.f32 %v1599, %v1616
        %v1621 = vmul.f32 %v1600, %v1616
        %v1622 = vmul.f32 %v1601, %v1616
        %v1623 = vmul.f32 %v1602, %v1616
        %v1624 = vmul.f32 %v1603, %v1616
        %v1625 = vmul.f32 %v1604, %v1616
        %v1626 = vmul.f32 %v1605, %v1616
        %v1627 = vmul.f32 %v1606, %v1616
        %v1628 = vmul.f32 %v1607, %v1616
        %v1629 = vmul.f32 %v1608, %v1616
        %v1630 = vmul.f32 %v1609, %v1616
        %v1631 = vmul.f32 %v1610, %v1616
        %v1632 = vmul.f32 %v1611, %v1616
        %v1633 = vadd.f32 %v1580, %v1617
        %v1634 = vadd.f32 %v1581, %v1618
        %v1635 = vadd.f32 %v1582, %v1619
        %v1636 = vadd.f32 %v1583, %v1620
        %v1637 = vadd.f32 %v1584, %v1621
        %v1638 = vadd.f32 %v1585, %v1622
        %v1639 = vadd.f32 %v1586, %v1623
        %v1640 = vadd.f32 %v1587, %v1624
        %v1641 = vadd.f32 %v1588, %v1625
        %v1642 = vadd.f32 %v1589, %v1626
        %v1643 = vadd.f32 %v1590, %v1627
        %v1644 = vadd.f32 %v1591, %v1628
        %v1645 = vadd.f32 %v1592, %v1629
        %v1646 = vadd.f32 %v1593, %v1630
        %v1647 = vadd.f32 %v1594, %v1631
        %v1648 = vadd.f32 %v1595, %v1632
        %v1649 = vld [vmem:[#allocation3 + $0x2] sm:$0xff]
        %v1650 = vld [vmem:[#allocation3 + $0xa] sm:$0xff]
        %v1651 = vld [vmem:[#allocation3 + $0x1a] sm:$0xff]
        %v1652 = vld [vmem:[#allocation3 + $0x22] sm:$0xff]
        %v1653 = vld [vmem:[#allocation3 + $0x32] sm:$0xff]
        %v1654 = vld [vmem:[#allocation3 + $0x3a] sm:$0xff]
        %v1655 = vld [vmem:[#allocation3 + $0x4a] sm:$0xff]
        %v1656 = vld [vmem:[#allocation3 + $0x52] sm:$0xff]
        %v1657 = vld [vmem:[#allocation3 + $0x62] sm:$0xff]
        %v1658 = vld [vmem:[#allocation3 + $0x6a] sm:$0xff]
        %v1659 = vld [vmem:[#allocation3 + $0x7a] sm:$0xff]
        %v1660 = vld [vmem:[#allocation3 + $0x82] sm:$0xff]
        %v1661 = vld [vmem:[#allocation3 + $0x92] sm:$0xff]
        %v1662 = vld [vmem:[#allocation3 + $0x9a] sm:$0xff]
        %v1663 = vld [vmem:[#allocation3 + $0xaa] sm:$0xff]
        %v1664 = vld [vmem:[#allocation3 + $0xb2] sm:$0xff]
        %v1665 = vld [vmem:[%s11 + $0x2] sm:$0x1]
        %v1666 = vlaneseq
        %v1667 = vshrl.u32 %v1666, 7
        %v1668 = vsub.s32 0, %v1667
        %v1669 = vrot.slane %v1665, %v1668
        %v1670 = vmul.f32 %v1649, %v1669
        %v1671 = vmul.f32 %v1650, %v1669
        %v1672 = vmul.f32 %v1651, %v1669
        %v1673 = vmul.f32 %v1652, %v1669
        %v1674 = vmul.f32 %v1653, %v1669
        %v1675 = vmul.f32 %v1654, %v1669
        %v1676 = vmul.f32 %v1655, %v1669
        %v1677 = vmul.f32 %v1656, %v1669
        %v1678 = vmul.f32 %v1657, %v1669
        %v1679 = vmul.f32 %v1658, %v1669
        %v1680 = vmul.f32 %v1659, %v1669
        %v1681 = vmul.f32 %v1660, %v1669
        %v1682 = vmul.f32 %v1661, %v1669
        %v1683 = vmul.f32 %v1662, %v1669
        %v1684 = vmul.f32 %v1663, %v1669
        %v1685 = vmul.f32 %v1664, %v1669
        %v1686 = vadd.f32 %v1633, %v1670
        %v1687 = vadd.f32 %v1634, %v1671
        %v1688 = vadd.f32 %v1635, %v1672
        %v1689 = vadd.f32 %v1636, %v1673
        %v1690 = vadd.f32 %v1637, %v1674
        %v1691 = vadd.f32 %v1638, %v1675
        %v1692 = vadd.f32 %v1639, %v1676
        %v1693 = vadd.f32 %v1640, %v1677
        %v1694 = vadd.f32 %v1641, %v1678
        %v1695 = vadd.f32 %v1642, %v1679
        %v1696 = vadd.f32 %v1643, %v1680
        %v1697 = vadd.f32 %v1644, %v1681
        %v1698 = vadd.f32 %v1645, %v1682
        %v1699 = vadd.f32 %v1646, %v1683
        %v1700 = vadd.f32 %v1647, %v1684
        %v1701 = vadd.f32 %v1648, %v1685
        %v1702 = vld [vmem:[%s1526] sm:$0xff]
        %v1703 = vld [vmem:[%s1526 + $0x8] sm:$0xff]
        %v1704 = vld [vmem:[%s1526 + $0x18] sm:$0xff]
        %v1705 = vld [vmem:[%s1526 + $0x20] sm:$0xff]
        %v1706 = vld [vmem:[%s1526 + $0x30] sm:$0xff]
        %v1707 = vld [vmem:[%s1526 + $0x38] sm:$0xff]
        %v1708 = vld [vmem:[%s1526 + $0x48] sm:$0xff]
        %v1709 = vld [vmem:[%s1526 + $0x50] sm:$0xff]
        %v1710 = vld [vmem:[%s1526 + $0x60] sm:$0xff]
        %v1711 = vld [vmem:[%s1526 + $0x68] sm:$0xff]
        %v1712 = vld [vmem:[%s1526 + $0x78] sm:$0xff]
        %v1713 = vld [vmem:[%s1526 + $0x80] sm:$0xff]
        %v1714 = vld [vmem:[%s1526 + $0x90] sm:$0xff]
        %v1715 = vld [vmem:[%s1526 + $0x98] sm:$0xff]
        %v1716 = vld [vmem:[%s1526 + $0xa8] sm:$0xff]
        %v1717 = vld [vmem:[%s1526 + $0xb0] sm:$0xff]
        %v1718 = vld [vmem:[%s11 + $0x3] sm:$0x1]
        %v1719 = vlaneseq
        %v1720 = vshrl.u32 %v1719, 7
        %v1721 = vsub.s32 0, %v1720
        %v1722 = vrot.slane %v1718, %v1721
        %v1723 = vmul.f32 %v1702, %v1722
        %v1724 = vmul.f32 %v1703, %v1722
        %v1725 = vmul.f32 %v1704, %v1722
        %v1726 = vmul.f32 %v1705, %v1722
        %v1727 = vmul.f32 %v1706, %v1722
        %v1728 = vmul.f32 %v1707, %v1722
        %v1729 = vmul.f32 %v1708, %v1722
        %v1730 = vmul.f32 %v1709, %v1722
        %v1731 = vmul.f32 %v1710, %v1722
        %v1732 = vmul.f32 %v1711, %v1722
        %v1733 = vmul.f32 %v1712, %v1722
        %v1734 = vmul.f32 %v1713, %v1722
        %v1735 = vmul.f32 %v1714, %v1722
        %v1736 = vmul.f32 %v1715, %v1722
        %v1737 = vmul.f32 %v1716, %v1722
        %v1738 = vmul.f32 %v1717, %v1722
        %v1739 = vadd.f32 %v1686, %v1723
        %v1740 = vadd.f32 %v1687, %v1724
        %v1741 = vadd.f32 %v1688, %v1725
        %v1742 = vadd.f32 %v1689, %v1726
        %v1743 = vadd.f32 %v1690, %v1727
        %v1744 = vadd.f32 %v1691, %v1728
        %v1745 = vadd.f32 %v1692, %v1729
        %v1746 = vadd.f32 %v1693, %v1730
        %v1747 = vadd.f32 %v1694, %v1731
        %v1748 = vadd.f32 %v1695, %v1732
        %v1749 = vadd.f32 %v1696, %v1733
        %v1750 = vadd.f32 %v1697, %v1734
        %v1751 = vadd.f32 %v1698, %v1735
        %v1752 = vadd.f32 %v1699, %v1736
        %v1753 = vadd.f32 %v1700, %v1737
        %v1754 = vadd.f32 %v1701, %v1738
        %v1755 = vld [vmem:[%s1526 + $0x1] sm:$0xff]
        %v1756 = vld [vmem:[%s1526 + $0x9] sm:$0xff]
        %v1757 = vld [vmem:[%s1526 + $0x19] sm:$0xff]
        %v1758 = vld [vmem:[%s1526 + $0x21] sm:$0xff]
        %v1759 = vld [vmem:[%s1526 + $0x31] sm:$0xff]
        %v1760 = vld [vmem:[%s1526 + $0x39] sm:$0xff]
        %v1761 = vld [vmem:[%s1526 + $0x49] sm:$0xff]
        %v1762 = vld [vmem:[%s1526 + $0x51] sm:$0xff]
        %v1763 = vld [vmem:[%s1526 + $0x61] sm:$0xff]
        %v1764 = vld [vmem:[%s1526 + $0x69] sm:$0xff]
        %v1765 = vld [vmem:[%s1526 + $0x79] sm:$0xff]
        %v1766 = vld [vmem:[%s1526 + $0x81] sm:$0xff]
        %v1767 = vld [vmem:[%s1526 + $0x91] sm:$0xff]
        %v1768 = vld [vmem:[%s1526 + $0x99] sm:$0xff]
        %v1769 = vld [vmem:[%s1526 + $0xa9] sm:$0xff]
        %v1770 = vld [vmem:[%s1526 + $0xb1] sm:$0xff]
        %v1771 = vld [vmem:[%s11 + $0x4] sm:$0x1]
        %v1772 = vlaneseq
        %v1773 = vshrl.u32 %v1772, 7
        %v1774 = vsub.s32 0, %v1773
        %v1775 = vrot.slane %v1771, %v1774
        %v1776 = vmul.f32 %v1755, %v1775
        %v1777 = vmul.f32 %v1756, %v1775
        %v1778 = vmul.f32 %v1757, %v1775
        %v1779 = vmul.f32 %v1758, %v1775
        %v1780 = vmul.f32 %v1759, %v1775
        %v1781 = vmul.f32 %v1760, %v1775
        %v1782 = vmul.f32 %v1761, %v1775
        %v1783 = vmul.f32 %v1762, %v1775
        %v1784 = vmul.f32 %v1763, %v1775
        %v1785 = vmul.f32 %v1764, %v1775
        %v1786 = vmul.f32 %v1765, %v1775
        %v1787 = vmul.f32 %v1766, %v1775
        %v1788 = vmul.f32 %v1767, %v1775
        %v1789 = vmul.f32 %v1768, %v1775
        %v1790 = vmul.f32 %v1769, %v1775
        %v1791 = vmul.f32 %v1770, %v1775
        %v1792 = vadd.f32 %v1739, %v1776
        %v1793 = vadd.f32 %v1740, %v1777
        %v1794 = vadd.f32 %v1741, %v1778
        %v1795 = vadd.f32 %v1742, %v1779
        %v1796 = vadd.f32 %v1743, %v1780
        %v1797 = vadd.f32 %v1744, %v1781
        %v1798 = vadd.f32 %v1745, %v1782
        %v1799 = vadd.f32 %v1746, %v1783
        %v1800 = vadd.f32 %v1747, %v1784
        %v1801 = vadd.f32 %v1748, %v1785
        %v1802 = vadd.f32 %v1749, %v1786
        %v1803 = vadd.f32 %v1750, %v1787
        %v1804 = vadd.f32 %v1751, %v1788
        %v1805 = vadd.f32 %v1752, %v1789
        %v1806 = vadd.f32 %v1753, %v1790
        %v1807 = vadd.f32 %v1754, %v1791
        %v1808 = vld [vmem:[%s1526 + $0x2] sm:$0xff]
        %v1809 = vld [vmem:[%s1526 + $0xa] sm:$0xff]
        %v1810 = vld [vmem:[%s1526 + $0x1a] sm:$0xff]
        %v1811 = vld [vmem:[%s1526 + $0x22] sm:$0xff]
        %v1812 = vld [vmem:[%s1526 + $0x32] sm:$0xff]
        %v1813 = vld [vmem:[%s1526 + $0x3a] sm:$0xff]
        %v1814 = vld [vmem:[%s1526 + $0x4a] sm:$0xff]
        %v1815 = vld [vmem:[%s1526 + $0x52] sm:$0xff]
        %v1816 = vld [vmem:[%s1526 + $0x62] sm:$0xff]
        %v1817 = vld [vmem:[%s1526 + $0x6a] sm:$0xff]
        %v1818 = vld [vmem:[%s1526 + $0x7a] sm:$0xff]
        %v1819 = vld [vmem:[%s1526 + $0x82] sm:$0xff]
        %v1820 = vld [vmem:[%s1526 + $0x92] sm:$0xff]
        %v1821 = vld [vmem:[%s1526 + $0x9a] sm:$0xff]
        %v1822 = vld [vmem:[%s1526 + $0xaa] sm:$0xff]
        %v1823 = vld [vmem:[%s1526 + $0xb2] sm:$0xff]
        %v1824 = vld [vmem:[%s11 + $0x5] sm:$0x1]
        %v1825 = vlaneseq
        %v1826 = vshrl.u32 %v1825, 7
        %v1827 = vsub.s32 0, %v1826
        %v1828 = vrot.slane %v1824, %v1827
        %v1829 = vmul.f32 %v1808, %v1828
        %v1830 = vmul.f32 %v1809, %v1828
        %v1831 = vmul.f32 %v1810, %v1828
        %v1832 = vmul.f32 %v1811, %v1828
        %v1833 = vmul.f32 %v1812, %v1828
        %v1834 = vmul.f32 %v1813, %v1828
        %v1835 = vmul.f32 %v1814, %v1828
        %v1836 = vmul.f32 %v1815, %v1828
        %v1837 = vmul.f32 %v1816, %v1828
        %v1838 = vmul.f32 %v1817, %v1828
        %v1839 = vmul.f32 %v1818, %v1828
        %v1840 = vmul.f32 %v1819, %v1828
        %v1841 = vmul.f32 %v1820, %v1828
        %v1842 = vmul.f32 %v1821, %v1828
        %v1843 = vmul.f32 %v1822, %v1828
        %v1844 = vmul.f32 %v1823, %v1828
        %v1845 = vadd.f32 %v1792, %v1829
        %v1846 = vadd.f32 %v1793, %v1830
        %v1847 = vadd.f32 %v1794, %v1831
        %v1848 = vadd.f32 %v1795, %v1832
        %v1849 = vadd.f32 %v1796, %v1833
        %v1850 = vadd.f32 %v1797, %v1834
        %v1851 = vadd.f32 %v1798, %v1835
        %v1852 = vadd.f32 %v1799, %v1836
        %v1853 = vadd.f32 %v1800, %v1837
        %v1854 = vadd.f32 %v1801, %v1838
        %v1855 = vadd.f32 %v1802, %v1839
        %v1856 = vadd.f32 %v1803, %v1840
        %v1857 = vadd.f32 %v1804, %v1841
        %v1858 = vadd.f32 %v1805, %v1842
        %v1859 = vadd.f32 %v1806, %v1843
        %v1860 = vadd.f32 %v1807, %v1844
        %s1861 = scalar_lea.vmem [#allocation3], 48
        %v1862 = vld [vmem:[%s1861] sm:$0xff]
        %v1863 = vld [vmem:[%s1861 + $0x8] sm:$0xff]
        %v1864 = vld [vmem:[%s1861 + $0x18] sm:$0xff]
        %v1865 = vld [vmem:[%s1861 + $0x20] sm:$0xff]
        %v1866 = vld [vmem:[%s1861 + $0x30] sm:$0xff]
        %v1867 = vld [vmem:[%s1861 + $0x38] sm:$0xff]
        %v1868 = vld [vmem:[%s1861 + $0x48] sm:$0xff]
        %v1869 = vld [vmem:[%s1861 + $0x50] sm:$0xff]
        %v1870 = vld [vmem:[%s1861 + $0x60] sm:$0xff]
        %v1871 = vld [vmem:[%s1861 + $0x68] sm:$0xff]
        %v1872 = vld [vmem:[%s1861 + $0x78] sm:$0xff]
        %v1873 = vld [vmem:[%s1861 + $0x80] sm:$0xff]
        %v1874 = vld [vmem:[%s1861 + $0x90] sm:$0xff]
        %v1875 = vld [vmem:[%s1861 + $0x98] sm:$0xff]
        %v1876 = vld [vmem:[%s1861 + $0xa8] sm:$0xff]
        %v1877 = vld [vmem:[%s1861 + $0xb0] sm:$0xff]
        %v1878 = vld [vmem:[%s11 + $0x6] sm:$0x1]
        %v1879 = vlaneseq
        %v1880 = vshrl.u32 %v1879, 7
        %v1881 = vsub.s32 0, %v1880
        %v1882 = vrot.slane %v1878, %v1881
        %v1883 = vmul.f32 %v1862, %v1882
        %v1884 = vmul.f32 %v1863, %v1882
        %v1885 = vmul.f32 %v1864, %v1882
        %v1886 = vmul.f32 %v1865, %v1882
        %v1887 = vmul.f32 %v1866, %v1882
        %v1888 = vmul.f32 %v1867, %v1882
        %v1889 = vmul.f32 %v1868, %v1882
        %v1890 = vmul.f32 %v1869, %v1882
        %v1891 = vmul.f32 %v1870, %v1882
        %v1892 = vmul.f32 %v1871, %v1882
        %v1893 = vmul.f32 %v1872, %v1882
        %v1894 = vmul.f32 %v1873, %v1882
        %v1895 = vmul.f32 %v1874, %v1882
        %v1896 = vmul.f32 %v1875, %v1882
        %v1897 = vmul.f32 %v1876, %v1882
        %v1898 = vmul.f32 %v1877, %v1882
        %v1899 = vadd.f32 %v1845, %v1883
        %v1900 = vadd.f32 %v1846, %v1884
        %v1901 = vadd.f32 %v1847, %v1885
        %v1902 = vadd.f32 %v1848, %v1886
        %v1903 = vadd.f32 %v1849, %v1887
        %v1904 = vadd.f32 %v1850, %v1888
        %v1905 = vadd.f32 %v1851, %v1889
        %v1906 = vadd.f32 %v1852, %v1890
        %v1907 = vadd.f32 %v1853, %v1891
        %v1908 = vadd.f32 %v1854, %v1892
        %v1909 = vadd.f32 %v1855, %v1893
        %v1910 = vadd.f32 %v1856, %v1894
        %v1911 = vadd.f32 %v1857, %v1895
        %v1912 = vadd.f32 %v1858, %v1896
        %v1913 = vadd.f32 %v1859, %v1897
        %v1914 = vadd.f32 %v1860, %v1898
        %v1915 = vld [vmem:[%s1861 + $0x1] sm:$0xff]
        %v1916 = vld [vmem:[%s1861 + $0x9] sm:$0xff]
        %v1917 = vld [vmem:[%s1861 + $0x19] sm:$0xff]
        %v1918 = vld [vmem:[%s1861 + $0x21] sm:$0xff]
        %v1919 = vld [vmem:[%s1861 + $0x31] sm:$0xff]
        %v1920 = vld [vmem:[%s1861 + $0x39] sm:$0xff]
        %v1921 = vld [vmem:[%s1861 + $0x49] sm:$0xff]
        %v1922 = vld [vmem:[%s1861 + $0x51] sm:$0xff]
        %v1923 = vld [vmem:[%s1861 + $0x61] sm:$0xff]
        %v1924 = vld [vmem:[%s1861 + $0x69] sm:$0xff]
        %v1925 = vld [vmem:[%s1861 + $0x79] sm:$0xff]
        %v1926 = vld [vmem:[%s1861 + $0x81] sm:$0xff]
        %v1927 = vld [vmem:[%s1861 + $0x91] sm:$0xff]
        %v1928 = vld [vmem:[%s1861 + $0x99] sm:$0xff]
        %v1929 = vld [vmem:[%s1861 + $0xa9] sm:$0xff]
        %v1930 = vld [vmem:[%s1861 + $0xb1] sm:$0xff]
        %v1931 = vld [vmem:[%s11 + $0x7] sm:$0x1]
        %v1932 = vlaneseq
        %v1933 = vshrl.u32 %v1932, 7
        %v1934 = vsub.s32 0, %v1933
        %v1935 = vrot.slane %v1931, %v1934
        %v1936 = vmul.f32 %v1915, %v1935
        %v1937 = vmul.f32 %v1916, %v1935
        %v1938 = vmul.f32 %v1917, %v1935
        %v1939 = vmul.f32 %v1918, %v1935
        %v1940 = vmul.f32 %v1919, %v1935
        %v1941 = vmul.f32 %v1920, %v1935
        %v1942 = vmul.f32 %v1921, %v1935
        %v1943 = vmul.f32 %v1922, %v1935
        %v1944 = vmul.f32 %v1923, %v1935
        %v1945 = vmul.f32 %v1924, %v1935
        %v1946 = vmul.f32 %v1925, %v1935
        %v1947 = vmul.f32 %v1926, %v1935
        %v1948 = vmul.f32 %v1927, %v1935
        %v1949 = vmul.f32 %v1928, %v1935
        %v1950 = vmul.f32 %v1929, %v1935
        %v1951 = vmul.f32 %v1930, %v1935
        %v1952 = vadd.f32 %v1899, %v1936
        %v1953 = vadd.f32 %v1900, %v1937
        %v1954 = vadd.f32 %v1901, %v1938
        %v1955 = vadd.f32 %v1902, %v1939
        %v1956 = vadd.f32 %v1903, %v1940
        %v1957 = vadd.f32 %v1904, %v1941
        %v1958 = vadd.f32 %v1905, %v1942
        %v1959 = vadd.f32 %v1906, %v1943
        %v1960 = vadd.f32 %v1907, %v1944
        %v1961 = vadd.f32 %v1908, %v1945
        %v1962 = vadd.f32 %v1909, %v1946
        %v1963 = vadd.f32 %v1910, %v1947
        %v1964 = vadd.f32 %v1911, %v1948
        %v1965 = vadd.f32 %v1912, %v1949
        %v1966 = vadd.f32 %v1913, %v1950
        %v1967 = vadd.f32 %v1914, %v1951
        %v1968 = vld [vmem:[%s1861 + $0x2] sm:$0xff]
        %v1969 = vld [vmem:[%s1861 + $0xa] sm:$0xff]
        %v1970 = vld [vmem:[%s1861 + $0x1a] sm:$0xff]
        %v1971 = vld [vmem:[%s1861 + $0x22] sm:$0xff]
        %v1972 = vld [vmem:[%s1861 + $0x32] sm:$0xff]
        %v1973 = vld [vmem:[%s1861 + $0x3a] sm:$0xff]
        %v1974 = vld [vmem:[%s1861 + $0x4a] sm:$0xff]
        %v1975 = vld [vmem:[%s1861 + $0x52] sm:$0xff]
        %v1976 = vld [vmem:[%s1861 + $0x62] sm:$0xff]
        %v1977 = vld [vmem:[%s1861 + $0x6a] sm:$0xff]
        %v1978 = vld [vmem:[%s1861 + $0x7a] sm:$0xff]
        %v1979 = vld [vmem:[%s1861 + $0x82] sm:$0xff]
        %v1980 = vld [vmem:[%s1861 + $0x92] sm:$0xff]
        %v1981 = vld [vmem:[%s1861 + $0x9a] sm:$0xff]
        %v1982 = vld [vmem:[%s1861 + $0xaa] sm:$0xff]
        %v1983 = vld [vmem:[%s1861 + $0xb2] sm:$0xff]
        %v1984 = vld [vmem:[%s11 + $0x8] sm:$0x1]
        %v1985 = vlaneseq
        %v1986 = vshrl.u32 %v1985, 7
        %v1987 = vsub.s32 0, %v1986
        %v1988 = vrot.slane %v1984, %v1987
        %v1989 = vmul.f32 %v1968, %v1988
        %v1990 = vmul.f32 %v1969, %v1988
        %v1991 = vmul.f32 %v1970, %v1988
        %v1992 = vmul.f32 %v1971, %v1988
        %v1993 = vmul.f32 %v1972, %v1988
        %v1994 = vmul.f32 %v1973, %v1988
        %v1995 = vmul.f32 %v1974, %v1988
        %v1996 = vmul.f32 %v1975, %v1988
        %v1997 = vmul.f32 %v1976, %v1988
        %v1998 = vmul.f32 %v1977, %v1988
        %v1999 = vmul.f32 %v1978, %v1988
        %v2000 = vmul.f32 %v1979, %v1988
        %v2001 = vmul.f32 %v1980, %v1988
        %v2002 = vmul.f32 %v1981, %v1988
        %v2003 = vmul.f32 %v1982, %v1988
        %v2004 = vmul.f32 %v1983, %v1988
        %v2005 = vadd.f32 %v1952, %v1989
        %v2006 = vadd.f32 %v1953, %v1990
        %v2007 = vadd.f32 %v1954, %v1991
        %v2008 = vadd.f32 %v1955, %v1992
        %v2009 = vadd.f32 %v1956, %v1993
        %v2010 = vadd.f32 %v1957, %v1994
        %v2011 = vadd.f32 %v1958, %v1995
        %v2012 = vadd.f32 %v1959, %v1996
        %v2013 = vadd.f32 %v1960, %v1997
        %v2014 = vadd.f32 %v1961, %v1998
        %v2015 = vadd.f32 %v1962, %v1999
        %v2016 = vadd.f32 %v1963, %v2000
        %v2017 = vadd.f32 %v1964, %v2001
        %v2018 = vadd.f32 %v1965, %v2002
        %v2019 = vadd.f32 %v1966, %v2003
        %v2020 = vadd.f32 %v1967, %v2004
        %v2021 = vld [vmem:[%s13] sm:$0x1]
        %v2023 = vlaneseq
        %v2024 = vshrl.u32 %v2023, 7
        %v2025 = vsub.s32 0, %v2024
        %v2026 = vrot.slane %v2021, %v2025
        %v2028 = vadd.f32 %v2005, %v2026
        %v2029 = vadd.f32 %v2006, %v2026
        %v2030 = vadd.f32 %v2007, %v2026
        %v2031 = vadd.f32 %v2008, %v2026
        %v2032 = vadd.f32 %v2009, %v2026
        %v2033 = vadd.f32 %v2010, %v2026
        %v2034 = vadd.f32 %v2011, %v2026
        %v2035 = vadd.f32 %v2012, %v2026
        %v2036 = vadd.f32 %v2013, %v2026
        %v2037 = vadd.f32 %v2014, %v2026
        %v2038 = vadd.f32 %v2015, %v2026
        %v2039 = vadd.f32 %v2016, %v2026
        %v2040 = vadd.f32 %v2017, %v2026
        %v2041 = vadd.f32 %v2018, %v2026
        %v2042 = vadd.f32 %v2019, %v2026
        %v2043 = vadd.f32 %v2020, %v2026
        %2060 = vrot.lane.b32.xlu0 %v2028, 112
        %v2061 = vpop.permute.xlu0 %2060
        %2062 = vrot.lane.b32.xlu0 %v2029, 112
        %v2063 = vpop.permute.xlu0 %2062
        %2064 = vrot.lane.b32.xlu0 %v2030, 112
        %v2065 = vpop.permute.xlu0 %2064
        %2066 = vrot.lane.b32.xlu0 %v2031, 112
        %v2067 = vpop.permute.xlu0 %2066
        %2068 = vrot.lane.b32.xlu0 %v2032, 112
        %v2069 = vpop.permute.xlu0 %2068
        %2070 = vrot.lane.b32.xlu0 %v2033, 112
        %v2071 = vpop.permute.xlu0 %2070
        %2072 = vrot.lane.b32.xlu0 %v2034, 112
        %v2073 = vpop.permute.xlu0 %2072
        %2074 = vrot.lane.b32.xlu0 %v2035, 112
        %v2075 = vpop.permute.xlu0 %2074
        %2076 = vrot.lane.b32.xlu0 %v2036, 112
        %v2077 = vpop.permute.xlu0 %2076
        %2078 = vrot.lane.b32.xlu0 %v2037, 112
        %v2079 = vpop.permute.xlu0 %2078
        %2080 = vrot.lane.b32.xlu0 %v2038, 112
        %v2081 = vpop.permute.xlu0 %2080
        %2082 = vrot.lane.b32.xlu0 %v2039, 112
        %v2083 = vpop.permute.xlu0 %2082
        %2084 = vrot.lane.b32.xlu0 %v2040, 112
        %v2085 = vpop.permute.xlu0 %2084
        %2086 = vrot.lane.b32.xlu0 %v2041, 112
        %v2087 = vpop.permute.xlu0 %2086
        %2088 = vrot.lane.b32.xlu0 %v2042, 112
        %v2089 = vpop.permute.xlu0 %2088
        %2090 = vrot.lane.b32.xlu0 %v2043, 112
        %v2091 = vpop.permute.xlu0 %2090
        %v2108 = vmul.f32 %v2028, %v2061
        %v2109 = vmul.f32 %v2029, %v2063
        %v2110 = vmul.f32 %v2030, %v2065
        %v2111 = vmul.f32 %v2031, %v2067
        %v2112 = vmul.f32 %v2032, %v2069
        %v2113 = vmul.f32 %v2033, %v2071
        %v2114 = vmul.f32 %v2034, %v2073
        %v2115 = vmul.f32 %v2035, %v2075
        %v2116 = vmul.f32 %v2036, %v2077
        %v2117 = vmul.f32 %v2037, %v2079
        %v2118 = vmul.f32 %v2038, %v2081
        %v2119 = vmul.f32 %v2039, %v2083
        %v2120 = vmul.f32 %v2040, %v2085
        %v2121 = vmul.f32 %v2041, %v2087
        %v2122 = vmul.f32 %v2042, %v2089
        %v2123 = vmul.f32 %v2043, %v2091
        %v2124 = vsel %vm952, %v2108, 0.0
        %v2125 = vsel %vm952, %v2110, 0.0
        %v2126 = vadd.f32 %v2124, %v2125
        %v2127 = vsel %vm952, %v2112, 0.0
        %v2128 = vadd.f32 %v2126, %v2127
        %v2129 = vsel %vm952, %v2114, 0.0
        %v2130 = vadd.f32 %v2128, %v2129
        %v2131 = vsel %vm952, %v2116, 0.0
        %v2132 = vadd.f32 %v2130, %v2131
        %v2133 = vsel %vm952, %v2118, 0.0
        %v2134 = vadd.f32 %v2132, %v2133
        %v2135 = vsel %vm952, %v2120, 0.0
        %v2136 = vadd.f32 %v2134, %v2135
        %v2137 = vsel %vm952, %v2122, 0.0
        %v2138 = vadd.f32 %v2136, %v2137
        %v2139 = vsel %vm952, %v2109, 0.0
        %v2140 = vsel %vm952, %v2111, 0.0
        %v2141 = vadd.f32 %v2139, %v2140
        %v2142 = vsel %vm952, %v2113, 0.0
        %v2143 = vadd.f32 %v2141, %v2142
        %v2144 = vsel %vm952, %v2115, 0.0
        %v2145 = vadd.f32 %v2143, %v2144
        %v2146 = vsel %vm952, %v2117, 0.0
        %v2147 = vadd.f32 %v2145, %v2146
        %v2148 = vsel %vm952, %v2119, 0.0
        %v2149 = vadd.f32 %v2147, %v2148
        %v2150 = vsel %vm952, %v2121, 0.0
        %v2151 = vadd.f32 %v2149, %v2150
        %v2152 = vsel %vm952, %v2123, 0.0
        %v2153 = vadd.f32 %v2151, %v2152
        %v2154 = vrcp.pop 8.0
        %v2155 = vmul.f32 %v2138, %v2154
        %v2156 = vmul.f32 %v2153, %v2154
        %v2157 = vsel %vm952, %v2155, 0.0
        %v2158 = vsel %vm952, %v2156, 0.0
        %v2159 = vadd.f32 %v2157, %v2158
        %v2160 = vrot.slane %v2159, 4
        %v2161 = vadd.f32 %v2159, %v2160
        %v2162 = vrot.slane %v2161, 2
        %v2163 = vadd.f32 %v2161, %v2162
        %v2164 = vrot.slane %v2163, 1
        %v2165 = vadd.f32 %v2163, %v2164
        %v2166 = vmul.f32 %v2165, %v1149
        %v2167 = vld [vmem:[%s15] sm:$0xff]
        %v2168 = vld [vmem:[%s15 + $0x8] sm:$0xff]
        %v2169 = vmul.f32 %v2167, %v2166
        %v2170 = vmul.f32 %v2168, %v2166
        %v2171 = vsel %vm952, %v2169, 0.0
        %2172 = vadd.xlane.f32.xlu0 %v2171
        %v2173 = vpop.xlane.xlu0 %2172
        %v2174 = vsel %vm952, %v2170, 0.0
        %2175 = vadd.xlane.f32.xlu0 %v2174
        %v2176 = vpop.xlane.xlu0 %2175
        %v2177 = vld [vmem:[%s17] sm:$0x1]
        %v2179 = vlaneseq
        %v2180 = vshrl.u32 %v2179, 7
        %v2181 = vsub.s32 0, %v2180
        %v2182 = vrot.slane %v2177, %v2181
        %2184 = vbcast.lane.b32.xlu0 %v2182, 256
        %v2185 = vpop.permute.xlu0 %2184
        %s2187 = sor.u32 256, 8
        %2188 = vbcast.lane.b32.xlu0 %v2182, %s2187
        %v2189 = vpop.permute.xlu0 %2188
        %v2192 = vadd.f32 %v2173, %v2185
        %v2193 = vadd.f32 %v2176, %v2189
        %2196 = vset.pattern.permute.xlu0 0
        %2197 = vperm.xlu0 %2196, %v2192
        %v2198 = vpop.permute.xlu0 %2197
        %2199 = vset.pattern.permute.xlu0 0
        %2200 = vperm.xlu0 %2199, %v2193
        %v2201 = vpop.permute.xlu0 %2200
        %v2202 = vlaneseq
        %v2203 = vand.u32 %v2202, 127
        %v2204 = vlaneseq
        %v2205 = vshrl.u32 %v2204, 7
        %v2206 = vsub.s32 %v2203, %v2205
        %v2207 = vrot.slane %v2198, %v2206
        %v2208 = vadd.s32 %v2203, 4294967288
        %v2209 = vlaneseq
        %v2210 = vshrl.u32 %v2209, 7
        %v2211 = vsub.s32 %v2208, %v2210
        %v2212 = vrot.slane %v2201, %v2211
        %vm2213 = vcmask 130112
        %v2214 = vsel %vm2213, %v2212, %v2207
        %vm2215 = vcmask 1042434
        %v2216 = vsel %vm2215, %v2214, %v2214
        %vm2217 = vcmask 1043459
        %v2218 = vsel %vm2217, %v2214, %v2216
        %vm2219 = vcmask 1044484
        %v2220 = vsel %vm2219, %v2214, %v2218
        %vm2221 = vcmask 1045509
        %v2222 = vsel %vm2221, %v2214, %v2220
        %vm2223 = vcmask 1046534
        %v2224 = vsel %vm2223, %v2214, %v2222
        %vm2225 = vcmask 1047559
        %v2226 = vsel %vm2225, %v2214, %v2224
        %v2228 = vmul.f32 %v2108, %v2226
        %v2229 = vmul.f32 %v2109, %v2226
        %v2230 = vmul.f32 %v2110, %v2226
        %v2231 = vmul.f32 %v2111, %v2226
        %v2232 = vmul.f32 %v2112, %v2226
        %v2233 = vmul.f32 %v2113, %v2226
        %v2234 = vmul.f32 %v2114, %v2226
        %v2235 = vmul.f32 %v2115, %v2226
        %v2236 = vmul.f32 %v2116, %v2226
        %v2237 = vmul.f32 %v2117, %v2226
        %v2238 = vmul.f32 %v2118, %v2226
        %v2239 = vmul.f32 %v2119, %v2226
        %v2240 = vmul.f32 %v2120, %v2226
        %v2241 = vmul.f32 %v2121, %v2226
        %v2242 = vmul.f32 %v2122, %v2226
        %v2243 = vmul.f32 %v2123, %v2226
        %v2244 = vpack.c.bf16 %v2229, %v2228
        %v2245 = vpack.c.bf16 %v2231, %v2230
        %v2246 = vpack.c.bf16 %v2233, %v2232
        %v2247 = vpack.c.bf16 %v2235, %v2234
        %v2248 = vpack.c.bf16 %v2237, %v2236
        %v2249 = vpack.c.bf16 %v2239, %v2238
        %v2250 = vpack.c.bf16 %v2241, %v2240
        %v2251 = vpack.c.bf16 %v2243, %v2242
        %v2252 = vld [vmem:[%s19] sm:$0xf]
        %v2253 = vld [vmem:[%s19 + $0x4] sm:$0xf]
        %v2254 = vld [vmem:[%s21] sm:$0x1]
        %v2256 = vlaneseq
        %v2257 = vshrl.u32 %v2256, 7
        %v2258 = vsub.s32 0, %v2257
        %v2259 = vrot.slane %v2254, %v2258
        %v2263 = vunpack.c.l.b16 %v2252
        %v2264 = vunpack.c.l.b16 %v2253
        %v2265 = vpack.c.b16 %v2264, %v2263
        %v2268 = vsel %vm952, %v2244, 0
        %v2271 = vsel %vm952, %v2245, 0
        %v2274 = vsel %vm952, %v2246, 0
        %v2277 = vsel %vm952, %v2247, 0
        %v2280 = vsel %vm952, %v2248, 0
        %v2283 = vsel %vm952, %v2249, 0
        %v2286 = vsel %vm952, %v2250, 0
        %v2289 = vsel %vm952, %v2251, 0
        %2291 = vmatprep.subr.bf16.mxu0 0
        %2292 = vmatpush1.bf16.msra.mxu0 %v2265
        %2293 = vmatprep.subr.bf16.mxu0 0
        %2294 = vmatpush1.bf16.msra.mxu0 0
        %2295 = vmatprep.subr.bf16.mxu0 0
        %2296 = vmatpush1.bf16.msra.mxu0 0
        %2297 = vmatprep.subr.bf16.mxu0 0
        %2298 = vmatpush1.bf16.msra.mxu0 0
        %2299 = vmatprep.subr.bf16.mxu0 0
        %2300 = vmatpush1.bf16.msra.mxu0 0
        %2301 = vmatprep.subr.bf16.mxu0 0
        %2302 = vmatpush1.bf16.msra.mxu0 0
        %2303 = vmatprep.subr.bf16.mxu0 0
        %2304 = vmatpush1.bf16.msra.mxu0 0
        %2305 = vmatprep.subr.bf16.mxu0 0
        %2306 = vmatpush1.bf16.msra.mxu0 0
        %2307 = vmatprep.subr.bf16.mxu0 0
        %2308 = vmatpush1.bf16.msra.mxu0 0
        %2309 = vmatprep.subr.bf16.mxu0 0
        %2310 = vmatpush1.bf16.msra.mxu0 0
        %2311 = vmatprep.subr.bf16.mxu0 0
        %2312 = vmatpush1.bf16.msra.mxu0 0
        %2313 = vmatprep.subr.bf16.mxu0 0
        %2314 = vmatpush1.bf16.msra.mxu0 0
        %2315 = vmatprep.subr.bf16.mxu0 0
        %2316 = vmatpush1.bf16.msra.mxu0 0
        %2317 = vmatprep.subr.bf16.mxu0 0
        %2318 = vmatpush1.bf16.msra.mxu0 0
        %2319 = vmatprep.subr.bf16.mxu0 0
        %2320 = vmatpush1.bf16.msra.mxu0 0
        %2321 = vmatprep.subr.bf16.mxu0 0
        %2322 = vmatpush1.bf16.msra.mxu0 0
        %2323 = vmatprep.mubr.bf16.mxu0 0
        %2324 = vmatmul.mubr.bf16.gmra.mrb[0].mxu0 %v2268
        %v2325 = vpop.f32.mrb[0].mxu0
        %v2326 = vadd.f32 %v2259, %v2325
        %v2327 = vpop.f32.mrb[0].mxu0
        %v2328 = vpop.f32.mrb[0].mxu0
        %v2329 = vadd.f32 %v2259, %v2328
        %v2330 = vpop.f32.mrb[0].mxu0
        %2331 = vmatprep.mubr.bf16.mxu0 0
        %2332 = vmatmul.mubr.bf16.gmra.mrb[0].mxu0 %v2271
        %v2333 = vpop.f32.mrb[0].mxu0
        %v2334 = vadd.f32 %v2259, %v2333
        %v2335 = vpop.f32.mrb[0].mxu0
        %v2336 = vpop.f32.mrb[0].mxu0
        %v2337 = vadd.f32 %v2259, %v2336
        %v2338 = vpop.f32.mrb[0].mxu0
        %2339 = vmatprep.mubr.bf16.mxu0 0
        %2340 = vmatmul.mubr.bf16.gmra.mrb[0].mxu0 %v2274
        %v2341 = vpop.f32.mrb[0].mxu0
        %v2342 = vadd.f32 %v2259, %v2341
        %v2343 = vpop.f32.mrb[0].mxu0
        %v2344 = vpop.f32.mrb[0].mxu0
        %v2345 = vadd.f32 %v2259, %v2344
        %v2346 = vpop.f32.mrb[0].mxu0
        %2347 = vmatprep.mubr.bf16.mxu0 0
        %2348 = vmatmul.mubr.bf16.gmra.mrb[0].mxu0 %v2277
        %v2349 = vpop.f32.mrb[0].mxu0
        %v2350 = vadd.f32 %v2259, %v2349
        %v2351 = vpop.f32.mrb[0].mxu0
        %v2352 = vpop.f32.mrb[0].mxu0
        %v2353 = vadd.f32 %v2259, %v2352
        %v2354 = vpop.f32.mrb[0].mxu0
        %2355 = vmatprep.mubr.bf16.mxu0 0
        %2356 = vmatmul.mubr.bf16.gmra.mrb[0].mxu0 %v2280
        %v2357 = vpop.f32.mrb[0].mxu0
        %v2358 = vadd.f32 %v2259, %v2357
        %v2359 = vpop.f32.mrb[0].mxu0
        %v2360 = vpop.f32.mrb[0].mxu0
        %v2361 = vadd.f32 %v2259, %v2360
        %v2362 = vpop.f32.mrb[0].mxu0
        %2363 = vmatprep.mubr.bf16.mxu0 0
        %2364 = vmatmul.mubr.bf16.gmra.mrb[0].mxu0 %v2283
        %v2365 = vpop.f32.mrb[0].mxu0
        %v2366 = vadd.f32 %v2259, %v2365
        %v2367 = vpop.f32.mrb[0].mxu0
        %v2368 = vpop.f32.mrb[0].mxu0
        %v2369 = vadd.f32 %v2259, %v2368
        %v2370 = vpop.f32.mrb[0].mxu0
        %2371 = vmatprep.mubr.bf16.mxu0 0
        %2372 = vmatmul.mubr.bf16.gmra.mrb[0].mxu0 %v2286
        %v2373 = vpop.f32.mrb[0].mxu0
        %v2374 = vadd.f32 %v2259, %v2373
        %v2375 = vpop.f32.mrb[0].mxu0
        %v2376 = vpop.f32.mrb[0].mxu0
        %v2377 = vadd.f32 %v2259, %v2376
        %v2378 = vpop.f32.mrb[0].mxu0
        %2379 = vmatprep.mubr.bf16.mxu0 0
        %2380 = vmatmul.mubr.bf16.gmra.mrb[0].mxu0 %v2289
        %v2381 = vpop.f32.mrb[0].mxu0
        %v2382 = vadd.f32 %v2259, %v2381
        %v2383 = vpop.f32.mrb[0].mxu0
        %v2384 = vpop.f32.mrb[0].mxu0
        %v2385 = vadd.f32 %v2259, %v2384
        %v2386 = vpop.f32.mrb[0].mxu0
        %2387 = vdwg.mxu0
        %v2388 = vld [vmem:[#allocation2] sm:$0xff]
        %v2389 = vld [vmem:[#allocation2 + $0x8] sm:$0xff]
        %v2390 = vld [vmem:[#allocation2 + $0x10] sm:$0xff]
        %v2391 = vld [vmem:[#allocation2 + $0x18] sm:$0xff]
        %v2392 = vld [vmem:[#allocation2 + $0x20] sm:$0xff]
        %v2393 = vld [vmem:[#allocation2 + $0x28] sm:$0xff]
        %v2394 = vld [vmem:[#allocation2 + $0x30] sm:$0xff]
        %v2395 = vld [vmem:[#allocation2 + $0x38] sm:$0xff]
        %v2396 = vld [vmem:[#allocation2 + $0x40] sm:$0xff]
        %v2397 = vld [vmem:[#allocation2 + $0x48] sm:$0xff]
        %v2398 = vld [vmem:[#allocation2 + $0x50] sm:$0xff]
        %v2399 = vld [vmem:[#allocation2 + $0x58] sm:$0xff]
        %v2400 = vld [vmem:[#allocation2 + $0x60] sm:$0xff]
        %v2401 = vld [vmem:[#allocation2 + $0x68] sm:$0xff]
        %v2402 = vld [vmem:[#allocation2 + $0x70] sm:$0xff]
        %v2403 = vld [vmem:[#allocation2 + $0x78] sm:$0xff]
        %v2404 = vadd.f32 %v2388, %v2326
        %v2405 = vadd.f32 %v2389, %v2329
        %v2406 = vadd.f32 %v2390, %v2334
        %v2407 = vadd.f32 %v2391, %v2337
        %v2408 = vadd.f32 %v2392, %v2342
        %v2409 = vadd.f32 %v2393, %v2345
        %v2410 = vadd.f32 %v2394, %v2350
        %v2411 = vadd.f32 %v2395, %v2353
        %v2412 = vadd.f32 %v2396, %v2358
        %v2413 = vadd.f32 %v2397, %v2361
        %v2414 = vadd.f32 %v2398, %v2366
        %v2415 = vadd.f32 %v2399, %v2369
        %v2416 = vadd.f32 %v2400, %v2374
        %v2417 = vadd.f32 %v2401, %v2377
        %v2418 = vadd.f32 %v2402, %v2382
        %v2419 = vadd.f32 %v2403, %v2385
        %2420 = vst.msk [vmem:[#allocation2] sm:$0xff] %vm952, %v2404
        %2421 = vst.msk [vmem:[#allocation2 + $0x8] sm:$0xff] %vm952, %v2405
        %2422 = vst.msk [vmem:[#allocation2 + $0x10] sm:$0xff] %vm952, %v2406
        %2423 = vst.msk [vmem:[#allocation2 + $0x18] sm:$0xff] %vm952, %v2407
        %2424 = vst.msk [vmem:[#allocation2 + $0x20] sm:$0xff] %vm952, %v2408
        %2425 = vst.msk [vmem:[#allocation2 + $0x28] sm:$0xff] %vm952, %v2409
        %2426 = vst.msk [vmem:[#allocation2 + $0x30] sm:$0xff] %vm952, %v2410
        %2427 = vst.msk [vmem:[#allocation2 + $0x38] sm:$0xff] %vm952, %v2411
        %2428 = vst.msk [vmem:[#allocation2 + $0x40] sm:$0xff] %vm952, %v2412
        %2429 = vst.msk [vmem:[#allocation2 + $0x48] sm:$0xff] %vm952, %v2413
        %2430 = vst.msk [vmem:[#allocation2 + $0x50] sm:$0xff] %vm952, %v2414
        %2431 = vst.msk [vmem:[#allocation2 + $0x58] sm:$0xff] %vm952, %v2415
        %2432 = vst.msk [vmem:[#allocation2 + $0x60] sm:$0xff] %vm952, %v2416
        %2433 = vst.msk [vmem:[#allocation2 + $0x68] sm:$0xff] %vm952, %v2417
        %2434 = vst.msk [vmem:[#allocation2 + $0x70] sm:$0xff] %vm952, %v2418
        %2435 = vst.msk [vmem:[#allocation2 + $0x78] sm:$0xff] %vm952, %v2419
        %v2436 = vld [vmem:[#allocation2] sm:$0xff]
        %v2437 = vld [vmem:[#allocation2 + $0x8] sm:$0xff]
        %v2438 = vld [vmem:[#allocation2 + $0x10] sm:$0xff]
        %v2439 = vld [vmem:[#allocation2 + $0x18] sm:$0xff]
        %v2440 = vld [vmem:[#allocation2 + $0x20] sm:$0xff]
        %v2441 = vld [vmem:[#allocation2 + $0x28] sm:$0xff]
        %v2442 = vld [vmem:[#allocation2 + $0x30] sm:$0xff]
        %v2443 = vld [vmem:[#allocation2 + $0x38] sm:$0xff]
        %v2444 = vld [vmem:[#allocation2 + $0x40] sm:$0xff]
        %v2445 = vld [vmem:[#allocation2 + $0x48] sm:$0xff]
        %v2446 = vld [vmem:[#allocation2 + $0x50] sm:$0xff]
        %v2447 = vld [vmem:[#allocation2 + $0x58] sm:$0xff]
        %v2448 = vld [vmem:[#allocation2 + $0x60] sm:$0xff]
        %v2449 = vld [vmem:[#allocation2 + $0x68] sm:$0xff]
        %v2450 = vld [vmem:[#allocation2 + $0x70] sm:$0xff]
        %v2451 = vld [vmem:[#allocation2 + $0x78] sm:$0xff]
        %s2452 = scalar_lea.vmem [#allocation4], 72
        %2453 = vst.msk [vmem:[%s2452 + $0x3] sm:$0xff] %vm952, %v2436
        %2454 = vst.msk [vmem:[%s2452 + $0xb] sm:$0xff] %vm952, %v2437
        %2455 = vst.msk [vmem:[%s2452 + $0x1b] sm:$0xff] %vm952, %v2438
        %2456 = vst.msk [vmem:[%s2452 + $0x23] sm:$0xff] %vm952, %v2439
        %2457 = vst.msk [vmem:[%s2452 + $0x33] sm:$0xff] %vm952, %v2440
        %2458 = vst.msk [vmem:[%s2452 + $0x3b] sm:$0xff] %vm952, %v2441
        %2459 = vst.msk [vmem:[%s2452 + $0x4b] sm:$0xff] %vm952, %v2442
        %2460 = vst.msk [vmem:[%s2452 + $0x53] sm:$0xff] %vm952, %v2443
        %2461 = vst.msk [vmem:[%s2452 + $0x63] sm:$0xff] %vm952, %v2444
        %2462 = vst.msk [vmem:[%s2452 + $0x6b] sm:$0xff] %vm952, %v2445
        %2463 = vst.msk [vmem:[%s2452 + $0x7b] sm:$0xff] %vm952, %v2446
        %2464 = vst.msk [vmem:[%s2452 + $0x83] sm:$0xff] %vm952, %v2447
        %2465 = vst.msk [vmem:[%s2452 + $0x93] sm:$0xff] %vm952, %v2448
        %2466 = vst.msk [vmem:[%s2452 + $0x9b] sm:$0xff] %vm952, %v2449
        %2467 = vst.msk [vmem:[%s2452 + $0xab] sm:$0xff] %vm952, %v2450
        %2468 = vst.msk [vmem:[%s2452 + $0xb3] sm:$0xff] %vm952, %v2451
        %v2469 = vld [vmem:[#allocation4] sm:$0xff]
        %v2470 = vld [vmem:[#allocation4 + $0x8] sm:$0xff]
        %v2471 = vld [vmem:[#allocation4 + $0x18] sm:$0xff]
        %v2472 = vld [vmem:[#allocation4 + $0x20] sm:$0xff]
        %v2473 = vld [vmem:[#allocation4 + $0x30] sm:$0xff]
        %v2474 = vld [vmem:[#allocation4 + $0x38] sm:$0xff]
        %v2475 = vld [vmem:[#allocation4 + $0x48] sm:$0xff]
        %v2476 = vld [vmem:[#allocation4 + $0x50] sm:$0xff]
        %v2477 = vld [vmem:[#allocation4 + $0x60] sm:$0xff]
        %v2478 = vld [vmem:[#allocation4 + $0x68] sm:$0xff]
        %v2479 = vld [vmem:[#allocation4 + $0x78] sm:$0xff]
        %v2480 = vld [vmem:[#allocation4 + $0x80] sm:$0xff]
        %v2481 = vld [vmem:[#allocation4 + $0x90] sm:$0xff]
        %v2482 = vld [vmem:[#allocation4 + $0x98] sm:$0xff]
        %v2483 = vld [vmem:[#allocation4 + $0xa8] sm:$0xff]
        %v2484 = vld [vmem:[#allocation4 + $0xb0] sm:$0xff]
        %v2485 = vld [vmem:[%s23] sm:$0x1]
        %v2486 = vlaneseq
        %v2487 = vshrl.u32 %v2486, 7
        %v2488 = vsub.s32 0, %v2487
        %v2489 = vrot.slane %v2485, %v2488
        %v2490 = vmul.f32 %v2469, %v2489
        %v2491 = vmul.f32 %v2470, %v2489
        %v2492 = vmul.f32 %v2471, %v2489
        %v2493 = vmul.f32 %v2472, %v2489
        %v2494 = vmul.f32 %v2473, %v2489
        %v2495 = vmul.f32 %v2474, %v2489
        %v2496 = vmul.f32 %v2475, %v2489
        %v2497 = vmul.f32 %v2476, %v2489
        %v2498 = vmul.f32 %v2477, %v2489
        %v2499 = vmul.f32 %v2478, %v2489
        %v2500 = vmul.f32 %v2479, %v2489
        %v2501 = vmul.f32 %v2480, %v2489
        %v2502 = vmul.f32 %v2481, %v2489
        %v2503 = vmul.f32 %v2482, %v2489
        %v2504 = vmul.f32 %v2483, %v2489
        %v2505 = vmul.f32 %v2484, %v2489
        %v2506 = vadd.f32 %v2490, 0.0
        %v2507 = vadd.f32 %v2491, 0.0
        %v2508 = vadd.f32 %v2492, 0.0
        %v2509 = vadd.f32 %v2493, 0.0
        %v2510 = vadd.f32 %v2494, 0.0
        %v2511 = vadd.f32 %v2495, 0.0
        %v2512 = vadd.f32 %v2496, 0.0
        %v2513 = vadd.f32 %v2497, 0.0
        %v2514 = vadd.f32 %v2498, 0.0
        %v2515 = vadd.f32 %v2499, 0.0
        %v2516 = vadd.f32 %v2500, 0.0
        %v2517 = vadd.f32 %v2501, 0.0
        %v2518 = vadd.f32 %v2502, 0.0
        %v2519 = vadd.f32 %v2503, 0.0
        %v2520 = vadd.f32 %v2504, 0.0
        %v2521 = vadd.f32 %v2505, 0.0
        %v2522 = vld [vmem:[#allocation4 + $0x1] sm:$0xff]
        %v2523 = vld [vmem:[#allocation4 + $0x9] sm:$0xff]
        %v2524 = vld [vmem:[#allocation4 + $0x19] sm:$0xff]
        %v2525 = vld [vmem:[#allocation4 + $0x21] sm:$0xff]
        %v2526 = vld [vmem:[#allocation4 + $0x31] sm:$0xff]
        %v2527 = vld [vmem:[#allocation4 + $0x39] sm:$0xff]
        %v2528 = vld [vmem:[#allocation4 + $0x49] sm:$0xff]
        %v2529 = vld [vmem:[#allocation4 + $0x51] sm:$0xff]
        %v2530 = vld [vmem:[#allocation4 + $0x61] sm:$0xff]
        %v2531 = vld [vmem:[#allocation4 + $0x69] sm:$0xff]
        %v2532 = vld [vmem:[#allocation4 + $0x79] sm:$0xff]
        %v2533 = vld [vmem:[#allocation4 + $0x81] sm:$0xff]
        %v2534 = vld [vmem:[#allocation4 + $0x91] sm:$0xff]
        %v2535 = vld [vmem:[#allocation4 + $0x99] sm:$0xff]
        %v2536 = vld [vmem:[#allocation4 + $0xa9] sm:$0xff]
        %v2537 = vld [vmem:[#allocation4 + $0xb1] sm:$0xff]
        %v2538 = vld [vmem:[%s23 + $0x1] sm:$0x1]
        %v2539 = vlaneseq
        %v2540 = vshrl.u32 %v2539, 7
        %v2541 = vsub.s32 0, %v2540
        %v2542 = vrot.slane %v2538, %v2541
        %v2543 = vmul.f32 %v2522, %v2542
        %v2544 = vmul.f32 %v2523, %v2542
        %v2545 = vmul.f32 %v2524, %v2542
        %v2546 = vmul.f32 %v2525, %v2542
        %v2547 = vmul.f32 %v2526, %v2542
        %v2548 = vmul.f32 %v2527, %v2542
        %v2549 = vmul.f32 %v2528, %v2542
        %v2550 = vmul.f32 %v2529, %v2542
        %v2551 = vmul.f32 %v2530, %v2542
        %v2552 = vmul.f32 %v2531, %v2542
        %v2553 = vmul.f32 %v2532, %v2542
        %v2554 = vmul.f32 %v2533, %v2542
        %v2555 = vmul.f32 %v2534, %v2542
        %v2556 = vmul.f32 %v2535, %v2542
        %v2557 = vmul.f32 %v2536, %v2542
        %v2558 = vmul.f32 %v2537, %v2542
        %v2559 = vadd.f32 %v2506, %v2543
        %v2560 = vadd.f32 %v2507, %v2544
        %v2561 = vadd.f32 %v2508, %v2545
        %v2562 = vadd.f32 %v2509, %v2546
        %v2563 = vadd.f32 %v2510, %v2547
        %v2564 = vadd.f32 %v2511, %v2548
        %v2565 = vadd.f32 %v2512, %v2549
        %v2566 = vadd.f32 %v2513, %v2550
        %v2567 = vadd.f32 %v2514, %v2551
        %v2568 = vadd.f32 %v2515, %v2552
        %v2569 = vadd.f32 %v2516, %v2553
        %v2570 = vadd.f32 %v2517, %v2554
        %v2571 = vadd.f32 %v2518, %v2555
        %v2572 = vadd.f32 %v2519, %v2556
        %v2573 = vadd.f32 %v2520, %v2557
        %v2574 = vadd.f32 %v2521, %v2558
        %v2575 = vld [vmem:[#allocation4 + $0x2] sm:$0xff]
        %v2576 = vld [vmem:[#allocation4 + $0xa] sm:$0xff]
        %v2577 = vld [vmem:[#allocation4 + $0x1a] sm:$0xff]
        %v2578 = vld [vmem:[#allocation4 + $0x22] sm:$0xff]
        %v2579 = vld [vmem:[#allocation4 + $0x32] sm:$0xff]
        %v2580 = vld [vmem:[#allocation4 + $0x3a] sm:$0xff]
        %v2581 = vld [vmem:[#allocation4 + $0x4a] sm:$0xff]
        %v2582 = vld [vmem:[#allocation4 + $0x52] sm:$0xff]
        %v2583 = vld [vmem:[#allocation4 + $0x62] sm:$0xff]
        %v2584 = vld [vmem:[#allocation4 + $0x6a] sm:$0xff]
        %v2585 = vld [vmem:[#allocation4 + $0x7a] sm:$0xff]
        %v2586 = vld [vmem:[#allocation4 + $0x82] sm:$0xff]
        %v2587 = vld [vmem:[#allocation4 + $0x92] sm:$0xff]
        %v2588 = vld [vmem:[#allocation4 + $0x9a] sm:$0xff]
        %v2589 = vld [vmem:[#allocation4 + $0xaa] sm:$0xff]
        %v2590 = vld [vmem:[#allocation4 + $0xb2] sm:$0xff]
        %v2591 = vld [vmem:[%s23 + $0x2] sm:$0x1]
        %v2592 = vlaneseq
        %v2593 = vshrl.u32 %v2592, 7
        %v2594 = vsub.s32 0, %v2593
        %v2595 = vrot.slane %v2591, %v2594
        %v2596 = vmul.f32 %v2575, %v2595
        %v2597 = vmul.f32 %v2576, %v2595
        %v2598 = vmul.f32 %v2577, %v2595
        %v2599 = vmul.f32 %v2578, %v2595
        %v2600 = vmul.f32 %v2579, %v2595
        %v2601 = vmul.f32 %v2580, %v2595
        %v2602 = vmul.f32 %v2581, %v2595
        %v2603 = vmul.f32 %v2582, %v2595
        %v2604 = vmul.f32 %v2583, %v2595
        %v2605 = vmul.f32 %v2584, %v2595
        %v2606 = vmul.f32 %v2585, %v2595
        %v2607 = vmul.f32 %v2586, %v2595
        %v2608 = vmul.f32 %v2587, %v2595
        %v2609 = vmul.f32 %v2588, %v2595
        %v2610 = vmul.f32 %v2589, %v2595
        %v2611 = vmul.f32 %v2590, %v2595
        %v2612 = vadd.f32 %v2559, %v2596
        %v2613 = vadd.f32 %v2560, %v2597
        %v2614 = vadd.f32 %v2561, %v2598
        %v2615 = vadd.f32 %v2562, %v2599
        %v2616 = vadd.f32 %v2563, %v2600
        %v2617 = vadd.f32 %v2564, %v2601
        %v2618 = vadd.f32 %v2565, %v2602
        %v2619 = vadd.f32 %v2566, %v2603
        %v2620 = vadd.f32 %v2567, %v2604
        %v2621 = vadd.f32 %v2568, %v2605
        %v2622 = vadd.f32 %v2569, %v2606
        %v2623 = vadd.f32 %v2570, %v2607
        %v2624 = vadd.f32 %v2571, %v2608
        %v2625 = vadd.f32 %v2572, %v2609
        %v2626 = vadd.f32 %v2573, %v2610
        %v2627 = vadd.f32 %v2574, %v2611
        %v2628 = vld [vmem:[#allocation4 + $0x3] sm:$0xff]
        %v2629 = vld [vmem:[#allocation4 + $0xb] sm:$0xff]
        %v2630 = vld [vmem:[#allocation4 + $0x1b] sm:$0xff]
        %v2631 = vld [vmem:[#allocation4 + $0x23] sm:$0xff]
        %v2632 = vld [vmem:[#allocation4 + $0x33] sm:$0xff]
        %v2633 = vld [vmem:[#allocation4 + $0x3b] sm:$0xff]
        %v2634 = vld [vmem:[#allocation4 + $0x4b] sm:$0xff]
        %v2635 = vld [vmem:[#allocation4 + $0x53] sm:$0xff]
        %v2636 = vld [vmem:[#allocation4 + $0x63] sm:$0xff]
        %v2637 = vld [vmem:[#allocation4 + $0x6b] sm:$0xff]
        %v2638 = vld [vmem:[#allocation4 + $0x7b] sm:$0xff]
        %v2639 = vld [vmem:[#allocation4 + $0x83] sm:$0xff]
        %v2640 = vld [vmem:[#allocation4 + $0x93] sm:$0xff]
        %v2641 = vld [vmem:[#allocation4 + $0x9b] sm:$0xff]
        %v2642 = vld [vmem:[#allocation4 + $0xab] sm:$0xff]
        %v2643 = vld [vmem:[#allocation4 + $0xb3] sm:$0xff]
        %v2644 = vld [vmem:[%s23 + $0x3] sm:$0x1]
        %v2645 = vlaneseq
        %v2646 = vshrl.u32 %v2645, 7
        %v2647 = vsub.s32 0, %v2646
        %v2648 = vrot.slane %v2644, %v2647
        %v2649 = vmul.f32 %v2628, %v2648
        %v2650 = vmul.f32 %v2629, %v2648
        %v2651 = vmul.f32 %v2630, %v2648
        %v2652 = vmul.f32 %v2631, %v2648
        %v2653 = vmul.f32 %v2632, %v2648
        %v2654 = vmul.f32 %v2633, %v2648
        %v2655 = vmul.f32 %v2634, %v2648
        %v2656 = vmul.f32 %v2635, %v2648
        %v2657 = vmul.f32 %v2636, %v2648
        %v2658 = vmul.f32 %v2637, %v2648
        %v2659 = vmul.f32 %v2638, %v2648
        %v2660 = vmul.f32 %v2639, %v2648
        %v2661 = vmul.f32 %v2640, %v2648
        %v2662 = vmul.f32 %v2641, %v2648
        %v2663 = vmul.f32 %v2642, %v2648
        %v2664 = vmul.f32 %v2643, %v2648
        %v2665 = vadd.f32 %v2612, %v2649
        %v2666 = vadd.f32 %v2613, %v2650
        %v2667 = vadd.f32 %v2614, %v2651
        %v2668 = vadd.f32 %v2615, %v2652
        %v2669 = vadd.f32 %v2616, %v2653
        %v2670 = vadd.f32 %v2617, %v2654
        %v2671 = vadd.f32 %v2618, %v2655
        %v2672 = vadd.f32 %v2619, %v2656
        %v2673 = vadd.f32 %v2620, %v2657
        %v2674 = vadd.f32 %v2621, %v2658
        %v2675 = vadd.f32 %v2622, %v2659
        %v2676 = vadd.f32 %v2623, %v2660
        %v2677 = vadd.f32 %v2624, %v2661
        %v2678 = vadd.f32 %v2625, %v2662
        %v2679 = vadd.f32 %v2626, %v2663
        %v2680 = vadd.f32 %v2627, %v2664
        %v2681 = vld [vmem:[#allocation4 + $0x4] sm:$0xff]
        %v2682 = vld [vmem:[#allocation4 + $0xc] sm:$0xff]
        %v2683 = vld [vmem:[#allocation4 + $0x1c] sm:$0xff]
        %v2684 = vld [vmem:[#allocation4 + $0x24] sm:$0xff]
        %v2685 = vld [vmem:[#allocation4 + $0x34] sm:$0xff]
        %v2686 = vld [vmem:[#allocation4 + $0x3c] sm:$0xff]
        %v2687 = vld [vmem:[#allocation4 + $0x4c] sm:$0xff]
        %v2688 = vld [vmem:[#allocation4 + $0x54] sm:$0xff]
        %v2689 = vld [vmem:[#allocation4 + $0x64] sm:$0xff]
        %v2690 = vld [vmem:[#allocation4 + $0x6c] sm:$0xff]
        %v2691 = vld [vmem:[#allocation4 + $0x7c] sm:$0xff]
        %v2692 = vld [vmem:[#allocation4 + $0x84] sm:$0xff]
        %v2693 = vld [vmem:[#allocation4 + $0x94] sm:$0xff]
        %v2694 = vld [vmem:[#allocation4 + $0x9c] sm:$0xff]
        %v2695 = vld [vmem:[#allocation4 + $0xac] sm:$0xff]
        %v2696 = vld [vmem:[#allocation4 + $0xb4] sm:$0xff]
        %v2697 = vld [vmem:[%s23 + $0x4] sm:$0x1]
        %v2698 = vlaneseq
        %v2699 = vshrl.u32 %v2698, 7
        %v2700 = vsub.s32 0, %v2699
        %v2701 = vrot.slane %v2697, %v2700
        %v2702 = vmul.f32 %v2681, %v2701
        %v2703 = vmul.f32 %v2682, %v2701
        %v2704 = vmul.f32 %v2683, %v2701
        %v2705 = vmul.f32 %v2684, %v2701
        %v2706 = vmul.f32 %v2685, %v2701
        %v2707 = vmul.f32 %v2686, %v2701
        %v2708 = vmul.f32 %v2687, %v2701
        %v2709 = vmul.f32 %v2688, %v2701
        %v2710 = vmul.f32 %v2689, %v2701
        %v2711 = vmul.f32 %v2690, %v2701
        %v2712 = vmul.f32 %v2691, %v2701
        %v2713 = vmul.f32 %v2692, %v2701
        %v2714 = vmul.f32 %v2693, %v2701
        %v2715 = vmul.f32 %v2694, %v2701
        %v2716 = vmul.f32 %v2695, %v2701
        %v2717 = vmul.f32 %v2696, %v2701
        %v2718 = vadd.f32 %v2665, %v2702
        %v2719 = vadd.f32 %v2666, %v2703
        %v2720 = vadd.f32 %v2667, %v2704
        %v2721 = vadd.f32 %v2668, %v2705
        %v2722 = vadd.f32 %v2669, %v2706
        %v2723 = vadd.f32 %v2670, %v2707
        %v2724 = vadd.f32 %v2671, %v2708
        %v2725 = vadd.f32 %v2672, %v2709
        %v2726 = vadd.f32 %v2673, %v2710
        %v2727 = vadd.f32 %v2674, %v2711
        %v2728 = vadd.f32 %v2675, %v2712
        %v2729 = vadd.f32 %v2676, %v2713
        %v2730 = vadd.f32 %v2677, %v2714
        %v2731 = vadd.f32 %v2678, %v2715
        %v2732 = vadd.f32 %v2679, %v2716
        %v2733 = vadd.f32 %v2680, %v2717
        %v2734 = vld [vmem:[#allocation4 + $0x5] sm:$0xff]
        %v2735 = vld [vmem:[#allocation4 + $0xd] sm:$0xff]
        %v2736 = vld [vmem:[#allocation4 + $0x1d] sm:$0xff]
        %v2737 = vld [vmem:[#allocation4 + $0x25] sm:$0xff]
        %v2738 = vld [vmem:[#allocation4 + $0x35] sm:$0xff]
        %v2739 = vld [vmem:[#allocation4 + $0x3d] sm:$0xff]
        %v2740 = vld [vmem:[#allocation4 + $0x4d] sm:$0xff]
        %v2741 = vld [vmem:[#allocation4 + $0x55] sm:$0xff]
        %v2742 = vld [vmem:[#allocation4 + $0x65] sm:$0xff]
        %v2743 = vld [vmem:[#allocation4 + $0x6d] sm:$0xff]
        %v2744 = vld [vmem:[#allocation4 + $0x7d] sm:$0xff]
        %v2745 = vld [vmem:[#allocation4 + $0x85] sm:$0xff]
        %v2746 = vld [vmem:[#allocation4 + $0x95] sm:$0xff]
        %v2747 = vld [vmem:[#allocation4 + $0x9d] sm:$0xff]
        %v2748 = vld [vmem:[#allocation4 + $0xad] sm:$0xff]
        %v2749 = vld [vmem:[#allocation4 + $0xb5] sm:$0xff]
        %v2750 = vld [vmem:[%s23 + $0x5] sm:$0x1]
        %v2751 = vlaneseq
        %v2752 = vshrl.u32 %v2751, 7
        %v2753 = vsub.s32 0, %v2752
        %v2754 = vrot.slane %v2750, %v2753
        %v2755 = vmul.f32 %v2734, %v2754
        %v2756 = vmul.f32 %v2735, %v2754
        %v2757 = vmul.f32 %v2736, %v2754
        %v2758 = vmul.f32 %v2737, %v2754
        %v2759 = vmul.f32 %v2738, %v2754
        %v2760 = vmul.f32 %v2739, %v2754
        %v2761 = vmul.f32 %v2740, %v2754
        %v2762 = vmul.f32 %v2741, %v2754
        %v2763 = vmul.f32 %v2742, %v2754
        %v2764 = vmul.f32 %v2743, %v2754
        %v2765 = vmul.f32 %v2744, %v2754
        %v2766 = vmul.f32 %v2745, %v2754
        %v2767 = vmul.f32 %v2746, %v2754
        %v2768 = vmul.f32 %v2747, %v2754
        %v2769 = vmul.f32 %v2748, %v2754
        %v2770 = vmul.f32 %v2749, %v2754
        %v2771 = vadd.f32 %v2718, %v2755
        %v2772 = vadd.f32 %v2719, %v2756
        %v2773 = vadd.f32 %v2720, %v2757
        %v2774 = vadd.f32 %v2721, %v2758
        %v2775 = vadd.f32 %v2722, %v2759
        %v2776 = vadd.f32 %v2723, %v2760
        %v2777 = vadd.f32 %v2724, %v2761
        %v2778 = vadd.f32 %v2725, %v2762
        %v2779 = vadd.f32 %v2726, %v2763
        %v2780 = vadd.f32 %v2727, %v2764
        %v2781 = vadd.f32 %v2728, %v2765
        %v2782 = vadd.f32 %v2729, %v2766
        %v2783 = vadd.f32 %v2730, %v2767
        %v2784 = vadd.f32 %v2731, %v2768
        %v2785 = vadd.f32 %v2732, %v2769
        %v2786 = vadd.f32 %v2733, %v2770
        %v2787 = vld [vmem:[#allocation4 + $0x6] sm:$0xff]
        %v2788 = vld [vmem:[#allocation4 + $0xe] sm:$0xff]
        %v2789 = vld [vmem:[#allocation4 + $0x1e] sm:$0xff]
        %v2790 = vld [vmem:[#allocation4 + $0x26] sm:$0xff]
        %v2791 = vld [vmem:[#allocation4 + $0x36] sm:$0xff]
        %v2792 = vld [vmem:[#allocation4 + $0x3e] sm:$0xff]
        %v2793 = vld [vmem:[#allocation4 + $0x4e] sm:$0xff]
        %v2794 = vld [vmem:[#allocation4 + $0x56] sm:$0xff]
        %v2795 = vld [vmem:[#allocation4 + $0x66] sm:$0xff]
        %v2796 = vld [vmem:[#allocation4 + $0x6e] sm:$0xff]
        %v2797 = vld [vmem:[#allocation4 + $0x7e] sm:$0xff]
        %v2798 = vld [vmem:[#allocation4 + $0x86] sm:$0xff]
        %v2799 = vld [vmem:[#allocation4 + $0x96] sm:$0xff]
        %v2800 = vld [vmem:[#allocation4 + $0x9e] sm:$0xff]
        %v2801 = vld [vmem:[#allocation4 + $0xae] sm:$0xff]
        %v2802 = vld [vmem:[#allocation4 + $0xb6] sm:$0xff]
        %v2803 = vld [vmem:[%s23 + $0x6] sm:$0x1]
        %v2804 = vlaneseq
        %v2805 = vshrl.u32 %v2804, 7
        %v2806 = vsub.s32 0, %v2805
        %v2807 = vrot.slane %v2803, %v2806
        %v2808 = vmul.f32 %v2787, %v2807
        %v2809 = vmul.f32 %v2788, %v2807
        %v2810 = vmul.f32 %v2789, %v2807
        %v2811 = vmul.f32 %v2790, %v2807
        %v2812 = vmul.f32 %v2791, %v2807
        %v2813 = vmul.f32 %v2792, %v2807
        %v2814 = vmul.f32 %v2793, %v2807
        %v2815 = vmul.f32 %v2794, %v2807
        %v2816 = vmul.f32 %v2795, %v2807
        %v2817 = vmul.f32 %v2796, %v2807
        %v2818 = vmul.f32 %v2797, %v2807
        %v2819 = vmul.f32 %v2798, %v2807
        %v2820 = vmul.f32 %v2799, %v2807
        %v2821 = vmul.f32 %v2800, %v2807
        %v2822 = vmul.f32 %v2801, %v2807
        %v2823 = vmul.f32 %v2802, %v2807
        %v2824 = vadd.f32 %v2771, %v2808
        %v2825 = vadd.f32 %v2772, %v2809
        %v2826 = vadd.f32 %v2773, %v2810
        %v2827 = vadd.f32 %v2774, %v2811
        %v2828 = vadd.f32 %v2775, %v2812
        %v2829 = vadd.f32 %v2776, %v2813
        %v2830 = vadd.f32 %v2777, %v2814
        %v2831 = vadd.f32 %v2778, %v2815
        %v2832 = vadd.f32 %v2779, %v2816
        %v2833 = vadd.f32 %v2780, %v2817
        %v2834 = vadd.f32 %v2781, %v2818
        %v2835 = vadd.f32 %v2782, %v2819
        %v2836 = vadd.f32 %v2783, %v2820
        %v2837 = vadd.f32 %v2784, %v2821
        %v2838 = vadd.f32 %v2785, %v2822
        %v2839 = vadd.f32 %v2786, %v2823
        %s2840 = scalar_lea.vmem [#allocation4], 24
        %v2841 = vld [vmem:[%s2840] sm:$0xff]
        %v2842 = vld [vmem:[%s2840 + $0x8] sm:$0xff]
        %v2843 = vld [vmem:[%s2840 + $0x18] sm:$0xff]
        %v2844 = vld [vmem:[%s2840 + $0x20] sm:$0xff]
        %v2845 = vld [vmem:[%s2840 + $0x30] sm:$0xff]
        %v2846 = vld [vmem:[%s2840 + $0x38] sm:$0xff]
        %v2847 = vld [vmem:[%s2840 + $0x48] sm:$0xff]
        %v2848 = vld [vmem:[%s2840 + $0x50] sm:$0xff]
        %v2849 = vld [vmem:[%s2840 + $0x60] sm:$0xff]
        %v2850 = vld [vmem:[%s2840 + $0x68] sm:$0xff]
        %v2851 = vld [vmem:[%s2840 + $0x78] sm:$0xff]
        %v2852 = vld [vmem:[%s2840 + $0x80] sm:$0xff]
        %v2853 = vld [vmem:[%s2840 + $0x90] sm:$0xff]
        %v2854 = vld [vmem:[%s2840 + $0x98] sm:$0xff]
        %v2855 = vld [vmem:[%s2840 + $0xa8] sm:$0xff]
        %v2856 = vld [vmem:[%s2840 + $0xb0] sm:$0xff]
        %v2857 = vld [vmem:[%s23 + $0x7] sm:$0x1]
        %v2858 = vlaneseq
        %v2859 = vshrl.u32 %v2858, 7
        %v2860 = vsub.s32 0, %v2859
        %v2861 = vrot.slane %v2857, %v2860
        %v2862 = vmul.f32 %v2841, %v2861
        %v2863 = vmul.f32 %v2842, %v2861
        %v2864 = vmul.f32 %v2843, %v2861
        %v2865 = vmul.f32 %v2844, %v2861
        %v2866 = vmul.f32 %v2845, %v2861
        %v2867 = vmul.f32 %v2846, %v2861
        %v2868 = vmul.f32 %v2847, %v2861
        %v2869 = vmul.f32 %v2848, %v2861
        %v2870 = vmul.f32 %v2849, %v2861
        %v2871 = vmul.f32 %v2850, %v2861
        %v2872 = vmul.f32 %v2851, %v2861
        %v2873 = vmul.f32 %v2852, %v2861
        %v2874 = vmul.f32 %v2853, %v2861
        %v2875 = vmul.f32 %v2854, %v2861
        %v2876 = vmul.f32 %v2855, %v2861
        %v2877 = vmul.f32 %v2856, %v2861
        %v2878 = vadd.f32 %v2824, %v2862
        %v2879 = vadd.f32 %v2825, %v2863
        %v2880 = vadd.f32 %v2826, %v2864
        %v2881 = vadd.f32 %v2827, %v2865
        %v2882 = vadd.f32 %v2828, %v2866
        %v2883 = vadd.f32 %v2829, %v2867
        %v2884 = vadd.f32 %v2830, %v2868
        %v2885 = vadd.f32 %v2831, %v2869
        %v2886 = vadd.f32 %v2832, %v2870
        %v2887 = vadd.f32 %v2833, %v2871
        %v2888 = vadd.f32 %v2834, %v2872
        %v2889 = vadd.f32 %v2835, %v2873
        %v2890 = vadd.f32 %v2836, %v2874
        %v2891 = vadd.f32 %v2837, %v2875
        %v2892 = vadd.f32 %v2838, %v2876
        %v2893 = vadd.f32 %v2839, %v2877
        %v2894 = vld [vmem:[%s2840 + $0x1] sm:$0xff]
        %v2895 = vld [vmem:[%s2840 + $0x9] sm:$0xff]
        %v2896 = vld [vmem:[%s2840 + $0x19] sm:$0xff]
        %v2897 = vld [vmem:[%s2840 + $0x21] sm:$0xff]
        %v2898 = vld [vmem:[%s2840 + $0x31] sm:$0xff]
        %v2899 = vld [vmem:[%s2840 + $0x39] sm:$0xff]
        %v2900 = vld [vmem:[%s2840 + $0x49] sm:$0xff]
        %v2901 = vld [vmem:[%s2840 + $0x51] sm:$0xff]
        %v2902 = vld [vmem:[%s2840 + $0x61] sm:$0xff]
        %v2903 = vld [vmem:[%s2840 + $0x69] sm:$0xff]
        %v2904 = vld [vmem:[%s2840 + $0x79] sm:$0xff]
        %v2905 = vld [vmem:[%s2840 + $0x81] sm:$0xff]
        %v2906 = vld [vmem:[%s2840 + $0x91] sm:$0xff]
        %v2907 = vld [vmem:[%s2840 + $0x99] sm:$0xff]
        %v2908 = vld [vmem:[%s2840 + $0xa9] sm:$0xff]
        %v2909 = vld [vmem:[%s2840 + $0xb1] sm:$0xff]
        %v2910 = vld [vmem:[%s23 + $0x8] sm:$0x1]
        %v2911 = vlaneseq
        %v2912 = vshrl.u32 %v2911, 7
        %v2913 = vsub.s32 0, %v2912
        %v2914 = vrot.slane %v2910, %v2913
        %v2915 = vmul.f32 %v2894, %v2914
        %v2916 = vmul.f32 %v2895, %v2914
        %v2917 = vmul.f32 %v2896, %v2914
        %v2918 = vmul.f32 %v2897, %v2914
        %v2919 = vmul.f32 %v2898, %v2914
        %v2920 = vmul.f32 %v2899, %v2914
        %v2921 = vmul.f32 %v2900, %v2914
        %v2922 = vmul.f32 %v2901, %v2914
        %v2923 = vmul.f32 %v2902, %v2914
        %v2924 = vmul.f32 %v2903, %v2914
        %v2925 = vmul.f32 %v2904, %v2914
        %v2926 = vmul.f32 %v2905, %v2914
        %v2927 = vmul.f32 %v2906, %v2914
        %v2928 = vmul.f32 %v2907, %v2914
        %v2929 = vmul.f32 %v2908, %v2914
        %v2930 = vmul.f32 %v2909, %v2914
        %v2931 = vadd.f32 %v2878, %v2915
        %v2932 = vadd.f32 %v2879, %v2916
        %v2933 = vadd.f32 %v2880, %v2917
        %v2934 = vadd.f32 %v2881, %v2918
        %v2935 = vadd.f32 %v2882, %v2919
        %v2936 = vadd.f32 %v2883, %v2920
        %v2937 = vadd.f32 %v2884, %v2921
        %v2938 = vadd.f32 %v2885, %v2922
        %v2939 = vadd.f32 %v2886, %v2923
        %v2940 = vadd.f32 %v2887, %v2924
        %v2941 = vadd.f32 %v2888, %v2925
        %v2942 = vadd.f32 %v2889, %v2926
        %v2943 = vadd.f32 %v2890, %v2927
        %v2944 = vadd.f32 %v2891, %v2928
        %v2945 = vadd.f32 %v2892, %v2929
        %v2946 = vadd.f32 %v2893, %v2930
        %v2947 = vld [vmem:[%s2840 + $0x2] sm:$0xff]
        %v2948 = vld [vmem:[%s2840 + $0xa] sm:$0xff]
        %v2949 = vld [vmem:[%s2840 + $0x1a] sm:$0xff]
        %v2950 = vld [vmem:[%s2840 + $0x22] sm:$0xff]
        %v2951 = vld [vmem:[%s2840 + $0x32] sm:$0xff]
        %v2952 = vld [vmem:[%s2840 + $0x3a] sm:$0xff]
        %v2953 = vld [vmem:[%s2840 + $0x4a] sm:$0xff]
        %v2954 = vld [vmem:[%s2840 + $0x52] sm:$0xff]
        %v2955 = vld [vmem:[%s2840 + $0x62] sm:$0xff]
        %v2956 = vld [vmem:[%s2840 + $0x6a] sm:$0xff]
        %v2957 = vld [vmem:[%s2840 + $0x7a] sm:$0xff]
        %v2958 = vld [vmem:[%s2840 + $0x82] sm:$0xff]
        %v2959 = vld [vmem:[%s2840 + $0x92] sm:$0xff]
        %v2960 = vld [vmem:[%s2840 + $0x9a] sm:$0xff]
        %v2961 = vld [vmem:[%s2840 + $0xaa] sm:$0xff]
        %v2962 = vld [vmem:[%s2840 + $0xb2] sm:$0xff]
        %v2963 = vld [vmem:[%s23 + $0x9] sm:$0x1]
        %v2964 = vlaneseq
        %v2965 = vshrl.u32 %v2964, 7
        %v2966 = vsub.s32 0, %v2965
        %v2967 = vrot.slane %v2963, %v2966
        %v2968 = vmul.f32 %v2947, %v2967
        %v2969 = vmul.f32 %v2948, %v2967
        %v2970 = vmul.f32 %v2949, %v2967
        %v2971 = vmul.f32 %v2950, %v2967
        %v2972 = vmul.f32 %v2951, %v2967
        %v2973 = vmul.f32 %v2952, %v2967
        %v2974 = vmul.f32 %v2953, %v2967
        %v2975 = vmul.f32 %v2954, %v2967
        %v2976 = vmul.f32 %v2955, %v2967
        %v2977 = vmul.f32 %v2956, %v2967
        %v2978 = vmul.f32 %v2957, %v2967
        %v2979 = vmul.f32 %v2958, %v2967
        %v2980 = vmul.f32 %v2959, %v2967
        %v2981 = vmul.f32 %v2960, %v2967
        %v2982 = vmul.f32 %v2961, %v2967
        %v2983 = vmul.f32 %v2962, %v2967
        %v2984 = vadd.f32 %v2931, %v2968
        %v2985 = vadd.f32 %v2932, %v2969
        %v2986 = vadd.f32 %v2933, %v2970
        %v2987 = vadd.f32 %v2934, %v2971
        %v2988 = vadd.f32 %v2935, %v2972
        %v2989 = vadd.f32 %v2936, %v2973
        %v2990 = vadd.f32 %v2937, %v2974
        %v2991 = vadd.f32 %v2938, %v2975
        %v2992 = vadd.f32 %v2939, %v2976
        %v2993 = vadd.f32 %v2940, %v2977
        %v2994 = vadd.f32 %v2941, %v2978
        %v2995 = vadd.f32 %v2942, %v2979
        %v2996 = vadd.f32 %v2943, %v2980
        %v2997 = vadd.f32 %v2944, %v2981
        %v2998 = vadd.f32 %v2945, %v2982
        %v2999 = vadd.f32 %v2946, %v2983
        %v3000 = vld [vmem:[%s2840 + $0x3] sm:$0xff]
        %v3001 = vld [vmem:[%s2840 + $0xb] sm:$0xff]
        %v3002 = vld [vmem:[%s2840 + $0x1b] sm:$0xff]
        %v3003 = vld [vmem:[%s2840 + $0x23] sm:$0xff]
        %v3004 = vld [vmem:[%s2840 + $0x33] sm:$0xff]
        %v3005 = vld [vmem:[%s2840 + $0x3b] sm:$0xff]
        %v3006 = vld [vmem:[%s2840 + $0x4b] sm:$0xff]
        %v3007 = vld [vmem:[%s2840 + $0x53] sm:$0xff]
        %v3008 = vld [vmem:[%s2840 + $0x63] sm:$0xff]
        %v3009 = vld [vmem:[%s2840 + $0x6b] sm:$0xff]
        %v3010 = vld [vmem:[%s2840 + $0x7b] sm:$0xff]
        %v3011 = vld [vmem:[%s2840 + $0x83] sm:$0xff]
        %v3012 = vld [vmem:[%s2840 + $0x93] sm:$0xff]
        %v3013 = vld [vmem:[%s2840 + $0x9b] sm:$0xff]
        %v3014 = vld [vmem:[%s2840 + $0xab] sm:$0xff]
        %v3015 = vld [vmem:[%s2840 + $0xb3] sm:$0xff]
        %v3016 = vld [vmem:[%s23 + $0xa] sm:$0x1]
        %v3017 = vlaneseq
        %v3018 = vshrl.u32 %v3017, 7
        %v3019 = vsub.s32 0, %v3018
        %v3020 = vrot.slane %v3016, %v3019
        %v3021 = vmul.f32 %v3000, %v3020
        %v3022 = vmul.f32 %v3001, %v3020
        %v3023 = vmul.f32 %v3002, %v3020
        %v3024 = vmul.f32 %v3003, %v3020
        %v3025 = vmul.f32 %v3004, %v3020
        %v3026 = vmul.f32 %v3005, %v3020
        %v3027 = vmul.f32 %v3006, %v3020
        %v3028 = vmul.f32 %v3007, %v3020
        %v3029 = vmul.f32 %v3008, %v3020
        %v3030 = vmul.f32 %v3009, %v3020
        %v3031 = vmul.f32 %v3010, %v3020
        %v3032 = vmul.f32 %v3011, %v3020
        %v3033 = vmul.f32 %v3012, %v3020
        %v3034 = vmul.f32 %v3013, %v3020
        %v3035 = vmul.f32 %v3014, %v3020
        %v3036 = vmul.f32 %v3015, %v3020
        %v3037 = vadd.f32 %v2984, %v3021
        %v3038 = vadd.f32 %v2985, %v3022
        %v3039 = vadd.f32 %v2986, %v3023
        %v3040 = vadd.f32 %v2987, %v3024
        %v3041 = vadd.f32 %v2988, %v3025
        %v3042 = vadd.f32 %v2989, %v3026
        %v3043 = vadd.f32 %v2990, %v3027
        %v3044 = vadd.f32 %v2991, %v3028
        %v3045 = vadd.f32 %v2992, %v3029
        %v3046 = vadd.f32 %v2993, %v3030
        %v3047 = vadd.f32 %v2994, %v3031
        %v3048 = vadd.f32 %v2995, %v3032
        %v3049 = vadd.f32 %v2996, %v3033
        %v3050 = vadd.f32 %v2997, %v3034
        %v3051 = vadd.f32 %v2998, %v3035
        %v3052 = vadd.f32 %v2999, %v3036
        %v3053 = vld [vmem:[%s2840 + $0x4] sm:$0xff]
        %v3054 = vld [vmem:[%s2840 + $0xc] sm:$0xff]
        %v3055 = vld [vmem:[%s2840 + $0x1c] sm:$0xff]
        %v3056 = vld [vmem:[%s2840 + $0x24] sm:$0xff]
        %v3057 = vld [vmem:[%s2840 + $0x34] sm:$0xff]
        %v3058 = vld [vmem:[%s2840 + $0x3c] sm:$0xff]
        %v3059 = vld [vmem:[%s2840 + $0x4c] sm:$0xff]
        %v3060 = vld [vmem:[%s2840 + $0x54] sm:$0xff]
        %v3061 = vld [vmem:[%s2840 + $0x64] sm:$0xff]
        %v3062 = vld [vmem:[%s2840 + $0x6c] sm:$0xff]
        %v3063 = vld [vmem:[%s2840 + $0x7c] sm:$0xff]
        %v3064 = vld [vmem:[%s2840 + $0x84] sm:$0xff]
        %v3065 = vld [vmem:[%s2840 + $0x94] sm:$0xff]
        %v3066 = vld [vmem:[%s2840 + $0x9c] sm:$0xff]
        %v3067 = vld [vmem:[%s2840 + $0xac] sm:$0xff]
        %v3068 = vld [vmem:[%s2840 + $0xb4] sm:$0xff]
        %v3069 = vld [vmem:[%s23 + $0xb] sm:$0x1]
        %v3070 = vlaneseq
        %v3071 = vshrl.u32 %v3070, 7
        %v3072 = vsub.s32 0, %v3071
        %v3073 = vrot.slane %v3069, %v3072
        %v3074 = vmul.f32 %v3053, %v3073
        %v3075 = vmul.f32 %v3054, %v3073
        %v3076 = vmul.f32 %v3055, %v3073
        %v3077 = vmul.f32 %v3056, %v3073
        %v3078 = vmul.f32 %v3057, %v3073
        %v3079 = vmul.f32 %v3058, %v3073
        %v3080 = vmul.f32 %v3059, %v3073
        %v3081 = vmul.f32 %v3060, %v3073
        %v3082 = vmul.f32 %v3061, %v3073
        %v3083 = vmul.f32 %v3062, %v3073
        %v3084 = vmul.f32 %v3063, %v3073
        %v3085 = vmul.f32 %v3064, %v3073
        %v3086 = vmul.f32 %v3065, %v3073
        %v3087 = vmul.f32 %v3066, %v3073
        %v3088 = vmul.f32 %v3067, %v3073
        %v3089 = vmul.f32 %v3068, %v3073
        %v3090 = vadd.f32 %v3037, %v3074
        %v3091 = vadd.f32 %v3038, %v3075
        %v3092 = vadd.f32 %v3039, %v3076
        %v3093 = vadd.f32 %v3040, %v3077
        %v3094 = vadd.f32 %v3041, %v3078
        %v3095 = vadd.f32 %v3042, %v3079
        %v3096 = vadd.f32 %v3043, %v3080
        %v3097 = vadd.f32 %v3044, %v3081
        %v3098 = vadd.f32 %v3045, %v3082
        %v3099 = vadd.f32 %v3046, %v3083
        %v3100 = vadd.f32 %v3047, %v3084
        %v3101 = vadd.f32 %v3048, %v3085
        %v3102 = vadd.f32 %v3049, %v3086
        %v3103 = vadd.f32 %v3050, %v3087
        %v3104 = vadd.f32 %v3051, %v3088
        %v3105 = vadd.f32 %v3052, %v3089
        %v3106 = vld [vmem:[%s2840 + $0x5] sm:$0xff]
        %v3107 = vld [vmem:[%s2840 + $0xd] sm:$0xff]
        %v3108 = vld [vmem:[%s2840 + $0x1d] sm:$0xff]
        %v3109 = vld [vmem:[%s2840 + $0x25] sm:$0xff]
        %v3110 = vld [vmem:[%s2840 + $0x35] sm:$0xff]
        %v3111 = vld [vmem:[%s2840 + $0x3d] sm:$0xff]
        %v3112 = vld [vmem:[%s2840 + $0x4d] sm:$0xff]
        %v3113 = vld [vmem:[%s2840 + $0x55] sm:$0xff]
        %v3114 = vld [vmem:[%s2840 + $0x65] sm:$0xff]
        %v3115 = vld [vmem:[%s2840 + $0x6d] sm:$0xff]
        %v3116 = vld [vmem:[%s2840 + $0x7d] sm:$0xff]
        %v3117 = vld [vmem:[%s2840 + $0x85] sm:$0xff]
        %v3118 = vld [vmem:[%s2840 + $0x95] sm:$0xff]
        %v3119 = vld [vmem:[%s2840 + $0x9d] sm:$0xff]
        %v3120 = vld [vmem:[%s2840 + $0xad] sm:$0xff]
        %v3121 = vld [vmem:[%s2840 + $0xb5] sm:$0xff]
        %v3122 = vld [vmem:[%s23 + $0xc] sm:$0x1]
        %v3123 = vlaneseq
        %v3124 = vshrl.u32 %v3123, 7
        %v3125 = vsub.s32 0, %v3124
        %v3126 = vrot.slane %v3122, %v3125
        %v3127 = vmul.f32 %v3106, %v3126
        %v3128 = vmul.f32 %v3107, %v3126
        %v3129 = vmul.f32 %v3108, %v3126
        %v3130 = vmul.f32 %v3109, %v3126
        %v3131 = vmul.f32 %v3110, %v3126
        %v3132 = vmul.f32 %v3111, %v3126
        %v3133 = vmul.f32 %v3112, %v3126
        %v3134 = vmul.f32 %v3113, %v3126
        %v3135 = vmul.f32 %v3114, %v3126
        %v3136 = vmul.f32 %v3115, %v3126
        %v3137 = vmul.f32 %v3116, %v3126
        %v3138 = vmul.f32 %v3117, %v3126
        %v3139 = vmul.f32 %v3118, %v3126
        %v3140 = vmul.f32 %v3119, %v3126
        %v3141 = vmul.f32 %v3120, %v3126
        %v3142 = vmul.f32 %v3121, %v3126
        %v3143 = vadd.f32 %v3090, %v3127
        %v3144 = vadd.f32 %v3091, %v3128
        %v3145 = vadd.f32 %v3092, %v3129
        %v3146 = vadd.f32 %v3093, %v3130
        %v3147 = vadd.f32 %v3094, %v3131
        %v3148 = vadd.f32 %v3095, %v3132
        %v3149 = vadd.f32 %v3096, %v3133
        %v3150 = vadd.f32 %v3097, %v3134
        %v3151 = vadd.f32 %v3098, %v3135
        %v3152 = vadd.f32 %v3099, %v3136
        %v3153 = vadd.f32 %v3100, %v3137
        %v3154 = vadd.f32 %v3101, %v3138
        %v3155 = vadd.f32 %v3102, %v3139
        %v3156 = vadd.f32 %v3103, %v3140
        %v3157 = vadd.f32 %v3104, %v3141
        %v3158 = vadd.f32 %v3105, %v3142
        %v3159 = vld [vmem:[%s2840 + $0x6] sm:$0xff]
        %v3160 = vld [vmem:[%s2840 + $0xe] sm:$0xff]
        %v3161 = vld [vmem:[%s2840 + $0x1e] sm:$0xff]
        %v3162 = vld [vmem:[%s2840 + $0x26] sm:$0xff]
        %v3163 = vld [vmem:[%s2840 + $0x36] sm:$0xff]
        %v3164 = vld [vmem:[%s2840 + $0x3e] sm:$0xff]
        %v3165 = vld [vmem:[%s2840 + $0x4e] sm:$0xff]
        %v3166 = vld [vmem:[%s2840 + $0x56] sm:$0xff]
        %v3167 = vld [vmem:[%s2840 + $0x66] sm:$0xff]
        %v3168 = vld [vmem:[%s2840 + $0x6e] sm:$0xff]
        %v3169 = vld [vmem:[%s2840 + $0x7e] sm:$0xff]
        %v3170 = vld [vmem:[%s2840 + $0x86] sm:$0xff]
        %v3171 = vld [vmem:[%s2840 + $0x96] sm:$0xff]
        %v3172 = vld [vmem:[%s2840 + $0x9e] sm:$0xff]
        %v3173 = vld [vmem:[%s2840 + $0xae] sm:$0xff]
        %v3174 = vld [vmem:[%s2840 + $0xb6] sm:$0xff]
        %v3175 = vld [vmem:[%s23 + $0xd] sm:$0x1]
        %v3176 = vlaneseq
        %v3177 = vshrl.u32 %v3176, 7
        %v3178 = vsub.s32 0, %v3177
        %v3179 = vrot.slane %v3175, %v3178
        %v3180 = vmul.f32 %v3159, %v3179
        %v3181 = vmul.f32 %v3160, %v3179
        %v3182 = vmul.f32 %v3161, %v3179
        %v3183 = vmul.f32 %v3162, %v3179
        %v3184 = vmul.f32 %v3163, %v3179
        %v3185 = vmul.f32 %v3164, %v3179
        %v3186 = vmul.f32 %v3165, %v3179
        %v3187 = vmul.f32 %v3166, %v3179
        %v3188 = vmul.f32 %v3167, %v3179
        %v3189 = vmul.f32 %v3168, %v3179
        %v3190 = vmul.f32 %v3169, %v3179
        %v3191 = vmul.f32 %v3170, %v3179
        %v3192 = vmul.f32 %v3171, %v3179
        %v3193 = vmul.f32 %v3172, %v3179
        %v3194 = vmul.f32 %v3173, %v3179
        %v3195 = vmul.f32 %v3174, %v3179
        %v3196 = vadd.f32 %v3143, %v3180
        %v3197 = vadd.f32 %v3144, %v3181
        %v3198 = vadd.f32 %v3145, %v3182
        %v3199 = vadd.f32 %v3146, %v3183
        %v3200 = vadd.f32 %v3147, %v3184
        %v3201 = vadd.f32 %v3148, %v3185
        %v3202 = vadd.f32 %v3149, %v3186
        %v3203 = vadd.f32 %v3150, %v3187
        %v3204 = vadd.f32 %v3151, %v3188
        %v3205 = vadd.f32 %v3152, %v3189
        %v3206 = vadd.f32 %v3153, %v3190
        %v3207 = vadd.f32 %v3154, %v3191
        %v3208 = vadd.f32 %v3155, %v3192
        %v3209 = vadd.f32 %v3156, %v3193
        %v3210 = vadd.f32 %v3157, %v3194
        %v3211 = vadd.f32 %v3158, %v3195
        %s3212 = scalar_lea.vmem [#allocation4], 48
        %v3213 = vld [vmem:[%s3212] sm:$0xff]
        %v3214 = vld [vmem:[%s3212 + $0x8] sm:$0xff]
        %v3215 = vld [vmem:[%s3212 + $0x18] sm:$0xff]
        %v3216 = vld [vmem:[%s3212 + $0x20] sm:$0xff]
        %v3217 = vld [vmem:[%s3212 + $0x30] sm:$0xff]
        %v3218 = vld [vmem:[%s3212 + $0x38] sm:$0xff]
        %v3219 = vld [vmem:[%s3212 + $0x48] sm:$0xff]
        %v3220 = vld [vmem:[%s3212 + $0x50] sm:$0xff]
        %v3221 = vld [vmem:[%s3212 + $0x60] sm:$0xff]
        %v3222 = vld [vmem:[%s3212 + $0x68] sm:$0xff]
        %v3223 = vld [vmem:[%s3212 + $0x78] sm:$0xff]
        %v3224 = vld [vmem:[%s3212 + $0x80] sm:$0xff]
        %v3225 = vld [vmem:[%s3212 + $0x90] sm:$0xff]
        %v3226 = vld [vmem:[%s3212 + $0x98] sm:$0xff]
        %v3227 = vld [vmem:[%s3212 + $0xa8] sm:$0xff]
        %v3228 = vld [vmem:[%s3212 + $0xb0] sm:$0xff]
        %v3229 = vld [vmem:[%s23 + $0xe] sm:$0x1]
        %v3230 = vlaneseq
        %v3231 = vshrl.u32 %v3230, 7
        %v3232 = vsub.s32 0, %v3231
        %v3233 = vrot.slane %v3229, %v3232
        %v3234 = vmul.f32 %v3213, %v3233
        %v3235 = vmul.f32 %v3214, %v3233
        %v3236 = vmul.f32 %v3215, %v3233
        %v3237 = vmul.f32 %v3216, %v3233
        %v3238 = vmul.f32 %v3217, %v3233
        %v3239 = vmul.f32 %v3218, %v3233
        %v3240 = vmul.f32 %v3219, %v3233
        %v3241 = vmul.f32 %v3220, %v3233
        %v3242 = vmul.f32 %v3221, %v3233
        %v3243 = vmul.f32 %v3222, %v3233
        %v3244 = vmul.f32 %v3223, %v3233
        %v3245 = vmul.f32 %v3224, %v3233
        %v3246 = vmul.f32 %v3225, %v3233
        %v3247 = vmul.f32 %v3226, %v3233
        %v3248 = vmul.f32 %v3227, %v3233
        %v3249 = vmul.f32 %v3228, %v3233
        %v3250 = vadd.f32 %v3196, %v3234
        %v3251 = vadd.f32 %v3197, %v3235
        %v3252 = vadd.f32 %v3198, %v3236
        %v3253 = vadd.f32 %v3199, %v3237
        %v3254 = vadd.f32 %v3200, %v3238
        %v3255 = vadd.f32 %v3201, %v3239
        %v3256 = vadd.f32 %v3202, %v3240
        %v3257 = vadd.f32 %v3203, %v3241
        %v3258 = vadd.f32 %v3204, %v3242
        %v3259 = vadd.f32 %v3205, %v3243
        %v3260 = vadd.f32 %v3206, %v3244
        %v3261 = vadd.f32 %v3207, %v3245
        %v3262 = vadd.f32 %v3208, %v3246
        %v3263 = vadd.f32 %v3209, %v3247
        %v3264 = vadd.f32 %v3210, %v3248
        %v3265 = vadd.f32 %v3211, %v3249
        %v3266 = vld [vmem:[%s3212 + $0x1] sm:$0xff]
        %v3267 = vld [vmem:[%s3212 + $0x9] sm:$0xff]
        %v3268 = vld [vmem:[%s3212 + $0x19] sm:$0xff]
        %v3269 = vld [vmem:[%s3212 + $0x21] sm:$0xff]
        %v3270 = vld [vmem:[%s3212 + $0x31] sm:$0xff]
        %v3271 = vld [vmem:[%s3212 + $0x39] sm:$0xff]
        %v3272 = vld [vmem:[%s3212 + $0x49] sm:$0xff]
        %v3273 = vld [vmem:[%s3212 + $0x51] sm:$0xff]
        %v3274 = vld [vmem:[%s3212 + $0x61] sm:$0xff]
        %v3275 = vld [vmem:[%s3212 + $0x69] sm:$0xff]
        %v3276 = vld [vmem:[%s3212 + $0x79] sm:$0xff]
        %v3277 = vld [vmem:[%s3212 + $0x81] sm:$0xff]
        %v3278 = vld [vmem:[%s3212 + $0x91] sm:$0xff]
        %v3279 = vld [vmem:[%s3212 + $0x99] sm:$0xff]
        %v3280 = vld [vmem:[%s3212 + $0xa9] sm:$0xff]
        %v3281 = vld [vmem:[%s3212 + $0xb1] sm:$0xff]
        %v3282 = vld [vmem:[%s23 + $0xf] sm:$0x1]
        %v3283 = vlaneseq
        %v3284 = vshrl.u32 %v3283, 7
        %v3285 = vsub.s32 0, %v3284
        %v3286 = vrot.slane %v3282, %v3285
        %v3287 = vmul.f32 %v3266, %v3286
        %v3288 = vmul.f32 %v3267, %v3286
        %v3289 = vmul.f32 %v3268, %v3286
        %v3290 = vmul.f32 %v3269, %v3286
        %v3291 = vmul.f32 %v3270, %v3286
        %v3292 = vmul.f32 %v3271, %v3286
        %v3293 = vmul.f32 %v3272, %v3286
        %v3294 = vmul.f32 %v3273, %v3286
        %v3295 = vmul.f32 %v3274, %v3286
        %v3296 = vmul.f32 %v3275, %v3286
        %v3297 = vmul.f32 %v3276, %v3286
        %v3298 = vmul.f32 %v3277, %v3286
        %v3299 = vmul.f32 %v3278, %v3286
        %v3300 = vmul.f32 %v3279, %v3286
        %v3301 = vmul.f32 %v3280, %v3286
        %v3302 = vmul.f32 %v3281, %v3286
        %v3303 = vadd.f32 %v3250, %v3287
        %v3304 = vadd.f32 %v3251, %v3288
        %v3305 = vadd.f32 %v3252, %v3289
        %v3306 = vadd.f32 %v3253, %v3290
        %v3307 = vadd.f32 %v3254, %v3291
        %v3308 = vadd.f32 %v3255, %v3292
        %v3309 = vadd.f32 %v3256, %v3293
        %v3310 = vadd.f32 %v3257, %v3294
        %v3311 = vadd.f32 %v3258, %v3295
        %v3312 = vadd.f32 %v3259, %v3296
        %v3313 = vadd.f32 %v3260, %v3297
        %v3314 = vadd.f32 %v3261, %v3298
        %v3315 = vadd.f32 %v3262, %v3299
        %v3316 = vadd.f32 %v3263, %v3300
        %v3317 = vadd.f32 %v3264, %v3301
        %v3318 = vadd.f32 %v3265, %v3302
        %v3319 = vld [vmem:[%s3212 + $0x2] sm:$0xff]
        %v3320 = vld [vmem:[%s3212 + $0xa] sm:$0xff]
        %v3321 = vld [vmem:[%s3212 + $0x1a] sm:$0xff]
        %v3322 = vld [vmem:[%s3212 + $0x22] sm:$0xff]
        %v3323 = vld [vmem:[%s3212 + $0x32] sm:$0xff]
        %v3324 = vld [vmem:[%s3212 + $0x3a] sm:$0xff]
        %v3325 = vld [vmem:[%s3212 + $0x4a] sm:$0xff]
        %v3326 = vld [vmem:[%s3212 + $0x52] sm:$0xff]
        %v3327 = vld [vmem:[%s3212 + $0x62] sm:$0xff]
        %v3328 = vld [vmem:[%s3212 + $0x6a] sm:$0xff]
        %v3329 = vld [vmem:[%s3212 + $0x7a] sm:$0xff]
        %v3330 = vld [vmem:[%s3212 + $0x82] sm:$0xff]
        %v3331 = vld [vmem:[%s3212 + $0x92] sm:$0xff]
        %v3332 = vld [vmem:[%s3212 + $0x9a] sm:$0xff]
        %v3333 = vld [vmem:[%s3212 + $0xaa] sm:$0xff]
        %v3334 = vld [vmem:[%s3212 + $0xb2] sm:$0xff]
        %v3335 = vld [vmem:[%s23 + $0x10] sm:$0x1]
        %v3336 = vlaneseq
        %v3337 = vshrl.u32 %v3336, 7
        %v3338 = vsub.s32 0, %v3337
        %v3339 = vrot.slane %v3335, %v3338
        %v3340 = vmul.f32 %v3319, %v3339
        %v3341 = vmul.f32 %v3320, %v3339
        %v3342 = vmul.f32 %v3321, %v3339
        %v3343 = vmul.f32 %v3322, %v3339
        %v3344 = vmul.f32 %v3323, %v3339
        %v3345 = vmul.f32 %v3324, %v3339
        %v3346 = vmul.f32 %v3325, %v3339
        %v3347 = vmul.f32 %v3326, %v3339
        %v3348 = vmul.f32 %v3327, %v3339
        %v3349 = vmul.f32 %v3328, %v3339
        %v3350 = vmul.f32 %v3329, %v3339
        %v3351 = vmul.f32 %v3330, %v3339
        %v3352 = vmul.f32 %v3331, %v3339
        %v3353 = vmul.f32 %v3332, %v3339
        %v3354 = vmul.f32 %v3333, %v3339
        %v3355 = vmul.f32 %v3334, %v3339
        %v3356 = vadd.f32 %v3303, %v3340
        %v3357 = vadd.f32 %v3304, %v3341
        %v3358 = vadd.f32 %v3305, %v3342
        %v3359 = vadd.f32 %v3306, %v3343
        %v3360 = vadd.f32 %v3307, %v3344
        %v3361 = vadd.f32 %v3308, %v3345
        %v3362 = vadd.f32 %v3309, %v3346
        %v3363 = vadd.f32 %v3310, %v3347
        %v3364 = vadd.f32 %v3311, %v3348
        %v3365 = vadd.f32 %v3312, %v3349
        %v3366 = vadd.f32 %v3313, %v3350
        %v3367 = vadd.f32 %v3314, %v3351
        %v3368 = vadd.f32 %v3315, %v3352
        %v3369 = vadd.f32 %v3316, %v3353
        %v3370 = vadd.f32 %v3317, %v3354
        %v3371 = vadd.f32 %v3318, %v3355
        %v3372 = vld [vmem:[%s3212 + $0x3] sm:$0xff]
        %v3373 = vld [vmem:[%s3212 + $0xb] sm:$0xff]
        %v3374 = vld [vmem:[%s3212 + $0x1b] sm:$0xff]
        %v3375 = vld [vmem:[%s3212 + $0x23] sm:$0xff]
        %v3376 = vld [vmem:[%s3212 + $0x33] sm:$0xff]
        %v3377 = vld [vmem:[%s3212 + $0x3b] sm:$0xff]
        %v3378 = vld [vmem:[%s3212 + $0x4b] sm:$0xff]
        %v3379 = vld [vmem:[%s3212 + $0x53] sm:$0xff]
        %v3380 = vld [vmem:[%s3212 + $0x63] sm:$0xff]
        %v3381 = vld [vmem:[%s3212 + $0x6b] sm:$0xff]
        %v3382 = vld [vmem:[%s3212 + $0x7b] sm:$0xff]
        %v3383 = vld [vmem:[%s3212 + $0x83] sm:$0xff]
        %v3384 = vld [vmem:[%s3212 + $0x93] sm:$0xff]
        %v3385 = vld [vmem:[%s3212 + $0x9b] sm:$0xff]
        %v3386 = vld [vmem:[%s3212 + $0xab] sm:$0xff]
        %v3387 = vld [vmem:[%s3212 + $0xb3] sm:$0xff]
        %v3388 = vld [vmem:[%s23 + $0x11] sm:$0x1]
        %v3389 = vlaneseq
        %v3390 = vshrl.u32 %v3389, 7
        %v3391 = vsub.s32 0, %v3390
        %v3392 = vrot.slane %v3388, %v3391
        %v3393 = vmul.f32 %v3372, %v3392
        %v3394 = vmul.f32 %v3373, %v3392
        %v3395 = vmul.f32 %v3374, %v3392
        %v3396 = vmul.f32 %v3375, %v3392
        %v3397 = vmul.f32 %v3376, %v3392
        %v3398 = vmul.f32 %v3377, %v3392
        %v3399 = vmul.f32 %v3378, %v3392
        %v3400 = vmul.f32 %v3379, %v3392
        %v3401 = vmul.f32 %v3380, %v3392
        %v3402 = vmul.f32 %v3381, %v3392
        %v3403 = vmul.f32 %v3382, %v3392
        %v3404 = vmul.f32 %v3383, %v3392
        %v3405 = vmul.f32 %v3384, %v3392
        %v3406 = vmul.f32 %v3385, %v3392
        %v3407 = vmul.f32 %v3386, %v3392
        %v3408 = vmul.f32 %v3387, %v3392
        %v3409 = vadd.f32 %v3356, %v3393
        %v3410 = vadd.f32 %v3357, %v3394
        %v3411 = vadd.f32 %v3358, %v3395
        %v3412 = vadd.f32 %v3359, %v3396
        %v3413 = vadd.f32 %v3360, %v3397
        %v3414 = vadd.f32 %v3361, %v3398
        %v3415 = vadd.f32 %v3362, %v3399
        %v3416 = vadd.f32 %v3363, %v3400
        %v3417 = vadd.f32 %v3364, %v3401
        %v3418 = vadd.f32 %v3365, %v3402
        %v3419 = vadd.f32 %v3366, %v3403
        %v3420 = vadd.f32 %v3367, %v3404
        %v3421 = vadd.f32 %v3368, %v3405
        %v3422 = vadd.f32 %v3369, %v3406
        %v3423 = vadd.f32 %v3370, %v3407
        %v3424 = vadd.f32 %v3371, %v3408
        %v3425 = vld [vmem:[%s3212 + $0x4] sm:$0xff]
        %v3426 = vld [vmem:[%s3212 + $0xc] sm:$0xff]
        %v3427 = vld [vmem:[%s3212 + $0x1c] sm:$0xff]
        %v3428 = vld [vmem:[%s3212 + $0x24] sm:$0xff]
        %v3429 = vld [vmem:[%s3212 + $0x34] sm:$0xff]
        %v3430 = vld [vmem:[%s3212 + $0x3c] sm:$0xff]
        %v3431 = vld [vmem:[%s3212 + $0x4c] sm:$0xff]
        %v3432 = vld [vmem:[%s3212 + $0x54] sm:$0xff]
        %v3433 = vld [vmem:[%s3212 + $0x64] sm:$0xff]
        %v3434 = vld [vmem:[%s3212 + $0x6c] sm:$0xff]
        %v3435 = vld [vmem:[%s3212 + $0x7c] sm:$0xff]
        %v3436 = vld [vmem:[%s3212 + $0x84] sm:$0xff]
        %v3437 = vld [vmem:[%s3212 + $0x94] sm:$0xff]
        %v3438 = vld [vmem:[%s3212 + $0x9c] sm:$0xff]
        %v3439 = vld [vmem:[%s3212 + $0xac] sm:$0xff]
        %v3440 = vld [vmem:[%s3212 + $0xb4] sm:$0xff]
        %v3441 = vld [vmem:[%s23 + $0x12] sm:$0x1]
        %v3442 = vlaneseq
        %v3443 = vshrl.u32 %v3442, 7
        %v3444 = vsub.s32 0, %v3443
        %v3445 = vrot.slane %v3441, %v3444
        %v3446 = vmul.f32 %v3425, %v3445
        %v3447 = vmul.f32 %v3426, %v3445
        %v3448 = vmul.f32 %v3427, %v3445
        %v3449 = vmul.f32 %v3428, %v3445
        %v3450 = vmul.f32 %v3429, %v3445
        %v3451 = vmul.f32 %v3430, %v3445
        %v3452 = vmul.f32 %v3431, %v3445
        %v3453 = vmul.f32 %v3432, %v3445
        %v3454 = vmul.f32 %v3433, %v3445
        %v3455 = vmul.f32 %v3434, %v3445
        %v3456 = vmul.f32 %v3435, %v3445
        %v3457 = vmul.f32 %v3436, %v3445
        %v3458 = vmul.f32 %v3437, %v3445
        %v3459 = vmul.f32 %v3438, %v3445
        %v3460 = vmul.f32 %v3439, %v3445
        %v3461 = vmul.f32 %v3440, %v3445
        %v3462 = vadd.f32 %v3409, %v3446
        %v3463 = vadd.f32 %v3410, %v3447
        %v3464 = vadd.f32 %v3411, %v3448
        %v3465 = vadd.f32 %v3412, %v3449
        %v3466 = vadd.f32 %v3413, %v3450
        %v3467 = vadd.f32 %v3414, %v3451
        %v3468 = vadd.f32 %v3415, %v3452
        %v3469 = vadd.f32 %v3416, %v3453
        %v3470 = vadd.f32 %v3417, %v3454
        %v3471 = vadd.f32 %v3418, %v3455
        %v3472 = vadd.f32 %v3419, %v3456
        %v3473 = vadd.f32 %v3420, %v3457
        %v3474 = vadd.f32 %v3421, %v3458
        %v3475 = vadd.f32 %v3422, %v3459
        %v3476 = vadd.f32 %v3423, %v3460
        %v3477 = vadd.f32 %v3424, %v3461
        %v3478 = vld [vmem:[%s3212 + $0x5] sm:$0xff]
        %v3479 = vld [vmem:[%s3212 + $0xd] sm:$0xff]
        %v3480 = vld [vmem:[%s3212 + $0x1d] sm:$0xff]
        %v3481 = vld [vmem:[%s3212 + $0x25] sm:$0xff]
        %v3482 = vld [vmem:[%s3212 + $0x35] sm:$0xff]
        %v3483 = vld [vmem:[%s3212 + $0x3d] sm:$0xff]
        %v3484 = vld [vmem:[%s3212 + $0x4d] sm:$0xff]
        %v3485 = vld [vmem:[%s3212 + $0x55] sm:$0xff]
        %v3486 = vld [vmem:[%s3212 + $0x65] sm:$0xff]
        %v3487 = vld [vmem:[%s3212 + $0x6d] sm:$0xff]
        %v3488 = vld [vmem:[%s3212 + $0x7d] sm:$0xff]
        %v3489 = vld [vmem:[%s3212 + $0x85] sm:$0xff]
        %v3490 = vld [vmem:[%s3212 + $0x95] sm:$0xff]
        %v3491 = vld [vmem:[%s3212 + $0x9d] sm:$0xff]
        %v3492 = vld [vmem:[%s3212 + $0xad] sm:$0xff]
        %v3493 = vld [vmem:[%s3212 + $0xb5] sm:$0xff]
        %v3494 = vld [vmem:[%s23 + $0x13] sm:$0x1]
        %v3495 = vlaneseq
        %v3496 = vshrl.u32 %v3495, 7
        %v3497 = vsub.s32 0, %v3496
        %v3498 = vrot.slane %v3494, %v3497
        %v3499 = vmul.f32 %v3478, %v3498
        %v3500 = vmul.f32 %v3479, %v3498
        %v3501 = vmul.f32 %v3480, %v3498
        %v3502 = vmul.f32 %v3481, %v3498
        %v3503 = vmul.f32 %v3482, %v3498
        %v3504 = vmul.f32 %v3483, %v3498
        %v3505 = vmul.f32 %v3484, %v3498
        %v3506 = vmul.f32 %v3485, %v3498
        %v3507 = vmul.f32 %v3486, %v3498
        %v3508 = vmul.f32 %v3487, %v3498
        %v3509 = vmul.f32 %v3488, %v3498
        %v3510 = vmul.f32 %v3489, %v3498
        %v3511 = vmul.f32 %v3490, %v3498
        %v3512 = vmul.f32 %v3491, %v3498
        %v3513 = vmul.f32 %v3492, %v3498
        %v3514 = vmul.f32 %v3493, %v3498
        %v3515 = vadd.f32 %v3462, %v3499
        %v3516 = vadd.f32 %v3463, %v3500
        %v3517 = vadd.f32 %v3464, %v3501
        %v3518 = vadd.f32 %v3465, %v3502
        %v3519 = vadd.f32 %v3466, %v3503
        %v3520 = vadd.f32 %v3467, %v3504
        %v3521 = vadd.f32 %v3468, %v3505
        %v3522 = vadd.f32 %v3469, %v3506
        %v3523 = vadd.f32 %v3470, %v3507
        %v3524 = vadd.f32 %v3471, %v3508
        %v3525 = vadd.f32 %v3472, %v3509
        %v3526 = vadd.f32 %v3473, %v3510
        %v3527 = vadd.f32 %v3474, %v3511
        %v3528 = vadd.f32 %v3475, %v3512
        %v3529 = vadd.f32 %v3476, %v3513
        %v3530 = vadd.f32 %v3477, %v3514
        %v3531 = vld [vmem:[%s3212 + $0x6] sm:$0xff]
        %v3532 = vld [vmem:[%s3212 + $0xe] sm:$0xff]
        %v3533 = vld [vmem:[%s3212 + $0x1e] sm:$0xff]
        %v3534 = vld [vmem:[%s3212 + $0x26] sm:$0xff]
        %v3535 = vld [vmem:[%s3212 + $0x36] sm:$0xff]
        %v3536 = vld [vmem:[%s3212 + $0x3e] sm:$0xff]
        %v3537 = vld [vmem:[%s3212 + $0x4e] sm:$0xff]
        %v3538 = vld [vmem:[%s3212 + $0x56] sm:$0xff]
        %v3539 = vld [vmem:[%s3212 + $0x66] sm:$0xff]
        %v3540 = vld [vmem:[%s3212 + $0x6e] sm:$0xff]
        %v3541 = vld [vmem:[%s3212 + $0x7e] sm:$0xff]
        %v3542 = vld [vmem:[%s3212 + $0x86] sm:$0xff]
        %v3543 = vld [vmem:[%s3212 + $0x96] sm:$0xff]
        %v3544 = vld [vmem:[%s3212 + $0x9e] sm:$0xff]
        %v3545 = vld [vmem:[%s3212 + $0xae] sm:$0xff]
        %v3546 = vld [vmem:[%s3212 + $0xb6] sm:$0xff]
        %v3547 = vld [vmem:[%s23 + $0x14] sm:$0x1]
        %v3548 = vlaneseq
        %v3549 = vshrl.u32 %v3548, 7
        %v3550 = vsub.s32 0, %v3549
        %v3551 = vrot.slane %v3547, %v3550
        %v3552 = vmul.f32 %v3531, %v3551
        %v3553 = vmul.f32 %v3532, %v3551
        %v3554 = vmul.f32 %v3533, %v3551
        %v3555 = vmul.f32 %v3534, %v3551
        %v3556 = vmul.f32 %v3535, %v3551
        %v3557 = vmul.f32 %v3536, %v3551
        %v3558 = vmul.f32 %v3537, %v3551
        %v3559 = vmul.f32 %v3538, %v3551
        %v3560 = vmul.f32 %v3539, %v3551
        %v3561 = vmul.f32 %v3540, %v3551
        %v3562 = vmul.f32 %v3541, %v3551
        %v3563 = vmul.f32 %v3542, %v3551
        %v3564 = vmul.f32 %v3543, %v3551
        %v3565 = vmul.f32 %v3544, %v3551
        %v3566 = vmul.f32 %v3545, %v3551
        %v3567 = vmul.f32 %v3546, %v3551
        %v3568 = vadd.f32 %v3515, %v3552
        %v3569 = vadd.f32 %v3516, %v3553
        %v3570 = vadd.f32 %v3517, %v3554
        %v3571 = vadd.f32 %v3518, %v3555
        %v3572 = vadd.f32 %v3519, %v3556
        %v3573 = vadd.f32 %v3520, %v3557
        %v3574 = vadd.f32 %v3521, %v3558
        %v3575 = vadd.f32 %v3522, %v3559
        %v3576 = vadd.f32 %v3523, %v3560
        %v3577 = vadd.f32 %v3524, %v3561
        %v3578 = vadd.f32 %v3525, %v3562
        %v3579 = vadd.f32 %v3526, %v3563
        %v3580 = vadd.f32 %v3527, %v3564
        %v3581 = vadd.f32 %v3528, %v3565
        %v3582 = vadd.f32 %v3529, %v3566
        %v3583 = vadd.f32 %v3530, %v3567
        %v3584 = vld [vmem:[%s2452] sm:$0xff]
        %v3585 = vld [vmem:[%s2452 + $0x8] sm:$0xff]
        %v3586 = vld [vmem:[%s2452 + $0x18] sm:$0xff]
        %v3587 = vld [vmem:[%s2452 + $0x20] sm:$0xff]
        %v3588 = vld [vmem:[%s2452 + $0x30] sm:$0xff]
        %v3589 = vld [vmem:[%s2452 + $0x38] sm:$0xff]
        %v3590 = vld [vmem:[%s2452 + $0x48] sm:$0xff]
        %v3591 = vld [vmem:[%s2452 + $0x50] sm:$0xff]
        %v3592 = vld [vmem:[%s2452 + $0x60] sm:$0xff]
        %v3593 = vld [vmem:[%s2452 + $0x68] sm:$0xff]
        %v3594 = vld [vmem:[%s2452 + $0x78] sm:$0xff]
        %v3595 = vld [vmem:[%s2452 + $0x80] sm:$0xff]
        %v3596 = vld [vmem:[%s2452 + $0x90] sm:$0xff]
        %v3597 = vld [vmem:[%s2452 + $0x98] sm:$0xff]
        %v3598 = vld [vmem:[%s2452 + $0xa8] sm:$0xff]
        %v3599 = vld [vmem:[%s2452 + $0xb0] sm:$0xff]
        %v3600 = vld [vmem:[%s23 + $0x15] sm:$0x1]
        %v3601 = vlaneseq
        %v3602 = vshrl.u32 %v3601, 7
        %v3603 = vsub.s32 0, %v3602
        %v3604 = vrot.slane %v3600, %v3603
        %v3605 = vmul.f32 %v3584, %v3604
        %v3606 = vmul.f32 %v3585, %v3604
        %v3607 = vmul.f32 %v3586, %v3604
        %v3608 = vmul.f32 %v3587, %v3604
        %v3609 = vmul.f32 %v3588, %v3604
        %v3610 = vmul.f32 %v3589, %v3604
        %v3611 = vmul.f32 %v3590, %v3604
        %v3612 = vmul.f32 %v3591, %v3604
        %v3613 = vmul.f32 %v3592, %v3604
        %v3614 = vmul.f32 %v3593, %v3604
        %v3615 = vmul.f32 %v3594, %v3604
        %v3616 = vmul.f32 %v3595, %v3604
        %v3617 = vmul.f32 %v3596, %v3604
        %v3618 = vmul.f32 %v3597, %v3604
        %v3619 = vmul.f32 %v3598, %v3604
        %v3620 = vmul.f32 %v3599, %v3604
        %v3621 = vadd.f32 %v3568, %v3605
        %v3622 = vadd.f32 %v3569, %v3606
        %v3623 = vadd.f32 %v3570, %v3607
        %v3624 = vadd.f32 %v3571, %v3608
        %v3625 = vadd.f32 %v3572, %v3609
        %v3626 = vadd.f32 %v3573, %v3610
        %v3627 = vadd.f32 %v3574, %v3611
        %v3628 = vadd.f32 %v3575, %v3612
        %v3629 = vadd.f32 %v3576, %v3613
        %v3630 = vadd.f32 %v3577, %v3614
        %v3631 = vadd.f32 %v3578, %v3615
        %v3632 = vadd.f32 %v3579, %v3616
        %v3633 = vadd.f32 %v3580, %v3617
        %v3634 = vadd.f32 %v3581, %v3618
        %v3635 = vadd.f32 %v3582, %v3619
        %v3636 = vadd.f32 %v3583, %v3620
        %v3637 = vld [vmem:[%s2452 + $0x1] sm:$0xff]
        %v3638 = vld [vmem:[%s2452 + $0x9] sm:$0xff]
        %v3639 = vld [vmem:[%s2452 + $0x19] sm:$0xff]
        %v3640 = vld [vmem:[%s2452 + $0x21] sm:$0xff]
        %v3641 = vld [vmem:[%s2452 + $0x31] sm:$0xff]
        %v3642 = vld [vmem:[%s2452 + $0x39] sm:$0xff]
        %v3643 = vld [vmem:[%s2452 + $0x49] sm:$0xff]
        %v3644 = vld [vmem:[%s2452 + $0x51] sm:$0xff]
        %v3645 = vld [vmem:[%s2452 + $0x61] sm:$0xff]
        %v3646 = vld [vmem:[%s2452 + $0x69] sm:$0xff]
        %v3647 = vld [vmem:[%s2452 + $0x79] sm:$0xff]
        %v3648 = vld [vmem:[%s2452 + $0x81] sm:$0xff]
        %v3649 = vld [vmem:[%s2452 + $0x91] sm:$0xff]
        %v3650 = vld [vmem:[%s2452 + $0x99] sm:$0xff]
        %v3651 = vld [vmem:[%s2452 + $0xa9] sm:$0xff]
        %v3652 = vld [vmem:[%s2452 + $0xb1] sm:$0xff]
        %v3653 = vld [vmem:[%s23 + $0x16] sm:$0x1]
        %v3654 = vlaneseq
        %v3655 = vshrl.u32 %v3654, 7
        %v3656 = vsub.s32 0, %v3655
        %v3657 = vrot.slane %v3653, %v3656
        %v3658 = vmul.f32 %v3637, %v3657
        %v3659 = vmul.f32 %v3638, %v3657
        %v3660 = vmul.f32 %v3639, %v3657
        %v3661 = vmul.f32 %v3640, %v3657
        %v3662 = vmul.f32 %v3641, %v3657
        %v3663 = vmul.f32 %v3642, %v3657
        %v3664 = vmul.f32 %v3643, %v3657
        %v3665 = vmul.f32 %v3644, %v3657
        %v3666 = vmul.f32 %v3645, %v3657
        %v3667 = vmul.f32 %v3646, %v3657
        %v3668 = vmul.f32 %v3647, %v3657
        %v3669 = vmul.f32 %v3648, %v3657
        %v3670 = vmul.f32 %v3649, %v3657
        %v3671 = vmul.f32 %v3650, %v3657
        %v3672 = vmul.f32 %v3651, %v3657
        %v3673 = vmul.f32 %v3652, %v3657
        %v3674 = vadd.f32 %v3621, %v3658
        %v3675 = vadd.f32 %v3622, %v3659
        %v3676 = vadd.f32 %v3623, %v3660
        %v3677 = vadd.f32 %v3624, %v3661
        %v3678 = vadd.f32 %v3625, %v3662
        %v3679 = vadd.f32 %v3626, %v3663
        %v3680 = vadd.f32 %v3627, %v3664
        %v3681 = vadd.f32 %v3628, %v3665
        %v3682 = vadd.f32 %v3629, %v3666
        %v3683 = vadd.f32 %v3630, %v3667
        %v3684 = vadd.f32 %v3631, %v3668
        %v3685 = vadd.f32 %v3632, %v3669
        %v3686 = vadd.f32 %v3633, %v3670
        %v3687 = vadd.f32 %v3634, %v3671
        %v3688 = vadd.f32 %v3635, %v3672
        %v3689 = vadd.f32 %v3636, %v3673
        %v3690 = vld [vmem:[%s2452 + $0x2] sm:$0xff]
        %v3691 = vld [vmem:[%s2452 + $0xa] sm:$0xff]
        %v3692 = vld [vmem:[%s2452 + $0x1a] sm:$0xff]
        %v3693 = vld [vmem:[%s2452 + $0x22] sm:$0xff]
        %v3694 = vld [vmem:[%s2452 + $0x32] sm:$0xff]
        %v3695 = vld [vmem:[%s2452 + $0x3a] sm:$0xff]
        %v3696 = vld [vmem:[%s2452 + $0x4a] sm:$0xff]
        %v3697 = vld [vmem:[%s2452 + $0x52] sm:$0xff]
        %v3698 = vld [vmem:[%s2452 + $0x62] sm:$0xff]
        %v3699 = vld [vmem:[%s2452 + $0x6a] sm:$0xff]
        %v3700 = vld [vmem:[%s2452 + $0x7a] sm:$0xff]
        %v3701 = vld [vmem:[%s2452 + $0x82] sm:$0xff]
        %v3702 = vld [vmem:[%s2452 + $0x92] sm:$0xff]
        %v3703 = vld [vmem:[%s2452 + $0x9a] sm:$0xff]
        %v3704 = vld [vmem:[%s2452 + $0xaa] sm:$0xff]
        %v3705 = vld [vmem:[%s2452 + $0xb2] sm:$0xff]
        %v3706 = vld [vmem:[%s23 + $0x17] sm:$0x1]
        %v3707 = vlaneseq
        %v3708 = vshrl.u32 %v3707, 7
        %v3709 = vsub.s32 0, %v3708
        %v3710 = vrot.slane %v3706, %v3709
        %v3711 = vmul.f32 %v3690, %v3710
        %v3712 = vmul.f32 %v3691, %v3710
        %v3713 = vmul.f32 %v3692, %v3710
        %v3714 = vmul.f32 %v3693, %v3710
        %v3715 = vmul.f32 %v3694, %v3710
        %v3716 = vmul.f32 %v3695, %v3710
        %v3717 = vmul.f32 %v3696, %v3710
        %v3718 = vmul.f32 %v3697, %v3710
        %v3719 = vmul.f32 %v3698, %v3710
        %v3720 = vmul.f32 %v3699, %v3710
        %v3721 = vmul.f32 %v3700, %v3710
        %v3722 = vmul.f32 %v3701, %v3710
        %v3723 = vmul.f32 %v3702, %v3710
        %v3724 = vmul.f32 %v3703, %v3710
        %v3725 = vmul.f32 %v3704, %v3710
        %v3726 = vmul.f32 %v3705, %v3710
        %v3727 = vadd.f32 %v3674, %v3711
        %v3728 = vadd.f32 %v3675, %v3712
        %v3729 = vadd.f32 %v3676, %v3713
        %v3730 = vadd.f32 %v3677, %v3714
        %v3731 = vadd.f32 %v3678, %v3715
        %v3732 = vadd.f32 %v3679, %v3716
        %v3733 = vadd.f32 %v3680, %v3717
        %v3734 = vadd.f32 %v3681, %v3718
        %v3735 = vadd.f32 %v3682, %v3719
        %v3736 = vadd.f32 %v3683, %v3720
        %v3737 = vadd.f32 %v3684, %v3721
        %v3738 = vadd.f32 %v3685, %v3722
        %v3739 = vadd.f32 %v3686, %v3723
        %v3740 = vadd.f32 %v3687, %v3724
        %v3741 = vadd.f32 %v3688, %v3725
        %v3742 = vadd.f32 %v3689, %v3726
        %v3743 = vld [vmem:[%s2452 + $0x3] sm:$0xff]
        %v3744 = vld [vmem:[%s2452 + $0xb] sm:$0xff]
        %v3745 = vld [vmem:[%s2452 + $0x1b] sm:$0xff]
        %v3746 = vld [vmem:[%s2452 + $0x23] sm:$0xff]
        %v3747 = vld [vmem:[%s2452 + $0x33] sm:$0xff]
        %v3748 = vld [vmem:[%s2452 + $0x3b] sm:$0xff]
        %v3749 = vld [vmem:[%s2452 + $0x4b] sm:$0xff]
        %v3750 = vld [vmem:[%s2452 + $0x53] sm:$0xff]
        %v3751 = vld [vmem:[%s2452 + $0x63] sm:$0xff]
        %v3752 = vld [vmem:[%s2452 + $0x6b] sm:$0xff]
        %v3753 = vld [vmem:[%s2452 + $0x7b] sm:$0xff]
        %v3754 = vld [vmem:[%s2452 + $0x83] sm:$0xff]
        %v3755 = vld [vmem:[%s2452 + $0x93] sm:$0xff]
        %v3756 = vld [vmem:[%s2452 + $0x9b] sm:$0xff]
        %v3757 = vld [vmem:[%s2452 + $0xab] sm:$0xff]
        %v3758 = vld [vmem:[%s2452 + $0xb3] sm:$0xff]
        %v3759 = vld [vmem:[%s23 + $0x18] sm:$0x1]
        %v3760 = vlaneseq
        %v3761 = vshrl.u32 %v3760, 7
        %v3762 = vsub.s32 0, %v3761
        %v3763 = vrot.slane %v3759, %v3762
        %v3764 = vmul.f32 %v3743, %v3763
        %v3765 = vmul.f32 %v3744, %v3763
        %v3766 = vmul.f32 %v3745, %v3763
        %v3767 = vmul.f32 %v3746, %v3763
        %v3768 = vmul.f32 %v3747, %v3763
        %v3769 = vmul.f32 %v3748, %v3763
        %v3770 = vmul.f32 %v3749, %v3763
        %v3771 = vmul.f32 %v3750, %v3763
        %v3772 = vmul.f32 %v3751, %v3763
        %v3773 = vmul.f32 %v3752, %v3763
        %v3774 = vmul.f32 %v3753, %v3763
        %v3775 = vmul.f32 %v3754, %v3763
        %v3776 = vmul.f32 %v3755, %v3763
        %v3777 = vmul.f32 %v3756, %v3763
        %v3778 = vmul.f32 %v3757, %v3763
        %v3779 = vmul.f32 %v3758, %v3763
        %v3780 = vadd.f32 %v3727, %v3764
        %v3781 = vadd.f32 %v3728, %v3765
        %v3782 = vadd.f32 %v3729, %v3766
        %v3783 = vadd.f32 %v3730, %v3767
        %v3784 = vadd.f32 %v3731, %v3768
        %v3785 = vadd.f32 %v3732, %v3769
        %v3786 = vadd.f32 %v3733, %v3770
        %v3787 = vadd.f32 %v3734, %v3771
        %v3788 = vadd.f32 %v3735, %v3772
        %v3789 = vadd.f32 %v3736, %v3773
        %v3790 = vadd.f32 %v3737, %v3774
        %v3791 = vadd.f32 %v3738, %v3775
        %v3792 = vadd.f32 %v3739, %v3776
        %v3793 = vadd.f32 %v3740, %v3777
        %v3794 = vadd.f32 %v3741, %v3778
        %v3795 = vadd.f32 %v3742, %v3779
        %v3796 = vld [vmem:[%s2452 + $0x4] sm:$0xff]
        %v3797 = vld [vmem:[%s2452 + $0xc] sm:$0xff]
        %v3798 = vld [vmem:[%s2452 + $0x1c] sm:$0xff]
        %v3799 = vld [vmem:[%s2452 + $0x24] sm:$0xff]
        %v3800 = vld [vmem:[%s2452 + $0x34] sm:$0xff]
        %v3801 = vld [vmem:[%s2452 + $0x3c] sm:$0xff]
        %v3802 = vld [vmem:[%s2452 + $0x4c] sm:$0xff]
        %v3803 = vld [vmem:[%s2452 + $0x54] sm:$0xff]
        %v3804 = vld [vmem:[%s2452 + $0x64] sm:$0xff]
        %v3805 = vld [vmem:[%s2452 + $0x6c] sm:$0xff]
        %v3806 = vld [vmem:[%s2452 + $0x7c] sm:$0xff]
        %v3807 = vld [vmem:[%s2452 + $0x84] sm:$0xff]
        %v3808 = vld [vmem:[%s2452 + $0x94] sm:$0xff]
        %v3809 = vld [vmem:[%s2452 + $0x9c] sm:$0xff]
        %v3810 = vld [vmem:[%s2452 + $0xac] sm:$0xff]
        %v3811 = vld [vmem:[%s2452 + $0xb4] sm:$0xff]
        %v3812 = vld [vmem:[%s23 + $0x19] sm:$0x1]
        %v3813 = vlaneseq
        %v3814 = vshrl.u32 %v3813, 7
        %v3815 = vsub.s32 0, %v3814
        %v3816 = vrot.slane %v3812, %v3815
        %v3817 = vmul.f32 %v3796, %v3816
        %v3818 = vmul.f32 %v3797, %v3816
        %v3819 = vmul.f32 %v3798, %v3816
        %v3820 = vmul.f32 %v3799, %v3816
        %v3821 = vmul.f32 %v3800, %v3816
        %v3822 = vmul.f32 %v3801, %v3816
        %v3823 = vmul.f32 %v3802, %v3816
        %v3824 = vmul.f32 %v3803, %v3816
        %v3825 = vmul.f32 %v3804, %v3816
        %v3826 = vmul.f32 %v3805, %v3816
        %v3827 = vmul.f32 %v3806, %v3816
        %v3828 = vmul.f32 %v3807, %v3816
        %v3829 = vmul.f32 %v3808, %v3816
        %v3830 = vmul.f32 %v3809, %v3816
        %v3831 = vmul.f32 %v3810, %v3816
        %v3832 = vmul.f32 %v3811, %v3816
        %v3833 = vadd.f32 %v3780, %v3817
        %v3834 = vadd.f32 %v3781, %v3818
        %v3835 = vadd.f32 %v3782, %v3819
        %v3836 = vadd.f32 %v3783, %v3820
        %v3837 = vadd.f32 %v3784, %v3821
        %v3838 = vadd.f32 %v3785, %v3822
        %v3839 = vadd.f32 %v3786, %v3823
        %v3840 = vadd.f32 %v3787, %v3824
        %v3841 = vadd.f32 %v3788, %v3825
        %v3842 = vadd.f32 %v3789, %v3826
        %v3843 = vadd.f32 %v3790, %v3827
        %v3844 = vadd.f32 %v3791, %v3828
        %v3845 = vadd.f32 %v3792, %v3829
        %v3846 = vadd.f32 %v3793, %v3830
        %v3847 = vadd.f32 %v3794, %v3831
        %v3848 = vadd.f32 %v3795, %v3832
        %v3849 = vld [vmem:[%s2452 + $0x5] sm:$0xff]
        %v3850 = vld [vmem:[%s2452 + $0xd] sm:$0xff]
        %v3851 = vld [vmem:[%s2452 + $0x1d] sm:$0xff]
        %v3852 = vld [vmem:[%s2452 + $0x25] sm:$0xff]
        %v3853 = vld [vmem:[%s2452 + $0x35] sm:$0xff]
        %v3854 = vld [vmem:[%s2452 + $0x3d] sm:$0xff]
        %v3855 = vld [vmem:[%s2452 + $0x4d] sm:$0xff]
        %v3856 = vld [vmem:[%s2452 + $0x55] sm:$0xff]
        %v3857 = vld [vmem:[%s2452 + $0x65] sm:$0xff]
        %v3858 = vld [vmem:[%s2452 + $0x6d] sm:$0xff]
        %v3859 = vld [vmem:[%s2452 + $0x7d] sm:$0xff]
        %v3860 = vld [vmem:[%s2452 + $0x85] sm:$0xff]
        %v3861 = vld [vmem:[%s2452 + $0x95] sm:$0xff]
        %v3862 = vld [vmem:[%s2452 + $0x9d] sm:$0xff]
        %v3863 = vld [vmem:[%s2452 + $0xad] sm:$0xff]
        %v3864 = vld [vmem:[%s2452 + $0xb5] sm:$0xff]
        %v3865 = vld [vmem:[%s23 + $0x1a] sm:$0x1]
        %v3866 = vlaneseq
        %v3867 = vshrl.u32 %v3866, 7
        %v3868 = vsub.s32 0, %v3867
        %v3869 = vrot.slane %v3865, %v3868
        %v3870 = vmul.f32 %v3849, %v3869
        %v3871 = vmul.f32 %v3850, %v3869
        %v3872 = vmul.f32 %v3851, %v3869
        %v3873 = vmul.f32 %v3852, %v3869
        %v3874 = vmul.f32 %v3853, %v3869
        %v3875 = vmul.f32 %v3854, %v3869
        %v3876 = vmul.f32 %v3855, %v3869
        %v3877 = vmul.f32 %v3856, %v3869
        %v3878 = vmul.f32 %v3857, %v3869
        %v3879 = vmul.f32 %v3858, %v3869
        %v3880 = vmul.f32 %v3859, %v3869
        %v3881 = vmul.f32 %v3860, %v3869
        %v3882 = vmul.f32 %v3861, %v3869
        %v3883 = vmul.f32 %v3862, %v3869
        %v3884 = vmul.f32 %v3863, %v3869
        %v3885 = vmul.f32 %v3864, %v3869
        %v3886 = vadd.f32 %v3833, %v3870
        %v3887 = vadd.f32 %v3834, %v3871
        %v3888 = vadd.f32 %v3835, %v3872
        %v3889 = vadd.f32 %v3836, %v3873
        %v3890 = vadd.f32 %v3837, %v3874
        %v3891 = vadd.f32 %v3838, %v3875
        %v3892 = vadd.f32 %v3839, %v3876
        %v3893 = vadd.f32 %v3840, %v3877
        %v3894 = vadd.f32 %v3841, %v3878
        %v3895 = vadd.f32 %v3842, %v3879
        %v3896 = vadd.f32 %v3843, %v3880
        %v3897 = vadd.f32 %v3844, %v3881
        %v3898 = vadd.f32 %v3845, %v3882
        %v3899 = vadd.f32 %v3846, %v3883
        %v3900 = vadd.f32 %v3847, %v3884
        %v3901 = vadd.f32 %v3848, %v3885
        %v3902 = vld [vmem:[%s2452 + $0x6] sm:$0xff]
        %v3903 = vld [vmem:[%s2452 + $0xe] sm:$0xff]
        %v3904 = vld [vmem:[%s2452 + $0x1e] sm:$0xff]
        %v3905 = vld [vmem:[%s2452 + $0x26] sm:$0xff]
        %v3906 = vld [vmem:[%s2452 + $0x36] sm:$0xff]
        %v3907 = vld [vmem:[%s2452 + $0x3e] sm:$0xff]
        %v3908 = vld [vmem:[%s2452 + $0x4e] sm:$0xff]
        %v3909 = vld [vmem:[%s2452 + $0x56] sm:$0xff]
        %v3910 = vld [vmem:[%s2452 + $0x66] sm:$0xff]
        %v3911 = vld [vmem:[%s2452 + $0x6e] sm:$0xff]
        %v3912 = vld [vmem:[%s2452 + $0x7e] sm:$0xff]
        %v3913 = vld [vmem:[%s2452 + $0x86] sm:$0xff]
        %v3914 = vld [vmem:[%s2452 + $0x96] sm:$0xff]
        %v3915 = vld [vmem:[%s2452 + $0x9e] sm:$0xff]
        %v3916 = vld [vmem:[%s2452 + $0xae] sm:$0xff]
        %v3917 = vld [vmem:[%s2452 + $0xb6] sm:$0xff]
        %v3918 = vld [vmem:[%s23 + $0x1b] sm:$0x1]
        %v3919 = vlaneseq
        %v3920 = vshrl.u32 %v3919, 7
        %v3921 = vsub.s32 0, %v3920
        %v3922 = vrot.slane %v3918, %v3921
        %v3923 = vmul.f32 %v3902, %v3922
        %v3924 = vmul.f32 %v3903, %v3922
        %v3925 = vmul.f32 %v3904, %v3922
        %v3926 = vmul.f32 %v3905, %v3922
        %v3927 = vmul.f32 %v3906, %v3922
        %v3928 = vmul.f32 %v3907, %v3922
        %v3929 = vmul.f32 %v3908, %v3922
        %v3930 = vmul.f32 %v3909, %v3922
        %v3931 = vmul.f32 %v3910, %v3922
        %v3932 = vmul.f32 %v3911, %v3922
        %v3933 = vmul.f32 %v3912, %v3922
        %v3934 = vmul.f32 %v3913, %v3922
        %v3935 = vmul.f32 %v3914, %v3922
        %v3936 = vmul.f32 %v3915, %v3922
        %v3937 = vmul.f32 %v3916, %v3922
        %v3938 = vmul.f32 %v3917, %v3922
        %v3939 = vadd.f32 %v3886, %v3923
        %v3940 = vadd.f32 %v3887, %v3924
        %v3941 = vadd.f32 %v3888, %v3925
        %v3942 = vadd.f32 %v3889, %v3926
        %v3943 = vadd.f32 %v3890, %v3927
        %v3944 = vadd.f32 %v3891, %v3928
        %v3945 = vadd.f32 %v3892, %v3929
        %v3946 = vadd.f32 %v3893, %v3930
        %v3947 = vadd.f32 %v3894, %v3931
        %v3948 = vadd.f32 %v3895, %v3932
        %v3949 = vadd.f32 %v3896, %v3933
        %v3950 = vadd.f32 %v3897, %v3934
        %v3951 = vadd.f32 %v3898, %v3935
        %v3952 = vadd.f32 %v3899, %v3936
        %v3953 = vadd.f32 %v3900, %v3937
        %v3954 = vadd.f32 %v3901, %v3938
        %s3955 = scalar_lea.vmem [#allocation4], 96
        %v3956 = vld [vmem:[%s3955] sm:$0xff]
        %v3957 = vld [vmem:[%s3955 + $0x8] sm:$0xff]
        %v3958 = vld [vmem:[%s3955 + $0x18] sm:$0xff]
        %v3959 = vld [vmem:[%s3955 + $0x20] sm:$0xff]
        %v3960 = vld [vmem:[%s3955 + $0x30] sm:$0xff]
        %v3961 = vld [vmem:[%s3955 + $0x38] sm:$0xff]
        %v3962 = vld [vmem:[%s3955 + $0x48] sm:$0xff]
        %v3963 = vld [vmem:[%s3955 + $0x50] sm:$0xff]
        %v3964 = vld [vmem:[%s3955 + $0x60] sm:$0xff]
        %v3965 = vld [vmem:[%s3955 + $0x68] sm:$0xff]
        %v3966 = vld [vmem:[%s3955 + $0x78] sm:$0xff]
        %v3967 = vld [vmem:[%s3955 + $0x80] sm:$0xff]
        %v3968 = vld [vmem:[%s3955 + $0x90] sm:$0xff]
        %v3969 = vld [vmem:[%s3955 + $0x98] sm:$0xff]
        %v3970 = vld [vmem:[%s3955 + $0xa8] sm:$0xff]
        %v3971 = vld [vmem:[%s3955 + $0xb0] sm:$0xff]
        %v3972 = vld [vmem:[%s23 + $0x1c] sm:$0x1]
        %v3973 = vlaneseq
        %v3974 = vshrl.u32 %v3973, 7
        %v3975 = vsub.s32 0, %v3974
        %v3976 = vrot.slane %v3972, %v3975
        %v3977 = vmul.f32 %v3956, %v3976
        %v3978 = vmul.f32 %v3957, %v3976
        %v3979 = vmul.f32 %v3958, %v3976
        %v3980 = vmul.f32 %v3959, %v3976
        %v3981 = vmul.f32 %v3960, %v3976
        %v3982 = vmul.f32 %v3961, %v3976
        %v3983 = vmul.f32 %v3962, %v3976
        %v3984 = vmul.f32 %v3963, %v3976
        %v3985 = vmul.f32 %v3964, %v3976
        %v3986 = vmul.f32 %v3965, %v3976
        %v3987 = vmul.f32 %v3966, %v3976
        %v3988 = vmul.f32 %v3967, %v3976
        %v3989 = vmul.f32 %v3968, %v3976
        %v3990 = vmul.f32 %v3969, %v3976
        %v3991 = vmul.f32 %v3970, %v3976
        %v3992 = vmul.f32 %v3971, %v3976
        %v3993 = vadd.f32 %v3939, %v3977
        %v3994 = vadd.f32 %v3940, %v3978
        %v3995 = vadd.f32 %v3941, %v3979
        %v3996 = vadd.f32 %v3942, %v3980
        %v3997 = vadd.f32 %v3943, %v3981
        %v3998 = vadd.f32 %v3944, %v3982
        %v3999 = vadd.f32 %v3945, %v3983
        %v4000 = vadd.f32 %v3946, %v3984
        %v4001 = vadd.f32 %v3947, %v3985
        %v4002 = vadd.f32 %v3948, %v3986
        %v4003 = vadd.f32 %v3949, %v3987
        %v4004 = vadd.f32 %v3950, %v3988
        %v4005 = vadd.f32 %v3951, %v3989
        %v4006 = vadd.f32 %v3952, %v3990
        %v4007 = vadd.f32 %v3953, %v3991
        %v4008 = vadd.f32 %v3954, %v3992
        %v4009 = vld [vmem:[%s3955 + $0x1] sm:$0xff]
        %v4010 = vld [vmem:[%s3955 + $0x9] sm:$0xff]
        %v4011 = vld [vmem:[%s3955 + $0x19] sm:$0xff]
        %v4012 = vld [vmem:[%s3955 + $0x21] sm:$0xff]
        %v4013 = vld [vmem:[%s3955 + $0x31] sm:$0xff]
        %v4014 = vld [vmem:[%s3955 + $0x39] sm:$0xff]
        %v4015 = vld [vmem:[%s3955 + $0x49] sm:$0xff]
        %v4016 = vld [vmem:[%s3955 + $0x51] sm:$0xff]
        %v4017 = vld [vmem:[%s3955 + $0x61] sm:$0xff]
        %v4018 = vld [vmem:[%s3955 + $0x69] sm:$0xff]
        %v4019 = vld [vmem:[%s3955 + $0x79] sm:$0xff]
        %v4020 = vld [vmem:[%s3955 + $0x81] sm:$0xff]
        %v4021 = vld [vmem:[%s3955 + $0x91] sm:$0xff]
        %v4022 = vld [vmem:[%s3955 + $0x99] sm:$0xff]
        %v4023 = vld [vmem:[%s3955 + $0xa9] sm:$0xff]
        %v4024 = vld [vmem:[%s3955 + $0xb1] sm:$0xff]
        %v4025 = vld [vmem:[%s23 + $0x1d] sm:$0x1]
        %v4026 = vlaneseq
        %v4027 = vshrl.u32 %v4026, 7
        %v4028 = vsub.s32 0, %v4027
        %v4029 = vrot.slane %v4025, %v4028
        %v4030 = vmul.f32 %v4009, %v4029
        %v4031 = vmul.f32 %v4010, %v4029
        %v4032 = vmul.f32 %v4011, %v4029
        %v4033 = vmul.f32 %v4012, %v4029
        %v4034 = vmul.f32 %v4013, %v4029
        %v4035 = vmul.f32 %v4014, %v4029
        %v4036 = vmul.f32 %v4015, %v4029
        %v4037 = vmul.f32 %v4016, %v4029
        %v4038 = vmul.f32 %v4017, %v4029
        %v4039 = vmul.f32 %v4018, %v4029
        %v4040 = vmul.f32 %v4019, %v4029
        %v4041 = vmul.f32 %v4020, %v4029
        %v4042 = vmul.f32 %v4021, %v4029
        %v4043 = vmul.f32 %v4022, %v4029
        %v4044 = vmul.f32 %v4023, %v4029
        %v4045 = vmul.f32 %v4024, %v4029
        %v4046 = vadd.f32 %v3993, %v4030
        %v4047 = vadd.f32 %v3994, %v4031
        %v4048 = vadd.f32 %v3995, %v4032
        %v4049 = vadd.f32 %v3996, %v4033
        %v4050 = vadd.f32 %v3997, %v4034
        %v4051 = vadd.f32 %v3998, %v4035
        %v4052 = vadd.f32 %v3999, %v4036
        %v4053 = vadd.f32 %v4000, %v4037
        %v4054 = vadd.f32 %v4001, %v4038
        %v4055 = vadd.f32 %v4002, %v4039
        %v4056 = vadd.f32 %v4003, %v4040
        %v4057 = vadd.f32 %v4004, %v4041
        %v4058 = vadd.f32 %v4005, %v4042
        %v4059 = vadd.f32 %v4006, %v4043
        %v4060 = vadd.f32 %v4007, %v4044
        %v4061 = vadd.f32 %v4008, %v4045
        %v4062 = vld [vmem:[%s3955 + $0x2] sm:$0xff]
        %v4063 = vld [vmem:[%s3955 + $0xa] sm:$0xff]
        %v4064 = vld [vmem:[%s3955 + $0x1a] sm:$0xff]
        %v4065 = vld [vmem:[%s3955 + $0x22] sm:$0xff]
        %v4066 = vld [vmem:[%s3955 + $0x32] sm:$0xff]
        %v4067 = vld [vmem:[%s3955 + $0x3a] sm:$0xff]
        %v4068 = vld [vmem:[%s3955 + $0x4a] sm:$0xff]
        %v4069 = vld [vmem:[%s3955 + $0x52] sm:$0xff]
        %v4070 = vld [vmem:[%s3955 + $0x62] sm:$0xff]
        %v4071 = vld [vmem:[%s3955 + $0x6a] sm:$0xff]
        %v4072 = vld [vmem:[%s3955 + $0x7a] sm:$0xff]
        %v4073 = vld [vmem:[%s3955 + $0x82] sm:$0xff]
        %v4074 = vld [vmem:[%s3955 + $0x92] sm:$0xff]
        %v4075 = vld [vmem:[%s3955 + $0x9a] sm:$0xff]
        %v4076 = vld [vmem:[%s3955 + $0xaa] sm:$0xff]
        %v4077 = vld [vmem:[%s3955 + $0xb2] sm:$0xff]
        %v4078 = vld [vmem:[%s23 + $0x1e] sm:$0x1]
        %v4079 = vlaneseq
        %v4080 = vshrl.u32 %v4079, 7
        %v4081 = vsub.s32 0, %v4080
        %v4082 = vrot.slane %v4078, %v4081
        %v4083 = vmul.f32 %v4062, %v4082
        %v4084 = vmul.f32 %v4063, %v4082
        %v4085 = vmul.f32 %v4064, %v4082
        %v4086 = vmul.f32 %v4065, %v4082
        %v4087 = vmul.f32 %v4066, %v4082
        %v4088 = vmul.f32 %v4067, %v4082
        %v4089 = vmul.f32 %v4068, %v4082
        %v4090 = vmul.f32 %v4069, %v4082
        %v4091 = vmul.f32 %v4070, %v4082
        %v4092 = vmul.f32 %v4071, %v4082
        %v4093 = vmul.f32 %v4072, %v4082
        %v4094 = vmul.f32 %v4073, %v4082
        %v4095 = vmul.f32 %v4074, %v4082
        %v4096 = vmul.f32 %v4075, %v4082
        %v4097 = vmul.f32 %v4076, %v4082
        %v4098 = vmul.f32 %v4077, %v4082
        %v4099 = vadd.f32 %v4046, %v4083
        %v4100 = vadd.f32 %v4047, %v4084
        %v4101 = vadd.f32 %v4048, %v4085
        %v4102 = vadd.f32 %v4049, %v4086
        %v4103 = vadd.f32 %v4050, %v4087
        %v4104 = vadd.f32 %v4051, %v4088
        %v4105 = vadd.f32 %v4052, %v4089
        %v4106 = vadd.f32 %v4053, %v4090
        %v4107 = vadd.f32 %v4054, %v4091
        %v4108 = vadd.f32 %v4055, %v4092
        %v4109 = vadd.f32 %v4056, %v4093
        %v4110 = vadd.f32 %v4057, %v4094
        %v4111 = vadd.f32 %v4058, %v4095
        %v4112 = vadd.f32 %v4059, %v4096
        %v4113 = vadd.f32 %v4060, %v4097
        %v4114 = vadd.f32 %v4061, %v4098
        %v4115 = vld [vmem:[%s3955 + $0x3] sm:$0xff]
        %v4116 = vld [vmem:[%s3955 + $0xb] sm:$0xff]
        %v4117 = vld [vmem:[%s3955 + $0x1b] sm:$0xff]
        %v4118 = vld [vmem:[%s3955 + $0x23] sm:$0xff]
        %v4119 = vld [vmem:[%s3955 + $0x33] sm:$0xff]
        %v4120 = vld [vmem:[%s3955 + $0x3b] sm:$0xff]
        %v4121 = vld [vmem:[%s3955 + $0x4b] sm:$0xff]
        %v4122 = vld [vmem:[%s3955 + $0x53] sm:$0xff]
        %v4123 = vld [vmem:[%s3955 + $0x63] sm:$0xff]
        %v4124 = vld [vmem:[%s3955 + $0x6b] sm:$0xff]
        %v4125 = vld [vmem:[%s3955 + $0x7b] sm:$0xff]
        %v4126 = vld [vmem:[%s3955 + $0x83] sm:$0xff]
        %v4127 = vld [vmem:[%s3955 + $0x93] sm:$0xff]
        %v4128 = vld [vmem:[%s3955 + $0x9b] sm:$0xff]
        %v4129 = vld [vmem:[%s3955 + $0xab] sm:$0xff]
        %v4130 = vld [vmem:[%s3955 + $0xb3] sm:$0xff]
        %v4131 = vld [vmem:[%s23 + $0x1f] sm:$0x1]
        %v4132 = vlaneseq
        %v4133 = vshrl.u32 %v4132, 7
        %v4134 = vsub.s32 0, %v4133
        %v4135 = vrot.slane %v4131, %v4134
        %v4136 = vmul.f32 %v4115, %v4135
        %v4137 = vmul.f32 %v4116, %v4135
        %v4138 = vmul.f32 %v4117, %v4135
        %v4139 = vmul.f32 %v4118, %v4135
        %v4140 = vmul.f32 %v4119, %v4135
        %v4141 = vmul.f32 %v4120, %v4135
        %v4142 = vmul.f32 %v4121, %v4135
        %v4143 = vmul.f32 %v4122, %v4135
        %v4144 = vmul.f32 %v4123, %v4135
        %v4145 = vmul.f32 %v4124, %v4135
        %v4146 = vmul.f32 %v4125, %v4135
        %v4147 = vmul.f32 %v4126, %v4135
        %v4148 = vmul.f32 %v4127, %v4135
        %v4149 = vmul.f32 %v4128, %v4135
        %v4150 = vmul.f32 %v4129, %v4135
        %v4151 = vmul.f32 %v4130, %v4135
        %v4152 = vadd.f32 %v4099, %v4136
        %v4153 = vadd.f32 %v4100, %v4137
        %v4154 = vadd.f32 %v4101, %v4138
        %v4155 = vadd.f32 %v4102, %v4139
        %v4156 = vadd.f32 %v4103, %v4140
        %v4157 = vadd.f32 %v4104, %v4141
        %v4158 = vadd.f32 %v4105, %v4142
        %v4159 = vadd.f32 %v4106, %v4143
        %v4160 = vadd.f32 %v4107, %v4144
        %v4161 = vadd.f32 %v4108, %v4145
        %v4162 = vadd.f32 %v4109, %v4146
        %v4163 = vadd.f32 %v4110, %v4147
        %v4164 = vadd.f32 %v4111, %v4148
        %v4165 = vadd.f32 %v4112, %v4149
        %v4166 = vadd.f32 %v4113, %v4150
        %v4167 = vadd.f32 %v4114, %v4151
        %v4168 = vld [vmem:[%s3955 + $0x4] sm:$0xff]
        %v4169 = vld [vmem:[%s3955 + $0xc] sm:$0xff]
        %v4170 = vld [vmem:[%s3955 + $0x1c] sm:$0xff]
        %v4171 = vld [vmem:[%s3955 + $0x24] sm:$0xff]
        %v4172 = vld [vmem:[%s3955 + $0x34] sm:$0xff]
        %v4173 = vld [vmem:[%s3955 + $0x3c] sm:$0xff]
        %v4174 = vld [vmem:[%s3955 + $0x4c] sm:$0xff]
        %v4175 = vld [vmem:[%s3955 + $0x54] sm:$0xff]
        %v4176 = vld [vmem:[%s3955 + $0x64] sm:$0xff]
        %v4177 = vld [vmem:[%s3955 + $0x6c] sm:$0xff]
        %v4178 = vld [vmem:[%s3955 + $0x7c] sm:$0xff]
        %v4179 = vld [vmem:[%s3955 + $0x84] sm:$0xff]
        %v4180 = vld [vmem:[%s3955 + $0x94] sm:$0xff]
        %v4181 = vld [vmem:[%s3955 + $0x9c] sm:$0xff]
        %v4182 = vld [vmem:[%s3955 + $0xac] sm:$0xff]
        %v4183 = vld [vmem:[%s3955 + $0xb4] sm:$0xff]
        %v4184 = vld [vmem:[%s23 + $0x20] sm:$0x1]
        %v4185 = vlaneseq
        %v4186 = vshrl.u32 %v4185, 7
        %v4187 = vsub.s32 0, %v4186
        %v4188 = vrot.slane %v4184, %v4187
        %v4189 = vmul.f32 %v4168, %v4188
        %v4190 = vmul.f32 %v4169, %v4188
        %v4191 = vmul.f32 %v4170, %v4188
        %v4192 = vmul.f32 %v4171, %v4188
        %v4193 = vmul.f32 %v4172, %v4188
        %v4194 = vmul.f32 %v4173, %v4188
        %v4195 = vmul.f32 %v4174, %v4188
        %v4196 = vmul.f32 %v4175, %v4188
        %v4197 = vmul.f32 %v4176, %v4188
        %v4198 = vmul.f32 %v4177, %v4188
        %v4199 = vmul.f32 %v4178, %v4188
        %v4200 = vmul.f32 %v4179, %v4188
        %v4201 = vmul.f32 %v4180, %v4188
        %v4202 = vmul.f32 %v4181, %v4188
        %v4203 = vmul.f32 %v4182, %v4188
        %v4204 = vmul.f32 %v4183, %v4188
        %v4205 = vadd.f32 %v4152, %v4189
        %v4206 = vadd.f32 %v4153, %v4190
        %v4207 = vadd.f32 %v4154, %v4191
        %v4208 = vadd.f32 %v4155, %v4192
        %v4209 = vadd.f32 %v4156, %v4193
        %v4210 = vadd.f32 %v4157, %v4194
        %v4211 = vadd.f32 %v4158, %v4195
        %v4212 = vadd.f32 %v4159, %v4196
        %v4213 = vadd.f32 %v4160, %v4197
        %v4214 = vadd.f32 %v4161, %v4198
        %v4215 = vadd.f32 %v4162, %v4199
        %v4216 = vadd.f32 %v4163, %v4200
        %v4217 = vadd.f32 %v4164, %v4201
        %v4218 = vadd.f32 %v4165, %v4202
        %v4219 = vadd.f32 %v4166, %v4203
        %v4220 = vadd.f32 %v4167, %v4204
        %v4221 = vld [vmem:[%s3955 + $0x5] sm:$0xff]
        %v4222 = vld [vmem:[%s3955 + $0xd] sm:$0xff]
        %v4223 = vld [vmem:[%s3955 + $0x1d] sm:$0xff]
        %v4224 = vld [vmem:[%s3955 + $0x25] sm:$0xff]
        %v4225 = vld [vmem:[%s3955 + $0x35] sm:$0xff]
        %v4226 = vld [vmem:[%s3955 + $0x3d] sm:$0xff]
        %v4227 = vld [vmem:[%s3955 + $0x4d] sm:$0xff]
        %v4228 = vld [vmem:[%s3955 + $0x55] sm:$0xff]
        %v4229 = vld [vmem:[%s3955 + $0x65] sm:$0xff]
        %v4230 = vld [vmem:[%s3955 + $0x6d] sm:$0xff]
        %v4231 = vld [vmem:[%s3955 + $0x7d] sm:$0xff]
        %v4232 = vld [vmem:[%s3955 + $0x85] sm:$0xff]
        %v4233 = vld [vmem:[%s3955 + $0x95] sm:$0xff]
        %v4234 = vld [vmem:[%s3955 + $0x9d] sm:$0xff]
        %v4235 = vld [vmem:[%s3955 + $0xad] sm:$0xff]
        %v4236 = vld [vmem:[%s3955 + $0xb5] sm:$0xff]
        %v4237 = vld [vmem:[%s23 + $0x21] sm:$0x1]
        %v4238 = vlaneseq
        %v4239 = vshrl.u32 %v4238, 7
        %v4240 = vsub.s32 0, %v4239
        %v4241 = vrot.slane %v4237, %v4240
        %v4242 = vmul.f32 %v4221, %v4241
        %v4243 = vmul.f32 %v4222, %v4241
        %v4244 = vmul.f32 %v4223, %v4241
        %v4245 = vmul.f32 %v4224, %v4241
        %v4246 = vmul.f32 %v4225, %v4241
        %v4247 = vmul.f32 %v4226, %v4241
        %v4248 = vmul.f32 %v4227, %v4241
        %v4249 = vmul.f32 %v4228, %v4241
        %v4250 = vmul.f32 %v4229, %v4241
        %v4251 = vmul.f32 %v4230, %v4241
        %v4252 = vmul.f32 %v4231, %v4241
        %v4253 = vmul.f32 %v4232, %v4241
        %v4254 = vmul.f32 %v4233, %v4241
        %v4255 = vmul.f32 %v4234, %v4241
        %v4256 = vmul.f32 %v4235, %v4241
        %v4257 = vmul.f32 %v4236, %v4241
        %v4258 = vadd.f32 %v4205, %v4242
        %v4259 = vadd.f32 %v4206, %v4243
        %v4260 = vadd.f32 %v4207, %v4244
        %v4261 = vadd.f32 %v4208, %v4245
        %v4262 = vadd.f32 %v4209, %v4246
        %v4263 = vadd.f32 %v4210, %v4247
        %v4264 = vadd.f32 %v4211, %v4248
        %v4265 = vadd.f32 %v4212, %v4249
        %v4266 = vadd.f32 %v4213, %v4250
        %v4267 = vadd.f32 %v4214, %v4251
        %v4268 = vadd.f32 %v4215, %v4252
        %v4269 = vadd.f32 %v4216, %v4253
        %v4270 = vadd.f32 %v4217, %v4254
        %v4271 = vadd.f32 %v4218, %v4255
        %v4272 = vadd.f32 %v4219, %v4256
        %v4273 = vadd.f32 %v4220, %v4257
        %v4274 = vld [vmem:[%s3955 + $0x6] sm:$0xff]
        %v4275 = vld [vmem:[%s3955 + $0xe] sm:$0xff]
        %v4276 = vld [vmem:[%s3955 + $0x1e] sm:$0xff]
        %v4277 = vld [vmem:[%s3955 + $0x26] sm:$0xff]
        %v4278 = vld [vmem:[%s3955 + $0x36] sm:$0xff]
        %v4279 = vld [vmem:[%s3955 + $0x3e] sm:$0xff]
        %v4280 = vld [vmem:[%s3955 + $0x4e] sm:$0xff]
        %v4281 = vld [vmem:[%s3955 + $0x56] sm:$0xff]
        %v4282 = vld [vmem:[%s3955 + $0x66] sm:$0xff]
        %v4283 = vld [vmem:[%s3955 + $0x6e] sm:$0xff]
        %v4284 = vld [vmem:[%s3955 + $0x7e] sm:$0xff]
        %v4285 = vld [vmem:[%s3955 + $0x86] sm:$0xff]
        %v4286 = vld [vmem:[%s3955 + $0x96] sm:$0xff]
        %v4287 = vld [vmem:[%s3955 + $0x9e] sm:$0xff]
        %v4288 = vld [vmem:[%s3955 + $0xae] sm:$0xff]
        %v4289 = vld [vmem:[%s3955 + $0xb6] sm:$0xff]
        %v4290 = vld [vmem:[%s23 + $0x22] sm:$0x1]
        %v4291 = vlaneseq
        %v4292 = vshrl.u32 %v4291, 7
        %v4293 = vsub.s32 0, %v4292
        %v4294 = vrot.slane %v4290, %v4293
        %v4295 = vmul.f32 %v4274, %v4294
        %v4296 = vmul.f32 %v4275, %v4294
        %v4297 = vmul.f32 %v4276, %v4294
        %v4298 = vmul.f32 %v4277, %v4294
        %v4299 = vmul.f32 %v4278, %v4294
        %v4300 = vmul.f32 %v4279, %v4294
        %v4301 = vmul.f32 %v4280, %v4294
        %v4302 = vmul.f32 %v4281, %v4294
        %v4303 = vmul.f32 %v4282, %v4294
        %v4304 = vmul.f32 %v4283, %v4294
        %v4305 = vmul.f32 %v4284, %v4294
        %v4306 = vmul.f32 %v4285, %v4294
        %v4307 = vmul.f32 %v4286, %v4294
        %v4308 = vmul.f32 %v4287, %v4294
        %v4309 = vmul.f32 %v4288, %v4294
        %v4310 = vmul.f32 %v4289, %v4294
        %v4311 = vadd.f32 %v4258, %v4295
        %v4312 = vadd.f32 %v4259, %v4296
        %v4313 = vadd.f32 %v4260, %v4297
        %v4314 = vadd.f32 %v4261, %v4298
        %v4315 = vadd.f32 %v4262, %v4299
        %v4316 = vadd.f32 %v4263, %v4300
        %v4317 = vadd.f32 %v4264, %v4301
        %v4318 = vadd.f32 %v4265, %v4302
        %v4319 = vadd.f32 %v4266, %v4303
        %v4320 = vadd.f32 %v4267, %v4304
        %v4321 = vadd.f32 %v4268, %v4305
        %v4322 = vadd.f32 %v4269, %v4306
        %v4323 = vadd.f32 %v4270, %v4307
        %v4324 = vadd.f32 %v4271, %v4308
        %v4325 = vadd.f32 %v4272, %v4309
        %v4326 = vadd.f32 %v4273, %v4310
        %s4327 = scalar_lea.vmem [#allocation4], 120
        %v4328 = vld [vmem:[%s4327] sm:$0xff]
        %v4329 = vld [vmem:[%s4327 + $0x8] sm:$0xff]
        %v4330 = vld [vmem:[%s4327 + $0x18] sm:$0xff]
        %v4331 = vld [vmem:[%s4327 + $0x20] sm:$0xff]
        %v4332 = vld [vmem:[%s4327 + $0x30] sm:$0xff]
        %v4333 = vld [vmem:[%s4327 + $0x38] sm:$0xff]
        %v4334 = vld [vmem:[%s4327 + $0x48] sm:$0xff]
        %v4335 = vld [vmem:[%s4327 + $0x50] sm:$0xff]
        %v4336 = vld [vmem:[%s4327 + $0x60] sm:$0xff]
        %v4337 = vld [vmem:[%s4327 + $0x68] sm:$0xff]
        %v4338 = vld [vmem:[%s4327 + $0x78] sm:$0xff]
        %v4339 = vld [vmem:[%s4327 + $0x80] sm:$0xff]
        %v4340 = vld [vmem:[%s4327 + $0x90] sm:$0xff]
        %v4341 = vld [vmem:[%s4327 + $0x98] sm:$0xff]
        %v4342 = vld [vmem:[%s4327 + $0xa8] sm:$0xff]
        %v4343 = vld [vmem:[%s4327 + $0xb0] sm:$0xff]
        %v4344 = vld [vmem:[%s23 + $0x23] sm:$0x1]
        %v4345 = vlaneseq
        %v4346 = vshrl.u32 %v4345, 7
        %v4347 = vsub.s32 0, %v4346
        %v4348 = vrot.slane %v4344, %v4347
        %v4349 = vmul.f32 %v4328, %v4348
        %v4350 = vmul.f32 %v4329, %v4348
        %v4351 = vmul.f32 %v4330, %v4348
        %v4352 = vmul.f32 %v4331, %v4348
        %v4353 = vmul.f32 %v4332, %v4348
        %v4354 = vmul.f32 %v4333, %v4348
        %v4355 = vmul.f32 %v4334, %v4348
        %v4356 = vmul.f32 %v4335, %v4348
        %v4357 = vmul.f32 %v4336, %v4348
        %v4358 = vmul.f32 %v4337, %v4348
        %v4359 = vmul.f32 %v4338, %v4348
        %v4360 = vmul.f32 %v4339, %v4348
        %v4361 = vmul.f32 %v4340, %v4348
        %v4362 = vmul.f32 %v4341, %v4348
        %v4363 = vmul.f32 %v4342, %v4348
        %v4364 = vmul.f32 %v4343, %v4348
        %v4365 = vadd.f32 %v4311, %v4349
        %v4366 = vadd.f32 %v4312, %v4350
        %v4367 = vadd.f32 %v4313, %v4351
        %v4368 = vadd.f32 %v4314, %v4352
        %v4369 = vadd.f32 %v4315, %v4353
        %v4370 = vadd.f32 %v4316, %v4354
        %v4371 = vadd.f32 %v4317, %v4355
        %v4372 = vadd.f32 %v4318, %v4356
        %v4373 = vadd.f32 %v4319, %v4357
        %v4374 = vadd.f32 %v4320, %v4358
        %v4375 = vadd.f32 %v4321, %v4359
        %v4376 = vadd.f32 %v4322, %v4360
        %v4377 = vadd.f32 %v4323, %v4361
        %v4378 = vadd.f32 %v4324, %v4362
        %v4379 = vadd.f32 %v4325, %v4363
        %v4380 = vadd.f32 %v4326, %v4364
        %v4381 = vld [vmem:[%s4327 + $0x1] sm:$0xff]
        %v4382 = vld [vmem:[%s4327 + $0x9] sm:$0xff]
        %v4383 = vld [vmem:[%s4327 + $0x19] sm:$0xff]
        %v4384 = vld [vmem:[%s4327 + $0x21] sm:$0xff]
        %v4385 = vld [vmem:[%s4327 + $0x31] sm:$0xff]
        %v4386 = vld [vmem:[%s4327 + $0x39] sm:$0xff]
        %v4387 = vld [vmem:[%s4327 + $0x49] sm:$0xff]
        %v4388 = vld [vmem:[%s4327 + $0x51] sm:$0xff]
        %v4389 = vld [vmem:[%s4327 + $0x61] sm:$0xff]
        %v4390 = vld [vmem:[%s4327 + $0x69] sm:$0xff]
        %v4391 = vld [vmem:[%s4327 + $0x79] sm:$0xff]
        %v4392 = vld [vmem:[%s4327 + $0x81] sm:$0xff]
        %v4393 = vld [vmem:[%s4327 + $0x91] sm:$0xff]
        %v4394 = vld [vmem:[%s4327 + $0x99] sm:$0xff]
        %v4395 = vld [vmem:[%s4327 + $0xa9] sm:$0xff]
        %v4396 = vld [vmem:[%s4327 + $0xb1] sm:$0xff]
        %v4397 = vld [vmem:[%s23 + $0x24] sm:$0x1]
        %v4398 = vlaneseq
        %v4399 = vshrl.u32 %v4398, 7
        %v4400 = vsub.s32 0, %v4399
        %v4401 = vrot.slane %v4397, %v4400
        %v4402 = vmul.f32 %v4381, %v4401
        %v4403 = vmul.f32 %v4382, %v4401
        %v4404 = vmul.f32 %v4383, %v4401
        %v4405 = vmul.f32 %v4384, %v4401
        %v4406 = vmul.f32 %v4385, %v4401
        %v4407 = vmul.f32 %v4386, %v4401
        %v4408 = vmul.f32 %v4387, %v4401
        %v4409 = vmul.f32 %v4388, %v4401
        %v4410 = vmul.f32 %v4389, %v4401
        %v4411 = vmul.f32 %v4390, %v4401
        %v4412 = vmul.f32 %v4391, %v4401
        %v4413 = vmul.f32 %v4392, %v4401
        %v4414 = vmul.f32 %v4393, %v4401
        %v4415 = vmul.f32 %v4394, %v4401
        %v4416 = vmul.f32 %v4395, %v4401
        %v4417 = vmul.f32 %v4396, %v4401
        %v4418 = vadd.f32 %v4365, %v4402
        %v4419 = vadd.f32 %v4366, %v4403
        %v4420 = vadd.f32 %v4367, %v4404
        %v4421 = vadd.f32 %v4368, %v4405
        %v4422 = vadd.f32 %v4369, %v4406
        %v4423 = vadd.f32 %v4370, %v4407
        %v4424 = vadd.f32 %v4371, %v4408
        %v4425 = vadd.f32 %v4372, %v4409
        %v4426 = vadd.f32 %v4373, %v4410
        %v4427 = vadd.f32 %v4374, %v4411
        %v4428 = vadd.f32 %v4375, %v4412
        %v4429 = vadd.f32 %v4376, %v4413
        %v4430 = vadd.f32 %v4377, %v4414
        %v4431 = vadd.f32 %v4378, %v4415
        %v4432 = vadd.f32 %v4379, %v4416
        %v4433 = vadd.f32 %v4380, %v4417
        %v4434 = vld [vmem:[%s4327 + $0x2] sm:$0xff]
        %v4435 = vld [vmem:[%s4327 + $0xa] sm:$0xff]
        %v4436 = vld [vmem:[%s4327 + $0x1a] sm:$0xff]
        %v4437 = vld [vmem:[%s4327 + $0x22] sm:$0xff]
        %v4438 = vld [vmem:[%s4327 + $0x32] sm:$0xff]
        %v4439 = vld [vmem:[%s4327 + $0x3a] sm:$0xff]
        %v4440 = vld [vmem:[%s4327 + $0x4a] sm:$0xff]
        %v4441 = vld [vmem:[%s4327 + $0x52] sm:$0xff]
        %v4442 = vld [vmem:[%s4327 + $0x62] sm:$0xff]
        %v4443 = vld [vmem:[%s4327 + $0x6a] sm:$0xff]
        %v4444 = vld [vmem:[%s4327 + $0x7a] sm:$0xff]
        %v4445 = vld [vmem:[%s4327 + $0x82] sm:$0xff]
        %v4446 = vld [vmem:[%s4327 + $0x92] sm:$0xff]
        %v4447 = vld [vmem:[%s4327 + $0x9a] sm:$0xff]
        %v4448 = vld [vmem:[%s4327 + $0xaa] sm:$0xff]
        %v4449 = vld [vmem:[%s4327 + $0xb2] sm:$0xff]
        %v4450 = vld [vmem:[%s23 + $0x25] sm:$0x1]
        %v4451 = vlaneseq
        %v4452 = vshrl.u32 %v4451, 7
        %v4453 = vsub.s32 0, %v4452
        %v4454 = vrot.slane %v4450, %v4453
        %v4455 = vmul.f32 %v4434, %v4454
        %v4456 = vmul.f32 %v4435, %v4454
        %v4457 = vmul.f32 %v4436, %v4454
        %v4458 = vmul.f32 %v4437, %v4454
        %v4459 = vmul.f32 %v4438, %v4454
        %v4460 = vmul.f32 %v4439, %v4454
        %v4461 = vmul.f32 %v4440, %v4454
        %v4462 = vmul.f32 %v4441, %v4454
        %v4463 = vmul.f32 %v4442, %v4454
        %v4464 = vmul.f32 %v4443, %v4454
        %v4465 = vmul.f32 %v4444, %v4454
        %v4466 = vmul.f32 %v4445, %v4454
        %v4467 = vmul.f32 %v4446, %v4454
        %v4468 = vmul.f32 %v4447, %v4454
        %v4469 = vmul.f32 %v4448, %v4454
        %v4470 = vmul.f32 %v4449, %v4454
        %v4471 = vadd.f32 %v4418, %v4455
        %v4472 = vadd.f32 %v4419, %v4456
        %v4473 = vadd.f32 %v4420, %v4457
        %v4474 = vadd.f32 %v4421, %v4458
        %v4475 = vadd.f32 %v4422, %v4459
        %v4476 = vadd.f32 %v4423, %v4460
        %v4477 = vadd.f32 %v4424, %v4461
        %v4478 = vadd.f32 %v4425, %v4462
        %v4479 = vadd.f32 %v4426, %v4463
        %v4480 = vadd.f32 %v4427, %v4464
        %v4481 = vadd.f32 %v4428, %v4465
        %v4482 = vadd.f32 %v4429, %v4466
        %v4483 = vadd.f32 %v4430, %v4467
        %v4484 = vadd.f32 %v4431, %v4468
        %v4485 = vadd.f32 %v4432, %v4469
        %v4486 = vadd.f32 %v4433, %v4470
        %v4487 = vld [vmem:[%s4327 + $0x3] sm:$0xff]
        %v4488 = vld [vmem:[%s4327 + $0xb] sm:$0xff]
        %v4489 = vld [vmem:[%s4327 + $0x1b] sm:$0xff]
        %v4490 = vld [vmem:[%s4327 + $0x23] sm:$0xff]
        %v4491 = vld [vmem:[%s4327 + $0x33] sm:$0xff]
        %v4492 = vld [vmem:[%s4327 + $0x3b] sm:$0xff]
        %v4493 = vld [vmem:[%s4327 + $0x4b] sm:$0xff]
        %v4494 = vld [vmem:[%s4327 + $0x53] sm:$0xff]
        %v4495 = vld [vmem:[%s4327 + $0x63] sm:$0xff]
        %v4496 = vld [vmem:[%s4327 + $0x6b] sm:$0xff]
        %v4497 = vld [vmem:[%s4327 + $0x7b] sm:$0xff]
        %v4498 = vld [vmem:[%s4327 + $0x83] sm:$0xff]
        %v4499 = vld [vmem:[%s4327 + $0x93] sm:$0xff]
        %v4500 = vld [vmem:[%s4327 + $0x9b] sm:$0xff]
        %v4501 = vld [vmem:[%s4327 + $0xab] sm:$0xff]
        %v4502 = vld [vmem:[%s4327 + $0xb3] sm:$0xff]
        %v4503 = vld [vmem:[%s23 + $0x26] sm:$0x1]
        %v4504 = vlaneseq
        %v4505 = vshrl.u32 %v4504, 7
        %v4506 = vsub.s32 0, %v4505
        %v4507 = vrot.slane %v4503, %v4506
        %v4508 = vmul.f32 %v4487, %v4507
        %v4509 = vmul.f32 %v4488, %v4507
        %v4510 = vmul.f32 %v4489, %v4507
        %v4511 = vmul.f32 %v4490, %v4507
        %v4512 = vmul.f32 %v4491, %v4507
        %v4513 = vmul.f32 %v4492, %v4507
        %v4514 = vmul.f32 %v4493, %v4507
        %v4515 = vmul.f32 %v4494, %v4507
        %v4516 = vmul.f32 %v4495, %v4507
        %v4517 = vmul.f32 %v4496, %v4507
        %v4518 = vmul.f32 %v4497, %v4507
        %v4519 = vmul.f32 %v4498, %v4507
        %v4520 = vmul.f32 %v4499, %v4507
        %v4521 = vmul.f32 %v4500, %v4507
        %v4522 = vmul.f32 %v4501, %v4507
        %v4523 = vmul.f32 %v4502, %v4507
        %v4524 = vadd.f32 %v4471, %v4508
        %v4525 = vadd.f32 %v4472, %v4509
        %v4526 = vadd.f32 %v4473, %v4510
        %v4527 = vadd.f32 %v4474, %v4511
        %v4528 = vadd.f32 %v4475, %v4512
        %v4529 = vadd.f32 %v4476, %v4513
        %v4530 = vadd.f32 %v4477, %v4514
        %v4531 = vadd.f32 %v4478, %v4515
        %v4532 = vadd.f32 %v4479, %v4516
        %v4533 = vadd.f32 %v4480, %v4517
        %v4534 = vadd.f32 %v4481, %v4518
        %v4535 = vadd.f32 %v4482, %v4519
        %v4536 = vadd.f32 %v4483, %v4520
        %v4537 = vadd.f32 %v4484, %v4521
        %v4538 = vadd.f32 %v4485, %v4522
        %v4539 = vadd.f32 %v4486, %v4523
        %v4540 = vld [vmem:[%s4327 + $0x4] sm:$0xff]
        %v4541 = vld [vmem:[%s4327 + $0xc] sm:$0xff]
        %v4542 = vld [vmem:[%s4327 + $0x1c] sm:$0xff]
        %v4543 = vld [vmem:[%s4327 + $0x24] sm:$0xff]
        %v4544 = vld [vmem:[%s4327 + $0x34] sm:$0xff]
        %v4545 = vld [vmem:[%s4327 + $0x3c] sm:$0xff]
        %v4546 = vld [vmem:[%s4327 + $0x4c] sm:$0xff]
        %v4547 = vld [vmem:[%s4327 + $0x54] sm:$0xff]
        %v4548 = vld [vmem:[%s4327 + $0x64] sm:$0xff]
        %v4549 = vld [vmem:[%s4327 + $0x6c] sm:$0xff]
        %v4550 = vld [vmem:[%s4327 + $0x7c] sm:$0xff]
        %v4551 = vld [vmem:[%s4327 + $0x84] sm:$0xff]
        %v4552 = vld [vmem:[%s4327 + $0x94] sm:$0xff]
        %v4553 = vld [vmem:[%s4327 + $0x9c] sm:$0xff]
        %v4554 = vld [vmem:[%s4327 + $0xac] sm:$0xff]
        %v4555 = vld [vmem:[%s4327 + $0xb4] sm:$0xff]
        %v4556 = vld [vmem:[%s23 + $0x27] sm:$0x1]
        %v4557 = vlaneseq
        %v4558 = vshrl.u32 %v4557, 7
        %v4559 = vsub.s32 0, %v4558
        %v4560 = vrot.slane %v4556, %v4559
        %v4561 = vmul.f32 %v4540, %v4560
        %v4562 = vmul.f32 %v4541, %v4560
        %v4563 = vmul.f32 %v4542, %v4560
        %v4564 = vmul.f32 %v4543, %v4560
        %v4565 = vmul.f32 %v4544, %v4560
        %v4566 = vmul.f32 %v4545, %v4560
        %v4567 = vmul.f32 %v4546, %v4560
        %v4568 = vmul.f32 %v4547, %v4560
        %v4569 = vmul.f32 %v4548, %v4560
        %v4570 = vmul.f32 %v4549, %v4560
        %v4571 = vmul.f32 %v4550, %v4560
        %v4572 = vmul.f32 %v4551, %v4560
        %v4573 = vmul.f32 %v4552, %v4560
        %v4574 = vmul.f32 %v4553, %v4560
        %v4575 = vmul.f32 %v4554, %v4560
        %v4576 = vmul.f32 %v4555, %v4560
        %v4577 = vadd.f32 %v4524, %v4561
        %v4578 = vadd.f32 %v4525, %v4562
        %v4579 = vadd.f32 %v4526, %v4563
        %v4580 = vadd.f32 %v4527, %v4564
        %v4581 = vadd.f32 %v4528, %v4565
        %v4582 = vadd.f32 %v4529, %v4566
        %v4583 = vadd.f32 %v4530, %v4567
        %v4584 = vadd.f32 %v4531, %v4568
        %v4585 = vadd.f32 %v4532, %v4569
        %v4586 = vadd.f32 %v4533, %v4570
        %v4587 = vadd.f32 %v4534, %v4571
        %v4588 = vadd.f32 %v4535, %v4572
        %v4589 = vadd.f32 %v4536, %v4573
        %v4590 = vadd.f32 %v4537, %v4574
        %v4591 = vadd.f32 %v4538, %v4575
        %v4592 = vadd.f32 %v4539, %v4576
        %v4593 = vld [vmem:[%s4327 + $0x5] sm:$0xff]
        %v4594 = vld [vmem:[%s4327 + $0xd] sm:$0xff]
        %v4595 = vld [vmem:[%s4327 + $0x1d] sm:$0xff]
        %v4596 = vld [vmem:[%s4327 + $0x25] sm:$0xff]
        %v4597 = vld [vmem:[%s4327 + $0x35] sm:$0xff]
        %v4598 = vld [vmem:[%s4327 + $0x3d] sm:$0xff]
        %v4599 = vld [vmem:[%s4327 + $0x4d] sm:$0xff]
        %v4600 = vld [vmem:[%s4327 + $0x55] sm:$0xff]
        %v4601 = vld [vmem:[%s4327 + $0x65] sm:$0xff]
        %v4602 = vld [vmem:[%s4327 + $0x6d] sm:$0xff]
        %v4603 = vld [vmem:[%s4327 + $0x7d] sm:$0xff]
        %v4604 = vld [vmem:[%s4327 + $0x85] sm:$0xff]
        %v4605 = vld [vmem:[%s4327 + $0x95] sm:$0xff]
        %v4606 = vld [vmem:[%s4327 + $0x9d] sm:$0xff]
        %v4607 = vld [vmem:[%s4327 + $0xad] sm:$0xff]
        %v4608 = vld [vmem:[%s4327 + $0xb5] sm:$0xff]
        %v4609 = vld [vmem:[%s23 + $0x28] sm:$0x1]
        %v4610 = vlaneseq
        %v4611 = vshrl.u32 %v4610, 7
        %v4612 = vsub.s32 0, %v4611
        %v4613 = vrot.slane %v4609, %v4612
        %v4614 = vmul.f32 %v4593, %v4613
        %v4615 = vmul.f32 %v4594, %v4613
        %v4616 = vmul.f32 %v4595, %v4613
        %v4617 = vmul.f32 %v4596, %v4613
        %v4618 = vmul.f32 %v4597, %v4613
        %v4619 = vmul.f32 %v4598, %v4613
        %v4620 = vmul.f32 %v4599, %v4613
        %v4621 = vmul.f32 %v4600, %v4613
        %v4622 = vmul.f32 %v4601, %v4613
        %v4623 = vmul.f32 %v4602, %v4613
        %v4624 = vmul.f32 %v4603, %v4613
        %v4625 = vmul.f32 %v4604, %v4613
        %v4626 = vmul.f32 %v4605, %v4613
        %v4627 = vmul.f32 %v4606, %v4613
        %v4628 = vmul.f32 %v4607, %v4613
        %v4629 = vmul.f32 %v4608, %v4613
        %v4630 = vadd.f32 %v4577, %v4614
        %v4631 = vadd.f32 %v4578, %v4615
        %v4632 = vadd.f32 %v4579, %v4616
        %v4633 = vadd.f32 %v4580, %v4617
        %v4634 = vadd.f32 %v4581, %v4618
        %v4635 = vadd.f32 %v4582, %v4619
        %v4636 = vadd.f32 %v4583, %v4620
        %v4637 = vadd.f32 %v4584, %v4621
        %v4638 = vadd.f32 %v4585, %v4622
        %v4639 = vadd.f32 %v4586, %v4623
        %v4640 = vadd.f32 %v4587, %v4624
        %v4641 = vadd.f32 %v4588, %v4625
        %v4642 = vadd.f32 %v4589, %v4626
        %v4643 = vadd.f32 %v4590, %v4627
        %v4644 = vadd.f32 %v4591, %v4628
        %v4645 = vadd.f32 %v4592, %v4629
        %v4646 = vld [vmem:[%s4327 + $0x6] sm:$0xff]
        %v4647 = vld [vmem:[%s4327 + $0xe] sm:$0xff]
        %v4648 = vld [vmem:[%s4327 + $0x1e] sm:$0xff]
        %v4649 = vld [vmem:[%s4327 + $0x26] sm:$0xff]
        %v4650 = vld [vmem:[%s4327 + $0x36] sm:$0xff]
        %v4651 = vld [vmem:[%s4327 + $0x3e] sm:$0xff]
        %v4652 = vld [vmem:[%s4327 + $0x4e] sm:$0xff]
        %v4653 = vld [vmem:[%s4327 + $0x56] sm:$0xff]
        %v4654 = vld [vmem:[%s4327 + $0x66] sm:$0xff]
        %v4655 = vld [vmem:[%s4327 + $0x6e] sm:$0xff]
        %v4656 = vld [vmem:[%s4327 + $0x7e] sm:$0xff]
        %v4657 = vld [vmem:[%s4327 + $0x86] sm:$0xff]
        %v4658 = vld [vmem:[%s4327 + $0x96] sm:$0xff]
        %v4659 = vld [vmem:[%s4327 + $0x9e] sm:$0xff]
        %v4660 = vld [vmem:[%s4327 + $0xae] sm:$0xff]
        %v4661 = vld [vmem:[%s4327 + $0xb6] sm:$0xff]
        %v4662 = vld [vmem:[%s23 + $0x29] sm:$0x1]
        %v4663 = vlaneseq
        %v4664 = vshrl.u32 %v4663, 7
        %v4665 = vsub.s32 0, %v4664
        %v4666 = vrot.slane %v4662, %v4665
        %v4667 = vmul.f32 %v4646, %v4666
        %v4668 = vmul.f32 %v4647, %v4666
        %v4669 = vmul.f32 %v4648, %v4666
        %v4670 = vmul.f32 %v4649, %v4666
        %v4671 = vmul.f32 %v4650, %v4666
        %v4672 = vmul.f32 %v4651, %v4666
        %v4673 = vmul.f32 %v4652, %v4666
        %v4674 = vmul.f32 %v4653, %v4666
        %v4675 = vmul.f32 %v4654, %v4666
        %v4676 = vmul.f32 %v4655, %v4666
        %v4677 = vmul.f32 %v4656, %v4666
        %v4678 = vmul.f32 %v4657, %v4666
        %v4679 = vmul.f32 %v4658, %v4666
        %v4680 = vmul.f32 %v4659, %v4666
        %v4681 = vmul.f32 %v4660, %v4666
        %v4682 = vmul.f32 %v4661, %v4666
        %v4683 = vadd.f32 %v4630, %v4667
        %v4684 = vadd.f32 %v4631, %v4668
        %v4685 = vadd.f32 %v4632, %v4669
        %v4686 = vadd.f32 %v4633, %v4670
        %v4687 = vadd.f32 %v4634, %v4671
        %v4688 = vadd.f32 %v4635, %v4672
        %v4689 = vadd.f32 %v4636, %v4673
        %v4690 = vadd.f32 %v4637, %v4674
        %v4691 = vadd.f32 %v4638, %v4675
        %v4692 = vadd.f32 %v4639, %v4676
        %v4693 = vadd.f32 %v4640, %v4677
        %v4694 = vadd.f32 %v4641, %v4678
        %v4695 = vadd.f32 %v4642, %v4679
        %v4696 = vadd.f32 %v4643, %v4680
        %v4697 = vadd.f32 %v4644, %v4681
        %v4698 = vadd.f32 %v4645, %v4682
        %s4699 = scalar_lea.vmem [#allocation4], 144
        %v4700 = vld [vmem:[%s4699] sm:$0xff]
        %v4701 = vld [vmem:[%s4699 + $0x8] sm:$0xff]
        %v4702 = vld [vmem:[%s4699 + $0x18] sm:$0xff]
        %v4703 = vld [vmem:[%s4699 + $0x20] sm:$0xff]
        %v4704 = vld [vmem:[%s4699 + $0x30] sm:$0xff]
        %v4705 = vld [vmem:[%s4699 + $0x38] sm:$0xff]
        %v4706 = vld [vmem:[%s4699 + $0x48] sm:$0xff]
        %v4707 = vld [vmem:[%s4699 + $0x50] sm:$0xff]
        %v4708 = vld [vmem:[%s4699 + $0x60] sm:$0xff]
        %v4709 = vld [vmem:[%s4699 + $0x68] sm:$0xff]
        %v4710 = vld [vmem:[%s4699 + $0x78] sm:$0xff]
        %v4711 = vld [vmem:[%s4699 + $0x80] sm:$0xff]
        %v4712 = vld [vmem:[%s4699 + $0x90] sm:$0xff]
        %v4713 = vld [vmem:[%s4699 + $0x98] sm:$0xff]
        %v4714 = vld [vmem:[%s4699 + $0xa8] sm:$0xff]
        %v4715 = vld [vmem:[%s4699 + $0xb0] sm:$0xff]
        %v4716 = vld [vmem:[%s23 + $0x2a] sm:$0x1]
        %v4717 = vlaneseq
        %v4718 = vshrl.u32 %v4717, 7
        %v4719 = vsub.s32 0, %v4718
        %v4720 = vrot.slane %v4716, %v4719
        %v4721 = vmul.f32 %v4700, %v4720
        %v4722 = vmul.f32 %v4701, %v4720
        %v4723 = vmul.f32 %v4702, %v4720
        %v4724 = vmul.f32 %v4703, %v4720
        %v4725 = vmul.f32 %v4704, %v4720
        %v4726 = vmul.f32 %v4705, %v4720
        %v4727 = vmul.f32 %v4706, %v4720
        %v4728 = vmul.f32 %v4707, %v4720
        %v4729 = vmul.f32 %v4708, %v4720
        %v4730 = vmul.f32 %v4709, %v4720
        %v4731 = vmul.f32 %v4710, %v4720
        %v4732 = vmul.f32 %v4711, %v4720
        %v4733 = vmul.f32 %v4712, %v4720
        %v4734 = vmul.f32 %v4713, %v4720
        %v4735 = vmul.f32 %v4714, %v4720
        %v4736 = vmul.f32 %v4715, %v4720
        %v4737 = vadd.f32 %v4683, %v4721
        %v4738 = vadd.f32 %v4684, %v4722
        %v4739 = vadd.f32 %v4685, %v4723
        %v4740 = vadd.f32 %v4686, %v4724
        %v4741 = vadd.f32 %v4687, %v4725
        %v4742 = vadd.f32 %v4688, %v4726
        %v4743 = vadd.f32 %v4689, %v4727
        %v4744 = vadd.f32 %v4690, %v4728
        %v4745 = vadd.f32 %v4691, %v4729
        %v4746 = vadd.f32 %v4692, %v4730
        %v4747 = vadd.f32 %v4693, %v4731
        %v4748 = vadd.f32 %v4694, %v4732
        %v4749 = vadd.f32 %v4695, %v4733
        %v4750 = vadd.f32 %v4696, %v4734
        %v4751 = vadd.f32 %v4697, %v4735
        %v4752 = vadd.f32 %v4698, %v4736
        %v4753 = vld [vmem:[%s4699 + $0x1] sm:$0xff]
        %v4754 = vld [vmem:[%s4699 + $0x9] sm:$0xff]
        %v4755 = vld [vmem:[%s4699 + $0x19] sm:$0xff]
        %v4756 = vld [vmem:[%s4699 + $0x21] sm:$0xff]
        %v4757 = vld [vmem:[%s4699 + $0x31] sm:$0xff]
        %v4758 = vld [vmem:[%s4699 + $0x39] sm:$0xff]
        %v4759 = vld [vmem:[%s4699 + $0x49] sm:$0xff]
        %v4760 = vld [vmem:[%s4699 + $0x51] sm:$0xff]
        %v4761 = vld [vmem:[%s4699 + $0x61] sm:$0xff]
        %v4762 = vld [vmem:[%s4699 + $0x69] sm:$0xff]
        %v4763 = vld [vmem:[%s4699 + $0x79] sm:$0xff]
        %v4764 = vld [vmem:[%s4699 + $0x81] sm:$0xff]
        %v4765 = vld [vmem:[%s4699 + $0x91] sm:$0xff]
        %v4766 = vld [vmem:[%s4699 + $0x99] sm:$0xff]
        %v4767 = vld [vmem:[%s4699 + $0xa9] sm:$0xff]
        %v4768 = vld [vmem:[%s4699 + $0xb1] sm:$0xff]
        %v4769 = vld [vmem:[%s23 + $0x2b] sm:$0x1]
        %v4770 = vlaneseq
        %v4771 = vshrl.u32 %v4770, 7
        %v4772 = vsub.s32 0, %v4771
        %v4773 = vrot.slane %v4769, %v4772
        %v4774 = vmul.f32 %v4753, %v4773
        %v4775 = vmul.f32 %v4754, %v4773
        %v4776 = vmul.f32 %v4755, %v4773
        %v4777 = vmul.f32 %v4756, %v4773
        %v4778 = vmul.f32 %v4757, %v4773
        %v4779 = vmul.f32 %v4758, %v4773
        %v4780 = vmul.f32 %v4759, %v4773
        %v4781 = vmul.f32 %v4760, %v4773
        %v4782 = vmul.f32 %v4761, %v4773
        %v4783 = vmul.f32 %v4762, %v4773
        %v4784 = vmul.f32 %v4763, %v4773
        %v4785 = vmul.f32 %v4764, %v4773
        %v4786 = vmul.f32 %v4765, %v4773
        %v4787 = vmul.f32 %v4766, %v4773
        %v4788 = vmul.f32 %v4767, %v4773
        %v4789 = vmul.f32 %v4768, %v4773
        %v4790 = vadd.f32 %v4737, %v4774
        %v4791 = vadd.f32 %v4738, %v4775
        %v4792 = vadd.f32 %v4739, %v4776
        %v4793 = vadd.f32 %v4740, %v4777
        %v4794 = vadd.f32 %v4741, %v4778
        %v4795 = vadd.f32 %v4742, %v4779
        %v4796 = vadd.f32 %v4743, %v4780
        %v4797 = vadd.f32 %v4744, %v4781
        %v4798 = vadd.f32 %v4745, %v4782
        %v4799 = vadd.f32 %v4746, %v4783
        %v4800 = vadd.f32 %v4747, %v4784
        %v4801 = vadd.f32 %v4748, %v4785
        %v4802 = vadd.f32 %v4749, %v4786
        %v4803 = vadd.f32 %v4750, %v4787
        %v4804 = vadd.f32 %v4751, %v4788
        %v4805 = vadd.f32 %v4752, %v4789
        %v4806 = vld [vmem:[%s4699 + $0x2] sm:$0xff]
        %v4807 = vld [vmem:[%s4699 + $0xa] sm:$0xff]
        %v4808 = vld [vmem:[%s4699 + $0x1a] sm:$0xff]
        %v4809 = vld [vmem:[%s4699 + $0x22] sm:$0xff]
        %v4810 = vld [vmem:[%s4699 + $0x32] sm:$0xff]
        %v4811 = vld [vmem:[%s4699 + $0x3a] sm:$0xff]
        %v4812 = vld [vmem:[%s4699 + $0x4a] sm:$0xff]
        %v4813 = vld [vmem:[%s4699 + $0x52] sm:$0xff]
        %v4814 = vld [vmem:[%s4699 + $0x62] sm:$0xff]
        %v4815 = vld [vmem:[%s4699 + $0x6a] sm:$0xff]
        %v4816 = vld [vmem:[%s4699 + $0x7a] sm:$0xff]
        %v4817 = vld [vmem:[%s4699 + $0x82] sm:$0xff]
        %v4818 = vld [vmem:[%s4699 + $0x92] sm:$0xff]
        %v4819 = vld [vmem:[%s4699 + $0x9a] sm:$0xff]
        %v4820 = vld [vmem:[%s4699 + $0xaa] sm:$0xff]
        %v4821 = vld [vmem:[%s4699 + $0xb2] sm:$0xff]
        %v4822 = vld [vmem:[%s23 + $0x2c] sm:$0x1]
        %v4823 = vlaneseq
        %v4824 = vshrl.u32 %v4823, 7
        %v4825 = vsub.s32 0, %v4824
        %v4826 = vrot.slane %v4822, %v4825
        %v4827 = vmul.f32 %v4806, %v4826
        %v4828 = vmul.f32 %v4807, %v4826
        %v4829 = vmul.f32 %v4808, %v4826
        %v4830 = vmul.f32 %v4809, %v4826
        %v4831 = vmul.f32 %v4810, %v4826
        %v4832 = vmul.f32 %v4811, %v4826
        %v4833 = vmul.f32 %v4812, %v4826
        %v4834 = vmul.f32 %v4813, %v4826
        %v4835 = vmul.f32 %v4814, %v4826
        %v4836 = vmul.f32 %v4815, %v4826
        %v4837 = vmul.f32 %v4816, %v4826
        %v4838 = vmul.f32 %v4817, %v4826
        %v4839 = vmul.f32 %v4818, %v4826
        %v4840 = vmul.f32 %v4819, %v4826
        %v4841 = vmul.f32 %v4820, %v4826
        %v4842 = vmul.f32 %v4821, %v4826
        %v4843 = vadd.f32 %v4790, %v4827
        %v4844 = vadd.f32 %v4791, %v4828
        %v4845 = vadd.f32 %v4792, %v4829
        %v4846 = vadd.f32 %v4793, %v4830
        %v4847 = vadd.f32 %v4794, %v4831
        %v4848 = vadd.f32 %v4795, %v4832
        %v4849 = vadd.f32 %v4796, %v4833
        %v4850 = vadd.f32 %v4797, %v4834
        %v4851 = vadd.f32 %v4798, %v4835
        %v4852 = vadd.f32 %v4799, %v4836
        %v4853 = vadd.f32 %v4800, %v4837
        %v4854 = vadd.f32 %v4801, %v4838
        %v4855 = vadd.f32 %v4802, %v4839
        %v4856 = vadd.f32 %v4803, %v4840
        %v4857 = vadd.f32 %v4804, %v4841
        %v4858 = vadd.f32 %v4805, %v4842
        %v4859 = vld [vmem:[%s4699 + $0x3] sm:$0xff]
        %v4860 = vld [vmem:[%s4699 + $0xb] sm:$0xff]
        %v4861 = vld [vmem:[%s4699 + $0x1b] sm:$0xff]
        %v4862 = vld [vmem:[%s4699 + $0x23] sm:$0xff]
        %v4863 = vld [vmem:[%s4699 + $0x33] sm:$0xff]
        %v4864 = vld [vmem:[%s4699 + $0x3b] sm:$0xff]
        %v4865 = vld [vmem:[%s4699 + $0x4b] sm:$0xff]
        %v4866 = vld [vmem:[%s4699 + $0x53] sm:$0xff]
        %v4867 = vld [vmem:[%s4699 + $0x63] sm:$0xff]
        %v4868 = vld [vmem:[%s4699 + $0x6b] sm:$0xff]
        %v4869 = vld [vmem:[%s4699 + $0x7b] sm:$0xff]
        %v4870 = vld [vmem:[%s4699 + $0x83] sm:$0xff]
        %v4871 = vld [vmem:[%s4699 + $0x93] sm:$0xff]
        %v4872 = vld [vmem:[%s4699 + $0x9b] sm:$0xff]
        %v4873 = vld [vmem:[%s4699 + $0xab] sm:$0xff]
        %v4874 = vld [vmem:[%s4699 + $0xb3] sm:$0xff]
        %v4875 = vld [vmem:[%s23 + $0x2d] sm:$0x1]
        %v4876 = vlaneseq
        %v4877 = vshrl.u32 %v4876, 7
        %v4878 = vsub.s32 0, %v4877
        %v4879 = vrot.slane %v4875, %v4878
        %v4880 = vmul.f32 %v4859, %v4879
        %v4881 = vmul.f32 %v4860, %v4879
        %v4882 = vmul.f32 %v4861, %v4879
        %v4883 = vmul.f32 %v4862, %v4879
        %v4884 = vmul.f32 %v4863, %v4879
        %v4885 = vmul.f32 %v4864, %v4879
        %v4886 = vmul.f32 %v4865, %v4879
        %v4887 = vmul.f32 %v4866, %v4879
        %v4888 = vmul.f32 %v4867, %v4879
        %v4889 = vmul.f32 %v4868, %v4879
        %v4890 = vmul.f32 %v4869, %v4879
        %v4891 = vmul.f32 %v4870, %v4879
        %v4892 = vmul.f32 %v4871, %v4879
        %v4893 = vmul.f32 %v4872, %v4879
        %v4894 = vmul.f32 %v4873, %v4879
        %v4895 = vmul.f32 %v4874, %v4879
        %v4896 = vadd.f32 %v4843, %v4880
        %v4897 = vadd.f32 %v4844, %v4881
        %v4898 = vadd.f32 %v4845, %v4882
        %v4899 = vadd.f32 %v4846, %v4883
        %v4900 = vadd.f32 %v4847, %v4884
        %v4901 = vadd.f32 %v4848, %v4885
        %v4902 = vadd.f32 %v4849, %v4886
        %v4903 = vadd.f32 %v4850, %v4887
        %v4904 = vadd.f32 %v4851, %v4888
        %v4905 = vadd.f32 %v4852, %v4889
        %v4906 = vadd.f32 %v4853, %v4890
        %v4907 = vadd.f32 %v4854, %v4891
        %v4908 = vadd.f32 %v4855, %v4892
        %v4909 = vadd.f32 %v4856, %v4893
        %v4910 = vadd.f32 %v4857, %v4894
        %v4911 = vadd.f32 %v4858, %v4895
        %v4912 = vld [vmem:[%s4699 + $0x4] sm:$0xff]
        %v4913 = vld [vmem:[%s4699 + $0xc] sm:$0xff]
        %v4914 = vld [vmem:[%s4699 + $0x1c] sm:$0xff]
        %v4915 = vld [vmem:[%s4699 + $0x24] sm:$0xff]
        %v4916 = vld [vmem:[%s4699 + $0x34] sm:$0xff]
        %v4917 = vld [vmem:[%s4699 + $0x3c] sm:$0xff]
        %v4918 = vld [vmem:[%s4699 + $0x4c] sm:$0xff]
        %v4919 = vld [vmem:[%s4699 + $0x54] sm:$0xff]
        %v4920 = vld [vmem:[%s4699 + $0x64] sm:$0xff]
        %v4921 = vld [vmem:[%s4699 + $0x6c] sm:$0xff]
        %v4922 = vld [vmem:[%s4699 + $0x7c] sm:$0xff]
        %v4923 = vld [vmem:[%s4699 + $0x84] sm:$0xff]
        %v4924 = vld [vmem:[%s4699 + $0x94] sm:$0xff]
        %v4925 = vld [vmem:[%s4699 + $0x9c] sm:$0xff]
        %v4926 = vld [vmem:[%s4699 + $0xac] sm:$0xff]
        %v4927 = vld [vmem:[%s4699 + $0xb4] sm:$0xff]
        %v4928 = vld [vmem:[%s23 + $0x2e] sm:$0x1]
        %v4929 = vlaneseq
        %v4930 = vshrl.u32 %v4929, 7
        %v4931 = vsub.s32 0, %v4930
        %v4932 = vrot.slane %v4928, %v4931
        %v4933 = vmul.f32 %v4912, %v4932
        %v4934 = vmul.f32 %v4913, %v4932
        %v4935 = vmul.f32 %v4914, %v4932
        %v4936 = vmul.f32 %v4915, %v4932
        %v4937 = vmul.f32 %v4916, %v4932
        %v4938 = vmul.f32 %v4917, %v4932
        %v4939 = vmul.f32 %v4918, %v4932
        %v4940 = vmul.f32 %v4919, %v4932
        %v4941 = vmul.f32 %v4920, %v4932
        %v4942 = vmul.f32 %v4921, %v4932
        %v4943 = vmul.f32 %v4922, %v4932
        %v4944 = vmul.f32 %v4923, %v4932
        %v4945 = vmul.f32 %v4924, %v4932
        %v4946 = vmul.f32 %v4925, %v4932
        %v4947 = vmul.f32 %v4926, %v4932
        %v4948 = vmul.f32 %v4927, %v4932
        %v4949 = vadd.f32 %v4896, %v4933
        %v4950 = vadd.f32 %v4897, %v4934
        %v4951 = vadd.f32 %v4898, %v4935
        %v4952 = vadd.f32 %v4899, %v4936
        %v4953 = vadd.f32 %v4900, %v4937
        %v4954 = vadd.f32 %v4901, %v4938
        %v4955 = vadd.f32 %v4902, %v4939
        %v4956 = vadd.f32 %v4903, %v4940
        %v4957 = vadd.f32 %v4904, %v4941
        %v4958 = vadd.f32 %v4905, %v4942
        %v4959 = vadd.f32 %v4906, %v4943
        %v4960 = vadd.f32 %v4907, %v4944
        %v4961 = vadd.f32 %v4908, %v4945
        %v4962 = vadd.f32 %v4909, %v4946
        %v4963 = vadd.f32 %v4910, %v4947
        %v4964 = vadd.f32 %v4911, %v4948
        %v4965 = vld [vmem:[%s4699 + $0x5] sm:$0xff]
        %v4966 = vld [vmem:[%s4699 + $0xd] sm:$0xff]
        %v4967 = vld [vmem:[%s4699 + $0x1d] sm:$0xff]
        %v4968 = vld [vmem:[%s4699 + $0x25] sm:$0xff]
        %v4969 = vld [vmem:[%s4699 + $0x35] sm:$0xff]
        %v4970 = vld [vmem:[%s4699 + $0x3d] sm:$0xff]
        %v4971 = vld [vmem:[%s4699 + $0x4d] sm:$0xff]
        %v4972 = vld [vmem:[%s4699 + $0x55] sm:$0xff]
        %v4973 = vld [vmem:[%s4699 + $0x65] sm:$0xff]
        %v4974 = vld [vmem:[%s4699 + $0x6d] sm:$0xff]
        %v4975 = vld [vmem:[%s4699 + $0x7d] sm:$0xff]
        %v4976 = vld [vmem:[%s4699 + $0x85] sm:$0xff]
        %v4977 = vld [vmem:[%s4699 + $0x95] sm:$0xff]
        %v4978 = vld [vmem:[%s4699 + $0x9d] sm:$0xff]
        %v4979 = vld [vmem:[%s4699 + $0xad] sm:$0xff]
        %v4980 = vld [vmem:[%s4699 + $0xb5] sm:$0xff]
        %v4981 = vld [vmem:[%s23 + $0x2f] sm:$0x1]
        %v4982 = vlaneseq
        %v4983 = vshrl.u32 %v4982, 7
        %v4984 = vsub.s32 0, %v4983
        %v4985 = vrot.slane %v4981, %v4984
        %v4986 = vmul.f32 %v4965, %v4985
        %v4987 = vmul.f32 %v4966, %v4985
        %v4988 = vmul.f32 %v4967, %v4985
        %v4989 = vmul.f32 %v4968, %v4985
        %v4990 = vmul.f32 %v4969, %v4985
        %v4991 = vmul.f32 %v4970, %v4985
        %v4992 = vmul.f32 %v4971, %v4985
        %v4993 = vmul.f32 %v4972, %v4985
        %v4994 = vmul.f32 %v4973, %v4985
        %v4995 = vmul.f32 %v4974, %v4985
        %v4996 = vmul.f32 %v4975, %v4985
        %v4997 = vmul.f32 %v4976, %v4985
        %v4998 = vmul.f32 %v4977, %v4985
        %v4999 = vmul.f32 %v4978, %v4985
        %v5000 = vmul.f32 %v4979, %v4985
        %v5001 = vmul.f32 %v4980, %v4985
        %v5002 = vadd.f32 %v4949, %v4986
        %v5003 = vadd.f32 %v4950, %v4987
        %v5004 = vadd.f32 %v4951, %v4988
        %v5005 = vadd.f32 %v4952, %v4989
        %v5006 = vadd.f32 %v4953, %v4990
        %v5007 = vadd.f32 %v4954, %v4991
        %v5008 = vadd.f32 %v4955, %v4992
        %v5009 = vadd.f32 %v4956, %v4993
        %v5010 = vadd.f32 %v4957, %v4994
        %v5011 = vadd.f32 %v4958, %v4995
        %v5012 = vadd.f32 %v4959, %v4996
        %v5013 = vadd.f32 %v4960, %v4997
        %v5014 = vadd.f32 %v4961, %v4998
        %v5015 = vadd.f32 %v4962, %v4999
        %v5016 = vadd.f32 %v4963, %v5000
        %v5017 = vadd.f32 %v4964, %v5001
        %v5018 = vld [vmem:[%s4699 + $0x6] sm:$0xff]
        %v5019 = vld [vmem:[%s4699 + $0xe] sm:$0xff]
        %v5020 = vld [vmem:[%s4699 + $0x1e] sm:$0xff]
        %v5021 = vld [vmem:[%s4699 + $0x26] sm:$0xff]
        %v5022 = vld [vmem:[%s4699 + $0x36] sm:$0xff]
        %v5023 = vld [vmem:[%s4699 + $0x3e] sm:$0xff]
        %v5024 = vld [vmem:[%s4699 + $0x4e] sm:$0xff]
        %v5025 = vld [vmem:[%s4699 + $0x56] sm:$0xff]
        %v5026 = vld [vmem:[%s4699 + $0x66] sm:$0xff]
        %v5027 = vld [vmem:[%s4699 + $0x6e] sm:$0xff]
        %v5028 = vld [vmem:[%s4699 + $0x7e] sm:$0xff]
        %v5029 = vld [vmem:[%s4699 + $0x86] sm:$0xff]
        %v5030 = vld [vmem:[%s4699 + $0x96] sm:$0xff]
        %v5031 = vld [vmem:[%s4699 + $0x9e] sm:$0xff]
        %v5032 = vld [vmem:[%s4699 + $0xae] sm:$0xff]
        %v5033 = vld [vmem:[%s4699 + $0xb6] sm:$0xff]
        %v5034 = vld [vmem:[%s23 + $0x30] sm:$0x1]
        %v5035 = vlaneseq
        %v5036 = vshrl.u32 %v5035, 7
        %v5037 = vsub.s32 0, %v5036
        %v5038 = vrot.slane %v5034, %v5037
        %v5039 = vmul.f32 %v5018, %v5038
        %v5040 = vmul.f32 %v5019, %v5038
        %v5041 = vmul.f32 %v5020, %v5038
        %v5042 = vmul.f32 %v5021, %v5038
        %v5043 = vmul.f32 %v5022, %v5038
        %v5044 = vmul.f32 %v5023, %v5038
        %v5045 = vmul.f32 %v5024, %v5038
        %v5046 = vmul.f32 %v5025, %v5038
        %v5047 = vmul.f32 %v5026, %v5038
        %v5048 = vmul.f32 %v5027, %v5038
        %v5049 = vmul.f32 %v5028, %v5038
        %v5050 = vmul.f32 %v5029, %v5038
        %v5051 = vmul.f32 %v5030, %v5038
        %v5052 = vmul.f32 %v5031, %v5038
        %v5053 = vmul.f32 %v5032, %v5038
        %v5054 = vmul.f32 %v5033, %v5038
        %v5055 = vadd.f32 %v5002, %v5039
        %v5056 = vadd.f32 %v5003, %v5040
        %v5057 = vadd.f32 %v5004, %v5041
        %v5058 = vadd.f32 %v5005, %v5042
        %v5059 = vadd.f32 %v5006, %v5043
        %v5060 = vadd.f32 %v5007, %v5044
        %v5061 = vadd.f32 %v5008, %v5045
        %v5062 = vadd.f32 %v5009, %v5046
        %v5063 = vadd.f32 %v5010, %v5047
        %v5064 = vadd.f32 %v5011, %v5048
        %v5065 = vadd.f32 %v5012, %v5049
        %v5066 = vadd.f32 %v5013, %v5050
        %v5067 = vadd.f32 %v5014, %v5051
        %v5068 = vadd.f32 %v5015, %v5052
        %v5069 = vadd.f32 %v5016, %v5053
        %v5070 = vadd.f32 %v5017, %v5054
        %v5071 = vld [vmem:[%s25] sm:$0x1]
        %v5073 = vlaneseq
        %v5074 = vshrl.u32 %v5073, 7
        %v5075 = vsub.s32 0, %v5074
        %v5076 = vrot.slane %v5071, %v5075
        %v5078 = vadd.f32 %v5055, %v5076
        %v5079 = vadd.f32 %v5056, %v5076
        %v5080 = vadd.f32 %v5057, %v5076
        %v5081 = vadd.f32 %v5058, %v5076
        %v5082 = vadd.f32 %v5059, %v5076
        %v5083 = vadd.f32 %v5060, %v5076
        %v5084 = vadd.f32 %v5061, %v5076
        %v5085 = vadd.f32 %v5062, %v5076
        %v5086 = vadd.f32 %v5063, %v5076
        %v5087 = vadd.f32 %v5064, %v5076
        %v5088 = vadd.f32 %v5065, %v5076
        %v5089 = vadd.f32 %v5066, %v5076
        %v5090 = vadd.f32 %v5067, %v5076
        %v5091 = vadd.f32 %v5068, %v5076
        %v5092 = vadd.f32 %v5069, %v5076
        %v5093 = vadd.f32 %v5070, %v5076
        %v5094 = vsel %vm952, %v5078, 0.0
        %v5095 = vsel %vm952, %v5079, 0.0
        %v5096 = vadd.f32 %v5094, %v5095
        %v5097 = vrot.slane %v5096, 4
        %v5098 = vadd.f32 %v5096, %v5097
        %v5099 = vrot.slane %v5098, 2
        %v5100 = vadd.f32 %v5098, %v5099
        %v5101 = vrot.slane %v5100, 1
        %v5102 = vadd.f32 %v5100, %v5101
        %v5103 = vsel %vm952, %v5080, 0.0
        %v5104 = vsel %vm952, %v5081, 0.0
        %v5105 = vadd.f32 %v5103, %v5104
        %v5106 = vrot.slane %v5105, 4
        %v5107 = vadd.f32 %v5105, %v5106
        %v5108 = vrot.slane %v5107, 2
        %v5109 = vadd.f32 %v5107, %v5108
        %v5110 = vrot.slane %v5109, 1
        %v5111 = vadd.f32 %v5109, %v5110
        %v5112 = vsel %vm952, %v5082, 0.0
        %v5113 = vsel %vm952, %v5083, 0.0
        %v5114 = vadd.f32 %v5112, %v5113
        %v5115 = vrot.slane %v5114, 4
        %v5116 = vadd.f32 %v5114, %v5115
        %v5117 = vrot.slane %v5116, 2
        %v5118 = vadd.f32 %v5116, %v5117
        %v5119 = vrot.slane %v5118, 1
        %v5120 = vadd.f32 %v5118, %v5119
        %v5121 = vsel %vm952, %v5084, 0.0
        %v5122 = vsel %vm952, %v5085, 0.0
        %v5123 = vadd.f32 %v5121, %v5122
        %v5124 = vrot.slane %v5123, 4
        %v5125 = vadd.f32 %v5123, %v5124
        %v5126 = vrot.slane %v5125, 2
        %v5127 = vadd.f32 %v5125, %v5126
        %v5128 = vrot.slane %v5127, 1
        %v5129 = vadd.f32 %v5127, %v5128
        %v5130 = vsel %vm952, %v5086, 0.0
        %v5131 = vsel %vm952, %v5087, 0.0
        %v5132 = vadd.f32 %v5130, %v5131
        %v5133 = vrot.slane %v5132, 4
        %v5134 = vadd.f32 %v5132, %v5133
        %v5135 = vrot.slane %v5134, 2
        %v5136 = vadd.f32 %v5134, %v5135
        %v5137 = vrot.slane %v5136, 1
        %v5138 = vadd.f32 %v5136, %v5137
        %v5139 = vsel %vm952, %v5088, 0.0
        %v5140 = vsel %vm952, %v5089, 0.0
        %v5141 = vadd.f32 %v5139, %v5140
        %v5142 = vrot.slane %v5141, 4
        %v5143 = vadd.f32 %v5141, %v5142
        %v5144 = vrot.slane %v5143, 2
        %v5145 = vadd.f32 %v5143, %v5144
        %v5146 = vrot.slane %v5145, 1
        %v5147 = vadd.f32 %v5145, %v5146
        %v5148 = vsel %vm952, %v5090, 0.0
        %v5149 = vsel %vm952, %v5091, 0.0
        %v5150 = vadd.f32 %v5148, %v5149
        %v5151 = vrot.slane %v5150, 4
        %v5152 = vadd.f32 %v5150, %v5151
        %v5153 = vrot.slane %v5152, 2
        %v5154 = vadd.f32 %v5152, %v5153
        %v5155 = vrot.slane %v5154, 1
        %v5156 = vadd.f32 %v5154, %v5155
        %v5157 = vsel %vm952, %v5092, 0.0
        %v5158 = vsel %vm952, %v5093, 0.0
        %v5159 = vadd.f32 %v5157, %v5158
        %v5160 = vrot.slane %v5159, 4
        %v5161 = vadd.f32 %v5159, %v5160
        %v5162 = vrot.slane %v5161, 2
        %v5163 = vadd.f32 %v5161, %v5162
        %v5164 = vrot.slane %v5163, 1
        %v5165 = vadd.f32 %v5163, %v5164
        %v5166 = vmul.f32 %v5102, %v1149
        %v5167 = vmul.f32 %v5111, %v1149
        %v5168 = vmul.f32 %v5120, %v1149
        %v5169 = vmul.f32 %v5129, %v1149
        %v5170 = vmul.f32 %v5138, %v1149
        %v5171 = vmul.f32 %v5147, %v1149
        %v5172 = vmul.f32 %v5156, %v1149
        %v5173 = vmul.f32 %v5165, %v1149
        %v5174 = vmul.f32 %v5078, %v5078
        %v5175 = vmul.f32 %v5079, %v5079
        %v5176 = vmul.f32 %v5080, %v5080
        %v5177 = vmul.f32 %v5081, %v5081
        %v5178 = vmul.f32 %v5082, %v5082
        %v5179 = vmul.f32 %v5083, %v5083
        %v5180 = vmul.f32 %v5084, %v5084
        %v5181 = vmul.f32 %v5085, %v5085
        %v5182 = vmul.f32 %v5086, %v5086
        %v5183 = vmul.f32 %v5087, %v5087
        %v5184 = vmul.f32 %v5088, %v5088
        %v5185 = vmul.f32 %v5089, %v5089
        %v5186 = vmul.f32 %v5090, %v5090
        %v5187 = vmul.f32 %v5091, %v5091
        %v5188 = vmul.f32 %v5092, %v5092
        %v5189 = vmul.f32 %v5093, %v5093
        %v5190 = vsel %vm952, %v5174, 0.0
        %v5191 = vsel %vm952, %v5175, 0.0
        %v5192 = vadd.f32 %v5190, %v5191
        %v5193 = vrot.slane %v5192, 4
        %v5194 = vadd.f32 %v5192, %v5193
        %v5195 = vrot.slane %v5194, 2
        %v5196 = vadd.f32 %v5194, %v5195
        %v5197 = vrot.slane %v5196, 1
        %v5198 = vadd.f32 %v5196, %v5197
        %v5199 = vsel %vm952, %v5176, 0.0
        %v5200 = vsel %vm952, %v5177, 0.0
        %v5201 = vadd.f32 %v5199, %v5200
        %v5202 = vrot.slane %v5201, 4
        %v5203 = vadd.f32 %v5201, %v5202
        %v5204 = vrot.slane %v5203, 2
        %v5205 = vadd.f32 %v5203, %v5204
        %v5206 = vrot.slane %v5205, 1
        %v5207 = vadd.f32 %v5205, %v5206
        %v5208 = vsel %vm952, %v5178, 0.0
        %v5209 = vsel %vm952, %v5179, 0.0
        %v5210 = vadd.f32 %v5208, %v5209
        %v5211 = vrot.slane %v5210, 4
        %v5212 = vadd.f32 %v5210, %v5211
        %v5213 = vrot.slane %v5212, 2
        %v5214 = vadd.f32 %v5212, %v5213
        %v5215 = vrot.slane %v5214, 1
        %v5216 = vadd.f32 %v5214, %v5215
        %v5217 = vsel %vm952, %v5180, 0.0
        %v5218 = vsel %vm952, %v5181, 0.0
        %v5219 = vadd.f32 %v5217, %v5218
        %v5220 = vrot.slane %v5219, 4
        %v5221 = vadd.f32 %v5219, %v5220
        %v5222 = vrot.slane %v5221, 2
        %v5223 = vadd.f32 %v5221, %v5222
        %v5224 = vrot.slane %v5223, 1
        %v5225 = vadd.f32 %v5223, %v5224
        %v5226 = vsel %vm952, %v5182, 0.0
        %v5227 = vsel %vm952, %v5183, 0.0
        %v5228 = vadd.f32 %v5226, %v5227
        %v5229 = vrot.slane %v5228, 4
        %v5230 = vadd.f32 %v5228, %v5229
        %v5231 = vrot.slane %v5230, 2
        %v5232 = vadd.f32 %v5230, %v5231
        %v5233 = vrot.slane %v5232, 1
        %v5234 = vadd.f32 %v5232, %v5233
        %v5235 = vsel %vm952, %v5184, 0.0
        %v5236 = vsel %vm952, %v5185, 0.0
        %v5237 = vadd.f32 %v5235, %v5236
        %v5238 = vrot.slane %v5237, 4
        %v5239 = vadd.f32 %v5237, %v5238
        %v5240 = vrot.slane %v5239, 2
        %v5241 = vadd.f32 %v5239, %v5240
        %v5242 = vrot.slane %v5241, 1
        %v5243 = vadd.f32 %v5241, %v5242
        %v5244 = vsel %vm952, %v5186, 0.0
        %v5245 = vsel %vm952, %v5187, 0.0
        %v5246 = vadd.f32 %v5244, %v5245
        %v5247 = vrot.slane %v5246, 4
        %v5248 = vadd.f32 %v5246, %v5247
        %v5249 = vrot.slane %v5248, 2
        %v5250 = vadd.f32 %v5248, %v5249
        %v5251 = vrot.slane %v5250, 1
        %v5252 = vadd.f32 %v5250, %v5251
        %v5253 = vsel %vm952, %v5188, 0.0
        %v5254 = vsel %vm952, %v5189, 0.0
        %v5255 = vadd.f32 %v5253, %v5254
        %v5256 = vrot.slane %v5255, 4
        %v5257 = vadd.f32 %v5255, %v5256
        %v5258 = vrot.slane %v5257, 2
        %v5259 = vadd.f32 %v5257, %v5258
        %v5260 = vrot.slane %v5259, 1
        %v5261 = vadd.f32 %v5259, %v5260
        %v5262 = vmul.f32 %v5198, %v1149
        %v5263 = vmul.f32 %v5207, %v1149
        %v5264 = vmul.f32 %v5216, %v1149
        %v5265 = vmul.f32 %v5225, %v1149
        %v5266 = vmul.f32 %v5234, %v1149
        %v5267 = vmul.f32 %v5243, %v1149
        %v5268 = vmul.f32 %v5252, %v1149
        %v5269 = vmul.f32 %v5261, %v1149
        %v5270 = vmul.f32 %v5166, %v5166
        %v5271 = vmul.f32 %v5167, %v5167
        %v5272 = vmul.f32 %v5168, %v5168
        %v5273 = vmul.f32 %v5169, %v5169
        %v5274 = vmul.f32 %v5170, %v5170
        %v5275 = vmul.f32 %v5171, %v5171
        %v5276 = vmul.f32 %v5172, %v5172
        %v5277 = vmul.f32 %v5173, %v5173
        %v5278 = vsub.f32 %v5262, %v5270
        %v5279 = vsub.f32 %v5263, %v5271
        %v5280 = vsub.f32 %v5264, %v5272
        %v5281 = vsub.f32 %v5265, %v5273
        %v5282 = vsub.f32 %v5266, %v5274
        %v5283 = vsub.f32 %v5267, %v5275
        %v5284 = vsub.f32 %v5268, %v5276
        %v5285 = vsub.f32 %v5269, %v5277
        %v5286 = vmax.f32 %v5278, 0.0
        %v5287 = vmax.f32 %v5279, 0.0
        %v5288 = vmax.f32 %v5280, 0.0
        %v5289 = vmax.f32 %v5281, 0.0
        %v5290 = vmax.f32 %v5282, 0.0
        %v5291 = vmax.f32 %v5283, 0.0
        %v5292 = vmax.f32 %v5284, 0.0
        %v5293 = vmax.f32 %v5285, 0.0
        %v5294 = vsub.f32 %v5078, %v5166
        %v5295 = vsub.f32 %v5079, %v5166
        %v5296 = vsub.f32 %v5080, %v5167
        %v5297 = vsub.f32 %v5081, %v5167
        %v5298 = vsub.f32 %v5082, %v5168
        %v5299 = vsub.f32 %v5083, %v5168
        %v5300 = vsub.f32 %v5084, %v5169
        %v5301 = vsub.f32 %v5085, %v5169
        %v5302 = vsub.f32 %v5086, %v5170
        %v5303 = vsub.f32 %v5087, %v5170
        %v5304 = vsub.f32 %v5088, %v5171
        %v5305 = vsub.f32 %v5089, %v5171
        %v5306 = vsub.f32 %v5090, %v5172
        %v5307 = vsub.f32 %v5091, %v5172
        %v5308 = vsub.f32 %v5092, %v5173
        %v5309 = vsub.f32 %v5093, %v5173
        %v5310 = vadd.f32 %v5286, 1e-05
        %v5311 = vadd.f32 %v5287, 1e-05
        %v5312 = vadd.f32 %v5288, 1e-05
        %v5313 = vadd.f32 %v5289, 1e-05
        %v5314 = vadd.f32 %v5290, 1e-05
        %v5315 = vadd.f32 %v5291, 1e-05
        %v5316 = vadd.f32 %v5292, 1e-05
        %v5317 = vadd.f32 %v5293, 1e-05
        %v5318 = vrsqrt.pop %v5310
        %v5319 = vrsqrt.pop %v5311
        %v5320 = vrsqrt.pop %v5312
        %v5321 = vrsqrt.pop %v5313
        %v5322 = vrsqrt.pop %v5314
        %v5323 = vrsqrt.pop %v5315
        %v5324 = vrsqrt.pop %v5316
        %v5325 = vrsqrt.pop %v5317
        %v5326 = vmul.f32 %v5294, %v5318
        %v5327 = vmul.f32 %v5295, %v5318
        %v5328 = vmul.f32 %v5296, %v5319
        %v5329 = vmul.f32 %v5297, %v5319
        %v5330 = vmul.f32 %v5298, %v5320
        %v5331 = vmul.f32 %v5299, %v5320
        %v5332 = vmul.f32 %v5300, %v5321
        %v5333 = vmul.f32 %v5301, %v5321
        %v5334 = vmul.f32 %v5302, %v5322
        %v5335 = vmul.f32 %v5303, %v5322
        %v5336 = vmul.f32 %v5304, %v5323
        %v5337 = vmul.f32 %v5305, %v5323
        %v5338 = vmul.f32 %v5306, %v5324
        %v5339 = vmul.f32 %v5307, %v5324
        %v5340 = vmul.f32 %v5308, %v5325
        %v5341 = vmul.f32 %v5309, %v5325
        %v5342 = vld [vmem:[%s27] sm:$0xff]
        %v5343 = vld [vmem:[%s27 + $0x8] sm:$0xff]
        %5345 = vset.pattern.permute.xlu0 0
        %5346 = vperm.xlu0 %5345, %v5342
        %v5347 = vpop.permute.xlu0 %5346
        %5350 = vset.pattern.permute.xlu0 0
        %5351 = vperm.xlu0 %5350, %v5343
        %v5352 = vpop.permute.xlu0 %5351
        %v5354 = vmul.f32 %v5326, %v5347
        %v5355 = vmul.f32 %v5327, %v5352
        %v5356 = vmul.f32 %v5328, %v5347
        %v5357 = vmul.f32 %v5329, %v5352
        %v5358 = vmul.f32 %v5330, %v5347
        %v5359 = vmul.f32 %v5331, %v5352
        %v5360 = vmul.f32 %v5332, %v5347
        %v5361 = vmul.f32 %v5333, %v5352
        %v5362 = vmul.f32 %v5334, %v5347
        %v5363 = vmul.f32 %v5335, %v5352
        %v5364 = vmul.f32 %v5336, %v5347
        %v5365 = vmul.f32 %v5337, %v5352
        %v5366 = vmul.f32 %v5338, %v5347
        %v5367 = vmul.f32 %v5339, %v5352
        %v5368 = vmul.f32 %v5340, %v5347
        %v5369 = vmul.f32 %v5341, %v5352
        %v5370 = vld [vmem:[%s29] sm:$0xff]
        %v5371 = vld [vmem:[%s29 + $0x8] sm:$0xff]
        %5373 = vset.pattern.permute.xlu0 0
        %5374 = vperm.xlu0 %5373, %v5370
        %v5375 = vpop.permute.xlu0 %5374
        %5378 = vset.pattern.permute.xlu0 0
        %5379 = vperm.xlu0 %5378, %v5371
        %v5380 = vpop.permute.xlu0 %5379
        %v5382 = vadd.f32 %v5354, %v5375
        %v5383 = vadd.f32 %v5355, %v5380
        %v5384 = vadd.f32 %v5356, %v5375
        %v5385 = vadd.f32 %v5357, %v5380
        %v5386 = vadd.f32 %v5358, %v5375
        %v5387 = vadd.f32 %v5359, %v5380
        %v5388 = vadd.f32 %v5360, %v5375
        %v5389 = vadd.f32 %v5361, %v5380
        %v5390 = vadd.f32 %v5362, %v5375
        %v5391 = vadd.f32 %v5363, %v5380
        %v5392 = vadd.f32 %v5364, %v5375
        %v5393 = vadd.f32 %v5365, %v5380
        %v5394 = vadd.f32 %v5366, %v5375
        %v5395 = vadd.f32 %v5367, %v5380
        %v5396 = vadd.f32 %v5368, %v5375
        %v5397 = vadd.f32 %v5369, %v5380
        %v5398 = vpack.c.bf16 %v5383, %v5382
        %v5399 = vpack.c.bf16 %v5385, %v5384
        %v5400 = vpack.c.bf16 %v5387, %v5386
        %v5401 = vpack.c.bf16 %v5389, %v5388
        %v5402 = vpack.c.bf16 %v5391, %v5390
        %v5403 = vpack.c.bf16 %v5393, %v5392
        %v5404 = vpack.c.bf16 %v5395, %v5394
        %v5405 = vpack.c.bf16 %v5397, %v5396
        %v5406 = vld [vmem:[%s31] sm:$0xf]
        %v5407 = vld [vmem:[%s31 + $0x4] sm:$0xf]
        %v5408 = vld [vmem:[%s33] sm:$0x1]
        %v5410 = vlaneseq
        %v5411 = vshrl.u32 %v5410, 7
        %v5412 = vsub.s32 0, %v5411
        %v5413 = vrot.slane %v5408, %v5412
        %v5417 = vunpack.c.l.b16 %v5406
        %v5418 = vunpack.c.l.b16 %v5407
        %v5419 = vpack.c.b16 %v5418, %v5417
        %v5422 = vsel %vm952, %v5398, 0
        %v5425 = vsel %vm952, %v5399, 0
        %v5428 = vsel %vm952, %v5400, 0
        %v5431 = vsel %vm952, %v5401, 0
        %v5434 = vsel %vm952, %v5402, 0
        %v5437 = vsel %vm952, %v5403, 0
        %v5440 = vsel %vm952, %v5404, 0
        %v5443 = vsel %vm952, %v5405, 0
        %5445 = vmatprep.subr.bf16.mxu0 0
        %5446 = vmatpush1.bf16.msra.mxu0 %v5419
        %5447 = vmatprep.subr.bf16.mxu0 0
        %5448 = vmatpush1.bf16.msra.mxu0 0
        %5449 = vmatprep.subr.bf16.mxu0 0
        %5450 = vmatpush1.bf16.msra.mxu0 0
        %5451 = vmatprep.subr.bf16.mxu0 0
        %5452 = vmatpush1.bf16.msra.mxu0 0
        %5453 = vmatprep.subr.bf16.mxu0 0
        %5454 = vmatpush1.bf16.msra.mxu0 0
        %5455 = vmatprep.subr.bf16.mxu0 0
        %5456 = vmatpush1.bf16.msra.mxu0 0
        %5457 = vmatprep.subr.bf16.mxu0 0
        %5458 = vmatpush1.bf16.msra.mxu0 0
        %5459 = vmatprep.subr.bf16.mxu0 0
        %5460 = vmatpush1.bf16.msra.mxu0 0
        %5461 = vmatprep.subr.bf16.mxu0 0
        %5462 = vmatpush1.bf16.msra.mxu0 0
        %5463 = vmatprep.subr.bf16.mxu0 0
        %5464 = vmatpush1.bf16.msra.mxu0 0
        %5465 = vmatprep.subr.bf16.mxu0 0
        %5466 = vmatpush1.bf16.msra.mxu0 0
        %5467 = vmatprep.subr.bf16.mxu0 0
        %5468 = vmatpush1.bf16.msra.mxu0 0
        %5469 = vmatprep.subr.bf16.mxu0 0
        %5470 = vmatpush1.bf16.msra.mxu0 0
        %5471 = vmatprep.subr.bf16.mxu0 0
        %5472 = vmatpush1.bf16.msra.mxu0 0
        %5473 = vmatprep.subr.bf16.mxu0 0
        %5474 = vmatpush1.bf16.msra.mxu0 0
        %5475 = vmatprep.subr.bf16.mxu0 0
        %5476 = vmatpush1.bf16.msra.mxu0 0
        %5477 = vmatprep.mubr.bf16.mxu0 0
        %5478 = vmatmul.mubr.bf16.gmra.mrb[0].mxu0 %v5422
        %v5479 = vpop.f32.mrb[0].mxu0
        %v5480 = vadd.f32 %v5413, %v5479
        %v5481 = vpop.f32.mrb[0].mxu0
        %v5482 = vpop.f32.mrb[0].mxu0
        %v5483 = vadd.f32 %v5413, %v5482
        %v5484 = vpop.f32.mrb[0].mxu0
        %5485 = vmatprep.mubr.bf16.mxu0 0
        %5486 = vmatmul.mubr.bf16.gmra.mrb[0].mxu0 %v5425
        %v5487 = vpop.f32.mrb[0].mxu0
        %v5488 = vadd.f32 %v5413, %v5487
        %v5489 = vpop.f32.mrb[0].mxu0
        %v5490 = vpop.f32.mrb[0].mxu0
        %v5491 = vadd.f32 %v5413, %v5490
        %v5492 = vpop.f32.mrb[0].mxu0
        %5493 = vmatprep.mubr.bf16.mxu0 0
        %5494 = vmatmul.mubr.bf16.gmra.mrb[0].mxu0 %v5428
        %v5495 = vpop.f32.mrb[0].mxu0
        %v5496 = vadd.f32 %v5413, %v5495
        %v5497 = vpop.f32.mrb[0].mxu0
        %v5498 = vpop.f32.mrb[0].mxu0
        %v5499 = vadd.f32 %v5413, %v5498
        %v5500 = vpop.f32.mrb[0].mxu0
        %5501 = vmatprep.mubr.bf16.mxu0 0
        %5502 = vmatmul.mubr.bf16.gmra.mrb[0].mxu0 %v5431
        %v5503 = vpop.f32.mrb[0].mxu0
        %v5504 = vadd.f32 %v5413, %v5503
        %v5505 = vpop.f32.mrb[0].mxu0
        %v5506 = vpop.f32.mrb[0].mxu0
        %v5507 = vadd.f32 %v5413, %v5506
        %v5508 = vpop.f32.mrb[0].mxu0
        %5509 = vmatprep.mubr.bf16.mxu0 0
        %5510 = vmatmul.mubr.bf16.gmra.mrb[0].mxu0 %v5434
        %v5511 = vpop.f32.mrb[0].mxu0
        %v5512 = vadd.f32 %v5413, %v5511
        %v5513 = vpop.f32.mrb[0].mxu0
        %v5514 = vpop.f32.mrb[0].mxu0
        %v5515 = vadd.f32 %v5413, %v5514
        %v5516 = vpop.f32.mrb[0].mxu0
        %5517 = vmatprep.mubr.bf16.mxu0 0
        %5518 = vmatmul.mubr.bf16.gmra.mrb[0].mxu0 %v5437
        %v5519 = vpop.f32.mrb[0].mxu0
        %v5520 = vadd.f32 %v5413, %v5519
        %v5521 = vpop.f32.mrb[0].mxu0
        %v5522 = vpop.f32.mrb[0].mxu0
        %v5523 = vadd.f32 %v5413, %v5522
        %v5524 = vpop.f32.mrb[0].mxu0
        %5525 = vmatprep.mubr.bf16.mxu0 0
        %5526 = vmatmul.mubr.bf16.gmra.mrb[0].mxu0 %v5440
        %v5527 = vpop.f32.mrb[0].mxu0
        %v5528 = vadd.f32 %v5413, %v5527
        %v5529 = vpop.f32.mrb[0].mxu0
        %v5530 = vpop.f32.mrb[0].mxu0
        %v5531 = vadd.f32 %v5413, %v5530
        %v5532 = vpop.f32.mrb[0].mxu0
        %5533 = vmatprep.mubr.bf16.mxu0 0
        %5534 = vmatmul.mubr.bf16.gmra.mrb[0].mxu0 %v5443
        %v5535 = vpop.f32.mrb[0].mxu0
        %v5536 = vadd.f32 %v5413, %v5535
        %v5537 = vpop.f32.mrb[0].mxu0
        %v5538 = vpop.f32.mrb[0].mxu0
        %v5539 = vadd.f32 %v5413, %v5538
        %v5540 = vpop.f32.mrb[0].mxu0
        %5541 = vdwg.mxu0
        %v5542 = vmul.f32 %v5480, %v5480
        %v5543 = vmul.f32 %v5483, %v5483
        %v5544 = vmul.f32 %v5488, %v5488
        %v5545 = vmul.f32 %v5491, %v5491
        %v5546 = vmul.f32 %v5496, %v5496
        %v5547 = vmul.f32 %v5499, %v5499
        %v5548 = vmul.f32 %v5504, %v5504
        %v5549 = vmul.f32 %v5507, %v5507
        %v5550 = vmul.f32 %v5512, %v5512
        %v5551 = vmul.f32 %v5515, %v5515
        %v5552 = vmul.f32 %v5520, %v5520
        %v5553 = vmul.f32 %v5523, %v5523
        %v5554 = vmul.f32 %v5528, %v5528
        %v5555 = vmul.f32 %v5531, %v5531
        %v5556 = vmul.f32 %v5536, %v5536
        %v5557 = vmul.f32 %v5539, %v5539
        %v5558 = vsel %vm922, %v5542, 0.0
        %v5559 = vsel %vm922, %v5544, 0.0
        %v5560 = vadd.f32 %v5558, %v5559
        %v5561 = vsel %vm922, %v5546, 0.0
        %v5562 = vadd.f32 %v5560, %v5561
        %v5563 = vsel %vm922, %v5548, 0.0
        %v5564 = vadd.f32 %v5562, %v5563
        %v5565 = vsel %vm922, %v5550, 0.0
        %v5566 = vadd.f32 %v5564, %v5565
        %v5567 = vsel %vm922, %v5552, 0.0
        %v5568 = vadd.f32 %v5566, %v5567
        %v5569 = vsel %vm922, %v5554, 0.0
        %v5570 = vadd.f32 %v5568, %v5569
        %v5571 = vsel %vm922, %v5556, 0.0
        %v5572 = vadd.f32 %v5570, %v5571
        %v5573 = vsel %vm922, %v5543, 0.0
        %v5574 = vsel %vm922, %v5545, 0.0
        %v5575 = vadd.f32 %v5573, %v5574
        %v5576 = vsel %vm922, %v5547, 0.0
        %v5577 = vadd.f32 %v5575, %v5576
        %v5578 = vsel %vm922, %v5549, 0.0
        %v5579 = vadd.f32 %v5577, %v5578
        %v5580 = vsel %vm922, %v5551, 0.0
        %v5581 = vadd.f32 %v5579, %v5580
        %v5582 = vsel %vm922, %v5553, 0.0
        %v5583 = vadd.f32 %v5581, %v5582
        %v5584 = vsel %vm922, %v5555, 0.0
        %v5585 = vadd.f32 %v5583, %v5584
        %v5586 = vsel %vm922, %v5557, 0.0
        %v5587 = vadd.f32 %v5585, %v5586
        %v5588 = vsel %vm922, %v5572, 0.0
        %v5589 = vsel %vm922, %v5587, 0.0
        %v5590 = vadd.f32 %v5588, %v5589
        %v5591 = vrot.slane %v5590, 4
        %v5592 = vadd.f32 %v5590, %v5591
        %v5593 = vrot.slane %v5592, 2
        %v5594 = vadd.f32 %v5592, %v5593
        %v5595 = vrot.slane %v5594, 1
        %v5596 = vadd.f32 %v5594, %v5595
        %v5597 = vrsqrt.pop %v5596
        %v5598 = vmul.f32 %v5596, %v5597
        %vm5599 = vcmp.eq.f32.partialorder %v5596, inf
        %v5600 = vsel %vm5599, %v5596, %v5598
        %vm5601 = vcmp.eq.f32.partialorder %v5596, 0.0
        %v5602 = vand.u32 %v5596, 2147483648
        %v5603 = vsel %vm5601, %v5602, %v5600
        %v5604 = vsel %vm922, %v5603, 0.0
        %5605 = vadd.xlane.f32.xlu0 %v5604
        %v5606 = vpop.xlane.xlu0 %5605
        %v5607 = vrcp.pop 32.0
        %v5608 = vmul.f32 %v5606, %v5607
        %v5609 = vadd.f32 %v5608, 1e-06
        %v5610 = vrcp.pop %v5609
        %v5611 = vmul.f32 %v5603, %v5610
        %v5612 = vld [vmem:[%s35] sm:$0x1]
        %v5613 = vmul.f32 %v5480, %v5611
        %v5614 = vmul.f32 %v5483, %v5611
        %v5615 = vmul.f32 %v5488, %v5611
        %v5616 = vmul.f32 %v5491, %v5611
        %v5617 = vmul.f32 %v5496, %v5611
        %v5618 = vmul.f32 %v5499, %v5611
        %v5619 = vmul.f32 %v5504, %v5611
        %v5620 = vmul.f32 %v5507, %v5611
        %v5621 = vmul.f32 %v5512, %v5611
        %v5622 = vmul.f32 %v5515, %v5611
        %v5623 = vmul.f32 %v5520, %v5611
        %v5624 = vmul.f32 %v5523, %v5611
        %v5625 = vmul.f32 %v5528, %v5611
        %v5626 = vmul.f32 %v5531, %v5611
        %v5627 = vmul.f32 %v5536, %v5611
        %v5628 = vmul.f32 %v5539, %v5611
        %v5630 = vlaneseq
        %v5631 = vshrl.u32 %v5630, 7
        %v5632 = vsub.s32 0, %v5631
        %v5633 = vrot.slane %v5612, %v5632
        %v5635 = vmul.f32 %v5633, %v5613
        %v5636 = vmul.f32 %v5633, %v5614
        %v5637 = vmul.f32 %v5633, %v5615
        %v5638 = vmul.f32 %v5633, %v5616
        %v5639 = vmul.f32 %v5633, %v5617
        %v5640 = vmul.f32 %v5633, %v5618
        %v5641 = vmul.f32 %v5633, %v5619
        %v5642 = vmul.f32 %v5633, %v5620
        %v5643 = vmul.f32 %v5633, %v5621
        %v5644 = vmul.f32 %v5633, %v5622
        %v5645 = vmul.f32 %v5633, %v5623
        %v5646 = vmul.f32 %v5633, %v5624
        %v5647 = vmul.f32 %v5633, %v5625
        %v5648 = vmul.f32 %v5633, %v5626
        %v5649 = vmul.f32 %v5633, %v5627
        %v5650 = vmul.f32 %v5633, %v5628
        %v5651 = vld [vmem:[%s37] sm:$0x1]
        %v5653 = vlaneseq
        %v5654 = vshrl.u32 %v5653, 7
        %v5655 = vsub.s32 0, %v5654
        %v5656 = vrot.slane %v5651, %v5655
        %v5658 = vadd.f32 %v5635, %v5656
        %v5659 = vadd.f32 %v5636, %v5656
        %v5660 = vadd.f32 %v5637, %v5656
        %v5661 = vadd.f32 %v5638, %v5656
        %v5662 = vadd.f32 %v5639, %v5656
        %v5663 = vadd.f32 %v5640, %v5656
        %v5664 = vadd.f32 %v5641, %v5656
        %v5665 = vadd.f32 %v5642, %v5656
        %v5666 = vadd.f32 %v5643, %v5656
        %v5667 = vadd.f32 %v5644, %v5656
        %v5668 = vadd.f32 %v5645, %v5656
        %v5669 = vadd.f32 %v5646, %v5656
        %v5670 = vadd.f32 %v5647, %v5656
        %v5671 = vadd.f32 %v5648, %v5656
        %v5672 = vadd.f32 %v5649, %v5656
        %v5673 = vadd.f32 %v5650, %v5656
        %v5674 = vadd.f32 %v5658, %v5480
        %v5675 = vadd.f32 %v5659, %v5483
        %v5676 = vadd.f32 %v5660, %v5488
        %v5677 = vadd.f32 %v5661, %v5491
        %v5678 = vadd.f32 %v5662, %v5496
        %v5679 = vadd.f32 %v5663, %v5499
        %v5680 = vadd.f32 %v5664, %v5504
        %v5681 = vadd.f32 %v5665, %v5507
        %v5682 = vadd.f32 %v5666, %v5512
        %v5683 = vadd.f32 %v5667, %v5515
        %v5684 = vadd.f32 %v5668, %v5520
        %v5685 = vadd.f32 %v5669, %v5523
        %v5686 = vadd.f32 %v5670, %v5528
        %v5687 = vadd.f32 %v5671, %v5531
        %v5688 = vadd.f32 %v5672, %v5536
        %v5689 = vadd.f32 %v5673, %v5539
        %v5690 = vpack.c.bf16 %v5675, %v5674
        %v5691 = vpack.c.bf16 %v5677, %v5676
        %v5692 = vpack.c.bf16 %v5679, %v5678
        %v5693 = vpack.c.bf16 %v5681, %v5680
        %v5694 = vpack.c.bf16 %v5683, %v5682
        %v5695 = vpack.c.bf16 %v5685, %v5684
        %v5696 = vpack.c.bf16 %v5687, %v5686
        %v5697 = vpack.c.bf16 %v5689, %v5688
        %v5698 = vld [vmem:[%s39] sm:$0xf]
        %v5699 = vld [vmem:[%s39 + $0x4] sm:$0xf]
        %v5700 = vld [vmem:[%s39 + $0x8] sm:$0xf]
        %v5701 = vld [vmem:[%s39 + $0xc] sm:$0xf]
        %v5702 = vld [vmem:[%s41] sm:$0x1]
        %v5704 = vlaneseq
        %v5705 = vshrl.u32 %v5704, 7
        %v5706 = vsub.s32 0, %v5705
        %v5707 = vrot.slane %v5702, %v5706
        %v5713 = vunpack.c.l.b16 %v5698
        %v5714 = vunpack.c.l.b16 %v5699
        %v5715 = vunpack.c.l.b16 %v5700
        %v5716 = vunpack.c.l.b16 %v5701
        %v5717 = vpack.c.b16 %v5714, %v5713
        %v5718 = vpack.c.b16 %v5716, %v5715
        %v5722 = vsel %vm922, %v5690, 0
        %v5725 = vsel %vm922, %v5691, 0
        %v5728 = vsel %vm922, %v5692, 0
        %v5731 = vsel %vm922, %v5693, 0
        %v5734 = vsel %vm922, %v5694, 0
        %v5737 = vsel %vm922, %v5695, 0
        %v5740 = vsel %vm922, %v5696, 0
        %v5743 = vsel %vm922, %v5697, 0
        %5745 = vmatprep.subr.bf16.mxu0 0
        %5746 = vmatpush1.bf16.msra.mxu0 %v5717
        %5747 = vmatprep.subr.bf16.mxu0 0
        %5748 = vmatpush1.bf16.msra.mxu0 %v5718
        %5749 = vmatprep.subr.bf16.mxu0 0
        %5750 = vmatpush1.bf16.msra.mxu0 0
        %5751 = vmatprep.subr.bf16.mxu0 0
        %5752 = vmatpush1.bf16.msra.mxu0 0
        %5753 = vmatprep.subr.bf16.mxu0 0
        %5754 = vmatpush1.bf16.msra.mxu0 0
        %5755 = vmatprep.subr.bf16.mxu0 0
        %5756 = vmatpush1.bf16.msra.mxu0 0
        %5757 = vmatprep.subr.bf16.mxu0 0
        %5758 = vmatpush1.bf16.msra.mxu0 0
        %5759 = vmatprep.subr.bf16.mxu0 0
        %5760 = vmatpush1.bf16.msra.mxu0 0
        %5761 = vmatprep.subr.bf16.mxu0 0
        %5762 = vmatpush1.bf16.msra.mxu0 0
        %5763 = vmatprep.subr.bf16.mxu0 0
        %5764 = vmatpush1.bf16.msra.mxu0 0
        %5765 = vmatprep.subr.bf16.mxu0 0
        %5766 = vmatpush1.bf16.msra.mxu0 0
        %5767 = vmatprep.subr.bf16.mxu0 0
        %5768 = vmatpush1.bf16.msra.mxu0 0
        %5769 = vmatprep.subr.bf16.mxu0 0
        %5770 = vmatpush1.bf16.msra.mxu0 0
        %5771 = vmatprep.subr.bf16.mxu0 0
        %5772 = vmatpush1.bf16.msra.mxu0 0
        %5773 = vmatprep.subr.bf16.mxu0 0
        %5774 = vmatpush1.bf16.msra.mxu0 0
        %5775 = vmatprep.subr.bf16.mxu0 0
        %5776 = vmatpush1.bf16.msra.mxu0 0
        %5777 = vmatprep.mubr.bf16.mxu0 0
        %5778 = vmatmul.mubr.bf16.gmra.mrb[0].mxu0 %v5722
        %v5779 = vpop.f32.mrb[0].mxu0
        %v5780 = vadd.f32 %v5707, %v5779
        %v5781 = vpop.f32.mrb[0].mxu0
        %v5782 = vpop.f32.mrb[0].mxu0
        %v5783 = vadd.f32 %v5707, %v5782
        %v5784 = vpop.f32.mrb[0].mxu0
        %5785 = vmatprep.mubr.bf16.mxu0 0
        %5786 = vmatmul.mubr.bf16.gmra.mrb[0].mxu0 %v5725
        %v5787 = vpop.f32.mrb[0].mxu0
        %v5788 = vadd.f32 %v5707, %v5787
        %v5789 = vpop.f32.mrb[0].mxu0
        %v5790 = vpop.f32.mrb[0].mxu0
        %v5791 = vadd.f32 %v5707, %v5790
        %v5792 = vpop.f32.mrb[0].mxu0
        %5793 = vmatprep.mubr.bf16.mxu0 0
        %5794 = vmatmul.mubr.bf16.gmra.mrb[0].mxu0 %v5728
        %v5795 = vpop.f32.mrb[0].mxu0
        %v5796 = vadd.f32 %v5707, %v5795
        %v5797 = vpop.f32.mrb[0].mxu0
        %v5798 = vpop.f32.mrb[0].mxu0
        %v5799 = vadd.f32 %v5707, %v5798
        %v5800 = vpop.f32.mrb[0].mxu0
        %5801 = vmatprep.mubr.bf16.mxu0 0
        %5802 = vmatmul.mubr.bf16.gmra.mrb[0].mxu0 %v5731
        %v5803 = vpop.f32.mrb[0].mxu0
        %v5804 = vadd.f32 %v5707, %v5803
        %v5805 = vpop.f32.mrb[0].mxu0
        %v5806 = vpop.f32.mrb[0].mxu0
        %v5807 = vadd.f32 %v5707, %v5806
        %v5808 = vpop.f32.mrb[0].mxu0
        %5809 = vmatprep.mubr.bf16.mxu0 0
        %5810 = vmatmul.mubr.bf16.gmra.mrb[0].mxu0 %v5734
        %v5811 = vpop.f32.mrb[0].mxu0
        %v5812 = vadd.f32 %v5707, %v5811
        %v5813 = vpop.f32.mrb[0].mxu0
        %v5814 = vpop.f32.mrb[0].mxu0
        %v5815 = vadd.f32 %v5707, %v5814
        %v5816 = vpop.f32.mrb[0].mxu0
        %5817 = vmatprep.mubr.bf16.mxu0 0
        %5818 = vmatmul.mubr.bf16.gmra.mrb[0].mxu0 %v5737
        %v5819 = vpop.f32.mrb[0].mxu0
        %v5820 = vadd.f32 %v5707, %v5819
        %v5821 = vpop.f32.mrb[0].mxu0
        %v5822 = vpop.f32.mrb[0].mxu0
        %v5823 = vadd.f32 %v5707, %v5822
        %v5824 = vpop.f32.mrb[0].mxu0
        %5825 = vmatprep.mubr.bf16.mxu0 0
        %5826 = vmatmul.mubr.bf16.gmra.mrb[0].mxu0 %v5740
        %v5827 = vpop.f32.mrb[0].mxu0
        %v5828 = vadd.f32 %v5707, %v5827
        %v5829 = vpop.f32.mrb[0].mxu0
        %v5830 = vpop.f32.mrb[0].mxu0
        %v5831 = vadd.f32 %v5707, %v5830
        %v5832 = vpop.f32.mrb[0].mxu0
        %5833 = vmatprep.mubr.bf16.mxu0 0
        %5834 = vmatmul.mubr.bf16.gmra.mrb[0].mxu0 %v5743
        %v5835 = vpop.f32.mrb[0].mxu0
        %v5836 = vadd.f32 %v5707, %v5835
        %v5837 = vpop.f32.mrb[0].mxu0
        %v5838 = vpop.f32.mrb[0].mxu0
        %v5839 = vadd.f32 %v5707, %v5838
        %v5840 = vpop.f32.mrb[0].mxu0
        %5841 = vdwg.mxu0
        %v5842 = vld [vmem:[#allocation2] sm:$0xff]
        %v5843 = vld [vmem:[#allocation2 + $0x8] sm:$0xff]
        %v5844 = vld [vmem:[#allocation2 + $0x10] sm:$0xff]
        %v5845 = vld [vmem:[#allocation2 + $0x18] sm:$0xff]
        %v5846 = vld [vmem:[#allocation2 + $0x20] sm:$0xff]
        %v5847 = vld [vmem:[#allocation2 + $0x28] sm:$0xff]
        %v5848 = vld [vmem:[#allocation2 + $0x30] sm:$0xff]
        %v5849 = vld [vmem:[#allocation2 + $0x38] sm:$0xff]
        %v5850 = vld [vmem:[#allocation2 + $0x40] sm:$0xff]
        %v5851 = vld [vmem:[#allocation2 + $0x48] sm:$0xff]
        %v5852 = vld [vmem:[#allocation2 + $0x50] sm:$0xff]
        %v5853 = vld [vmem:[#allocation2 + $0x58] sm:$0xff]
        %v5854 = vld [vmem:[#allocation2 + $0x60] sm:$0xff]
        %v5855 = vld [vmem:[#allocation2 + $0x68] sm:$0xff]
        %v5856 = vld [vmem:[#allocation2 + $0x70] sm:$0xff]
        %v5857 = vld [vmem:[#allocation2 + $0x78] sm:$0xff]
        %v5858 = vadd.f32 %v5842, %v5780
        %v5859 = vadd.f32 %v5843, %v5783
        %v5860 = vadd.f32 %v5844, %v5788
        %v5861 = vadd.f32 %v5845, %v5791
        %v5862 = vadd.f32 %v5846, %v5796
        %v5863 = vadd.f32 %v5847, %v5799
        %v5864 = vadd.f32 %v5848, %v5804
        %v5865 = vadd.f32 %v5849, %v5807
        %v5866 = vadd.f32 %v5850, %v5812
        %v5867 = vadd.f32 %v5851, %v5815
        %v5868 = vadd.f32 %v5852, %v5820
        %v5869 = vadd.f32 %v5853, %v5823
        %v5870 = vadd.f32 %v5854, %v5828
        %v5871 = vadd.f32 %v5855, %v5831
        %v5872 = vadd.f32 %v5856, %v5836
        %v5873 = vadd.f32 %v5857, %v5839
        %5874 = vst.msk [vmem:[#allocation2] sm:$0xff] %vm952, %v5858
        %5875 = vst.msk [vmem:[#allocation2 + $0x8] sm:$0xff] %vm952, %v5859
        %5876 = vst.msk [vmem:[#allocation2 + $0x10] sm:$0xff] %vm952, %v5860
        %5877 = vst.msk [vmem:[#allocation2 + $0x18] sm:$0xff] %vm952, %v5861
        %5878 = vst.msk [vmem:[#allocation2 + $0x20] sm:$0xff] %vm952, %v5862
        %5879 = vst.msk [vmem:[#allocation2 + $0x28] sm:$0xff] %vm952, %v5863
        %5880 = vst.msk [vmem:[#allocation2 + $0x30] sm:$0xff] %vm952, %v5864
        %5881 = vst.msk [vmem:[#allocation2 + $0x38] sm:$0xff] %vm952, %v5865
        %5882 = vst.msk [vmem:[#allocation2 + $0x40] sm:$0xff] %vm952, %v5866
        %5883 = vst.msk [vmem:[#allocation2 + $0x48] sm:$0xff] %vm952, %v5867
        %5884 = vst.msk [vmem:[#allocation2 + $0x50] sm:$0xff] %vm952, %v5868
        %5885 = vst.msk [vmem:[#allocation2 + $0x58] sm:$0xff] %vm952, %v5869
        %5886 = vst.msk [vmem:[#allocation2 + $0x60] sm:$0xff] %vm952, %v5870
        %5887 = vst.msk [vmem:[#allocation2 + $0x68] sm:$0xff] %vm952, %v5871
        %5888 = vst.msk [vmem:[#allocation2 + $0x70] sm:$0xff] %vm952, %v5872
        %5889 = vst.msk [vmem:[#allocation2 + $0x78] sm:$0xff] %vm952, %v5873
        %v5890 = vld [vmem:[#allocation2] sm:$0xff]
        %v5891 = vld [vmem:[#allocation2 + $0x8] sm:$0xff]
        %v5892 = vld [vmem:[#allocation2 + $0x10] sm:$0xff]
        %v5893 = vld [vmem:[#allocation2 + $0x18] sm:$0xff]
        %v5894 = vld [vmem:[#allocation2 + $0x20] sm:$0xff]
        %v5895 = vld [vmem:[#allocation2 + $0x28] sm:$0xff]
        %v5896 = vld [vmem:[#allocation2 + $0x30] sm:$0xff]
        %v5897 = vld [vmem:[#allocation2 + $0x38] sm:$0xff]
        %v5898 = vld [vmem:[#allocation2 + $0x40] sm:$0xff]
        %v5899 = vld [vmem:[#allocation2 + $0x48] sm:$0xff]
        %v5900 = vld [vmem:[#allocation2 + $0x50] sm:$0xff]
        %v5901 = vld [vmem:[#allocation2 + $0x58] sm:$0xff]
        %v5902 = vld [vmem:[#allocation2 + $0x60] sm:$0xff]
        %v5903 = vld [vmem:[#allocation2 + $0x68] sm:$0xff]
        %v5904 = vld [vmem:[#allocation2 + $0x70] sm:$0xff]
        %v5905 = vld [vmem:[#allocation2 + $0x78] sm:$0xff]
        %v5906 = vsel %vm952, %v5890, 0.0
        %v5907 = vsel %vm952, %v5891, 0.0
        %v5908 = vadd.f32 %v5906, %v5907
        %v5909 = vrot.slane %v5908, 4
        %v5910 = vadd.f32 %v5908, %v5909
        %v5911 = vrot.slane %v5910, 2
        %v5912 = vadd.f32 %v5910, %v5911
        %v5913 = vrot.slane %v5912, 1
        %v5914 = vadd.f32 %v5912, %v5913
        %v5915 = vsel %vm952, %v5892, 0.0
        %v5916 = vsel %vm952, %v5893, 0.0
        %v5917 = vadd.f32 %v5915, %v5916
        %v5918 = vrot.slane %v5917, 4
        %v5919 = vadd.f32 %v5917, %v5918
        %v5920 = vrot.slane %v5919, 2
        %v5921 = vadd.f32 %v5919, %v5920
        %v5922 = vrot.slane %v5921, 1
        %v5923 = vadd.f32 %v5921, %v5922
        %v5924 = vsel %vm952, %v5894, 0.0
        %v5925 = vsel %vm952, %v5895, 0.0
        %v5926 = vadd.f32 %v5924, %v5925
        %v5927 = vrot.slane %v5926, 4
        %v5928 = vadd.f32 %v5926, %v5927
        %v5929 = vrot.slane %v5928, 2
        %v5930 = vadd.f32 %v5928, %v5929
        %v5931 = vrot.slane %v5930, 1
        %v5932 = vadd.f32 %v5930, %v5931
        %v5933 = vsel %vm952, %v5896, 0.0
        %v5934 = vsel %vm952, %v5897, 0.0
        %v5935 = vadd.f32 %v5933, %v5934
        %v5936 = vrot.slane %v5935, 4
        %v5937 = vadd.f32 %v5935, %v5936
        %v5938 = vrot.slane %v5937, 2
        %v5939 = vadd.f32 %v5937, %v5938
        %v5940 = vrot.slane %v5939, 1
        %v5941 = vadd.f32 %v5939, %v5940
        %v5942 = vsel %vm952, %v5898, 0.0
        %v5943 = vsel %vm952, %v5899, 0.0
        %v5944 = vadd.f32 %v5942, %v5943
        %v5945 = vrot.slane %v5944, 4
        %v5946 = vadd.f32 %v5944, %v5945
        %v5947 = vrot.slane %v5946, 2
        %v5948 = vadd.f32 %v5946, %v5947
        %v5949 = vrot.slane %v5948, 1
        %v5950 = vadd.f32 %v5948, %v5949
        %v5951 = vsel %vm952, %v5900, 0.0
        %v5952 = vsel %vm952, %v5901, 0.0
        %v5953 = vadd.f32 %v5951, %v5952
        %v5954 = vrot.slane %v5953, 4
        %v5955 = vadd.f32 %v5953, %v5954
        %v5956 = vrot.slane %v5955, 2
        %v5957 = vadd.f32 %v5955, %v5956
        %v5958 = vrot.slane %v5957, 1
        %v5959 = vadd.f32 %v5957, %v5958
        %v5960 = vsel %vm952, %v5902, 0.0
        %v5961 = vsel %vm952, %v5903, 0.0
        %v5962 = vadd.f32 %v5960, %v5961
        %v5963 = vrot.slane %v5962, 4
        %v5964 = vadd.f32 %v5962, %v5963
        %v5965 = vrot.slane %v5964, 2
        %v5966 = vadd.f32 %v5964, %v5965
        %v5967 = vrot.slane %v5966, 1
        %v5968 = vadd.f32 %v5966, %v5967
        %v5969 = vsel %vm952, %v5904, 0.0
        %v5970 = vsel %vm952, %v5905, 0.0
        %v5971 = vadd.f32 %v5969, %v5970
        %v5972 = vrot.slane %v5971, 4
        %v5973 = vadd.f32 %v5971, %v5972
        %v5974 = vrot.slane %v5973, 2
        %v5975 = vadd.f32 %v5973, %v5974
        %v5976 = vrot.slane %v5975, 1
        %v5977 = vadd.f32 %v5975, %v5976
        %v5978 = vmul.f32 %v5914, %v1149
        %v5979 = vmul.f32 %v5923, %v1149
        %v5980 = vmul.f32 %v5932, %v1149
        %v5981 = vmul.f32 %v5941, %v1149
        %v5982 = vmul.f32 %v5950, %v1149
        %v5983 = vmul.f32 %v5959, %v1149
        %v5984 = vmul.f32 %v5968, %v1149
        %v5985 = vmul.f32 %v5977, %v1149
        %v5986 = vmul.f32 %v5890, %v5890
        %v5987 = vmul.f32 %v5891, %v5891
        %v5988 = vmul.f32 %v5892, %v5892
        %v5989 = vmul.f32 %v5893, %v5893
        %v5990 = vmul.f32 %v5894, %v5894
        %v5991 = vmul.f32 %v5895, %v5895
        %v5992 = vmul.f32 %v5896, %v5896
        %v5993 = vmul.f32 %v5897, %v5897
        %v5994 = vmul.f32 %v5898, %v5898
        %v5995 = vmul.f32 %v5899, %v5899
        %v5996 = vmul.f32 %v5900, %v5900
        %v5997 = vmul.f32 %v5901, %v5901
        %v5998 = vmul.f32 %v5902, %v5902
        %v5999 = vmul.f32 %v5903, %v5903
        %v6000 = vmul.f32 %v5904, %v5904
        %v6001 = vmul.f32 %v5905, %v5905
        %v6002 = vsel %vm952, %v5986, 0.0
        %v6003 = vsel %vm952, %v5987, 0.0
        %v6004 = vadd.f32 %v6002, %v6003
        %v6005 = vrot.slane %v6004, 4
        %v6006 = vadd.f32 %v6004, %v6005
        %v6007 = vrot.slane %v6006, 2
        %v6008 = vadd.f32 %v6006, %v6007
        %v6009 = vrot.slane %v6008, 1
        %v6010 = vadd.f32 %v6008, %v6009
        %v6011 = vsel %vm952, %v5988, 0.0
        %v6012 = vsel %vm952, %v5989, 0.0
        %v6013 = vadd.f32 %v6011, %v6012
        %v6014 = vrot.slane %v6013, 4
        %v6015 = vadd.f32 %v6013, %v6014
        %v6016 = vrot.slane %v6015, 2
        %v6017 = vadd.f32 %v6015, %v6016
        %v6018 = vrot.slane %v6017, 1
        %v6019 = vadd.f32 %v6017, %v6018
        %v6020 = vsel %vm952, %v5990, 0.0
        %v6021 = vsel %vm952, %v5991, 0.0
        %v6022 = vadd.f32 %v6020, %v6021
        %v6023 = vrot.slane %v6022, 4
        %v6024 = vadd.f32 %v6022, %v6023
        %v6025 = vrot.slane %v6024, 2
        %v6026 = vadd.f32 %v6024, %v6025
        %v6027 = vrot.slane %v6026, 1
        %v6028 = vadd.f32 %v6026, %v6027
        %v6029 = vsel %vm952, %v5992, 0.0
        %v6030 = vsel %vm952, %v5993, 0.0
        %v6031 = vadd.f32 %v6029, %v6030
        %v6032 = vrot.slane %v6031, 4
        %v6033 = vadd.f32 %v6031, %v6032
        %v6034 = vrot.slane %v6033, 2
        %v6035 = vadd.f32 %v6033, %v6034
        %v6036 = vrot.slane %v6035, 1
        %v6037 = vadd.f32 %v6035, %v6036
        %v6038 = vsel %vm952, %v5994, 0.0
        %v6039 = vsel %vm952, %v5995, 0.0
        %v6040 = vadd.f32 %v6038, %v6039
        %v6041 = vrot.slane %v6040, 4
        %v6042 = vadd.f32 %v6040, %v6041
        %v6043 = vrot.slane %v6042, 2
        %v6044 = vadd.f32 %v6042, %v6043
        %v6045 = vrot.slane %v6044, 1
        %v6046 = vadd.f32 %v6044, %v6045
        %v6047 = vsel %vm952, %v5996, 0.0
        %v6048 = vsel %vm952, %v5997, 0.0
        %v6049 = vadd.f32 %v6047, %v6048
        %v6050 = vrot.slane %v6049, 4
        %v6051 = vadd.f32 %v6049, %v6050
        %v6052 = vrot.slane %v6051, 2
        %v6053 = vadd.f32 %v6051, %v6052
        %v6054 = vrot.slane %v6053, 1
        %v6055 = vadd.f32 %v6053, %v6054
        %v6056 = vsel %vm952, %v5998, 0.0
        %v6057 = vsel %vm952, %v5999, 0.0
        %v6058 = vadd.f32 %v6056, %v6057
        %v6059 = vrot.slane %v6058, 4
        %v6060 = vadd.f32 %v6058, %v6059
        %v6061 = vrot.slane %v6060, 2
        %v6062 = vadd.f32 %v6060, %v6061
        %v6063 = vrot.slane %v6062, 1
        %v6064 = vadd.f32 %v6062, %v6063
        %v6065 = vsel %vm952, %v6000, 0.0
        %v6066 = vsel %vm952, %v6001, 0.0
        %v6067 = vadd.f32 %v6065, %v6066
        %v6068 = vrot.slane %v6067, 4
        %v6069 = vadd.f32 %v6067, %v6068
        %v6070 = vrot.slane %v6069, 2
        %v6071 = vadd.f32 %v6069, %v6070
        %v6072 = vrot.slane %v6071, 1
        %v6073 = vadd.f32 %v6071, %v6072
        %v6074 = vmul.f32 %v6010, %v1149
        %v6075 = vmul.f32 %v6019, %v1149
        %v6076 = vmul.f32 %v6028, %v1149
        %v6077 = vmul.f32 %v6037, %v1149
        %v6078 = vmul.f32 %v6046, %v1149
        %v6079 = vmul.f32 %v6055, %v1149
        %v6080 = vmul.f32 %v6064, %v1149
        %v6081 = vmul.f32 %v6073, %v1149
        %v6082 = vmul.f32 %v5978, %v5978
        %v6083 = vmul.f32 %v5979, %v5979
        %v6084 = vmul.f32 %v5980, %v5980
        %v6085 = vmul.f32 %v5981, %v5981
        %v6086 = vmul.f32 %v5982, %v5982
        %v6087 = vmul.f32 %v5983, %v5983
        %v6088 = vmul.f32 %v5984, %v5984
        %v6089 = vmul.f32 %v5985, %v5985
        %v6090 = vsub.f32 %v6074, %v6082
        %v6091 = vsub.f32 %v6075, %v6083
        %v6092 = vsub.f32 %v6076, %v6084
        %v6093 = vsub.f32 %v6077, %v6085
        %v6094 = vsub.f32 %v6078, %v6086
        %v6095 = vsub.f32 %v6079, %v6087
        %v6096 = vsub.f32 %v6080, %v6088
        %v6097 = vsub.f32 %v6081, %v6089
        %v6098 = vmax.f32 %v6090, 0.0
        %v6099 = vmax.f32 %v6091, 0.0
        %v6100 = vmax.f32 %v6092, 0.0
        %v6101 = vmax.f32 %v6093, 0.0
        %v6102 = vmax.f32 %v6094, 0.0
        %v6103 = vmax.f32 %v6095, 0.0
        %v6104 = vmax.f32 %v6096, 0.0
        %v6105 = vmax.f32 %v6097, 0.0
        %v6106 = vsub.f32 %v5890, %v5978
        %v6107 = vsub.f32 %v5891, %v5978
        %v6108 = vsub.f32 %v5892, %v5979
        %v6109 = vsub.f32 %v5893, %v5979
        %v6110 = vsub.f32 %v5894, %v5980
        %v6111 = vsub.f32 %v5895, %v5980
        %v6112 = vsub.f32 %v5896, %v5981
        %v6113 = vsub.f32 %v5897, %v5981
        %v6114 = vsub.f32 %v5898, %v5982
        %v6115 = vsub.f32 %v5899, %v5982
        %v6116 = vsub.f32 %v5900, %v5983
        %v6117 = vsub.f32 %v5901, %v5983
        %v6118 = vsub.f32 %v5902, %v5984
        %v6119 = vsub.f32 %v5903, %v5984
        %v6120 = vsub.f32 %v5904, %v5985
        %v6121 = vsub.f32 %v5905, %v5985
        %v6122 = vadd.f32 %v6098, 1e-05
        %v6123 = vadd.f32 %v6099, 1e-05
        %v6124 = vadd.f32 %v6100, 1e-05
        %v6125 = vadd.f32 %v6101, 1e-05
        %v6126 = vadd.f32 %v6102, 1e-05
        %v6127 = vadd.f32 %v6103, 1e-05
        %v6128 = vadd.f32 %v6104, 1e-05
        %v6129 = vadd.f32 %v6105, 1e-05
        %v6130 = vrsqrt.pop %v6122
        %v6131 = vrsqrt.pop %v6123
        %v6132 = vrsqrt.pop %v6124
        %v6133 = vrsqrt.pop %v6125
        %v6134 = vrsqrt.pop %v6126
        %v6135 = vrsqrt.pop %v6127
        %v6136 = vrsqrt.pop %v6128
        %v6137 = vrsqrt.pop %v6129
        %v6138 = vmul.f32 %v6106, %v6130
        %v6139 = vmul.f32 %v6107, %v6130
        %v6140 = vmul.f32 %v6108, %v6131
        %v6141 = vmul.f32 %v6109, %v6131
        %v6142 = vmul.f32 %v6110, %v6132
        %v6143 = vmul.f32 %v6111, %v6132
        %v6144 = vmul.f32 %v6112, %v6133
        %v6145 = vmul.f32 %v6113, %v6133
        %v6146 = vmul.f32 %v6114, %v6134
        %v6147 = vmul.f32 %v6115, %v6134
        %v6148 = vmul.f32 %v6116, %v6135
        %v6149 = vmul.f32 %v6117, %v6135
        %v6150 = vmul.f32 %v6118, %v6136
        %v6151 = vmul.f32 %v6119, %v6136
        %v6152 = vmul.f32 %v6120, %v6137
        %v6153 = vmul.f32 %v6121, %v6137
        %v6154 = vld [vmem:[%s43] sm:$0xff]
        %v6155 = vld [vmem:[%s43 + $0x8] sm:$0xff]
        %6157 = vset.pattern.permute.xlu0 0
        %6158 = vperm.xlu0 %6157, %v6154
        %v6159 = vpop.permute.xlu0 %6158
        %6162 = vset.pattern.permute.xlu0 0
        %6163 = vperm.xlu0 %6162, %v6155
        %v6164 = vpop.permute.xlu0 %6163
        %v6166 = vmul.f32 %v6138, %v6159
        %v6167 = vmul.f32 %v6139, %v6164
        %v6168 = vmul.f32 %v6140, %v6159
        %v6169 = vmul.f32 %v6141, %v6164
        %v6170 = vmul.f32 %v6142, %v6159
        %v6171 = vmul.f32 %v6143, %v6164
        %v6172 = vmul.f32 %v6144, %v6159
        %v6173 = vmul.f32 %v6145, %v6164
        %v6174 = vmul.f32 %v6146, %v6159
        %v6175 = vmul.f32 %v6147, %v6164
        %v6176 = vmul.f32 %v6148, %v6159
        %v6177 = vmul.f32 %v6149, %v6164
        %v6178 = vmul.f32 %v6150, %v6159
        %v6179 = vmul.f32 %v6151, %v6164
        %v6180 = vmul.f32 %v6152, %v6159
        %v6181 = vmul.f32 %v6153, %v6164
        %v6182 = vld [vmem:[%s45] sm:$0xff]
        %v6183 = vld [vmem:[%s45 + $0x8] sm:$0xff]
        %6185 = vset.pattern.permute.xlu0 0
        %6186 = vperm.xlu0 %6185, %v6182
        %v6187 = vpop.permute.xlu0 %6186
        %6190 = vset.pattern.permute.xlu0 0
        %6191 = vperm.xlu0 %6190, %v6183
        %v6192 = vpop.permute.xlu0 %6191
        %v6194 = vadd.f32 %v6166, %v6187
        %v6195 = vadd.f32 %v6167, %v6192
        %v6196 = vadd.f32 %v6168, %v6187
        %v6197 = vadd.f32 %v6169, %v6192
        %v6198 = vadd.f32 %v6170, %v6187
        %v6199 = vadd.f32 %v6171, %v6192
        %v6200 = vadd.f32 %v6172, %v6187
        %v6201 = vadd.f32 %v6173, %v6192
        %v6202 = vadd.f32 %v6174, %v6187
        %v6203 = vadd.f32 %v6175, %v6192
        %v6204 = vadd.f32 %v6176, %v6187
        %v6205 = vadd.f32 %v6177, %v6192
        %v6206 = vadd.f32 %v6178, %v6187
        %v6207 = vadd.f32 %v6179, %v6192
        %v6208 = vadd.f32 %v6180, %v6187
        %v6209 = vadd.f32 %v6181, %v6192
        %v6210 = vpack.c.bf16 %v6195, %v6194
        %v6211 = vpack.c.bf16 %v6197, %v6196
        %v6212 = vpack.c.bf16 %v6199, %v6198
        %v6213 = vpack.c.bf16 %v6201, %v6200
        %v6214 = vpack.c.bf16 %v6203, %v6202
        %v6215 = vpack.c.bf16 %v6205, %v6204
        %v6216 = vpack.c.bf16 %v6207, %v6206
        %v6217 = vpack.c.bf16 %v6209, %v6208
        %v6218 = vld [vmem:[%s47] sm:$0xf]
        %v6219 = vld [vmem:[%s47 + $0x4] sm:$0xf]
        %v6220 = vld [vmem:[%s49] sm:$0x1]
        %v6222 = vlaneseq
        %v6223 = vshrl.u32 %v6222, 7
        %v6224 = vsub.s32 0, %v6223
        %v6225 = vrot.slane %v6220, %v6224
        %v6229 = vunpack.c.l.b16 %v6218
        %v6230 = vunpack.c.l.b16 %v6219
        %v6231 = vpack.c.b16 %v6230, %v6229
        %v6234 = vsel %vm952, %v6210, 0
        %v6237 = vsel %vm952, %v6211, 0
        %v6240 = vsel %vm952, %v6212, 0
        %v6243 = vsel %vm952, %v6213, 0
        %v6246 = vsel %vm952, %v6214, 0
        %v6249 = vsel %vm952, %v6215, 0
        %v6252 = vsel %vm952, %v6216, 0
        %v6255 = vsel %vm952, %v6217, 0
        %6257 = vmatprep.subr.bf16.mxu0 0
        %6258 = vmatpush1.bf16.msra.mxu0 %v6231
        %6259 = vmatprep.subr.bf16.mxu0 0
        %6260 = vmatpush1.bf16.msra.mxu0 0
        %6261 = vmatprep.subr.bf16.mxu0 0
        %6262 = vmatpush1.bf16.msra.mxu0 0
        %6263 = vmatprep.subr.bf16.mxu0 0
        %6264 = vmatpush1.bf16.msra.mxu0 0
        %6265 = vmatprep.subr.bf16.mxu0 0
        %6266 = vmatpush1.bf16.msra.mxu0 0
        %6267 = vmatprep.subr.bf16.mxu0 0
        %6268 = vmatpush1.bf16.msra.mxu0 0
        %6269 = vmatprep.subr.bf16.mxu0 0
        %6270 = vmatpush1.bf16.msra.mxu0 0
        %6271 = vmatprep.subr.bf16.mxu0 0
        %6272 = vmatpush1.bf16.msra.mxu0 0
        %6273 = vmatprep.subr.bf16.mxu0 0
        %6274 = vmatpush1.bf16.msra.mxu0 0
        %6275 = vmatprep.subr.bf16.mxu0 0
        %6276 = vmatpush1.bf16.msra.mxu0 0
        %6277 = vmatprep.subr.bf16.mxu0 0
        %6278 = vmatpush1.bf16.msra.mxu0 0
        %6279 = vmatprep.subr.bf16.mxu0 0
        %6280 = vmatpush1.bf16.msra.mxu0 0
        %6281 = vmatprep.subr.bf16.mxu0 0
        %6282 = vmatpush1.bf16.msra.mxu0 0
        %6283 = vmatprep.subr.bf16.mxu0 0
        %6284 = vmatpush1.bf16.msra.mxu0 0
        %6285 = vmatprep.subr.bf16.mxu0 0
        %6286 = vmatpush1.bf16.msra.mxu0 0
        %6287 = vmatprep.subr.bf16.mxu0 0
        %6288 = vmatpush1.bf16.msra.mxu0 0
        %6289 = vmatprep.mubr.bf16.mxu0 0
        %6290 = vmatmul.mubr.bf16.gmra.mrb[0].mxu0 %v6234
        %v6291 = vpop.f32.mrb[0].mxu0
        %v6292 = vadd.f32 %v6225, %v6291
        %v6293 = vpop.f32.mrb[0].mxu0
        %v6294 = vpop.f32.mrb[0].mxu0
        %v6295 = vadd.f32 %v6225, %v6294
        %v6296 = vpop.f32.mrb[0].mxu0
        %6297 = vmatprep.mubr.bf16.mxu0 0
        %6298 = vmatmul.mubr.bf16.gmra.mrb[0].mxu0 %v6237
        %v6299 = vpop.f32.mrb[0].mxu0
        %v6300 = vadd.f32 %v6225, %v6299
        %v6301 = vpop.f32.mrb[0].mxu0
        %v6302 = vpop.f32.mrb[0].mxu0
        %v6303 = vadd.f32 %v6225, %v6302
        %v6304 = vpop.f32.mrb[0].mxu0
        %6305 = vmatprep.mubr.bf16.mxu0 0
        %6306 = vmatmul.mubr.bf16.gmra.mrb[0].mxu0 %v6240
        %v6307 = vpop.f32.mrb[0].mxu0
        %v6308 = vadd.f32 %v6225, %v6307
        %v6309 = vpop.f32.mrb[0].mxu0
        %v6310 = vpop.f32.mrb[0].mxu0
        %v6311 = vadd.f32 %v6225, %v6310
        %v6312 = vpop.f32.mrb[0].mxu0
        %6313 = vmatprep.mubr.bf16.mxu0 0
        %6314 = vmatmul.mubr.bf16.gmra.mrb[0].mxu0 %v6243
        %v6315 = vpop.f32.mrb[0].mxu0
        %v6316 = vadd.f32 %v6225, %v6315
        %v6317 = vpop.f32.mrb[0].mxu0
        %v6318 = vpop.f32.mrb[0].mxu0
        %v6319 = vadd.f32 %v6225, %v6318
        %v6320 = vpop.f32.mrb[0].mxu0
        %6321 = vmatprep.mubr.bf16.mxu0 0
        %6322 = vmatmul.mubr.bf16.gmra.mrb[0].mxu0 %v6246
        %v6323 = vpop.f32.mrb[0].mxu0
        %v6324 = vadd.f32 %v6225, %v6323
        %v6325 = vpop.f32.mrb[0].mxu0
        %v6326 = vpop.f32.mrb[0].mxu0
        %v6327 = vadd.f32 %v6225, %v6326
        %v6328 = vpop.f32.mrb[0].mxu0
        %6329 = vmatprep.mubr.bf16.mxu0 0
        %6330 = vmatmul.mubr.bf16.gmra.mrb[0].mxu0 %v6249
        %v6331 = vpop.f32.mrb[0].mxu0
        %v6332 = vadd.f32 %v6225, %v6331
        %v6333 = vpop.f32.mrb[0].mxu0
        %v6334 = vpop.f32.mrb[0].mxu0
        %v6335 = vadd.f32 %v6225, %v6334
        %v6336 = vpop.f32.mrb[0].mxu0
        %6337 = vmatprep.mubr.bf16.mxu0 0
        %6338 = vmatmul.mubr.bf16.gmra.mrb[0].mxu0 %v6252
        %v6339 = vpop.f32.mrb[0].mxu0
        %v6340 = vadd.f32 %v6225, %v6339
        %v6341 = vpop.f32.mrb[0].mxu0
        %v6342 = vpop.f32.mrb[0].mxu0
        %v6343 = vadd.f32 %v6225, %v6342
        %v6344 = vpop.f32.mrb[0].mxu0
        %6345 = vmatprep.mubr.bf16.mxu0 0
        %6346 = vmatmul.mubr.bf16.gmra.mrb[0].mxu0 %v6255
        %v6347 = vpop.f32.mrb[0].mxu0
        %v6348 = vadd.f32 %v6225, %v6347
        %v6349 = vpop.f32.mrb[0].mxu0
        %v6350 = vpop.f32.mrb[0].mxu0
        %v6351 = vadd.f32 %v6225, %v6350
        %v6352 = vpop.f32.mrb[0].mxu0
        %6353 = vdwg.mxu0
        %s6354 = scalar_lea.vmem [#allocation5], 24
        %6355 = vst [vmem:[%s6354 + $0x1] sm:$0xff] %v6292
        %6356 = vst [vmem:[%s6354 + $0x9] sm:$0xff] %v6295
        %6357 = vst [vmem:[%s6354 + $0x19] sm:$0xff] %v6300
        %6358 = vst [vmem:[%s6354 + $0x21] sm:$0xff] %v6303
        %6359 = vst [vmem:[%s6354 + $0x31] sm:$0xff] %v6308
        %6360 = vst [vmem:[%s6354 + $0x39] sm:$0xff] %v6311
        %6361 = vst [vmem:[%s6354 + $0x49] sm:$0xff] %v6316
        %6362 = vst [vmem:[%s6354 + $0x51] sm:$0xff] %v6319
        %6363 = vst [vmem:[%s6354 + $0x61] sm:$0xff] %v6324
        %6364 = vst [vmem:[%s6354 + $0x69] sm:$0xff] %v6327
        %6365 = vst [vmem:[%s6354 + $0x79] sm:$0xff] %v6332
        %6366 = vst [vmem:[%s6354 + $0x81] sm:$0xff] %v6335
        %6367 = vst [vmem:[%s6354 + $0x91] sm:$0xff] %v6340
        %6368 = vst [vmem:[%s6354 + $0x99] sm:$0xff] %v6343
        %6369 = vst [vmem:[%s6354 + $0xa9] sm:$0xff] %v6348
        %6370 = vst [vmem:[%s6354 + $0xb1] sm:$0xff] %v6351
        %v6371 = vld [vmem:[#allocation5] sm:$0xff]
        %v6372 = vld [vmem:[#allocation5 + $0x8] sm:$0xff]
        %v6373 = vld [vmem:[#allocation5 + $0x18] sm:$0xff]
        %v6374 = vld [vmem:[#allocation5 + $0x20] sm:$0xff]
        %v6375 = vld [vmem:[#allocation5 + $0x30] sm:$0xff]
        %v6376 = vld [vmem:[#allocation5 + $0x38] sm:$0xff]
        %v6377 = vld [vmem:[#allocation5 + $0x48] sm:$0xff]
        %v6378 = vld [vmem:[#allocation5 + $0x50] sm:$0xff]
        %v6379 = vld [vmem:[#allocation5 + $0x60] sm:$0xff]
        %v6380 = vld [vmem:[#allocation5 + $0x68] sm:$0xff]
        %v6381 = vld [vmem:[#allocation5 + $0x78] sm:$0xff]
        %v6382 = vld [vmem:[#allocation5 + $0x80] sm:$0xff]
        %v6383 = vld [vmem:[#allocation5 + $0x90] sm:$0xff]
        %v6384 = vld [vmem:[#allocation5 + $0x98] sm:$0xff]
        %v6385 = vld [vmem:[#allocation5 + $0xa8] sm:$0xff]
        %v6386 = vld [vmem:[#allocation5 + $0xb0] sm:$0xff]
        %v6387 = vld [vmem:[%s51] sm:$0x1]
        %v6388 = vlaneseq
        %v6389 = vshrl.u32 %v6388, 7
        %v6390 = vsub.s32 0, %v6389
        %v6391 = vrot.slane %v6387, %v6390
        %v6392 = vmul.f32 %v6371, %v6391
        %v6393 = vmul.f32 %v6372, %v6391
        %v6394 = vmul.f32 %v6373, %v6391
        %v6395 = vmul.f32 %v6374, %v6391
        %v6396 = vmul.f32 %v6375, %v6391
        %v6397 = vmul.f32 %v6376, %v6391
        %v6398 = vmul.f32 %v6377, %v6391
        %v6399 = vmul.f32 %v6378, %v6391
        %v6400 = vmul.f32 %v6379, %v6391
        %v6401 = vmul.f32 %v6380, %v6391
        %v6402 = vmul.f32 %v6381, %v6391
        %v6403 = vmul.f32 %v6382, %v6391
        %v6404 = vmul.f32 %v6383, %v6391
        %v6405 = vmul.f32 %v6384, %v6391
        %v6406 = vmul.f32 %v6385, %v6391
        %v6407 = vmul.f32 %v6386, %v6391
        %v6408 = vadd.f32 %v6392, 0.0
        %v6409 = vadd.f32 %v6393, 0.0
        %v6410 = vadd.f32 %v6394, 0.0
        %v6411 = vadd.f32 %v6395, 0.0
        %v6412 = vadd.f32 %v6396, 0.0
        %v6413 = vadd.f32 %v6397, 0.0
        %v6414 = vadd.f32 %v6398, 0.0
        %v6415 = vadd.f32 %v6399, 0.0
        %v6416 = vadd.f32 %v6400, 0.0
        %v6417 = vadd.f32 %v6401, 0.0
        %v6418 = vadd.f32 %v6402, 0.0
        %v6419 = vadd.f32 %v6403, 0.0
        %v6420 = vadd.f32 %v6404, 0.0
        %v6421 = vadd.f32 %v6405, 0.0
        %v6422 = vadd.f32 %v6406, 0.0
        %v6423 = vadd.f32 %v6407, 0.0
        %v6424 = vld [vmem:[#allocation5 + $0x1] sm:$0xff]
        %v6425 = vld [vmem:[#allocation5 + $0x9] sm:$0xff]
        %v6426 = vld [vmem:[#allocation5 + $0x19] sm:$0xff]
        %v6427 = vld [vmem:[#allocation5 + $0x21] sm:$0xff]
        %v6428 = vld [vmem:[#allocation5 + $0x31] sm:$0xff]
        %v6429 = vld [vmem:[#allocation5 + $0x39] sm:$0xff]
        %v6430 = vld [vmem:[#allocation5 + $0x49] sm:$0xff]
        %v6431 = vld [vmem:[#allocation5 + $0x51] sm:$0xff]
        %v6432 = vld [vmem:[#allocation5 + $0x61] sm:$0xff]
        %v6433 = vld [vmem:[#allocation5 + $0x69] sm:$0xff]
        %v6434 = vld [vmem:[#allocation5 + $0x79] sm:$0xff]
        %v6435 = vld [vmem:[#allocation5 + $0x81] sm:$0xff]
        %v6436 = vld [vmem:[#allocation5 + $0x91] sm:$0xff]
        %v6437 = vld [vmem:[#allocation5 + $0x99] sm:$0xff]
        %v6438 = vld [vmem:[#allocation5 + $0xa9] sm:$0xff]
        %v6439 = vld [vmem:[#allocation5 + $0xb1] sm:$0xff]
        %v6440 = vld [vmem:[%s51 + $0x1] sm:$0x1]
        %v6441 = vlaneseq
        %v6442 = vshrl.u32 %v6441, 7
        %v6443 = vsub.s32 0, %v6442
        %v6444 = vrot.slane %v6440, %v6443
        %v6445 = vmul.f32 %v6424, %v6444
        %v6446 = vmul.f32 %v6425, %v6444
        %v6447 = vmul.f32 %v6426, %v6444
        %v6448 = vmul.f32 %v6427, %v6444
        %v6449 = vmul.f32 %v6428, %v6444
        %v6450 = vmul.f32 %v6429, %v6444
        %v6451 = vmul.f32 %v6430, %v6444
        %v6452 = vmul.f32 %v6431, %v6444
        %v6453 = vmul.f32 %v6432, %v6444
        %v6454 = vmul.f32 %v6433, %v6444
        %v6455 = vmul.f32 %v6434, %v6444
        %v6456 = vmul.f32 %v6435, %v6444
        %v6457 = vmul.f32 %v6436, %v6444
        %v6458 = vmul.f32 %v6437, %v6444
        %v6459 = vmul.f32 %v6438, %v6444
        %v6460 = vmul.f32 %v6439, %v6444
        %v6461 = vadd.f32 %v6408, %v6445
        %v6462 = vadd.f32 %v6409, %v6446
        %v6463 = vadd.f32 %v6410, %v6447
        %v6464 = vadd.f32 %v6411, %v6448
        %v6465 = vadd.f32 %v6412, %v6449
        %v6466 = vadd.f32 %v6413, %v6450
        %v6467 = vadd.f32 %v6414, %v6451
        %v6468 = vadd.f32 %v6415, %v6452
        %v6469 = vadd.f32 %v6416, %v6453
        %v6470 = vadd.f32 %v6417, %v6454
        %v6471 = vadd.f32 %v6418, %v6455
        %v6472 = vadd.f32 %v6419, %v6456
        %v6473 = vadd.f32 %v6420, %v6457
        %v6474 = vadd.f32 %v6421, %v6458
        %v6475 = vadd.f32 %v6422, %v6459
        %v6476 = vadd.f32 %v6423, %v6460
        %v6477 = vld [vmem:[#allocation5 + $0x2] sm:$0xff]
        %v6478 = vld [vmem:[#allocation5 + $0xa] sm:$0xff]
        %v6479 = vld [vmem:[#allocation5 + $0x1a] sm:$0xff]
        %v6480 = vld [vmem:[#allocation5 + $0x22] sm:$0xff]
        %v6481 = vld [vmem:[#allocation5 + $0x32] sm:$0xff]
        %v6482 = vld [vmem:[#allocation5 + $0x3a] sm:$0xff]
        %v6483 = vld [vmem:[#allocation5 + $0x4a] sm:$0xff]
        %v6484 = vld [vmem:[#allocation5 + $0x52] sm:$0xff]
        %v6485 = vld [vmem:[#allocation5 + $0x62] sm:$0xff]
        %v6486 = vld [vmem:[#allocation5 + $0x6a] sm:$0xff]
        %v6487 = vld [vmem:[#allocation5 + $0x7a] sm:$0xff]
        %v6488 = vld [vmem:[#allocation5 + $0x82] sm:$0xff]
        %v6489 = vld [vmem:[#allocation5 + $0x92] sm:$0xff]
        %v6490 = vld [vmem:[#allocation5 + $0x9a] sm:$0xff]
        %v6491 = vld [vmem:[#allocation5 + $0xaa] sm:$0xff]
        %v6492 = vld [vmem:[#allocation5 + $0xb2] sm:$0xff]
        %v6493 = vld [vmem:[%s51 + $0x2] sm:$0x1]
        %v6494 = vlaneseq
        %v6495 = vshrl.u32 %v6494, 7
        %v6496 = vsub.s32 0, %v6495
        %v6497 = vrot.slane %v6493, %v6496
        %v6498 = vmul.f32 %v6477, %v6497
        %v6499 = vmul.f32 %v6478, %v6497
        %v6500 = vmul.f32 %v6479, %v6497
        %v6501 = vmul.f32 %v6480, %v6497
        %v6502 = vmul.f32 %v6481, %v6497
        %v6503 = vmul.f32 %v6482, %v6497
        %v6504 = vmul.f32 %v6483, %v6497
        %v6505 = vmul.f32 %v6484, %v6497
        %v6506 = vmul.f32 %v6485, %v6497
        %v6507 = vmul.f32 %v6486, %v6497
        %v6508 = vmul.f32 %v6487, %v6497
        %v6509 = vmul.f32 %v6488, %v6497
        %v6510 = vmul.f32 %v6489, %v6497
        %v6511 = vmul.f32 %v6490, %v6497
        %v6512 = vmul.f32 %v6491, %v6497
        %v6513 = vmul.f32 %v6492, %v6497
        %v6514 = vadd.f32 %v6461, %v6498
        %v6515 = vadd.f32 %v6462, %v6499
        %v6516 = vadd.f32 %v6463, %v6500
        %v6517 = vadd.f32 %v6464, %v6501
        %v6518 = vadd.f32 %v6465, %v6502
        %v6519 = vadd.f32 %v6466, %v6503
        %v6520 = vadd.f32 %v6467, %v6504
        %v6521 = vadd.f32 %v6468, %v6505
        %v6522 = vadd.f32 %v6469, %v6506
        %v6523 = vadd.f32 %v6470, %v6507
        %v6524 = vadd.f32 %v6471, %v6508
        %v6525 = vadd.f32 %v6472, %v6509
        %v6526 = vadd.f32 %v6473, %v6510
        %v6527 = vadd.f32 %v6474, %v6511
        %v6528 = vadd.f32 %v6475, %v6512
        %v6529 = vadd.f32 %v6476, %v6513
        %v6530 = vld [vmem:[%s6354] sm:$0xff]
        %v6531 = vld [vmem:[%s6354 + $0x8] sm:$0xff]
        %v6532 = vld [vmem:[%s6354 + $0x18] sm:$0xff]
        %v6533 = vld [vmem:[%s6354 + $0x20] sm:$0xff]
        %v6534 = vld [vmem:[%s6354 + $0x30] sm:$0xff]
        %v6535 = vld [vmem:[%s6354 + $0x38] sm:$0xff]
        %v6536 = vld [vmem:[%s6354 + $0x48] sm:$0xff]
        %v6537 = vld [vmem:[%s6354 + $0x50] sm:$0xff]
        %v6538 = vld [vmem:[%s6354 + $0x60] sm:$0xff]
        %v6539 = vld [vmem:[%s6354 + $0x68] sm:$0xff]
        %v6540 = vld [vmem:[%s6354 + $0x78] sm:$0xff]
        %v6541 = vld [vmem:[%s6354 + $0x80] sm:$0xff]
        %v6542 = vld [vmem:[%s6354 + $0x90] sm:$0xff]
        %v6543 = vld [vmem:[%s6354 + $0x98] sm:$0xff]
        %v6544 = vld [vmem:[%s6354 + $0xa8] sm:$0xff]
        %v6545 = vld [vmem:[%s6354 + $0xb0] sm:$0xff]
        %v6546 = vld [vmem:[%s51 + $0x3] sm:$0x1]
        %v6547 = vlaneseq
        %v6548 = vshrl.u32 %v6547, 7
        %v6549 = vsub.s32 0, %v6548
        %v6550 = vrot.slane %v6546, %v6549
        %v6551 = vmul.f32 %v6530, %v6550
        %v6552 = vmul.f32 %v6531, %v6550
        %v6553 = vmul.f32 %v6532, %v6550
        %v6554 = vmul.f32 %v6533, %v6550
        %v6555 = vmul.f32 %v6534, %v6550
        %v6556 = vmul.f32 %v6535, %v6550
        %v6557 = vmul.f32 %v6536, %v6550
        %v6558 = vmul.f32 %v6537, %v6550
        %v6559 = vmul.f32 %v6538, %v6550
        %v6560 = vmul.f32 %v6539, %v6550
        %v6561 = vmul.f32 %v6540, %v6550
        %v6562 = vmul.f32 %v6541, %v6550
        %v6563 = vmul.f32 %v6542, %v6550
        %v6564 = vmul.f32 %v6543, %v6550
        %v6565 = vmul.f32 %v6544, %v6550
        %v6566 = vmul.f32 %v6545, %v6550
        %v6567 = vadd.f32 %v6514, %v6551
        %v6568 = vadd.f32 %v6515, %v6552
        %v6569 = vadd.f32 %v6516, %v6553
        %v6570 = vadd.f32 %v6517, %v6554
        %v6571 = vadd.f32 %v6518, %v6555
        %v6572 = vadd.f32 %v6519, %v6556
        %v6573 = vadd.f32 %v6520, %v6557
        %v6574 = vadd.f32 %v6521, %v6558
        %v6575 = vadd.f32 %v6522, %v6559
        %v6576 = vadd.f32 %v6523, %v6560
        %v6577 = vadd.f32 %v6524, %v6561
        %v6578 = vadd.f32 %v6525, %v6562
        %v6579 = vadd.f32 %v6526, %v6563
        %v6580 = vadd.f32 %v6527, %v6564
        %v6581 = vadd.f32 %v6528, %v6565
        %v6582 = vadd.f32 %v6529, %v6566
        %v6583 = vld [vmem:[%s6354 + $0x1] sm:$0xff]
        %v6584 = vld [vmem:[%s6354 + $0x9] sm:$0xff]
        %v6585 = vld [vmem:[%s6354 + $0x19] sm:$0xff]
        %v6586 = vld [vmem:[%s6354 + $0x21] sm:$0xff]
        %v6587 = vld [vmem:[%s6354 + $0x31] sm:$0xff]
        %v6588 = vld [vmem:[%s6354 + $0x39] sm:$0xff]
        %v6589 = vld [vmem:[%s6354 + $0x49] sm:$0xff]
        %v6590 = vld [vmem:[%s6354 + $0x51] sm:$0xff]
        %v6591 = vld [vmem:[%s6354 + $0x61] sm:$0xff]
        %v6592 = vld [vmem:[%s6354 + $0x69] sm:$0xff]
        %v6593 = vld [vmem:[%s6354 + $0x79] sm:$0xff]
        %v6594 = vld [vmem:[%s6354 + $0x81] sm:$0xff]
        %v6595 = vld [vmem:[%s6354 + $0x91] sm:$0xff]
        %v6596 = vld [vmem:[%s6354 + $0x99] sm:$0xff]
        %v6597 = vld [vmem:[%s6354 + $0xa9] sm:$0xff]
        %v6598 = vld [vmem:[%s6354 + $0xb1] sm:$0xff]
        %v6599 = vld [vmem:[%s51 + $0x4] sm:$0x1]
        %v6600 = vlaneseq
        %v6601 = vshrl.u32 %v6600, 7
        %v6602 = vsub.s32 0, %v6601
        %v6603 = vrot.slane %v6599, %v6602
        %v6604 = vmul.f32 %v6583, %v6603
        %v6605 = vmul.f32 %v6584, %v6603
        %v6606 = vmul.f32 %v6585, %v6603
        %v6607 = vmul.f32 %v6586, %v6603
        %v6608 = vmul.f32 %v6587, %v6603
        %v6609 = vmul.f32 %v6588, %v6603
        %v6610 = vmul.f32 %v6589, %v6603
        %v6611 = vmul.f32 %v6590, %v6603
        %v6612 = vmul.f32 %v6591, %v6603
        %v6613 = vmul.f32 %v6592, %v6603
        %v6614 = vmul.f32 %v6593, %v6603
        %v6615 = vmul.f32 %v6594, %v6603
        %v6616 = vmul.f32 %v6595, %v6603
        %v6617 = vmul.f32 %v6596, %v6603
        %v6618 = vmul.f32 %v6597, %v6603
        %v6619 = vmul.f32 %v6598, %v6603
        %v6620 = vadd.f32 %v6567, %v6604
        %v6621 = vadd.f32 %v6568, %v6605
        %v6622 = vadd.f32 %v6569, %v6606
        %v6623 = vadd.f32 %v6570, %v6607
        %v6624 = vadd.f32 %v6571, %v6608
        %v6625 = vadd.f32 %v6572, %v6609
        %v6626 = vadd.f32 %v6573, %v6610
        %v6627 = vadd.f32 %v6574, %v6611
        %v6628 = vadd.f32 %v6575, %v6612
        %v6629 = vadd.f32 %v6576, %v6613
        %v6630 = vadd.f32 %v6577, %v6614
        %v6631 = vadd.f32 %v6578, %v6615
        %v6632 = vadd.f32 %v6579, %v6616
        %v6633 = vadd.f32 %v6580, %v6617
        %v6634 = vadd.f32 %v6581, %v6618
        %v6635 = vadd.f32 %v6582, %v6619
        %v6636 = vld [vmem:[%s6354 + $0x2] sm:$0xff]
        %v6637 = vld [vmem:[%s6354 + $0xa] sm:$0xff]
        %v6638 = vld [vmem:[%s6354 + $0x1a] sm:$0xff]
        %v6639 = vld [vmem:[%s6354 + $0x22] sm:$0xff]
        %v6640 = vld [vmem:[%s6354 + $0x32] sm:$0xff]
        %v6641 = vld [vmem:[%s6354 + $0x3a] sm:$0xff]
        %v6642 = vld [vmem:[%s6354 + $0x4a] sm:$0xff]
        %v6643 = vld [vmem:[%s6354 + $0x52] sm:$0xff]
        %v6644 = vld [vmem:[%s6354 + $0x62] sm:$0xff]
        %v6645 = vld [vmem:[%s6354 + $0x6a] sm:$0xff]
        %v6646 = vld [vmem:[%s6354 + $0x7a] sm:$0xff]
        %v6647 = vld [vmem:[%s6354 + $0x82] sm:$0xff]
        %v6648 = vld [vmem:[%s6354 + $0x92] sm:$0xff]
        %v6649 = vld [vmem:[%s6354 + $0x9a] sm:$0xff]
        %v6650 = vld [vmem:[%s6354 + $0xaa] sm:$0xff]
        %v6651 = vld [vmem:[%s6354 + $0xb2] sm:$0xff]
        %v6652 = vld [vmem:[%s51 + $0x5] sm:$0x1]
        %v6653 = vlaneseq
        %v6654 = vshrl.u32 %v6653, 7
        %v6655 = vsub.s32 0, %v6654
        %v6656 = vrot.slane %v6652, %v6655
        %v6657 = vmul.f32 %v6636, %v6656
        %v6658 = vmul.f32 %v6637, %v6656
        %v6659 = vmul.f32 %v6638, %v6656
        %v6660 = vmul.f32 %v6639, %v6656
        %v6661 = vmul.f32 %v6640, %v6656
        %v6662 = vmul.f32 %v6641, %v6656
        %v6663 = vmul.f32 %v6642, %v6656
        %v6664 = vmul.f32 %v6643, %v6656
        %v6665 = vmul.f32 %v6644, %v6656
        %v6666 = vmul.f32 %v6645, %v6656
        %v6667 = vmul.f32 %v6646, %v6656
        %v6668 = vmul.f32 %v6647, %v6656
        %v6669 = vmul.f32 %v6648, %v6656
        %v6670 = vmul.f32 %v6649, %v6656
        %v6671 = vmul.f32 %v6650, %v6656
        %v6672 = vmul.f32 %v6651, %v6656
        %v6673 = vadd.f32 %v6620, %v6657
        %v6674 = vadd.f32 %v6621, %v6658
        %v6675 = vadd.f32 %v6622, %v6659
        %v6676 = vadd.f32 %v6623, %v6660
        %v6677 = vadd.f32 %v6624, %v6661
        %v6678 = vadd.f32 %v6625, %v6662
        %v6679 = vadd.f32 %v6626, %v6663
        %v6680 = vadd.f32 %v6627, %v6664
        %v6681 = vadd.f32 %v6628, %v6665
        %v6682 = vadd.f32 %v6629, %v6666
        %v6683 = vadd.f32 %v6630, %v6667
        %v6684 = vadd.f32 %v6631, %v6668
        %v6685 = vadd.f32 %v6632, %v6669
        %v6686 = vadd.f32 %v6633, %v6670
        %v6687 = vadd.f32 %v6634, %v6671
        %v6688 = vadd.f32 %v6635, %v6672
        %s6689 = scalar_lea.vmem [#allocation5], 48
        %v6690 = vld [vmem:[%s6689] sm:$0xff]
        %v6691 = vld [vmem:[%s6689 + $0x8] sm:$0xff]
        %v6692 = vld [vmem:[%s6689 + $0x18] sm:$0xff]
        %v6693 = vld [vmem:[%s6689 + $0x20] sm:$0xff]
        %v6694 = vld [vmem:[%s6689 + $0x30] sm:$0xff]
        %v6695 = vld [vmem:[%s6689 + $0x38] sm:$0xff]
        %v6696 = vld [vmem:[%s6689 + $0x48] sm:$0xff]
        %v6697 = vld [vmem:[%s6689 + $0x50] sm:$0xff]
        %v6698 = vld [vmem:[%s6689 + $0x60] sm:$0xff]
        %v6699 = vld [vmem:[%s6689 + $0x68] sm:$0xff]
        %v6700 = vld [vmem:[%s6689 + $0x78] sm:$0xff]
        %v6701 = vld [vmem:[%s6689 + $0x80] sm:$0xff]
        %v6702 = vld [vmem:[%s6689 + $0x90] sm:$0xff]
        %v6703 = vld [vmem:[%s6689 + $0x98] sm:$0xff]
        %v6704 = vld [vmem:[%s6689 + $0xa8] sm:$0xff]
        %v6705 = vld [vmem:[%s6689 + $0xb0] sm:$0xff]
        %v6706 = vld [vmem:[%s51 + $0x6] sm:$0x1]
        %v6707 = vlaneseq
        %v6708 = vshrl.u32 %v6707, 7
        %v6709 = vsub.s32 0, %v6708
        %v6710 = vrot.slane %v6706, %v6709
        %v6711 = vmul.f32 %v6690, %v6710
        %v6712 = vmul.f32 %v6691, %v6710
        %v6713 = vmul.f32 %v6692, %v6710
        %v6714 = vmul.f32 %v6693, %v6710
        %v6715 = vmul.f32 %v6694, %v6710
        %v6716 = vmul.f32 %v6695, %v6710
        %v6717 = vmul.f32 %v6696, %v6710
        %v6718 = vmul.f32 %v6697, %v6710
        %v6719 = vmul.f32 %v6698, %v6710
        %v6720 = vmul.f32 %v6699, %v6710
        %v6721 = vmul.f32 %v6700, %v6710
        %v6722 = vmul.f32 %v6701, %v6710
        %v6723 = vmul.f32 %v6702, %v6710
        %v6724 = vmul.f32 %v6703, %v6710
        %v6725 = vmul.f32 %v6704, %v6710
        %v6726 = vmul.f32 %v6705, %v6710
        %v6727 = vadd.f32 %v6673, %v6711
        %v6728 = vadd.f32 %v6674, %v6712
        %v6729 = vadd.f32 %v6675, %v6713
        %v6730 = vadd.f32 %v6676, %v6714
        %v6731 = vadd.f32 %v6677, %v6715
        %v6732 = vadd.f32 %v6678, %v6716
        %v6733 = vadd.f32 %v6679, %v6717
        %v6734 = vadd.f32 %v6680, %v6718
        %v6735 = vadd.f32 %v6681, %v6719
        %v6736 = vadd.f32 %v6682, %v6720
        %v6737 = vadd.f32 %v6683, %v6721
        %v6738 = vadd.f32 %v6684, %v6722
        %v6739 = vadd.f32 %v6685, %v6723
        %v6740 = vadd.f32 %v6686, %v6724
        %v6741 = vadd.f32 %v6687, %v6725
        %v6742 = vadd.f32 %v6688, %v6726
        %v6743 = vld [vmem:[%s6689 + $0x1] sm:$0xff]
        %v6744 = vld [vmem:[%s6689 + $0x9] sm:$0xff]
        %v6745 = vld [vmem:[%s6689 + $0x19] sm:$0xff]
        %v6746 = vld [vmem:[%s6689 + $0x21] sm:$0xff]
        %v6747 = vld [vmem:[%s6689 + $0x31] sm:$0xff]
        %v6748 = vld [vmem:[%s6689 + $0x39] sm:$0xff]
        %v6749 = vld [vmem:[%s6689 + $0x49] sm:$0xff]
        %v6750 = vld [vmem:[%s6689 + $0x51] sm:$0xff]
        %v6751 = vld [vmem:[%s6689 + $0x61] sm:$0xff]
        %v6752 = vld [vmem:[%s6689 + $0x69] sm:$0xff]
        %v6753 = vld [vmem:[%s6689 + $0x79] sm:$0xff]
        %v6754 = vld [vmem:[%s6689 + $0x81] sm:$0xff]
        %v6755 = vld [vmem:[%s6689 + $0x91] sm:$0xff]
        %v6756 = vld [vmem:[%s6689 + $0x99] sm:$0xff]
        %v6757 = vld [vmem:[%s6689 + $0xa9] sm:$0xff]
        %v6758 = vld [vmem:[%s6689 + $0xb1] sm:$0xff]
        %v6759 = vld [vmem:[%s51 + $0x7] sm:$0x1]
        %v6760 = vlaneseq
        %v6761 = vshrl.u32 %v6760, 7
        %v6762 = vsub.s32 0, %v6761
        %v6763 = vrot.slane %v6759, %v6762
        %v6764 = vmul.f32 %v6743, %v6763
        %v6765 = vmul.f32 %v6744, %v6763
        %v6766 = vmul.f32 %v6745, %v6763
        %v6767 = vmul.f32 %v6746, %v6763
        %v6768 = vmul.f32 %v6747, %v6763
        %v6769 = vmul.f32 %v6748, %v6763
        %v6770 = vmul.f32 %v6749, %v6763
        %v6771 = vmul.f32 %v6750, %v6763
        %v6772 = vmul.f32 %v6751, %v6763
        %v6773 = vmul.f32 %v6752, %v6763
        %v6774 = vmul.f32 %v6753, %v6763
        %v6775 = vmul.f32 %v6754, %v6763
        %v6776 = vmul.f32 %v6755, %v6763
        %v6777 = vmul.f32 %v6756, %v6763
        %v6778 = vmul.f32 %v6757, %v6763
        %v6779 = vmul.f32 %v6758, %v6763
        %v6780 = vadd.f32 %v6727, %v6764
        %v6781 = vadd.f32 %v6728, %v6765
        %v6782 = vadd.f32 %v6729, %v6766
        %v6783 = vadd.f32 %v6730, %v6767
        %v6784 = vadd.f32 %v6731, %v6768
        %v6785 = vadd.f32 %v6732, %v6769
        %v6786 = vadd.f32 %v6733, %v6770
        %v6787 = vadd.f32 %v6734, %v6771
        %v6788 = vadd.f32 %v6735, %v6772
        %v6789 = vadd.f32 %v6736, %v6773
        %v6790 = vadd.f32 %v6737, %v6774
        %v6791 = vadd.f32 %v6738, %v6775
        %v6792 = vadd.f32 %v6739, %v6776
        %v6793 = vadd.f32 %v6740, %v6777
        %v6794 = vadd.f32 %v6741, %v6778
        %v6795 = vadd.f32 %v6742, %v6779
        %v6796 = vld [vmem:[%s6689 + $0x2] sm:$0xff]
        %v6797 = vld [vmem:[%s6689 + $0xa] sm:$0xff]
        %v6798 = vld [vmem:[%s6689 + $0x1a] sm:$0xff]
        %v6799 = vld [vmem:[%s6689 + $0x22] sm:$0xff]
        %v6800 = vld [vmem:[%s6689 + $0x32] sm:$0xff]
        %v6801 = vld [vmem:[%s6689 + $0x3a] sm:$0xff]
        %v6802 = vld [vmem:[%s6689 + $0x4a] sm:$0xff]
        %v6803 = vld [vmem:[%s6689 + $0x52] sm:$0xff]
        %v6804 = vld [vmem:[%s6689 + $0x62] sm:$0xff]
        %v6805 = vld [vmem:[%s6689 + $0x6a] sm:$0xff]
        %v6806 = vld [vmem:[%s6689 + $0x7a] sm:$0xff]
        %v6807 = vld [vmem:[%s6689 + $0x82] sm:$0xff]
        %v6808 = vld [vmem:[%s6689 + $0x92] sm:$0xff]
        %v6809 = vld [vmem:[%s6689 + $0x9a] sm:$0xff]
        %v6810 = vld [vmem:[%s6689 + $0xaa] sm:$0xff]
        %v6811 = vld [vmem:[%s6689 + $0xb2] sm:$0xff]
        %v6812 = vld [vmem:[%s51 + $0x8] sm:$0x1]
        %v6813 = vlaneseq
        %v6814 = vshrl.u32 %v6813, 7
        %v6815 = vsub.s32 0, %v6814
        %v6816 = vrot.slane %v6812, %v6815
        %v6817 = vmul.f32 %v6796, %v6816
        %v6818 = vmul.f32 %v6797, %v6816
        %v6819 = vmul.f32 %v6798, %v6816
        %v6820 = vmul.f32 %v6799, %v6816
        %v6821 = vmul.f32 %v6800, %v6816
        %v6822 = vmul.f32 %v6801, %v6816
        %v6823 = vmul.f32 %v6802, %v6816
        %v6824 = vmul.f32 %v6803, %v6816
        %v6825 = vmul.f32 %v6804, %v6816
        %v6826 = vmul.f32 %v6805, %v6816
        %v6827 = vmul.f32 %v6806, %v6816
        %v6828 = vmul.f32 %v6807, %v6816
        %v6829 = vmul.f32 %v6808, %v6816
        %v6830 = vmul.f32 %v6809, %v6816
        %v6831 = vmul.f32 %v6810, %v6816
        %v6832 = vmul.f32 %v6811, %v6816
        %v6833 = vadd.f32 %v6780, %v6817
        %v6834 = vadd.f32 %v6781, %v6818
        %v6835 = vadd.f32 %v6782, %v6819
        %v6836 = vadd.f32 %v6783, %v6820
        %v6837 = vadd.f32 %v6784, %v6821
        %v6838 = vadd.f32 %v6785, %v6822
        %v6839 = vadd.f32 %v6786, %v6823
        %v6840 = vadd.f32 %v6787, %v6824
        %v6841 = vadd.f32 %v6788, %v6825
        %v6842 = vadd.f32 %v6789, %v6826
        %v6843 = vadd.f32 %v6790, %v6827
        %v6844 = vadd.f32 %v6791, %v6828
        %v6845 = vadd.f32 %v6792, %v6829
        %v6846 = vadd.f32 %v6793, %v6830
        %v6847 = vadd.f32 %v6794, %v6831
        %v6848 = vadd.f32 %v6795, %v6832
        %v6849 = vld [vmem:[%s53] sm:$0x1]
        %v6851 = vlaneseq
        %v6852 = vshrl.u32 %v6851, 7
        %v6853 = vsub.s32 0, %v6852
        %v6854 = vrot.slane %v6849, %v6853
        %v6856 = vadd.f32 %v6833, %v6854
        %v6857 = vadd.f32 %v6834, %v6854
        %v6858 = vadd.f32 %v6835, %v6854
        %v6859 = vadd.f32 %v6836, %v6854
        %v6860 = vadd.f32 %v6837, %v6854
        %v6861 = vadd.f32 %v6838, %v6854
        %v6862 = vadd.f32 %v6839, %v6854
        %v6863 = vadd.f32 %v6840, %v6854
        %v6864 = vadd.f32 %v6841, %v6854
        %v6865 = vadd.f32 %v6842, %v6854
        %v6866 = vadd.f32 %v6843, %v6854
        %v6867 = vadd.f32 %v6844, %v6854
        %v6868 = vadd.f32 %v6845, %v6854
        %v6869 = vadd.f32 %v6846, %v6854
        %v6870 = vadd.f32 %v6847, %v6854
        %v6871 = vadd.f32 %v6848, %v6854
        %v6872 = vmul.f32 %v6856, 0.5
        %v6873 = vmul.f32 %v6857, 0.5
        %v6874 = vmul.f32 %v6858, 0.5
        %v6875 = vmul.f32 %v6859, 0.5
        %v6876 = vmul.f32 %v6860, 0.5
        %v6877 = vmul.f32 %v6861, 0.5
        %v6878 = vmul.f32 %v6862, 0.5
        %v6879 = vmul.f32 %v6863, 0.5
        %v6880 = vmul.f32 %v6864, 0.5
        %v6881 = vmul.f32 %v6865, 0.5
        %v6882 = vmul.f32 %v6866, 0.5
        %v6883 = vmul.f32 %v6867, 0.5
        %v6884 = vmul.f32 %v6868, 0.5
        %v6885 = vmul.f32 %v6869, 0.5
        %v6886 = vmul.f32 %v6870, 0.5
        %v6887 = vmul.f32 %v6871, 0.5
        %v6888 = vmul.f32 %v6856, 0.70710677
        %v6889 = vmul.f32 %v6857, 0.70710677
        %v6890 = vmul.f32 %v6858, 0.70710677
        %v6891 = vmul.f32 %v6859, 0.70710677
        %v6892 = vmul.f32 %v6860, 0.70710677
        %v6893 = vmul.f32 %v6861, 0.70710677
        %v6894 = vmul.f32 %v6862, 0.70710677
        %v6895 = vmul.f32 %v6863, 0.70710677
        %v6896 = vmul.f32 %v6864, 0.70710677
        %v6897 = vmul.f32 %v6865, 0.70710677
        %v6898 = vmul.f32 %v6866, 0.70710677
        %v6899 = vmul.f32 %v6867, 0.70710677
        %v6900 = vmul.f32 %v6868, 0.70710677
        %v6901 = vmul.f32 %v6869, 0.70710677
        %v6902 = vmul.f32 %v6870, 0.70710677
        %v6903 = vmul.f32 %v6871, 0.70710677
        %vm6904 = vcmp.lt.f32.partialorder %v6888, 0.0
        %vm6905 = vcmp.lt.f32.partialorder %v6889, 0.0
        %vm6906 = vcmp.lt.f32.partialorder %v6890, 0.0
        %vm6907 = vcmp.lt.f32.partialorder %v6891, 0.0
        %vm6908 = vcmp.lt.f32.partialorder %v6892, 0.0
        %vm6909 = vcmp.lt.f32.partialorder %v6893, 0.0
        %vm6910 = vcmp.lt.f32.partialorder %v6894, 0.0
        %vm6911 = vcmp.lt.f32.partialorder %v6895, 0.0
        %vm6912 = vcmp.lt.f32.partialorder %v6896, 0.0
        %vm6913 = vcmp.lt.f32.partialorder %v6897, 0.0
        %vm6914 = vcmp.lt.f32.partialorder %v6898, 0.0
        %vm6915 = vcmp.lt.f32.partialorder %v6899, 0.0
        %vm6916 = vcmp.lt.f32.partialorder %v6900, 0.0
        %vm6917 = vcmp.lt.f32.partialorder %v6901, 0.0
        %vm6918 = vcmp.lt.f32.partialorder %v6902, 0.0
        %vm6919 = vcmp.lt.f32.partialorder %v6903, 0.0
        %v6920 = vsel %vm6904, -1.0, 1.0
        %v6921 = vsel %vm6905, -1.0, 1.0
        %v6922 = vsel %vm6906, -1.0, 1.0
        %v6923 = vsel %vm6907, -1.0, 1.0
        %v6924 = vsel %vm6908, -1.0, 1.0
        %v6925 = vsel %vm6909, -1.0, 1.0
        %v6926 = vsel %vm6910, -1.0, 1.0
        %v6927 = vsel %vm6911, -1.0, 1.0
        %v6928 = vsel %vm6912, -1.0, 1.0
        %v6929 = vsel %vm6913, -1.0, 1.0
        %v6930 = vsel %vm6914, -1.0, 1.0
        %v6931 = vsel %vm6915, -1.0, 1.0
        %v6932 = vsel %vm6916, -1.0, 1.0
        %v6933 = vsel %vm6917, -1.0, 1.0
        %v6934 = vsel %vm6918, -1.0, 1.0
        %v6935 = vsel %vm6919, -1.0, 1.0
        %v6936 = vand.u32 2147483647, %v6888
        %v6937 = vand.u32 2147483647, %v6889
        %v6938 = vand.u32 2147483647, %v6890
        %v6939 = vand.u32 2147483647, %v6891
        %v6940 = vand.u32 2147483647, %v6892
        %v6941 = vand.u32 2147483647, %v6893
        %v6942 = vand.u32 2147483647, %v6894
        %v6943 = vand.u32 2147483647, %v6895
        %v6944 = vand.u32 2147483647, %v6896
        %v6945 = vand.u32 2147483647, %v6897
        %v6946 = vand.u32 2147483647, %v6898
        %v6947 = vand.u32 2147483647, %v6899
        %v6948 = vand.u32 2147483647, %v6900
        %v6949 = vand.u32 2147483647, %v6901
        %v6950 = vand.u32 2147483647, %v6902
        %v6951 = vand.u32 2147483647, %v6903
        %v6952 = vmul.f32 %v6936, 0.3275911
        %v6953 = vmul.f32 %v6937, 0.3275911
        %v6954 = vmul.f32 %v6938, 0.3275911
        %v6955 = vmul.f32 %v6939, 0.3275911
        %v6956 = vmul.f32 %v6940, 0.3275911
        %v6957 = vmul.f32 %v6941, 0.3275911
        %v6958 = vmul.f32 %v6942, 0.3275911
        %v6959 = vmul.f32 %v6943, 0.3275911
        %v6960 = vmul.f32 %v6944, 0.3275911
        %v6961 = vmul.f32 %v6945, 0.3275911
        %v6962 = vmul.f32 %v6946, 0.3275911
        %v6963 = vmul.f32 %v6947, 0.3275911
        %v6964 = vmul.f32 %v6948, 0.3275911
        %v6965 = vmul.f32 %v6949, 0.3275911
        %v6966 = vmul.f32 %v6950, 0.3275911
        %v6967 = vmul.f32 %v6951, 0.3275911
        %v6968 = vadd.f32 %v6952, 1.0
        %v6969 = vadd.f32 %v6953, 1.0
        %v6970 = vadd.f32 %v6954, 1.0
        %v6971 = vadd.f32 %v6955, 1.0
        %v6972 = vadd.f32 %v6956, 1.0
        %v6973 = vadd.f32 %v6957, 1.0
        %v6974 = vadd.f32 %v6958, 1.0
        %v6975 = vadd.f32 %v6959, 1.0
        %v6976 = vadd.f32 %v6960, 1.0
        %v6977 = vadd.f32 %v6961, 1.0
        %v6978 = vadd.f32 %v6962, 1.0
        %v6979 = vadd.f32 %v6963, 1.0
        %v6980 = vadd.f32 %v6964, 1.0
        %v6981 = vadd.f32 %v6965, 1.0
        %v6982 = vadd.f32 %v6966, 1.0
        %v6983 = vadd.f32 %v6967, 1.0
        %v6984 = vrcp.pop %v6968
        %v6985 = vmul.f32 1.0, %v6984
        %v6986 = vrcp.pop %v6969
        %v6987 = vmul.f32 1.0, %v6986
        %v6988 = vrcp.pop %v6970
        %v6989 = vmul.f32 1.0, %v6988
        %v6990 = vrcp.pop %v6971
        %v6991 = vmul.f32 1.0, %v6990
        %v6992 = vrcp.pop %v6972
        %v6993 = vmul.f32 1.0, %v6992
        %v6994 = vrcp.pop %v6973
        %v6995 = vmul.f32 1.0, %v6994
        %v6996 = vrcp.pop %v6974
        %v6997 = vmul.f32 1.0, %v6996
        %v6998 = vrcp.pop %v6975
        %v6999 = vmul.f32 1.0, %v6998
        %v7000 = vrcp.pop %v6976
        %v7001 = vmul.f32 1.0, %v7000
        %v7002 = vrcp.pop %v6977
        %v7003 = vmul.f32 1.0, %v7002
        %v7004 = vrcp.pop %v6978
        %v7005 = vmul.f32 1.0, %v7004
        %v7006 = vrcp.pop %v6979
        %v7007 = vmul.f32 1.0, %v7006
        %v7008 = vrcp.pop %v6980
        %v7009 = vmul.f32 1.0, %v7008
        %v7010 = vrcp.pop %v6981
        %v7011 = vmul.f32 1.0, %v7010
        %v7012 = vrcp.pop %v6982
        %v7013 = vmul.f32 1.0, %v7012
        %v7014 = vrcp.pop %v6983
        %v7015 = vmul.f32 1.0, %v7014
        %v7016 = vmul.f32 %v6985, 1.0614054
        %v7017 = vmul.f32 %v6987, 1.0614054
        %v7018 = vmul.f32 %v6989, 1.0614054
        %v7019 = vmul.f32 %v6991, 1.0614054
        %v7020 = vmul.f32 %v6993, 1.0614054
        %v7021 = vmul.f32 %v6995, 1.0614054
        %v7022 = vmul.f32 %v6997, 1.0614054
        %v7023 = vmul.f32 %v6999, 1.0614054
        %v7024 = vmul.f32 %v7001, 1.0614054
        %v7025 = vmul.f32 %v7003, 1.0614054
        %v7026 = vmul.f32 %v7005, 1.0614054
        %v7027 = vmul.f32 %v7007, 1.0614054
        %v7028 = vmul.f32 %v7009, 1.0614054
        %v7029 = vmul.f32 %v7011, 1.0614054
        %v7030 = vmul.f32 %v7013, 1.0614054
        %v7031 = vmul.f32 %v7015, 1.0614054
        %v7032 = vadd.f32 %v7016, -1.4531521
        %v7033 = vadd.f32 %v7017, -1.4531521
        %v7034 = vadd.f32 %v7018, -1.4531521
        %v7035 = vadd.f32 %v7019, -1.4531521
        %v7036 = vadd.f32 %v7020, -1.4531521
        %v7037 = vadd.f32 %v7021, -1.4531521
        %v7038 = vadd.f32 %v7022, -1.4531521
        %v7039 = vadd.f32 %v7023, -1.4531521
        %v7040 = vadd.f32 %v7024, -1.4531521
        %v7041 = vadd.f32 %v7025, -1.4531521
        %v7042 = vadd.f32 %v7026, -1.4531521
        %v7043 = vadd.f32 %v7027, -1.4531521
        %v7044 = vadd.f32 %v7028, -1.4531521
        %v7045 = vadd.f32 %v7029, -1.4531521
        %v7046 = vadd.f32 %v7030, -1.4531521
        %v7047 = vadd.f32 %v7031, -1.4531521
        %v7048 = vmul.f32 %v7032, %v6985
        %v7049 = vmul.f32 %v7033, %v6987
        %v7050 = vmul.f32 %v7034, %v6989
        %v7051 = vmul.f32 %v7035, %v6991
        %v7052 = vmul.f32 %v7036, %v6993
        %v7053 = vmul.f32 %v7037, %v6995
        %v7054 = vmul.f32 %v7038, %v6997
        %v7055 = vmul.f32 %v7039, %v6999
        %v7056 = vmul.f32 %v7040, %v7001
        %v7057 = vmul.f32 %v7041, %v7003
        %v7058 = vmul.f32 %v7042, %v7005
        %v7059 = vmul.f32 %v7043, %v7007
        %v7060 = vmul.f32 %v7044, %v7009
        %v7061 = vmul.f32 %v7045, %v7011
        %v7062 = vmul.f32 %v7046, %v7013
        %v7063 = vmul.f32 %v7047, %v7015
        %v7064 = vadd.f32 %v7048, 1.4214138
        %v7065 = vadd.f32 %v7049, 1.4214138
        %v7066 = vadd.f32 %v7050, 1.4214138
        %v7067 = vadd.f32 %v7051, 1.4214138
        %v7068 = vadd.f32 %v7052, 1.4214138
        %v7069 = vadd.f32 %v7053, 1.4214138
        %v7070 = vadd.f32 %v7054, 1.4214138
        %v7071 = vadd.f32 %v7055, 1.4214138
        %v7072 = vadd.f32 %v7056, 1.4214138
        %v7073 = vadd.f32 %v7057, 1.4214138
        %v7074 = vadd.f32 %v7058, 1.4214138
        %v7075 = vadd.f32 %v7059, 1.4214138
        %v7076 = vadd.f32 %v7060, 1.4214138
        %v7077 = vadd.f32 %v7061, 1.4214138
        %v7078 = vadd.f32 %v7062, 1.4214138
        %v7079 = vadd.f32 %v7063, 1.4214138
        %v7080 = vmul.f32 %v7064, %v6985
        %v7081 = vmul.f32 %v7065, %v6987
        %v7082 = vmul.f32 %v7066, %v6989
        %v7083 = vmul.f32 %v7067, %v6991
        %v7084 = vmul.f32 %v7068, %v6993
        %v7085 = vmul.f32 %v7069, %v6995
        %v7086 = vmul.f32 %v7070, %v6997
        %v7087 = vmul.f32 %v7071, %v6999
        %v7088 = vmul.f32 %v7072, %v7001
        %v7089 = vmul.f32 %v7073, %v7003
        %v7090 = vmul.f32 %v7074, %v7005
        %v7091 = vmul.f32 %v7075, %v7007
        %v7092 = vmul.f32 %v7076, %v7009
        %v7093 = vmul.f32 %v7077, %v7011
        %v7094 = vmul.f32 %v7078, %v7013
        %v7095 = vmul.f32 %v7079, %v7015
        %v7096 = vadd.f32 %v7080, -0.28449672
        %v7097 = vadd.f32 %v7081, -0.28449672
        %v7098 = vadd.f32 %v7082, -0.28449672
        %v7099 = vadd.f32 %v7083, -0.28449672
        %v7100 = vadd.f32 %v7084, -0.28449672
        %v7101 = vadd.f32 %v7085, -0.28449672
        %v7102 = vadd.f32 %v7086, -0.28449672
        %v7103 = vadd.f32 %v7087, -0.28449672
        %v7104 = vadd.f32 %v7088, -0.28449672
        %v7105 = vadd.f32 %v7089, -0.28449672
        %v7106 = vadd.f32 %v7090, -0.28449672
        %v7107 = vadd.f32 %v7091, -0.28449672
        %v7108 = vadd.f32 %v7092, -0.28449672
        %v7109 = vadd.f32 %v7093, -0.28449672
        %v7110 = vadd.f32 %v7094, -0.28449672
        %v7111 = vadd.f32 %v7095, -0.28449672
        %v7112 = vmul.f32 %v7096, %v6985
        %v7113 = vmul.f32 %v7097, %v6987
        %v7114 = vmul.f32 %v7098, %v6989
        %v7115 = vmul.f32 %v7099, %v6991
        %v7116 = vmul.f32 %v7100, %v6993
        %v7117 = vmul.f32 %v7101, %v6995
        %v7118 = vmul.f32 %v7102, %v6997
        %v7119 = vmul.f32 %v7103, %v6999
        %v7120 = vmul.f32 %v7104, %v7001
        %v7121 = vmul.f32 %v7105, %v7003
        %v7122 = vmul.f32 %v7106, %v7005
        %v7123 = vmul.f32 %v7107, %v7007
        %v7124 = vmul.f32 %v7108, %v7009
        %v7125 = vmul.f32 %v7109, %v7011
        %v7126 = vmul.f32 %v7110, %v7013
        %v7127 = vmul.f32 %v7111, %v7015
        %v7128 = vadd.f32 %v7112, 0.2548296
        %v7129 = vadd.f32 %v7113, 0.2548296
        %v7130 = vadd.f32 %v7114, 0.2548296
        %v7131 = vadd.f32 %v7115, 0.2548296
        %v7132 = vadd.f32 %v7116, 0.2548296
        %v7133 = vadd.f32 %v7117, 0.2548296
        %v7134 = vadd.f32 %v7118, 0.2548296
        %v7135 = vadd.f32 %v7119, 0.2548296
        %v7136 = vadd.f32 %v7120, 0.2548296
        %v7137 = vadd.f32 %v7121, 0.2548296
        %v7138 = vadd.f32 %v7122, 0.2548296
        %v7139 = vadd.f32 %v7123, 0.2548296
        %v7140 = vadd.f32 %v7124, 0.2548296
        %v7141 = vadd.f32 %v7125, 0.2548296
        %v7142 = vadd.f32 %v7126, 0.2548296
        %v7143 = vadd.f32 %v7127, 0.2548296
        %v7144 = vmul.f32 %v7128, %v6985
        %v7145 = vmul.f32 %v7129, %v6987
        %v7146 = vmul.f32 %v7130, %v6989
        %v7147 = vmul.f32 %v7131, %v6991
        %v7148 = vmul.f32 %v7132, %v6993
        %v7149 = vmul.f32 %v7133, %v6995
        %v7150 = vmul.f32 %v7134, %v6997
        %v7151 = vmul.f32 %v7135, %v6999
        %v7152 = vmul.f32 %v7136, %v7001
        %v7153 = vmul.f32 %v7137, %v7003
        %v7154 = vmul.f32 %v7138, %v7005
        %v7155 = vmul.f32 %v7139, %v7007
        %v7156 = vmul.f32 %v7140, %v7009
        %v7157 = vmul.f32 %v7141, %v7011
        %v7158 = vmul.f32 %v7142, %v7013
        %v7159 = vmul.f32 %v7143, %v7015
        %v7160 = vsub.f32 0.0, %v6936
        %v7161 = vsub.f32 0.0, %v6937
        %v7162 = vsub.f32 0.0, %v6938
        %v7163 = vsub.f32 0.0, %v6939
        %v7164 = vsub.f32 0.0, %v6940
        %v7165 = vsub.f32 0.0, %v6941
        %v7166 = vsub.f32 0.0, %v6942
        %v7167 = vsub.f32 0.0, %v6943
        %v7168 = vsub.f32 0.0, %v6944
        %v7169 = vsub.f32 0.0, %v6945
        %v7170 = vsub.f32 0.0, %v6946
        %v7171 = vsub.f32 0.0, %v6947
        %v7172 = vsub.f32 0.0, %v6948
        %v7173 = vsub.f32 0.0, %v6949
        %v7174 = vsub.f32 0.0, %v6950
        %v7175 = vsub.f32 0.0, %v6951
        %v7176 = vmul.f32 %v7160, %v6936
        %v7177 = vmul.f32 %v7161, %v6937
        %v7178 = vmul.f32 %v7162, %v6938
        %v7179 = vmul.f32 %v7163, %v6939
        %v7180 = vmul.f32 %v7164, %v6940
        %v7181 = vmul.f32 %v7165, %v6941
        %v7182 = vmul.f32 %v7166, %v6942
        %v7183 = vmul.f32 %v7167, %v6943
        %v7184 = vmul.f32 %v7168, %v6944
        %v7185 = vmul.f32 %v7169, %v6945
        %v7186 = vmul.f32 %v7170, %v6946
        %v7187 = vmul.f32 %v7171, %v6947
        %v7188 = vmul.f32 %v7172, %v6948
        %v7189 = vmul.f32 %v7173, %v6949
        %v7190 = vmul.f32 %v7174, %v6950
        %v7191 = vmul.f32 %v7175, %v6951
        %v7192 = vmul.f32 %v7176, 1.442695
        %v7193 = vpow.pop %v7192
        %v7194 = vmul.f32 %v7177, 1.442695
        %v7195 = vpow.pop %v7194
        %v7196 = vmul.f32 %v7178, 1.442695
        %v7197 = vpow.pop %v7196
        %v7198 = vmul.f32 %v7179, 1.442695
        %v7199 = vpow.pop %v7198
        %v7200 = vmul.f32 %v7180, 1.442695
        %v7201 = vpow.pop %v7200
        %v7202 = vmul.f32 %v7181, 1.442695
        %v7203 = vpow.pop %v7202
        %v7204 = vmul.f32 %v7182, 1.442695
        %v7205 = vpow.pop %v7204
        %v7206 = vmul.f32 %v7183, 1.442695
        %v7207 = vpow.pop %v7206
        %v7208 = vmul.f32 %v7184, 1.442695
        %v7209 = vpow.pop %v7208
        %v7210 = vmul.f32 %v7185, 1.442695
        %v7211 = vpow.pop %v7210
        %v7212 = vmul.f32 %v7186, 1.442695
        %v7213 = vpow.pop %v7212
        %v7214 = vmul.f32 %v7187, 1.442695
        %v7215 = vpow.pop %v7214
        %v7216 = vmul.f32 %v7188, 1.442695
        %v7217 = vpow.pop %v7216
        %v7218 = vmul.f32 %v7189, 1.442695
        %v7219 = vpow.pop %v7218
        %v7220 = vmul.f32 %v7190, 1.442695
        %v7221 = vpow.pop %v7220
        %v7222 = vmul.f32 %v7191, 1.442695
        %v7223 = vpow.pop %v7222
        %v7224 = vmul.f32 %v7144, %v7193
        %v7225 = vmul.f32 %v7145, %v7195
        %v7226 = vmul.f32 %v7146, %v7197
        %v7227 = vmul.f32 %v7147, %v7199
        %v7228 = vmul.f32 %v7148, %v7201
        %v7229 = vmul.f32 %v7149, %v7203
        %v7230 = vmul.f32 %v7150, %v7205
        %v7231 = vmul.f32 %v7151, %v7207
        %v7232 = vmul.f32 %v7152, %v7209
        %v7233 = vmul.f32 %v7153, %v7211
        %v7234 = vmul.f32 %v7154, %v7213
        %v7235 = vmul.f32 %v7155, %v7215
        %v7236 = vmul.f32 %v7156, %v7217
        %v7237 = vmul.f32 %v7157, %v7219
        %v7238 = vmul.f32 %v7158, %v7221
        %v7239 = vmul.f32 %v7159, %v7223
        %v7240 = vsub.f32 1.0, %v7224
        %v7241 = vsub.f32 1.0, %v7225
        %v7242 = vsub.f32 1.0, %v7226
        %v7243 = vsub.f32 1.0, %v7227
        %v7244 = vsub.f32 1.0, %v7228
        %v7245 = vsub.f32 1.0, %v7229
        %v7246 = vsub.f32 1.0, %v7230
        %v7247 = vsub.f32 1.0, %v7231
        %v7248 = vsub.f32 1.0, %v7232
        %v7249 = vsub.f32 1.0, %v7233
        %v7250 = vsub.f32 1.0, %v7234
        %v7251 = vsub.f32 1.0, %v7235
        %v7252 = vsub.f32 1.0, %v7236
        %v7253 = vsub.f32 1.0, %v7237
        %v7254 = vsub.f32 1.0, %v7238
        %v7255 = vsub.f32 1.0, %v7239
        %v7256 = vmul.f32 %v6920, %v7240
        %v7257 = vmul.f32 %v6921, %v7241
        %v7258 = vmul.f32 %v6922, %v7242
        %v7259 = vmul.f32 %v6923, %v7243
        %v7260 = vmul.f32 %v6924, %v7244
        %v7261 = vmul.f32 %v6925, %v7245
        %v7262 = vmul.f32 %v6926, %v7246
        %v7263 = vmul.f32 %v6927, %v7247
        %v7264 = vmul.f32 %v6928, %v7248
        %v7265 = vmul.f32 %v6929, %v7249
        %v7266 = vmul.f32 %v6930, %v7250
        %v7267 = vmul.f32 %v6931, %v7251
        %v7268 = vmul.f32 %v6932, %v7252
        %v7269 = vmul.f32 %v6933, %v7253
        %v7270 = vmul.f32 %v6934, %v7254
        %v7271 = vmul.f32 %v6935, %v7255
        %v7272 = vadd.f32 %v7256, 1.0
        %v7273 = vadd.f32 %v7257, 1.0
        %v7274 = vadd.f32 %v7258, 1.0
        %v7275 = vadd.f32 %v7259, 1.0
        %v7276 = vadd.f32 %v7260, 1.0
        %v7277 = vadd.f32 %v7261, 1.0
        %v7278 = vadd.f32 %v7262, 1.0
        %v7279 = vadd.f32 %v7263, 1.0
        %v7280 = vadd.f32 %v7264, 1.0
        %v7281 = vadd.f32 %v7265, 1.0
        %v7282 = vadd.f32 %v7266, 1.0
        %v7283 = vadd.f32 %v7267, 1.0
        %v7284 = vadd.f32 %v7268, 1.0
        %v7285 = vadd.f32 %v7269, 1.0
        %v7286 = vadd.f32 %v7270, 1.0
        %v7287 = vadd.f32 %v7271, 1.0
        %v7288 = vmul.f32 %v6872, %v7272
        %v7289 = vmul.f32 %v6873, %v7273
        %v7290 = vmul.f32 %v6874, %v7274
        %v7291 = vmul.f32 %v6875, %v7275
        %v7292 = vmul.f32 %v6876, %v7276
        %v7293 = vmul.f32 %v6877, %v7277
        %v7294 = vmul.f32 %v6878, %v7278
        %v7295 = vmul.f32 %v6879, %v7279
        %v7296 = vmul.f32 %v6880, %v7280
        %v7297 = vmul.f32 %v6881, %v7281
        %v7298 = vmul.f32 %v6882, %v7282
        %v7299 = vmul.f32 %v6883, %v7283
        %v7300 = vmul.f32 %v6884, %v7284
        %v7301 = vmul.f32 %v6885, %v7285
        %v7302 = vmul.f32 %v6886, %v7286
        %v7303 = vmul.f32 %v6887, %v7287
        %7320 = vrot.lane.b32.xlu0 %v6856, 64
        %v7321 = vpop.permute.xlu0 %7320
        %7322 = vrot.lane.b32.xlu0 %v6857, 64
        %v7323 = vpop.permute.xlu0 %7322
        %7324 = vrot.lane.b32.xlu0 %v6858, 64
        %v7325 = vpop.permute.xlu0 %7324
        %7326 = vrot.lane.b32.xlu0 %v6859, 64
        %v7327 = vpop.permute.xlu0 %7326
        %7328 = vrot.lane.b32.xlu0 %v6860, 64
        %v7329 = vpop.permute.xlu0 %7328
        %7330 = vrot.lane.b32.xlu0 %v6861, 64
        %v7331 = vpop.permute.xlu0 %7330
        %7332 = vrot.lane.b32.xlu0 %v6862, 64
        %v7333 = vpop.permute.xlu0 %7332
        %7334 = vrot.lane.b32.xlu0 %v6863, 64
        %v7335 = vpop.permute.xlu0 %7334
        %7336 = vrot.lane.b32.xlu0 %v6864, 64
        %v7337 = vpop.permute.xlu0 %7336
        %7338 = vrot.lane.b32.xlu0 %v6865, 64
        %v7339 = vpop.permute.xlu0 %7338
        %7340 = vrot.lane.b32.xlu0 %v6866, 64
        %v7341 = vpop.permute.xlu0 %7340
        %7342 = vrot.lane.b32.xlu0 %v6867, 64
        %v7343 = vpop.permute.xlu0 %7342
        %7344 = vrot.lane.b32.xlu0 %v6868, 64
        %v7345 = vpop.permute.xlu0 %7344
        %7346 = vrot.lane.b32.xlu0 %v6869, 64
        %v7347 = vpop.permute.xlu0 %7346
        %7348 = vrot.lane.b32.xlu0 %v6870, 64
        %v7349 = vpop.permute.xlu0 %7348
        %7350 = vrot.lane.b32.xlu0 %v6871, 64
        %v7351 = vpop.permute.xlu0 %7350
        %v7368 = vmul.f32 %v7288, %v7321
        %v7369 = vmul.f32 %v7289, %v7323
        %v7370 = vmul.f32 %v7290, %v7325
        %v7371 = vmul.f32 %v7291, %v7327
        %v7372 = vmul.f32 %v7292, %v7329
        %v7373 = vmul.f32 %v7293, %v7331
        %v7374 = vmul.f32 %v7294, %v7333
        %v7375 = vmul.f32 %v7295, %v7335
        %v7376 = vmul.f32 %v7296, %v7337
        %v7377 = vmul.f32 %v7297, %v7339
        %v7378 = vmul.f32 %v7298, %v7341
        %v7379 = vmul.f32 %v7299, %v7343
        %v7380 = vmul.f32 %v7300, %v7345
        %v7381 = vmul.f32 %v7301, %v7347
        %v7382 = vmul.f32 %v7302, %v7349
        %v7383 = vmul.f32 %v7303, %v7351
        %v7384 = vpack.c.bf16 %v7369, %v7368
        %v7385 = vpack.c.bf16 %v7371, %v7370
        %v7386 = vpack.c.bf16 %v7373, %v7372
        %v7387 = vpack.c.bf16 %v7375, %v7374
        %v7388 = vpack.c.bf16 %v7377, %v7376
        %v7389 = vpack.c.bf16 %v7379, %v7378
        %v7390 = vpack.c.bf16 %v7381, %v7380
        %v7391 = vpack.c.bf16 %v7383, %v7382
        %v7392 = vld [vmem:[%s55] sm:$0xf]
        %v7393 = vld [vmem:[%s55 + $0x4] sm:$0xf]
        %v7394 = vld [vmem:[%s55 + $0x8] sm:$0xf]
        %v7395 = vld [vmem:[%s55 + $0xc] sm:$0xf]
        %v7396 = vld [vmem:[%s55 + $0x10] sm:$0xf]
        %v7397 = vld [vmem:[%s55 + $0x14] sm:$0xf]
        %v7398 = vld [vmem:[%s55 + $0x18] sm:$0xf]
        %v7399 = vld [vmem:[%s55 + $0x1c] sm:$0xf]
        %v7400 = vld [vmem:[%s57] sm:$0x1]
        %v7402 = vlaneseq
        %v7403 = vshrl.u32 %v7402, 7
        %v7404 = vsub.s32 0, %v7403
        %v7405 = vrot.slane %v7400, %v7404
        %v7415 = vunpack.c.l.b16 %v7392
        %v7416 = vunpack.c.l.b16 %v7393
        %v7417 = vunpack.c.l.b16 %v7394
        %v7418 = vunpack.c.l.b16 %v7395
        %v7419 = vunpack.c.l.b16 %v7396
        %v7420 = vunpack.c.l.b16 %v7397
        %v7421 = vunpack.c.l.b16 %v7398
        %v7422 = vunpack.c.l.b16 %v7399
        %v7423 = vpack.c.b16 %v7416, %v7415
        %v7424 = vpack.c.b16 %v7418, %v7417
        %v7425 = vpack.c.b16 %v7420, %v7419
        %v7426 = vpack.c.b16 %v7422, %v7421
        %vm7431 = vcmask 523264
        %v7433 = vsel %vm7431, %v7384, 0
        %v7436 = vsel %vm7431, %v7385, 0
        %v7439 = vsel %vm7431, %v7386, 0
        %v7442 = vsel %vm7431, %v7387, 0
        %v7445 = vsel %vm7431, %v7388, 0
        %v7448 = vsel %vm7431, %v7389, 0
        %v7451 = vsel %vm7431, %v7390, 0
        %v7454 = vsel %vm7431, %v7391, 0
        %7456 = vmatprep.subr.bf16.mxu0 0
        %7457 = vmatpush1.bf16.msra.mxu0 %v7423
        %7458 = vmatprep.subr.bf16.mxu0 0
        %7459 = vmatpush1.bf16.msra.mxu0 %v7424
        %7460 = vmatprep.subr.bf16.mxu0 0
        %7461 = vmatpush1.bf16.msra.mxu0 %v7425
        %7462 = vmatprep.subr.bf16.mxu0 0
        %7463 = vmatpush1.bf16.msra.mxu0 %v7426
        %7464 = vmatprep.subr.bf16.mxu0 0
        %7465 = vmatpush1.bf16.msra.mxu0 0
        %7466 = vmatprep.subr.bf16.mxu0 0
        %7467 = vmatpush1.bf16.msra.mxu0 0
        %7468 = vmatprep.subr.bf16.mxu0 0
        %7469 = vmatpush1.bf16.msra.mxu0 0
        %7470 = vmatprep.subr.bf16.mxu0 0
        %7471 = vmatpush1.bf16.msra.mxu0 0
        %7472 = vmatprep.subr.bf16.mxu0 0
        %7473 = vmatpush1.bf16.msra.mxu0 0
        %7474 = vmatprep.subr.bf16.mxu0 0
        %7475 = vmatpush1.bf16.msra.mxu0 0
        %7476 = vmatprep.subr.bf16.mxu0 0
        %7477 = vmatpush1.bf16.msra.mxu0 0
        %7478 = vmatprep.subr.bf16.mxu0 0
        %7479 = vmatpush1.bf16.msra.mxu0 0
        %7480 = vmatprep.subr.bf16.mxu0 0
        %7481 = vmatpush1.bf16.msra.mxu0 0
        %7482 = vmatprep.subr.bf16.mxu0 0
        %7483 = vmatpush1.bf16.msra.mxu0 0
        %7484 = vmatprep.subr.bf16.mxu0 0
        %7485 = vmatpush1.bf16.msra.mxu0 0
        %7486 = vmatprep.subr.bf16.mxu0 0
        %7487 = vmatpush1.bf16.msra.mxu0 0
        %7488 = vmatprep.mubr.bf16.mxu0 0
        %7489 = vmatmul.mubr.bf16.gmra.mrb[0].mxu0 %v7433
        %v7490 = vpop.f32.mrb[0].mxu0
        %v7491 = vadd.f32 %v7405, %v7490
        %v7492 = vpop.f32.mrb[0].mxu0
        %v7493 = vpop.f32.mrb[0].mxu0
        %v7494 = vadd.f32 %v7405, %v7493
        %v7495 = vpop.f32.mrb[0].mxu0
        %7496 = vmatprep.mubr.bf16.mxu0 0
        %7497 = vmatmul.mubr.bf16.gmra.mrb[0].mxu0 %v7436
        %v7498 = vpop.f32.mrb[0].mxu0
        %v7499 = vadd.f32 %v7405, %v7498
        %v7500 = vpop.f32.mrb[0].mxu0
        %v7501 = vpop.f32.mrb[0].mxu0
        %v7502 = vadd.f32 %v7405, %v7501
        %v7503 = vpop.f32.mrb[0].mxu0
        %7504 = vmatprep.mubr.bf16.mxu0 0
        %7505 = vmatmul.mubr.bf16.gmra.mrb[0].mxu0 %v7439
        %v7506 = vpop.f32.mrb[0].mxu0
        %v7507 = vadd.f32 %v7405, %v7506
        %v7508 = vpop.f32.mrb[0].mxu0
        %v7509 = vpop.f32.mrb[0].mxu0
        %v7510 = vadd.f32 %v7405, %v7509
        %v7511 = vpop.f32.mrb[0].mxu0
        %7512 = vmatprep.mubr.bf16.mxu0 0
        %7513 = vmatmul.mubr.bf16.gmra.mrb[0].mxu0 %v7442
        %v7514 = vpop.f32.mrb[0].mxu0
        %v7515 = vadd.f32 %v7405, %v7514
        %v7516 = vpop.f32.mrb[0].mxu0
        %v7517 = vpop.f32.mrb[0].mxu0
        %v7518 = vadd.f32 %v7405, %v7517
        %v7519 = vpop.f32.mrb[0].mxu0
        %7520 = vmatprep.mubr.bf16.mxu0 0
        %7521 = vmatmul.mubr.bf16.gmra.mrb[0].mxu0 %v7445
        %v7522 = vpop.f32.mrb[0].mxu0
        %v7523 = vadd.f32 %v7405, %v7522
        %v7524 = vpop.f32.mrb[0].mxu0
        %v7525 = vpop.f32.mrb[0].mxu0
        %v7526 = vadd.f32 %v7405, %v7525
        %v7527 = vpop.f32.mrb[0].mxu0
        %7528 = vmatprep.mubr.bf16.mxu0 0
        %7529 = vmatmul.mubr.bf16.gmra.mrb[0].mxu0 %v7448
        %v7530 = vpop.f32.mrb[0].mxu0
        %v7531 = vadd.f32 %v7405, %v7530
        %v7532 = vpop.f32.mrb[0].mxu0
        %v7533 = vpop.f32.mrb[0].mxu0
        %v7534 = vadd.f32 %v7405, %v7533
        %v7535 = vpop.f32.mrb[0].mxu0
        %7536 = vmatprep.mubr.bf16.mxu0 0
        %7537 = vmatmul.mubr.bf16.gmra.mrb[0].mxu0 %v7451
        %v7538 = vpop.f32.mrb[0].mxu0
        %v7539 = vadd.f32 %v7405, %v7538
        %v7540 = vpop.f32.mrb[0].mxu0
        %v7541 = vpop.f32.mrb[0].mxu0
        %v7542 = vadd.f32 %v7405, %v7541
        %v7543 = vpop.f32.mrb[0].mxu0
        %7544 = vmatprep.mubr.bf16.mxu0 0
        %7545 = vmatmul.mubr.bf16.gmra.mrb[0].mxu0 %v7454
        %v7546 = vpop.f32.mrb[0].mxu0
        %v7547 = vadd.f32 %v7405, %v7546
        %v7548 = vpop.f32.mrb[0].mxu0
        %v7549 = vpop.f32.mrb[0].mxu0
        %v7550 = vadd.f32 %v7405, %v7549
        %v7551 = vpop.f32.mrb[0].mxu0
        %7552 = vdwg.mxu0
        %v7553 = vld [vmem:[#allocation2] sm:$0xff]
        %v7554 = vld [vmem:[#allocation2 + $0x8] sm:$0xff]
        %v7555 = vld [vmem:[#allocation2 + $0x10] sm:$0xff]
        %v7556 = vld [vmem:[#allocation2 + $0x18] sm:$0xff]
        %v7557 = vld [vmem:[#allocation2 + $0x20] sm:$0xff]
        %v7558 = vld [vmem:[#allocation2 + $0x28] sm:$0xff]
        %v7559 = vld [vmem:[#allocation2 + $0x30] sm:$0xff]
        %v7560 = vld [vmem:[#allocation2 + $0x38] sm:$0xff]
        %v7561 = vld [vmem:[#allocation2 + $0x40] sm:$0xff]
        %v7562 = vld [vmem:[#allocation2 + $0x48] sm:$0xff]
        %v7563 = vld [vmem:[#allocation2 + $0x50] sm:$0xff]
        %v7564 = vld [vmem:[#allocation2 + $0x58] sm:$0xff]
        %v7565 = vld [vmem:[#allocation2 + $0x60] sm:$0xff]
        %v7566 = vld [vmem:[#allocation2 + $0x68] sm:$0xff]
        %v7567 = vld [vmem:[#allocation2 + $0x70] sm:$0xff]
        %v7568 = vld [vmem:[#allocation2 + $0x78] sm:$0xff]
        %v7569 = vadd.f32 %v7553, %v7491
        %v7570 = vadd.f32 %v7554, %v7494
        %v7571 = vadd.f32 %v7555, %v7499
        %v7572 = vadd.f32 %v7556, %v7502
        %v7573 = vadd.f32 %v7557, %v7507
        %v7574 = vadd.f32 %v7558, %v7510
        %v7575 = vadd.f32 %v7559, %v7515
        %v7576 = vadd.f32 %v7560, %v7518
        %v7577 = vadd.f32 %v7561, %v7523
        %v7578 = vadd.f32 %v7562, %v7526
        %v7579 = vadd.f32 %v7563, %v7531
        %v7580 = vadd.f32 %v7564, %v7534
        %v7581 = vadd.f32 %v7565, %v7539
        %v7582 = vadd.f32 %v7566, %v7542
        %v7583 = vadd.f32 %v7567, %v7547
        %v7584 = vadd.f32 %v7568, %v7550
        %7585 = vst.msk [vmem:[%s920] sm:$0xff] %vm952, %v7569
        %7586 = vst.msk [vmem:[%s920 + $0x8] sm:$0xff] %vm952, %v7570
        %7587 = vst.msk [vmem:[%s920 + $0x10] sm:$0xff] %vm952, %v7571
        %7588 = vst.msk [vmem:[%s920 + $0x18] sm:$0xff] %vm952, %v7572
        %7589 = vst.msk [vmem:[%s920 + $0x20] sm:$0xff] %vm952, %v7573
        %7590 = vst.msk [vmem:[%s920 + $0x28] sm:$0xff] %vm952, %v7574
        %7591 = vst.msk [vmem:[%s920 + $0x30] sm:$0xff] %vm952, %v7575
        %7592 = vst.msk [vmem:[%s920 + $0x38] sm:$0xff] %vm952, %v7576
        %7593 = vst.msk [vmem:[%s920 + $0x40] sm:$0xff] %vm952, %v7577
        %7594 = vst.msk [vmem:[%s920 + $0x48] sm:$0xff] %vm952, %v7578
        %7595 = vst.msk [vmem:[%s920 + $0x50] sm:$0xff] %vm952, %v7579
        %7596 = vst.msk [vmem:[%s920 + $0x58] sm:$0xff] %vm952, %v7580
        %7597 = vst.msk [vmem:[%s920 + $0x60] sm:$0xff] %vm952, %v7581
        %7598 = vst.msk [vmem:[%s920 + $0x68] sm:$0xff] %vm952, %v7582
        %7599 = vst.msk [vmem:[%s920 + $0x70] sm:$0xff] %vm952, %v7583
        %7600 = vst.msk [vmem:[%s920 + $0x78] sm:$0xff] %vm952, %v7584
        %s7601 = sand.u32 %s698, 1
        %s7602 = scalar_lea.sflag [#allocation8], %s7601
        %s7603 = sand.u32 %s698, 1
        %s7604 = smul.addr %s7603, 128
        %s7605 = scalar_lea.vmem [#allocation9], %s7604
        // Predicated region
        $region141: #{tpu_custom_call.1} parent=135 // pred_check
          %p7606 = pneg %p708
        $region142: #{tpu_custom_call.1} parent=135 // pred_check_branch
          %7608 = sbr.rel (%p7606) target = $region144
        $region143: #{tpu_custom_call.1} parent=135 // pred_region
          %s7610 = ssub.s32 2048, 2048
          %7611 = vsyncadd %s7602, %s7610
          %s7612 = smul.addr %s76, 16
          %s7613 = smul.addr %s7612, 128
          %s7614 = scalar_lea.hbm %s59, %s7613
          %s7615 = sshll.u32 %s7605, 4
          %s7616 = int_to_ptr.vmem [resolvable:$true] %s7615
          %7621 = dma.vmem_to_hbm [thread:$0]  %s7616, 2048, %s7614, %s7602, 128, 128, 8
        $region144: #{tpu_custom_call.1} parent=135 // pred_fallthru
          _
      $region136: #{tpu_custom_call.1} parent=5 // pred_fallthru
        _
      %p7622 = scmp.le.s32.totalorder 2, %s71
      // Predicated region
      $region145: #{tpu_custom_call.1} parent=5 // pred_check
        %p7623 = pneg %p7622
      $region146: #{tpu_custom_call.1} parent=5 // pred_check_branch
        %7625 = sbr.rel (%p7623) target = $region148
      $region147: #{tpu_custom_call.1} parent=5 // pred_region
        %s7626 = ssub.s32 %s71, 2
        // Predicated region
        $region149: #{tpu_custom_call.1} parent=147 // pred_check
          %p7627 = pneg %p714
        $region150: #{tpu_custom_call.1} parent=147 // pred_check_branch
          %7629 = sbr.rel (%p7627) target = $region152
        $region151: #{tpu_custom_call.1} parent=147 // pred_region
          %s7630 = sand.u32 %s699, 1
          %s7631 = scalar_lea.sflag [#allocation8], %s7630
          %s7632 = sand.u32 %s699, 1
          %s7633 = smul.addr %s7632, 128
          %s7634 = scalar_lea.vmem [#allocation9], %s7633
          %7635 = dma.done %s7631, 2048
        $region152: #{tpu_custom_call.1} parent=147 // pred_fallthru
          _
      $region148: #{tpu_custom_call.1} parent=5 // pred_fallthru
        _
    $region6: #{tpu_custom_call.1} parent=1 // loop_footer
      %s75 = sadd.s32 1, %s71
    $region7: #{tpu_custom_call.1} parent=1 // loop_footer_branch
      %70 = sbr.rel target = $region3
    $region8: #{tpu_custom_call.1} parent=1 // loop_exit
      _
    %7636 = vsyncpa [#allocation7], 1
    %s7637 = scalar_lea.sflag [#allocation7], 1
    %7638 = vsyncpa %s7637, 1
    %7639 = vsyncpa [#allocation8], 1
    %s7640 = scalar_lea.sflag [#allocation8], 1
    %7641 = vsyncpa %s7640, 1

</llo_original>
